<compile_context>
chip_gen: v6e
topology: v6e:2x2x1
jax: 0.10.0
libtpu: 0.0.40
codegen_flags: <defaults>
</compile_context>

<pallas_src>
import jax
import jax.numpy as jnp
from jax import lax
from jax.experimental import pallas as pl
from jax.experimental.pallas import tpu as pltpu

_BN_EPS = 1e-5


# ---------------------------------------------------------------------------
# Fused kernel: conv1+BN1+ReLU -> conv2+BN2, 1x1 proj+BN, add, final ReLU
# ---------------------------------------------------------------------------
def _res_block_kernel(x_ref, w1_ref, s1_ref, b1_ref, w2_ref, s2_ref, b2_ref,
                      wp_ref, sp_ref, bp_ref, o_ref,
                      xp_ref, slab1_ref, h1p_ref, slab2_ref):
  h = x_ref.shape[1]
  w = x_ref.shape[2]
  cin = x_ref.shape[3]
  c0 = w1_ref.shape[1]
  c1 = w2_ref.shape[1]
  oh, ow = o_ref.shape[1], o_ref.shape[2]
  m = oh * ow
  bf16, f32 = jnp.bfloat16, jnp.float32

  # ---- stage zero-padded input in bf16 VMEM (border-only zeroing) ----------
  zrow = jnp.zeros((1, w + 2, cin), bf16)
  zcol = jnp.zeros((h, 1, cin), bf16)
  xp_ref[0:1, :, :] = zrow
  xp_ref[h + 1:h + 2, :, :] = zrow
  xp_ref[1:1 + h, 0:1, :] = zcol
  xp_ref[1:1 + h, w + 1:w + 2, :] = zcol
  xp_ref[1:1 + h, 1:1 + w, :] = x_ref[0]

  # ---- conv1 (3x3, pad=1): im2col slab (m, 9*cin) -> ONE deep-K MXU dot ----
  for di in range(3):
    for dj in range(3):
      tap = di * 3 + dj
      win = xp_ref[di:di + oh, dj:dj + ow, :].reshape(m, cin)
      slab1_ref[:, tap * cin:(tap + 1) * cin] = win
  acc1 = jnp.dot(slab1_ref[...], w1_ref[...], preferred_element_type=f32)
  h1 = jnp.maximum(acc1 * s1_ref[...] + b1_ref[...], 0.0).astype(bf16)

  # ---- stage zero-padded h1 in bf16 VMEM (border-only zeroing) -------------
  zrow1 = jnp.zeros((1, ow + 2, c0), bf16)
  zcol1 = jnp.zeros((oh, 1, c0), bf16)
  h1p_ref[0:1, :, :] = zrow1
  h1p_ref[oh + 1:oh + 2, :, :] = zrow1
  h1p_ref[1:1 + oh, 0:1, :] = zcol1
  h1p_ref[1:1 + oh, ow + 1:ow + 2, :] = zcol1
  h1p_ref[1:1 + oh, 1:1 + ow, :] = h1.reshape(oh, ow, c0)

  # ---- conv2 (3x3, 'same'): im2col slab (m, 9*c0) -> ONE deep-K MXU dot ----
  for di in range(3):
    for dj in range(3):
      tap = di * 3 + dj
      win = h1p_ref[di:di + oh, dj:dj + ow, :].reshape(m, c0)
      slab2_ref[:, tap * c0:(tap + 1) * c0] = win
  main = jnp.dot(slab2_ref[...], w2_ref[...], preferred_element_type=f32)
  main = main * s2_ref[...] + b2_ref[...]

  # ---- projection shortcut: 1x1 conv -> folded BN affine -------------------
  xin = x_ref[0].reshape(m, cin)
  sc = jnp.dot(xin, wp_ref[...], preferred_element_type=f32)
  sc = sc * sp_ref[...] + bp_ref[...]

  # ---- residual add + final ReLU -------------------------------------------
  o_ref[0] = jnp.maximum(main + sc, 0.0).reshape(oh, ow, c1).astype(o_ref.dtype)


# ---------------------------------------------------------------------------
# Parameter construction / BN folding
# ---------------------------------------------------------------------------
def _fold_bn(conv_bias, bn):
  # Inference-mode BatchNorm folded into a per-channel affine.
  # TODO(synk): training-mode BatchNorm (batch statistics) is not modeled.
  scale = bn["gamma"] * lax.rsqrt(bn["var"] + _BN_EPS)
  bias = bn["beta"] + (conv_bias - bn["mean"]) * scale
  return scale.astype(jnp.float32), bias.astype(jnp.float32)


def init_params(key, in_channels, out_channels):
  c0, c1 = out_channels
  ks = jax.random.split(key, 6)

  def kaiming_out(k, shape):  # kaiming_normal_(mode='fan_out', relu)
    fan_out = shape[0] * shape[2] * shape[3]
    return jax.random.normal(k, shape, jnp.float32) * (2.0 / fan_out) ** 0.5

  def conv_bias(k, fan_in, n):  # PyTorch Conv2d default bias init
    bound = 1.0 / (fan_in ** 0.5)
    return jax.random.uniform(k, (n,), jnp.float32, -bound, bound)

  def bn_params(c):  # PyTorch BatchNorm2d defaults
    return dict(gamma=jnp.ones((c,), jnp.float32),
                beta=jnp.zeros((c,), jnp.float32),
                mean=jnp.zeros((c,), jnp.float32),
                var=jnp.ones((c,), jnp.float32))

  return dict(
      w1=kaiming_out(ks[0], (c0, in_channels, 3, 3)),
      b1=conv_bias(ks[1], in_channels * 9, c0),
      bn1=bn_params(c0),
      w2=kaiming_out(ks[2], (c1, c0, 3, 3)),
      b2=conv_bias(ks[3], c0 * 9, c1),
      bn2=bn_params(c1),
      wp=kaiming_out(ks[4], (c1, in_channels, 1, 1)),
      bp=conv_bias(ks[5], in_channels, c1),
      bnp=bn_params(c1),
  )


# ---------------------------------------------------------------------------
# Wrapper (mirrors BuildingBlockResidual_ConvBlock.forward, NCHW in / out)
# ---------------------------------------------------------------------------
def building_block_residual_forward(params, x_nchw, *, stride=1):
  if stride != 1:
    # TODO(synk): stride > 1 (strided window sub-sampling in the slab fill)
    # is not implemented in the fused kernel; module default stride=1 only.
    raise NotImplementedError("Pallas kernel implements stride=1 only.")
  n, cin, h, w = x_nchw.shape
  c0 = params["w1"].shape[0]
  c1 = params["w2"].shape[0]
  oh, ow = h, w
  m = oh * ow

  # NCHW -> NHWC (channels minor), bf16 for the HBM->VMEM transfer.
  x = jnp.transpose(x_nchw, (0, 2, 3, 1)).astype(jnp.bfloat16)

  s1, b1 = _fold_bn(params["b1"], params["bn1"])
  s2, b2 = _fold_bn(params["b2"], params["bn2"])
  sp, bp = _fold_bn(params["bp"], params["bnp"])

  # Flattened weights for the fused-K dots: K ordered (kh, kw, cin) to match
  # the in-kernel im2col slab layout.
  w1 = jnp.transpose(params["w1"], (2, 3, 1, 0)).reshape(9 * cin, c0).astype(jnp.bfloat16)
  w2 = jnp.transpose(params["w2"], (2, 3, 1, 0)).reshape(9 * c0, c1).astype(jnp.bfloat16)
  wp = jnp.transpose(params["wp"][:, :, 0, 0], (1, 0)).astype(jnp.bfloat16)

  flops = 2 * n * m * (9 * cin * c0 + 9 * c0 * c1 + cin * c1)
  bytes_accessed = (x.size * 2 + w1.size * 2 + w2.size * 2 + wp.size * 2
                    + 4 * (2 * c0 + 4 * c1) + n * oh * ow * c1 * 4)

  out_nhwc = pl.pallas_call(
      _res_block_kernel,
      out_shape=jax.ShapeDtypeStruct((n, oh, ow, c1), jnp.float32),
      grid=(n,),
      in_specs=[
          pl.BlockSpec((1, h, w, cin), lambda i: (i, 0, 0, 0)),
          pl.BlockSpec((9 * cin, c0), lambda i: (0, 0)),
          pl.BlockSpec((1, c0), lambda i: (0, 0)),
          pl.BlockSpec((1, c0), lambda i: (0, 0)),
          pl.BlockSpec((9 * c0, c1), lambda i: (0, 0)),
          pl.BlockSpec((1, c1), lambda i: (0, 0)),
          pl.BlockSpec((1, c1), lambda i: (0, 0)),
          pl.BlockSpec((cin, c1), lambda i: (0, 0)),
          pl.BlockSpec((1, c1), lambda i: (0, 0)),
          pl.BlockSpec((1, c1), lambda i: (0, 0)),
      ],
      out_specs=pl.BlockSpec((1, oh, ow, c1), lambda i: (i, 0, 0, 0)),
      scratch_shapes=[
          pltpu.VMEM((h + 2, w + 2, cin), jnp.bfloat16),   # padded input
          pltpu.VMEM((m, 9 * cin), jnp.bfloat16),          # conv1 patch slab
          pltpu.VMEM((oh + 2, ow + 2, c0), jnp.bfloat16),  # padded conv1 act
          pltpu.VMEM((m, 9 * c0), jnp.bfloat16),           # conv2 patch slab
      ],
      compiler_params=pltpu.CompilerParams(
          dimension_semantics=("parallel",),
          vmem_limit_bytes=32 * 1024 * 1024),
      cost_estimate=pl.CostEstimate(
          flops=flops, transcendentals=0, bytes_accessed=bytes_accessed),
  )(x, w1, s1.reshape(1, c0), b1.reshape(1, c0),
    w2, s2.reshape(1, c1), b2.reshape(1, c1),
    wp, sp.reshape(1, c1), bp.reshape(1, c1))
  return jnp.transpose(out_nhwc, (0, 3, 1, 2))  # back to NCHW


# ---------------------------------------------------------------------------
# Pure-JAX reference (lax.conv) on the same bf16-rounded operands
# ---------------------------------------------------------------------------
def reference_forward(params, x_nchw, *, stride=1):
  f32 = jnp.float32
  rb = lambda a: a.astype(jnp.bfloat16).astype(f32)  # bf16 rounding

  def conv(x, w, st, pad):
    return lax.conv_general_dilated(
        x, rb(w), window_strides=(st, st), padding=pad,
        dimension_numbers=("NCHW", "OIHW", "NCHW"),
        precision=lax.Precision.HIGHEST)

  def affine(y, scale, bias):
    return y * scale.reshape(1, -1, 1, 1) + bias.reshape(1, -1, 1, 1)

  s1, b1 = _fold_bn(params["b1"], params["bn1"])
  s2, b2 = _fold_bn(params["b2"], params["bn2"])
  sp, bp = _fold_bn(params["bp"], params["bnp"])

  x = rb(x_nchw)
  h = jnp.maximum(affine(conv(x, params["w1"], stride, [(1, 1), (1, 1)]), s1, b1), 0.0)
  main = affine(conv(rb(h), params["w2"], 1, [(1, 1), (1, 1)]), s2, b2)
  sc = affine(conv(x, params["wp"], stride, [(0, 0), (0, 0)]), sp, bp)
  return jnp.maximum(main + sc, 0.0)


if __name__ == "__main__":
  key = jax.random.PRNGKey(0)
  kp, kx = jax.random.split(key)
  in_channels, out_channels, stride = 32, (64, 128), 1
  params = init_params(kp, in_channels, out_channels)
  x = jax.random.normal(kx, (2, in_channels, 16, 16), jnp.float32)

  out = building_block_residual_forward(params, x, stride=stride)
  out = jax.block_until_ready(out)
  assert out.shape == (2, out_channels[1], 16, 16), out.shape
  assert bool(jnp.all(jnp.isfinite(out)))

  ref = reference_forward(params, x, stride=stride)
  err = float(jnp.max(jnp.abs(out - ref)))
  assert err < 1e-2, f"max abs err {err}"
  print("KERNEL_OK")
</pallas_src>

<mosaic_0001>
module attributes {stable_mosaic.version = 11 : i64} {
  func.func @_res_block_kernel(%arg0: i32, %arg1: memref<1x16x16x32xbf16, #tpu.memory_space<vmem>>, %arg2: memref<288x64xbf16, #tpu.memory_space<vmem>>, %arg3: memref<1x64xf32, #tpu.memory_space<vmem>>, %arg4: memref<1x64xf32, #tpu.memory_space<vmem>>, %arg5: memref<576x128xbf16, #tpu.memory_space<vmem>>, %arg6: memref<1x128xf32, #tpu.memory_space<vmem>>, %arg7: memref<1x128xf32, #tpu.memory_space<vmem>>, %arg8: memref<32x128xbf16, #tpu.memory_space<vmem>>, %arg9: memref<1x128xf32, #tpu.memory_space<vmem>>, %arg10: memref<1x128xf32, #tpu.memory_space<vmem>>, %arg11: memref<1x16x16x128xf32, #tpu.memory_space<vmem>>, %arg12: memref<18x18x32xbf16, #tpu.memory_space<vmem>>, %arg13: memref<256x288xbf16, #tpu.memory_space<vmem>>, %arg14: memref<18x18x64xbf16, #tpu.memory_space<vmem>>, %arg15: memref<256x576xbf16, #tpu.memory_space<vmem>>) attributes {dimension_semantics = [#tpu.dimension_semantics<parallel>], iteration_bounds = array<i64: 2>, scalar_prefetch = 0 : i64, scratch_operands = 4 : i64, tpu.core_type = #tpu.core_type<tc>, window_params = [{transform_indices = @transform_0, window_bounds = array<i64: 1, 16, 16, 32>}, {pipeline_mode = #tpu.pipeline_mode<synchronous>, transform_indices = @transform_1, window_bounds = array<i64: 288, 64>}, {pipeline_mode = #tpu.pipeline_mode<synchronous>, transform_indices = @transform_2, window_bounds = array<i64: 1, 64>}, {pipeline_mode = #tpu.pipeline_mode<synchronous>, transform_indices = @transform_3, window_bounds = array<i64: 1, 64>}, {pipeline_mode = #tpu.pipeline_mode<synchronous>, transform_indices = @transform_4, window_bounds = array<i64: 576, 128>}, {pipeline_mode = #tpu.pipeline_mode<synchronous>, transform_indices = @transform_5, window_bounds = array<i64: 1, 128>}, {pipeline_mode = #tpu.pipeline_mode<synchronous>, transform_indices = @transform_6, window_bounds = array<i64: 1, 128>}, {pipeline_mode = #tpu.pipeline_mode<synchronous>, transform_indices = @transform_7, window_bounds = array<i64: 32, 128>}, {pipeline_mode = #tpu.pipeline_mode<synchronous>, transform_indices = @transform_8, window_bounds = array<i64: 1, 128>}, {pipeline_mode = #tpu.pipeline_mode<synchronous>, transform_indices = @transform_9, window_bounds = array<i64: 1, 128>}, {transform_indices = @transform_10, window_bounds = array<i64: 1, 16, 16, 128>}]} {
    %cst = arith.constant 0.000000e+00 : bf16
    %0 = vector.broadcast %cst : bf16 to vector<1x18x32xbf16>
    %cst_0 = arith.constant 0.000000e+00 : bf16
    %1 = vector.broadcast %cst_0 : bf16 to vector<16x1x32xbf16>
    %c0 = arith.constant 0 : index
    %c0_1 = arith.constant 0 : index
    %c0_2 = arith.constant 0 : index
    %2 = vector.load %arg12[%c0, %c0_1, %c0_2] : memref<18x18x32xbf16, #tpu.memory_space<vmem>>, vector<1x18x32xbf16>
    tpu.vector_store %arg12[%c0, %c0_1, %c0_2], %0 {strides = array<i32>} : memref<18x18x32xbf16, #tpu.memory_space<vmem>>, vector<1x18x32xbf16>,
    %c17 = arith.constant 17 : index
    %c0_3 = arith.constant 0 : index
    %c0_4 = arith.constant 0 : index
    %3 = vector.load %arg12[%c17, %c0_3, %c0_4] : memref<18x18x32xbf16, #tpu.memory_space<vmem>>, vector<1x18x32xbf16>
    tpu.vector_store %arg12[%c17, %c0_3, %c0_4], %0 {strides = array<i32>} : memref<18x18x32xbf16, #tpu.memory_space<vmem>>, vector<1x18x32xbf16>,
    %c1 = arith.constant 1 : index
    %c0_5 = arith.constant 0 : index
    %c0_6 = arith.constant 0 : index
    %4 = vector.load %arg12[%c1, %c0_5, %c0_6] : memref<18x18x32xbf16, #tpu.memory_space<vmem>>, vector<16x1x32xbf16>
    tpu.vector_store %arg12[%c1, %c0_5, %c0_6], %1 {strides = array<i32>} : memref<18x18x32xbf16, #tpu.memory_space<vmem>>, vector<16x1x32xbf16>,
    %c1_7 = arith.constant 1 : index
    %c17_8 = arith.constant 17 : index
    %c0_9 = arith.constant 0 : index
    %5 = vector.load %arg12[%c1_7, %c17_8, %c0_9] : memref<18x18x32xbf16, #tpu.memory_space<vmem>>, vector<16x1x32xbf16>
    tpu.vector_store %arg12[%c1_7, %c17_8, %c0_9], %1 {strides = array<i32>} : memref<18x18x32xbf16, #tpu.memory_space<vmem>>, vector<16x1x32xbf16>,
    %c0_10 = arith.constant 0 : index
    %c0_11 = arith.constant 0 : index
    %c0_12 = arith.constant 0 : index
    %c0_13 = arith.constant 0 : index
    %6 = vector.load %arg1[%c0_10, %c0_11, %c0_12, %c0_13] : memref<1x16x16x32xbf16, #tpu.memory_space<vmem>>, vector<1x16x16x32xbf16>
    %7 = vector.shape_cast %6 : vector<1x16x16x32xbf16> to vector<16x16x32xbf16>
    %c1_14 = arith.constant 1 : index
    %c1_15 = arith.constant 1 : index
    %c0_16 = arith.constant 0 : index
    %8 = vector.load %arg12[%c1_14, %c1_15, %c0_16] : memref<18x18x32xbf16, #tpu.memory_space<vmem>>, vector<16x16x32xbf16>
    tpu.vector_store %arg12[%c1_14, %c1_15, %c0_16], %7 {strides = array<i32>} : memref<18x18x32xbf16, #tpu.memory_space<vmem>>, vector<16x16x32xbf16>,
    %c0_17 = arith.constant 0 : index
    %c0_18 = arith.constant 0 : index
    %c0_19 = arith.constant 0 : index
    %9 = vector.load %arg12[%c0_17, %c0_18, %c0_19] : memref<18x18x32xbf16, #tpu.memory_space<vmem>>, vector<16x16x32xbf16>
    %10 = vector.shape_cast %9 : vector<16x16x32xbf16> to vector<256x32xbf16>
    %c0_20 = arith.constant 0 : index
    %c0_21 = arith.constant 0 : index
    %11 = vector.load %arg13[%c0_20, %c0_21] : memref<256x288xbf16, #tpu.memory_space<vmem>>, vector<256x32xbf16>
    tpu.vector_store %arg13[%c0_20, %c0_21], %10 {strides = array<i32>} : memref<256x288xbf16, #tpu.memory_space<vmem>>, vector<256x32xbf16>,
    %c0_22 = arith.constant 0 : index
    %c1_23 = arith.constant 1 : index
    %c0_24 = arith.constant 0 : index
    %12 = vector.load %arg12[%c0_22, %c1_23, %c0_24] : memref<18x18x32xbf16, #tpu.memory_space<vmem>>, vector<16x16x32xbf16>
    %13 = vector.shape_cast %12 : vector<16x16x32xbf16> to vector<256x32xbf16>
    %c0_25 = arith.constant 0 : index
    %c32 = arith.constant 32 : index
    %14 = vector.load %arg13[%c0_25, %c32] : memref<256x288xbf16, #tpu.memory_space<vmem>>, vector<256x32xbf16>
    tpu.vector_store %arg13[%c0_25, %c32], %13 {strides = array<i32>} : memref<256x288xbf16, #tpu.memory_space<vmem>>, vector<256x32xbf16>,
    %c0_26 = arith.constant 0 : index
    %c2 = arith.constant 2 : index
    %c0_27 = arith.constant 0 : index
    %15 = vector.load %arg12[%c0_26, %c2, %c0_27] : memref<18x18x32xbf16, #tpu.memory_space<vmem>>, vector<16x16x32xbf16>
    %16 = vector.shape_cast %15 : vector<16x16x32xbf16> to vector<256x32xbf16>
    %c0_28 = arith.constant 0 : index
    %c64 = arith.constant 64 : index
    %17 = vector.load %arg13[%c0_28, %c64] : memref<256x288xbf16, #tpu.memory_space<vmem>>, vector<256x32xbf16>
    tpu.vector_store %arg13[%c0_28, %c64], %16 {strides = array<i32>} : memref<256x288xbf16, #tpu.memory_space<vmem>>, vector<256x32xbf16>,
    %c1_29 = arith.constant 1 : index
    %c0_30 = arith.constant 0 : index
    %c0_31 = arith.constant 0 : index
    %18 = vector.load %arg12[%c1_29, %c0_30, %c0_31] : memref<18x18x32xbf16, #tpu.memory_space<vmem>>, vector<16x16x32xbf16>
    %19 = vector.shape_cast %18 : vector<16x16x32xbf16> to vector<256x32xbf16>
    %c0_32 = arith.constant 0 : index
    %c96 = arith.constant 96 : index
    %20 = vector.load %arg13[%c0_32, %c96] : memref<256x288xbf16, #tpu.memory_space<vmem>>, vector<256x32xbf16>
    tpu.vector_store %arg13[%c0_32, %c96], %19 {strides = array<i32>} : memref<256x288xbf16, #tpu.memory_space<vmem>>, vector<256x32xbf16>,
    %c1_33 = arith.constant 1 : index
    %c1_34 = arith.constant 1 : index
    %c0_35 = arith.constant 0 : index
    %21 = vector.load %arg12[%c1_33, %c1_34, %c0_35] : memref<18x18x32xbf16, #tpu.memory_space<vmem>>, vector<16x16x32xbf16>
    %22 = vector.shape_cast %21 : vector<16x16x32xbf16> to vector<256x32xbf16>
    %c0_36 = arith.constant 0 : index
    %c128 = arith.constant 128 : index
    %23 = vector.load %arg13[%c0_36, %c128] : memref<256x288xbf16, #tpu.memory_space<vmem>>, vector<256x32xbf16>
    tpu.vector_store %arg13[%c0_36, %c128], %22 {strides = array<i32>} : memref<256x288xbf16, #tpu.memory_space<vmem>>, vector<256x32xbf16>,
    %c1_37 = arith.constant 1 : index
    %c2_38 = arith.constant 2 : index
    %c0_39 = arith.constant 0 : index
    %24 = vector.load %arg12[%c1_37, %c2_38, %c0_39] : memref<18x18x32xbf16, #tpu.memory_space<vmem>>, vector<16x16x32xbf16>
    %25 = vector.shape_cast %24 : vector<16x16x32xbf16> to vector<256x32xbf16>
    %c0_40 = arith.constant 0 : index
    %c160 = arith.constant 160 : index
    %26 = vector.load %arg13[%c0_40, %c160] : memref<256x288xbf16, #tpu.memory_space<vmem>>, vector<256x32xbf16>
    tpu.vector_store %arg13[%c0_40, %c160], %25 {strides = array<i32>} : memref<256x288xbf16, #tpu.memory_space<vmem>>, vector<256x32xbf16>,
    %c2_41 = arith.constant 2 : index
    %c0_42 = arith.constant 0 : index
    %c0_43 = arith.constant 0 : index
    %27 = vector.load %arg12[%c2_41, %c0_42, %c0_43] : memref<18x18x32xbf16, #tpu.memory_space<vmem>>, vector<16x16x32xbf16>
    %28 = vector.shape_cast %27 : vector<16x16x32xbf16> to vector<256x32xbf16>
    %c0_44 = arith.constant 0 : index
    %c192 = arith.constant 192 : index
    %29 = vector.load %arg13[%c0_44, %c192] : memref<256x288xbf16, #tpu.memory_space<vmem>>, vector<256x32xbf16>
    tpu.vector_store %arg13[%c0_44, %c192], %28 {strides = array<i32>} : memref<256x288xbf16, #tpu.memory_space<vmem>>, vector<256x32xbf16>,
    %c2_45 = arith.constant 2 : index
    %c1_46 = arith.constant 1 : index
    %c0_47 = arith.constant 0 : index
    %30 = vector.load %arg12[%c2_45, %c1_46, %c0_47] : memref<18x18x32xbf16, #tpu.memory_space<vmem>>, vector<16x16x32xbf16>
    %31 = vector.shape_cast %30 : vector<16x16x32xbf16> to vector<256x32xbf16>
    %c0_48 = arith.constant 0 : index
    %c224 = arith.constant 224 : index
    %32 = vector.load %arg13[%c0_48, %c224] : memref<256x288xbf16, #tpu.memory_space<vmem>>, vector<256x32xbf16>
    tpu.vector_store %arg13[%c0_48, %c224], %31 {strides = array<i32>} : memref<256x288xbf16, #tpu.memory_space<vmem>>, vector<256x32xbf16>,
    %c2_49 = arith.constant 2 : index
    %c2_50 = arith.constant 2 : index
    %c0_51 = arith.constant 0 : index
    %33 = vector.load %arg12[%c2_49, %c2_50, %c0_51] : memref<18x18x32xbf16, #tpu.memory_space<vmem>>, vector<16x16x32xbf16>
    %34 = vector.shape_cast %33 : vector<16x16x32xbf16> to vector<256x32xbf16>
    %c0_52 = arith.constant 0 : index
    %c256 = arith.constant 256 : index
    %35 = vector.load %arg13[%c0_52, %c256] : memref<256x288xbf16, #tpu.memory_space<vmem>>, vector<256x32xbf16>
    tpu.vector_store %arg13[%c0_52, %c256], %34 {strides = array<i32>} : memref<256x288xbf16, #tpu.memory_space<vmem>>, vector<256x32xbf16>,
    %c0_53 = arith.constant 0 : index
    %c0_54 = arith.constant 0 : index
    %36 = vector.load %arg13[%c0_53, %c0_54] : memref<256x288xbf16, #tpu.memory_space<vmem>>, vector<256x288xbf16>
    %c0_55 = arith.constant 0 : index
    %c0_56 = arith.constant 0 : index
    %37 = vector.load %arg2[%c0_55, %c0_56] : memref<288x64xbf16, #tpu.memory_space<vmem>>, vector<288x64xbf16>
    %cst_57 = arith.constant dense<0.000000e+00> : vector<256x64xf32>
    %38 = tpu.matmul %36, %37, %cst_57 {dimension_numbers = #tpu.dot_dimension_numbers<[1], [0], [0], [1], [0, 0, 1, 1], [], []>} : vector<256x288xbf16>, vector<288x64xbf16>, vector<256x64xf32> -> vector<256x64xf32>
    %c0_58 = arith.constant 0 : index
    %c0_59 = arith.constant 0 : index
    %39 = vector.load %arg3[%c0_58, %c0_59] : memref<1x64xf32, #tpu.memory_space<vmem>>, vector<1x64xf32>
    %40 = vector.broadcast %39 : vector<1x64xf32> to vector<256x64xf32>
    %41 = arith.mulf %38, %40 : vector<256x64xf32>
    %c0_60 = arith.constant 0 : index
    %c0_61 = arith.constant 0 : index
    %42 = vector.load %arg4[%c0_60, %c0_61] : memref<1x64xf32, #tpu.memory_space<vmem>>, vector<1x64xf32>
    %43 = vector.broadcast %42 : vector<1x64xf32> to vector<256x64xf32>
    %44 = arith.addf %41, %43 : vector<256x64xf32>
    %cst_62 = arith.constant 0.000000e+00 : f32
    %45 = vector.broadcast %cst_62 : f32 to vector<256x64xf32>
    %46 = arith.maximumf %44, %45 : vector<256x64xf32>
    %47 = arith.truncf %46 : vector<256x64xf32> to vector<256x64xbf16>
    %cst_63 = arith.constant 0.000000e+00 : bf16
    %48 = vector.broadcast %cst_63 : bf16 to vector<1x18x64xbf16>
    %cst_64 = arith.constant 0.000000e+00 : bf16
    %49 = vector.broadcast %cst_64 : bf16 to vector<16x1x64xbf16>
    %c0_65 = arith.constant 0 : index
    %c0_66 = arith.constant 0 : index
    %c0_67 = arith.constant 0 : index
    %50 = vector.load %arg14[%c0_65, %c0_66, %c0_67] : memref<18x18x64xbf16, #tpu.memory_space<vmem>>, vector<1x18x64xbf16>
    tpu.vector_store %arg14[%c0_65, %c0_66, %c0_67], %48 {strides = array<i32>} : memref<18x18x64xbf16, #tpu.memory_space<vmem>>, vector<1x18x64xbf16>,
    %c17_68 = arith.constant 17 : index
    %c0_69 = arith.constant 0 : index
    %c0_70 = arith.constant 0 : index
    %51 = vector.load %arg14[%c17_68, %c0_69, %c0_70] : memref<18x18x64xbf16, #tpu.memory_space<vmem>>, vector<1x18x64xbf16>
    tpu.vector_store %arg14[%c17_68, %c0_69, %c0_70], %48 {strides = array<i32>} : memref<18x18x64xbf16, #tpu.memory_space<vmem>>, vector<1x18x64xbf16>,
    %c1_71 = arith.constant 1 : index
    %c0_72 = arith.constant 0 : index
    %c0_73 = arith.constant 0 : index
    %52 = vector.load %arg14[%c1_71, %c0_72, %c0_73] : memref<18x18x64xbf16, #tpu.memory_space<vmem>>, vector<16x1x64xbf16>
    tpu.vector_store %arg14[%c1_71, %c0_72, %c0_73], %49 {strides = array<i32>} : memref<18x18x64xbf16, #tpu.memory_space<vmem>>, vector<16x1x64xbf16>,
    %c1_74 = arith.constant 1 : index
    %c17_75 = arith.constant 17 : index
    %c0_76 = arith.constant 0 : index
    %53 = vector.load %arg14[%c1_74, %c17_75, %c0_76] : memref<18x18x64xbf16, #tpu.memory_space<vmem>>, vector<16x1x64xbf16>
    tpu.vector_store %arg14[%c1_74, %c17_75, %c0_76], %49 {strides = array<i32>} : memref<18x18x64xbf16, #tpu.memory_space<vmem>>, vector<16x1x64xbf16>,
    %54 = vector.shape_cast %47 : vector<256x64xbf16> to vector<16x16x64xbf16>
    %c1_77 = arith.constant 1 : index
    %c1_78 = arith.constant 1 : index
    %c0_79 = arith.constant 0 : index
    %55 = vector.load %arg14[%c1_77, %c1_78, %c0_79] : memref<18x18x64xbf16, #tpu.memory_space<vmem>>, vector<16x16x64xbf16>
    tpu.vector_store %arg14[%c1_77, %c1_78, %c0_79], %54 {strides = array<i32>} : memref<18x18x64xbf16, #tpu.memory_space<vmem>>, vector<16x16x64xbf16>,
    %c0_80 = arith.constant 0 : index
    %c0_81 = arith.constant 0 : index
    %c0_82 = arith.constant 0 : index
    %56 = vector.load %arg14[%c0_80, %c0_81, %c0_82] : memref<18x18x64xbf16, #tpu.memory_space<vmem>>, vector<16x16x64xbf16>
    %57 = vector.shape_cast %56 : vector<16x16x64xbf16> to vector<256x64xbf16>
    %c0_83 = arith.constant 0 : index
    %c0_84 = arith.constant 0 : index
    %58 = vector.load %arg15[%c0_83, %c0_84] : memref<256x576xbf16, #tpu.memory_space<vmem>>, vector<256x64xbf16>
    tpu.vector_store %arg15[%c0_83, %c0_84], %57 {strides = array<i32>} : memref<256x576xbf16, #tpu.memory_space<vmem>>, vector<256x64xbf16>,
    %c0_85 = arith.constant 0 : index
    %c1_86 = arith.constant 1 : index
    %c0_87 = arith.constant 0 : index
    %59 = vector.load %arg14[%c0_85, %c1_86, %c0_87] : memref<18x18x64xbf16, #tpu.memory_space<vmem>>, vector<16x16x64xbf16>
    %60 = vector.shape_cast %59 : vector<16x16x64xbf16> to vector<256x64xbf16>
    %c0_88 = arith.constant 0 : index
    %c64_89 = arith.constant 64 : index
    %61 = vector.load %arg15[%c0_88, %c64_89] : memref<256x576xbf16, #tpu.memory_space<vmem>>, vector<256x64xbf16>
    tpu.vector_store %arg15[%c0_88, %c64_89], %60 {strides = array<i32>} : memref<256x576xbf16, #tpu.memory_space<vmem>>, vector<256x64xbf16>,
    %c0_90 = arith.constant 0 : index
    %c2_91 = arith.constant 2 : index
    %c0_92 = arith.constant 0 : index
    %62 = vector.load %arg14[%c0_90, %c2_91, %c0_92] : memref<18x18x64xbf16, #tpu.memory_space<vmem>>, vector<16x16x64xbf16>
    %63 = vector.shape_cast %62 : vector<16x16x64xbf16> to vector<256x64xbf16>
    %c0_93 = arith.constant 0 : index
    %c128_94 = arith.constant 128 : index
    %64 = vector.load %arg15[%c0_93, %c128_94] : memref<256x576xbf16, #tpu.memory_space<vmem>>, vector<256x64xbf16>
    tpu.vector_store %arg15[%c0_93, %c128_94], %63 {strides = array<i32>} : memref<256x576xbf16, #tpu.memory_space<vmem>>, vector<256x64xbf16>,
    %c1_95 = arith.constant 1 : index
    %c0_96 = arith.constant 0 : index
    %c0_97 = arith.constant 0 : index
    %65 = vector.load %arg14[%c1_95, %c0_96, %c0_97] : memref<18x18x64xbf16, #tpu.memory_space<vmem>>, vector<16x16x64xbf16>
    %66 = vector.shape_cast %65 : vector<16x16x64xbf16> to vector<256x64xbf16>
    %c0_98 = arith.constant 0 : index
    %c192_99 = arith.constant 192 : index
    %67 = vector.load %arg15[%c0_98, %c192_99] : memref<256x576xbf16, #tpu.memory_space<vmem>>, vector<256x64xbf16>
    tpu.vector_store %arg15[%c0_98, %c192_99], %66 {strides = array<i32>} : memref<256x576xbf16, #tpu.memory_space<vmem>>, vector<256x64xbf16>,
    %c1_100 = arith.constant 1 : index
    %c1_101 = arith.constant 1 : index
    %c0_102 = arith.constant 0 : index
    %68 = vector.load %arg14[%c1_100, %c1_101, %c0_102] : memref<18x18x64xbf16, #tpu.memory_space<vmem>>, vector<16x16x64xbf16>
    %69 = vector.shape_cast %68 : vector<16x16x64xbf16> to vector<256x64xbf16>
    %c0_103 = arith.constant 0 : index
    %c256_104 = arith.constant 256 : index
    %70 = vector.load %arg15[%c0_103, %c256_104] : memref<256x576xbf16, #tpu.memory_space<vmem>>, vector<256x64xbf16>
    tpu.vector_store %arg15[%c0_103, %c256_104], %69 {strides = array<i32>} : memref<256x576xbf16, #tpu.memory_space<vmem>>, vector<256x64xbf16>,
    %c1_105 = arith.constant 1 : index
    %c2_106 = arith.constant 2 : index
    %c0_107 = arith.constant 0 : index
    %71 = vector.load %arg14[%c1_105, %c2_106, %c0_107] : memref<18x18x64xbf16, #tpu.memory_space<vmem>>, vector<16x16x64xbf16>
    %72 = vector.shape_cast %71 : vector<16x16x64xbf16> to vector<256x64xbf16>
    %c0_108 = arith.constant 0 : index
    %c320 = arith.constant 320 : index
    %73 = vector.load %arg15[%c0_108, %c320] : memref<256x576xbf16, #tpu.memory_space<vmem>>, vector<256x64xbf16>
    tpu.vector_store %arg15[%c0_108, %c320], %72 {strides = array<i32>} : memref<256x576xbf16, #tpu.memory_space<vmem>>, vector<256x64xbf16>,
    %c2_109 = arith.constant 2 : index
    %c0_110 = arith.constant 0 : index
    %c0_111 = arith.constant 0 : index
    %74 = vector.load %arg14[%c2_109, %c0_110, %c0_111] : memref<18x18x64xbf16, #tpu.memory_space<vmem>>, vector<16x16x64xbf16>
    %75 = vector.shape_cast %74 : vector<16x16x64xbf16> to vector<256x64xbf16>
    %c0_112 = arith.constant 0 : index
    %c384 = arith.constant 384 : index
    %76 = vector.load %arg15[%c0_112, %c384] : memref<256x576xbf16, #tpu.memory_space<vmem>>, vector<256x64xbf16>
    tpu.vector_store %arg15[%c0_112, %c384], %75 {strides = array<i32>} : memref<256x576xbf16, #tpu.memory_space<vmem>>, vector<256x64xbf16>,
    %c2_113 = arith.constant 2 : index
    %c1_114 = arith.constant 1 : index
    %c0_115 = arith.constant 0 : index
    %77 = vector.load %arg14[%c2_113, %c1_114, %c0_115] : memref<18x18x64xbf16, #tpu.memory_space<vmem>>, vector<16x16x64xbf16>
    %78 = vector.shape_cast %77 : vector<16x16x64xbf16> to vector<256x64xbf16>
    %c0_116 = arith.constant 0 : index
    %c448 = arith.constant 448 : index
    %79 = vector.load %arg15[%c0_116, %c448] : memref<256x576xbf16, #tpu.memory_space<vmem>>, vector<256x64xbf16>
    tpu.vector_store %arg15[%c0_116, %c448], %78 {strides = array<i32>} : memref<256x576xbf16, #tpu.memory_space<vmem>>, vector<256x64xbf16>,
    %c2_117 = arith.constant 2 : index
    %c2_118 = arith.constant 2 : index
    %c0_119 = arith.constant 0 : index
    %80 = vector.load %arg14[%c2_117, %c2_118, %c0_119] : memref<18x18x64xbf16, #tpu.memory_space<vmem>>, vector<16x16x64xbf16>
    %81 = vector.shape_cast %80 : vector<16x16x64xbf16> to vector<256x64xbf16>
    %c0_120 = arith.constant 0 : index
    %c512 = arith.constant 512 : index
    %82 = vector.load %arg15[%c0_120, %c512] : memref<256x576xbf16, #tpu.memory_space<vmem>>, vector<256x64xbf16>
    tpu.vector_store %arg15[%c0_120, %c512], %81 {strides = array<i32>} : memref<256x576xbf16, #tpu.memory_space<vmem>>, vector<256x64xbf16>,
    %c0_121 = arith.constant 0 : index
    %c0_122 = arith.constant 0 : index
    %83 = vector.load %arg15[%c0_121, %c0_122] : memref<256x576xbf16, #tpu.memory_space<vmem>>, vector<256x576xbf16>
    %c0_123 = arith.constant 0 : index
    %c0_124 = arith.constant 0 : index
    %84 = vector.load %arg5[%c0_123, %c0_124] : memref<576x128xbf16, #tpu.memory_space<vmem>>, vector<576x128xbf16>
    %cst_125 = arith.constant dense<0.000000e+00> : vector<256x128xf32>
    %85 = tpu.matmul %83, %84, %cst_125 {dimension_numbers = #tpu.dot_dimension_numbers<[1], [0], [0], [1], [0, 0, 1, 1], [], []>} : vector<256x576xbf16>, vector<576x128xbf16>, vector<256x128xf32> -> vector<256x128xf32>
    %c0_126 = arith.constant 0 : index
    %c0_127 = arith.constant 0 : index
    %86 = vector.load %arg6[%c0_126, %c0_127] : memref<1x128xf32, #tpu.memory_space<vmem>>, vector<1x128xf32>
    %87 = vector.broadcast %86 : vector<1x128xf32> to vector<256x128xf32>
    %88 = arith.mulf %85, %87 : vector<256x128xf32>
    %c0_128 = arith.constant 0 : index
    %c0_129 = arith.constant 0 : index
    %89 = vector.load %arg7[%c0_128, %c0_129] : memref<1x128xf32, #tpu.memory_space<vmem>>, vector<1x128xf32>
    %90 = vector.broadcast %89 : vector<1x128xf32> to vector<256x128xf32>
    %91 = arith.addf %88, %90 : vector<256x128xf32>
    %c0_130 = arith.constant 0 : index
    %c0_131 = arith.constant 0 : index
    %c0_132 = arith.constant 0 : index
    %c0_133 = arith.constant 0 : index
    %92 = vector.load %arg1[%c0_130, %c0_131, %c0_132, %c0_133] : memref<1x16x16x32xbf16, #tpu.memory_space<vmem>>, vector<1x16x16x32xbf16>
    %93 = vector.shape_cast %92 : vector<1x16x16x32xbf16> to vector<16x16x32xbf16>
    %94 = vector.shape_cast %93 : vector<16x16x32xbf16> to vector<256x32xbf16>
    %c0_134 = arith.constant 0 : index
    %c0_135 = arith.constant 0 : index
    %95 = vector.load %arg8[%c0_134, %c0_135] : memref<32x128xbf16, #tpu.memory_space<vmem>>, vector<32x128xbf16>
    %cst_136 = arith.constant dense<0.000000e+00> : vector<256x128xf32>
    %96 = tpu.matmul %94, %95, %cst_136 {dimension_numbers = #tpu.dot_dimension_numbers<[1], [0], [0], [1], [0, 0, 1, 1], [], []>} : vector<256x32xbf16>, vector<32x128xbf16>, vector<256x128xf32> -> vector<256x128xf32>
    %c0_137 = arith.constant 0 : index
    %c0_138 = arith.constant 0 : index
    %97 = vector.load %arg9[%c0_137, %c0_138] : memref<1x128xf32, #tpu.memory_space<vmem>>, vector<1x128xf32>
    %98 = vector.broadcast %97 : vector<1x128xf32> to vector<256x128xf32>
    %99 = arith.mulf %96, %98 : vector<256x128xf32>
    %c0_139 = arith.constant 0 : index
    %c0_140 = arith.constant 0 : index
    %100 = vector.load %arg10[%c0_139, %c0_140] : memref<1x128xf32, #tpu.memory_space<vmem>>, vector<1x128xf32>
    %101 = vector.broadcast %100 : vector<1x128xf32> to vector<256x128xf32>
    %102 = arith.addf %99, %101 : vector<256x128xf32>
    %103 = arith.addf %91, %102 : vector<256x128xf32>
    %cst_141 = arith.constant 0.000000e+00 : f32
    %104 = vector.broadcast %cst_141 : f32 to vector<256x128xf32>
    %105 = arith.maximumf %103, %104 : vector<256x128xf32>
    %106 = vector.shape_cast %105 : vector<256x128xf32> to vector<16x16x128xf32>
    %c0_142 = arith.constant 0 : index
    %c0_143 = arith.constant 0 : index
    %c0_144 = arith.constant 0 : index
    %c0_145 = arith.constant 0 : index
    %107 = vector.load %arg11[%c0_142, %c0_143, %c0_144, %c0_145] : memref<1x16x16x128xf32, #tpu.memory_space<vmem>>, vector<1x16x16x128xf32>
    %108 = vector.shape_cast %107 : vector<1x16x16x128xf32> to vector<16x16x128xf32>
    %109 = vector.shape_cast %106 : vector<16x16x128xf32> to vector<1x16x16x128xf32>
    tpu.vector_store %arg11[%c0_142, %c0_143, %c0_144, %c0_145], %109 {strides = array<i32>} : memref<1x16x16x128xf32, #tpu.memory_space<vmem>>, vector<1x16x16x128xf32>,
    return
  }
  func.func @transform_0(%arg0: i32) -> (i32, i32, i32, i32) {
    %c0_i32 = arith.constant 0 : i32
    %c0_i32_0 = arith.constant 0 : i32
    %c0_i32_1 = arith.constant 0 : i32
    %c0_i32_2 = arith.constant 0 : i32
    return %arg0, %c0_i32, %c0_i32_0, %c0_i32_1 : i32, i32, i32, i32
  }
  func.func @transform_1(%arg0: i32) -> (i32, i32) {
    %c0_i32 = arith.constant 0 : i32
    %c0_i32_0 = arith.constant 0 : i32
    %c0_i32_1 = arith.constant 0 : i32
    return %c0_i32, %c0_i32_0 : i32, i32
  }
  func.func @transform_2(%arg0: i32) -> (i32, i32) {
    %c0_i32 = arith.constant 0 : i32
    %c0_i32_0 = arith.constant 0 : i32
    %c0_i32_1 = arith.constant 0 : i32
    return %c0_i32, %c0_i32_0 : i32, i32
  }
  func.func @transform_3(%arg0: i32) -> (i32, i32) {
    %c0_i32 = arith.constant 0 : i32
    %c0_i32_0 = arith.constant 0 : i32
    %c0_i32_1 = arith.constant 0 : i32
    return %c0_i32, %c0_i32_0 : i32, i32
  }
  func.func @transform_4(%arg0: i32) -> (i32, i32) {
    %c0_i32 = arith.constant 0 : i32
    %c0_i32_0 = arith.constant 0 : i32
    %c0_i32_1 = arith.constant 0 : i32
    return %c0_i32, %c0_i32_0 : i32, i32
  }
  func.func @transform_5(%arg0: i32) -> (i32, i32) {
    %c0_i32 = arith.constant 0 : i32
    %c0_i32_0 = arith.constant 0 : i32
    %c0_i32_1 = arith.constant 0 : i32
    return %c0_i32, %c0_i32_0 : i32, i32
  }
  func.func @transform_6(%arg0: i32) -> (i32, i32) {
    %c0_i32 = arith.constant 0 : i32
    %c0_i32_0 = arith.constant 0 : i32
    %c0_i32_1 = arith.constant 0 : i32
    return %c0_i32, %c0_i32_0 : i32, i32
  }
  func.func @transform_7(%arg0: i32) -> (i32, i32) {
    %c0_i32 = arith.constant 0 : i32
    %c0_i32_0 = arith.constant 0 : i32
    %c0_i32_1 = arith.constant 0 : i32
    return %c0_i32, %c0_i32_0 : i32, i32
  }
  func.func @transform_8(%arg0: i32) -> (i32, i32) {
    %c0_i32 = arith.constant 0 : i32
    %c0_i32_0 = arith.constant 0 : i32
    %c0_i32_1 = arith.constant 0 : i32
    return %c0_i32, %c0_i32_0 : i32, i32
  }
  func.func @transform_9(%arg0: i32) -> (i32, i32) {
    %c0_i32 = arith.constant 0 : i32
    %c0_i32_0 = arith.constant 0 : i32
    %c0_i32_1 = arith.constant 0 : i32
    return %c0_i32, %c0_i32_0 : i32, i32
  }
  func.func @transform_10(%arg0: i32) -> (i32, i32, i32, i32) {
    %c0_i32 = arith.constant 0 : i32
    %c0_i32_0 = arith.constant 0 : i32
    %c0_i32_1 = arith.constant 0 : i32
    %c0_i32_2 = arith.constant 0 : i32
    return %arg0, %c0_i32, %c0_i32_0, %c0_i32_1 : i32, i32, i32, i32
  }
}

</mosaic_0001>

<llo_original>
// kernel: tpu_custom_call.1
$region0: #{tpu_custom_call.1}
  #allocation0 [shape = 'u32[]', space=smem, size = 0x4, offset = 0x4, fixed_abs, tag = 'smem constant byte address 0x4 - core index']
  #allocation1 [shape = 'u32[144,128]{1,0:T(1,128)}', space=vmem, size = 0x12000, scoped, tag = 'internal scratch']
  #allocation2 [shape = 'bf16[18,18,32]{2,1,0:T(8,128)(2,1)}', space=vmem, size = 0x1b000, scoped, tag = 'scratch operand']
  #allocation3 [shape = 'bf16[256,288]{1,0:T(8,128)(2,1)}', space=vmem, size = 0x30000, scoped, tag = 'scratch operand']
  #allocation4 [shape = 'bf16[18,18,64]{2,1,0:T(8,128)(2,1)}', space=vmem, size = 0x1b000, scoped, tag = 'scratch operand']
  #allocation5 [shape = 'bf16[256,576]{1,0:T(8,128)(2,1)}', space=vmem, size = 0x50000, scoped, tag = 'scratch operand']
  %s0 = inlined_call_operand.hbm [shape: bf16[2,16,16,32], index: 0, kind: input, shape index: {}]
  %s1 = inlined_call_operand.vmem [shape: bf16[288,64], index: 1, kind: input, shape index: {}]
  %s2 = inlined_call_operand.vmem [shape: f32[1,64], index: 2, kind: input, shape index: {}]
  %s3 = inlined_call_operand.vmem [shape: f32[1,64], index: 3, kind: input, shape index: {}]
  %s4 = inlined_call_operand.hbm [shape: bf16[576,128], index: 4, kind: input, shape index: {}]
  %s5 = inlined_call_operand.vmem [shape: f32[1,128], index: 5, kind: input, shape index: {}]
  %s6 = inlined_call_operand.vmem [shape: f32[1,128], index: 6, kind: input, shape index: {}]
  %s7 = inlined_call_operand.vmem [shape: bf16[32,128], index: 7, kind: input, shape index: {}]
  %s8 = inlined_call_operand.vmem [shape: f32[1,128], index: 8, kind: input, shape index: {}]
  %s9 = inlined_call_operand.vmem [shape: f32[1,128], index: 9, kind: input, shape index: {}]
  %s10 = inlined_call_operand.hbm [shape: f32[2,16,16,128], index: 10, kind: output, shape index: {}]
  %s11 = sld [smem:[#allocation0]]
  $region81: #{tpu_custom_call.1} parent=0
    _
  %s13 = ssub.s32 1, %s11
  %s14 = scalar_select 0, %s13, %s11
  $region1: #{tpu_custom_call.1} parent=0
    #allocation6 [shape = 'u8[131072]{0}', space=vmem, size = 0x20000, scoped, tag = 'input window, operand 0']
    #allocation7 [shape = 's32[2]{0}', space=sflag, size = 0x8, scoped, tag = 'scoped memory for tpu_custom_call.1']
    #allocation8 [shape = 's32[2]{0}', space=sflag, size = 0x8, scoped, tag = 'scoped memory for tpu_custom_call.1']
    #allocation9 [shape = 'u8[147456]{0}', space=vmem, size = 0x24000, scoped, tag = 'input window, operand 4, single buffered']
    #allocation10 [shape = 's32[1]{0}', space=sflag, size = 0x4, scoped, tag = 'scoped memory for tpu_custom_call.1']
    #allocation11 [shape = 'u8[262144]{0}', space=vmem, size = 0x40000, scoped, tag = 'output window, operand 0']
    %15 = vsyncpa [#allocation7], 0
    %s16 = scalar_lea.sflag [#allocation7], 1
    %17 = vsyncpa %s16, 0
    %18 = vsyncpa [#allocation10], 0
    %19 = vsyncpa [#allocation8], 0
    %s20 = scalar_lea.sflag [#allocation8], 1
    %21 = vsyncpa %s20, 0
    loop: start=0, step=1, limit=4
    $region2: #{tpu_custom_call.1} parent=1 // loop_pre_header
      _
    $region3: #{tpu_custom_call.1} parent=1 // loop_header
      %s23 = sphi 0, %s27
      %p24 = scmp.ge.s32.totalorder %s23, 4
      %s33 = sphi 0, %s35
      %s36 = sphi 0, %s33
      %s37 = sphi 0, %s36
      %s53 = sphi 0, %s37
      %s57 = sphi 0, %s57
      %s59 = sphi 0, %s57
      %s60 = sphi 0, %s59
      %s74 = sphi 0, %s60
      %s78 = sphi 0, %s78
      %s80 = sphi 0, %s78
      %s81 = sphi 0, %s80
      %s95 = sphi 0, %s81
      %s99 = sphi 0, %s99
      %s101 = sphi 0, %s99
      %s102 = sphi 0, %s101
      %s116 = sphi 0, %s102
      %s120 = sphi 0, %s120
      %s122 = sphi 0, %s120
      %s123 = sphi 0, %s122
      %s137 = sphi 0, %s123
      %s141 = sphi 0, %s141
      %s143 = sphi 0, %s141
      %s144 = sphi 0, %s143
      %s158 = sphi 0, %s144
      %s162 = sphi 0, %s162
      %s164 = sphi 0, %s162
      %s165 = sphi 0, %s164
      %s179 = sphi 0, %s165
      %s183 = sphi 0, %s183
      %s185 = sphi 0, %s183
      %s186 = sphi 0, %s185
      %s200 = sphi 0, %s186
      %s204 = sphi 0, %s204
      %s206 = sphi 0, %s204
      %s207 = sphi 0, %s206
      %s221 = sphi 0, %s207
      %s225 = sphi 0, %s225
      %s227 = sphi 0, %s225
      %s228 = sphi 0, %s227
      %s242 = sphi 0, %s228
      %s248 = sphi 0, %s250
      %s251 = sphi 0, %s248
      %s252 = sphi 0, %s251
      %s268 = sphi 0, %s252
    $region4: #{tpu_custom_call.1} parent=1 // loop_header_branch
      %26 = sbr.rel (%p24) target = $region8
    $region5: #{tpu_custom_call.1} parent=1 // loop_body
      %s28 = ssub.s32 %s23, 1
      %s29 = ssub.s32 %s23, 2
      %s30 = sadd.s32 %s23, 1
      %s31 = ssub.s32 %s23, %s30
      %p32 = scmp.eq.s32.totalorder %s31, 0
      %s34 = sadd.s32 %s33, 1
      %s35 = scalar_select %p32, %s33, %s34
      %p38 = pneg %p32
      %p39 = scmp.eq.s32.totalorder %s23, 1
      %p40 = por %p38, %p39
      %p41 = scmp.ne.s32.totalorder %s33, %s36
      %p42 = scmp.eq.s32.totalorder %s23, 0
      %p43 = por %p41, %p42
      %p44 = scmp.ne.s32.totalorder %s33, %s36
      %p45 = scmp.eq.s32.totalorder %s28, 1
      %p46 = por %p44, %p45
      %p47 = scmp.ne.s32.totalorder %s36, %s37
      %p48 = scmp.eq.s32.totalorder %s28, 0
      %p49 = por %p47, %p48
      %p50 = scmp.ne.s32.totalorder %s36, %s37
      %p51 = scmp.eq.s32.totalorder %s29, 1
      %p52 = por %p50, %p51
      %p54 = scmp.ne.s32.totalorder %s37, %s53
      %p55 = scmp.eq.s32.totalorder %s29, 0
      %p56 = por %p54, %p55
      %s58 = sadd.s32 %s57, 1
      %p61 = scmp.eq.s32.totalorder %s23, 1
      %p62 = scmp.ne.s32.totalorder %s57, %s59
      %p63 = scmp.eq.s32.totalorder %s23, 0
      %p64 = por %p62, %p63
      %p65 = scmp.ne.s32.totalorder %s57, %s59
      %p66 = scmp.eq.s32.totalorder %s28, 1
      %p67 = por %p65, %p66
      %p68 = scmp.ne.s32.totalorder %s59, %s60
      %p69 = scmp.eq.s32.totalorder %s28, 0
      %p70 = por %p68, %p69
      %p71 = scmp.ne.s32.totalorder %s59, %s60
      %p72 = scmp.eq.s32.totalorder %s29, 1
      %p73 = por %p71, %p72
      %p75 = scmp.ne.s32.totalorder %s60, %s74
      %p76 = scmp.eq.s32.totalorder %s29, 0
      %p77 = por %p75, %p76
      %s79 = sadd.s32 %s78, 1
      %p82 = scmp.eq.s32.totalorder %s23, 1
      %p83 = scmp.ne.s32.totalorder %s78, %s80
      %p84 = scmp.eq.s32.totalorder %s23, 0
      %p85 = por %p83, %p84
      %p86 = scmp.ne.s32.totalorder %s78, %s80
      %p87 = scmp.eq.s32.totalorder %s28, 1
      %p88 = por %p86, %p87
      %p89 = scmp.ne.s32.totalorder %s80, %s81
      %p90 = scmp.eq.s32.totalorder %s28, 0
      %p91 = por %p89, %p90
      %p92 = scmp.ne.s32.totalorder %s80, %s81
      %p93 = scmp.eq.s32.totalorder %s29, 1
      %p94 = por %p92, %p93
      %p96 = scmp.ne.s32.totalorder %s81, %s95
      %p97 = scmp.eq.s32.totalorder %s29, 0
      %p98 = por %p96, %p97
      %s100 = sadd.s32 %s99, 1
      %p103 = scmp.eq.s32.totalorder %s23, 1
      %p104 = scmp.ne.s32.totalorder %s99, %s101
      %p105 = scmp.eq.s32.totalorder %s23, 0
      %p106 = por %p104, %p105
      %p107 = scmp.ne.s32.totalorder %s99, %s101
      %p108 = scmp.eq.s32.totalorder %s28, 1
      %p109 = por %p107, %p108
      %p110 = scmp.ne.s32.totalorder %s101, %s102
      %p111 = scmp.eq.s32.totalorder %s28, 0
      %p112 = por %p110, %p111
      %p113 = scmp.ne.s32.totalorder %s101, %s102
      %p114 = scmp.eq.s32.totalorder %s29, 1
      %p115 = por %p113, %p114
      %p117 = scmp.ne.s32.totalorder %s102, %s116
      %p118 = scmp.eq.s32.totalorder %s29, 0
      %p119 = por %p117, %p118
      %s121 = sadd.s32 %s120, 1
      %p124 = scmp.eq.s32.totalorder %s23, 1
      %p125 = scmp.ne.s32.totalorder %s120, %s122
      %p126 = scmp.eq.s32.totalorder %s23, 0
      %p127 = por %p125, %p126
      %p128 = scmp.ne.s32.totalorder %s120, %s122
      %p129 = scmp.eq.s32.totalorder %s28, 1
      %p130 = por %p128, %p129
      %p131 = scmp.ne.s32.totalorder %s122, %s123
      %p132 = scmp.eq.s32.totalorder %s28, 0
      %p133 = por %p131, %p132
      %p134 = scmp.ne.s32.totalorder %s122, %s123
      %p135 = scmp.eq.s32.totalorder %s29, 1
      %p136 = por %p134, %p135
      %p138 = scmp.ne.s32.totalorder %s123, %s137
      %p139 = scmp.eq.s32.totalorder %s29, 0
      %p140 = por %p138, %p139
      %s142 = sadd.s32 %s141, 1
      %p145 = scmp.eq.s32.totalorder %s23, 1
      %p146 = scmp.ne.s32.totalorder %s141, %s143
      %p147 = scmp.eq.s32.totalorder %s23, 0
      %p148 = por %p146, %p147
      %p149 = scmp.ne.s32.totalorder %s141, %s143
      %p150 = scmp.eq.s32.totalorder %s28, 1
      %p151 = por %p149, %p150
      %p152 = scmp.ne.s32.totalorder %s143, %s144
      %p153 = scmp.eq.s32.totalorder %s28, 0
      %p154 = por %p152, %p153
      %p155 = scmp.ne.s32.totalorder %s143, %s144
      %p156 = scmp.eq.s32.totalorder %s29, 1
      %p157 = por %p155, %p156
      %p159 = scmp.ne.s32.totalorder %s144, %s158
      %p160 = scmp.eq.s32.totalorder %s29, 0
      %p161 = por %p159, %p160
      %s163 = sadd.s32 %s162, 1
      %p166 = scmp.eq.s32.totalorder %s23, 1
      %p167 = scmp.ne.s32.totalorder %s162, %s164
      %p168 = scmp.eq.s32.totalorder %s23, 0
      %p169 = por %p167, %p168
      %p170 = scmp.ne.s32.totalorder %s162, %s164
      %p171 = scmp.eq.s32.totalorder %s28, 1
      %p172 = por %p170, %p171
      %p173 = scmp.ne.s32.totalorder %s164, %s165
      %p174 = scmp.eq.s32.totalorder %s28, 0
      %p175 = por %p173, %p174
      %p176 = scmp.ne.s32.totalorder %s164, %s165
      %p177 = scmp.eq.s32.totalorder %s29, 1
      %p178 = por %p176, %p177
      %p180 = scmp.ne.s32.totalorder %s165, %s179
      %p181 = scmp.eq.s32.totalorder %s29, 0
      %p182 = por %p180, %p181
      %s184 = sadd.s32 %s183, 1
      %p187 = scmp.eq.s32.totalorder %s23, 1
      %p188 = scmp.ne.s32.totalorder %s183, %s185
      %p189 = scmp.eq.s32.totalorder %s23, 0
      %p190 = por %p188, %p189
      %p191 = scmp.ne.s32.totalorder %s183, %s185
      %p192 = scmp.eq.s32.totalorder %s28, 1
      %p193 = por %p191, %p192
      %p194 = scmp.ne.s32.totalorder %s185, %s186
      %p195 = scmp.eq.s32.totalorder %s28, 0
      %p196 = por %p194, %p195
      %p197 = scmp.ne.s32.totalorder %s185, %s186
      %p198 = scmp.eq.s32.totalorder %s29, 1
      %p199 = por %p197, %p198
      %p201 = scmp.ne.s32.totalorder %s186, %s200
      %p202 = scmp.eq.s32.totalorder %s29, 0
      %p203 = por %p201, %p202
      %s205 = sadd.s32 %s204, 1
      %p208 = scmp.eq.s32.totalorder %s23, 1
      %p209 = scmp.ne.s32.totalorder %s204, %s206
      %p210 = scmp.eq.s32.totalorder %s23, 0
      %p211 = por %p209, %p210
      %p212 = scmp.ne.s32.totalorder %s204, %s206
      %p213 = scmp.eq.s32.totalorder %s28, 1
      %p214 = por %p212, %p213
      %p215 = scmp.ne.s32.totalorder %s206, %s207
      %p216 = scmp.eq.s32.totalorder %s28, 0
      %p217 = por %p215, %p216
      %p218 = scmp.ne.s32.totalorder %s206, %s207
      %p219 = scmp.eq.s32.totalorder %s29, 1
      %p220 = por %p218, %p219
      %p222 = scmp.ne.s32.totalorder %s207, %s221
      %p223 = scmp.eq.s32.totalorder %s29, 0
      %p224 = por %p222, %p223
      %s226 = sadd.s32 %s225, 1
      %p229 = scmp.eq.s32.totalorder %s23, 1
      %p230 = scmp.ne.s32.totalorder %s225, %s227
      %p231 = scmp.eq.s32.totalorder %s23, 0
      %p232 = por %p230, %p231
      %p233 = scmp.ne.s32.totalorder %s225, %s227
      %p234 = scmp.eq.s32.totalorder %s28, 1
      %p235 = por %p233, %p234
      %p236 = scmp.ne.s32.totalorder %s227, %s228
      %p237 = scmp.eq.s32.totalorder %s28, 0
      %p238 = por %p236, %p237
      %p239 = scmp.ne.s32.totalorder %s227, %s228
      %p240 = scmp.eq.s32.totalorder %s29, 1
      %p241 = por %p239, %p240
      %p243 = scmp.ne.s32.totalorder %s228, %s242
      %p244 = scmp.eq.s32.totalorder %s29, 0
      %p245 = por %p243, %p244
      %s246 = ssub.s32 %s23, %s30
      %p247 = scmp.eq.s32.totalorder %s246, 0
      %s249 = sadd.s32 %s248, 1
      %s250 = scalar_select %p247, %s248, %s249
      %p253 = pneg %p247
      %p254 = scmp.eq.s32.totalorder %s23, 1
      %p255 = por %p253, %p254
      %p256 = scmp.ne.s32.totalorder %s248, %s251
      %p257 = scmp.eq.s32.totalorder %s23, 0
      %p258 = por %p256, %p257
      %p259 = scmp.ne.s32.totalorder %s248, %s251
      %p260 = scmp.eq.s32.totalorder %s28, 1
      %p261 = por %p259, %p260
      %p262 = scmp.ne.s32.totalorder %s251, %s252
      %p263 = scmp.eq.s32.totalorder %s28, 0
      %p264 = por %p262, %p263
      %p265 = scmp.ne.s32.totalorder %s251, %s252
      %p266 = scmp.eq.s32.totalorder %s29, 1
      %p267 = por %p265, %p266
      %p269 = scmp.ne.s32.totalorder %s252, %s268
      %p270 = scmp.eq.s32.totalorder %s29, 0
      %p271 = por %p269, %p270
      %p272 = scmp.le.s32.totalorder 1, %s23
      %p273 = scmp.lt.s32.totalorder %s23, 3
      %p274 = pnand %p272, %p273
      %p275 = pneg %p274
      // Predicated region
      $region9: #{tpu_custom_call.1} parent=5 // pred_check
        _
      $region10: #{tpu_custom_call.1} parent=5 // pred_check_branch
        %277 = sbr.rel (%p274) target = $region12
      $region11: #{tpu_custom_call.1} parent=5 // pred_region
        %s278 = ssub.s32 %s23, 1
        // Predicated region
        $region13: #{tpu_custom_call.1} parent=11 // pred_check
          %p279 = pneg %p70
        $region14: #{tpu_custom_call.1} parent=11 // pred_check_branch
          %281 = sbr.rel (%p279) target = $region16
        $region15: #{tpu_custom_call.1} parent=11 // pred_region
          _
        $region16: #{tpu_custom_call.1} parent=11 // pred_fallthru
          _
        // Predicated region
        $region17: #{tpu_custom_call.1} parent=11 // pred_check
          %p282 = pneg %p91
        $region18: #{tpu_custom_call.1} parent=11 // pred_check_branch
          %284 = sbr.rel (%p282) target = $region20
        $region19: #{tpu_custom_call.1} parent=11 // pred_region
          _
        $region20: #{tpu_custom_call.1} parent=11 // pred_fallthru
          _
        // Predicated region
        $region21: #{tpu_custom_call.1} parent=11 // pred_check
          %p285 = pneg %p112
        $region22: #{tpu_custom_call.1} parent=11 // pred_check_branch
          %287 = sbr.rel (%p285) target = $region24
        $region23: #{tpu_custom_call.1} parent=11 // pred_region
          _
        $region24: #{tpu_custom_call.1} parent=11 // pred_fallthru
          _
        // Predicated region
        $region25: #{tpu_custom_call.1} parent=11 // pred_check
          %p288 = pneg %p133
        $region26: #{tpu_custom_call.1} parent=11 // pred_check_branch
          %290 = sbr.rel (%p288) target = $region28
        $region27: #{tpu_custom_call.1} parent=11 // pred_region
          %s292 = ssub.s32 4608, 4608
          %293 = vsyncadd [#allocation10], %s292
          %s294 = sshll.u32 [#allocation9], 4
          %s295 = int_to_ptr.vmem [resolvable:$true] %s294
          %300 = dma.hbm_to_vmem [thread:$0]  %s4, 4608, %s295, [#allocation10], 64, 64, 4
        $region28: #{tpu_custom_call.1} parent=11 // pred_fallthru
          _
        // Predicated region
        $region29: #{tpu_custom_call.1} parent=11 // pred_check
          %p301 = pneg %p154
        $region30: #{tpu_custom_call.1} parent=11 // pred_check_branch
          %303 = sbr.rel (%p301) target = $region32
        $region31: #{tpu_custom_call.1} parent=11 // pred_region
          _
        $region32: #{tpu_custom_call.1} parent=11 // pred_fallthru
          _
        // Predicated region
        $region33: #{tpu_custom_call.1} parent=11 // pred_check
          %p304 = pneg %p175
        $region34: #{tpu_custom_call.1} parent=11 // pred_check_branch
          %306 = sbr.rel (%p304) target = $region36
        $region35: #{tpu_custom_call.1} parent=11 // pred_region
          _
        $region36: #{tpu_custom_call.1} parent=11 // pred_fallthru
          _
        // Predicated region
        $region37: #{tpu_custom_call.1} parent=11 // pred_check
          %p307 = pneg %p196
        $region38: #{tpu_custom_call.1} parent=11 // pred_check_branch
          %309 = sbr.rel (%p307) target = $region40
        $region39: #{tpu_custom_call.1} parent=11 // pred_region
          _
        $region40: #{tpu_custom_call.1} parent=11 // pred_fallthru
          _
        // Predicated region
        $region41: #{tpu_custom_call.1} parent=11 // pred_check
          %p310 = pneg %p217
        $region42: #{tpu_custom_call.1} parent=11 // pred_check_branch
          %312 = sbr.rel (%p310) target = $region44
        $region43: #{tpu_custom_call.1} parent=11 // pred_region
          _
        $region44: #{tpu_custom_call.1} parent=11 // pred_fallthru
          _
        // Predicated region
        $region45: #{tpu_custom_call.1} parent=11 // pred_check
          %p313 = pneg %p238
        $region46: #{tpu_custom_call.1} parent=11 // pred_check_branch
          %315 = sbr.rel (%p313) target = $region48
        $region47: #{tpu_custom_call.1} parent=11 // pred_region
          _
        $region48: #{tpu_custom_call.1} parent=11 // pred_fallthru
          _
      $region12: #{tpu_custom_call.1} parent=5 // pred_fallthru
        _
      %p316 = scmp.lt.s32.totalorder %s23, 2
      // Predicated region
      $region49: #{tpu_custom_call.1} parent=5 // pred_check
        %p317 = pneg %p316
      $region50: #{tpu_custom_call.1} parent=5 // pred_check_branch
        %319 = sbr.rel (%p317) target = $region52
      $region51: #{tpu_custom_call.1} parent=5 // pred_region
        // Predicated region
        $region53: #{tpu_custom_call.1} parent=51 // pred_check
          %p320 = pneg %p43
        $region54: #{tpu_custom_call.1} parent=51 // pred_check_branch
          %322 = sbr.rel (%p320) target = $region56
        $region55: #{tpu_custom_call.1} parent=51 // pred_region
          %s323 = sand.u32 %s33, 1
          %s324 = scalar_lea.sflag [#allocation7], %s323
          %s325 = sand.u32 %s33, 1
          %s326 = smul.addr %s325, 128
          %s327 = scalar_lea.vmem [#allocation6], %s326
          %s329 = ssub.s32 2048, 2048
          %330 = vsyncadd %s324, %s329
          %s331 = smul.addr %s23, 32
          %s332 = smul.addr %s331, 64
          %s333 = scalar_lea.hbm %s0, %s332
          %s334 = sshll.u32 %s327, 4
          %s335 = int_to_ptr.vmem [resolvable:$true] %s334
          %340 = dma.hbm_to_vmem [thread:$0]  %s333, 2048, %s335, %s324, 64, 64, 4
        $region56: #{tpu_custom_call.1} parent=51 // pred_fallthru
          _
      $region52: #{tpu_custom_call.1} parent=5 // pred_fallthru
        _
      %p341 = scmp.le.s32.totalorder 1, %s23
      %p342 = scmp.lt.s32.totalorder %s23, 3
      %p343 = pnand %p341, %p342
      %p344 = pneg %p343
      // Predicated region
      $region57: #{tpu_custom_call.1} parent=5 // pred_check
        _
      $region58: #{tpu_custom_call.1} parent=5 // pred_check_branch
        %346 = sbr.rel (%p343) target = $region60
      $region59: #{tpu_custom_call.1} parent=5 // pred_region
        %s347 = ssub.s32 %s23, 1
        %s348 = sand.u32 %s36, 1
        %s349 = scalar_lea.sflag [#allocation7], %s348
        %s350 = sand.u32 %s36, 1
        %s351 = smul.addr %s350, 128
        %s352 = scalar_lea.vmem [#allocation6], %s351
        // Predicated region
        $region61: #{tpu_custom_call.1} parent=59 // pred_check
          %p353 = pneg %p49
        $region62: #{tpu_custom_call.1} parent=59 // pred_check_branch
          %355 = sbr.rel (%p353) target = $region64
        $region63: #{tpu_custom_call.1} parent=59 // pred_region
          %356 = dma.done %s349, 2048
        $region64: #{tpu_custom_call.1} parent=59 // pred_fallthru
          _
        // Predicated region
        $region65: #{tpu_custom_call.1} parent=59 // pred_check
          %p357 = pneg %p133
        $region66: #{tpu_custom_call.1} parent=59 // pred_check_branch
          %359 = sbr.rel (%p357) target = $region68
        $region67: #{tpu_custom_call.1} parent=59 // pred_region
          %360 = dma.done [#allocation10], 4608
        $region68: #{tpu_custom_call.1} parent=59 // pred_fallthru
          _
        %s361 = sand.u32 %s36, 1
        %s362 = scalar_lea.sflag [#allocation7], %s361
        %s363 = sand.u32 %s36, 1
        %s364 = smul.addr %s363, 128
        %s365 = scalar_lea.vmem [#allocation6], %s364
        %p366 = pneg %p49
        %p367 = pneg %p46
        %p368 = pneg %p70
        %p369 = pneg %p67
        %p370 = pneg %p91
        %p371 = pneg %p88
        %p372 = pneg %p112
        %p373 = pneg %p109
        %p374 = pneg %p133
        %p375 = pneg %p130
        %p376 = pneg %p154
        %p377 = pneg %p151
        %p378 = pneg %p175
        %p379 = pneg %p172
        %p380 = pneg %p196
        %p381 = pneg %p193
        %p382 = pneg %p217
        %p383 = pneg %p214
        %p384 = pneg %p238
        %p385 = pneg %p235
        %p386 = pneg %p264
        %p387 = pneg %p261
        %s388 = sand.u32 %s251, 1
        %s389 = scalar_lea.sflag [#allocation8], %s388
        %s390 = sand.u32 %s251, 1
        %s391 = smul.addr %s390, 256
        %s392 = scalar_lea.vmem [#allocation11], %s391
        %vm394 = vcmask 257024
        %395 = vst.msk [vmem:[#allocation2] sm:$0xf] %vm394, 0
        %396 = vst.msk [vmem:[#allocation2 + $0x4] sm:$0xf] %vm394, 0
        %vm397 = vcmask 253952
        %398 = vst.msk [vmem:[#allocation2 + $0x8] sm:$0x1] %vm397, 0
        %s399 = scalar_lea.vmem [#allocation2], 204
        %400 = vst.msk [vmem:[%s399] sm:$0xf] %vm394, 0
        %401 = vst.msk [vmem:[%s399 + $0x4] sm:$0xf] %vm394, 0
        %402 = vst.msk [vmem:[%s399 + $0x8] sm:$0x1] %vm397, 0
        %s403 = scalar_lea.vmem [#allocation2], 12
        %vm404 = vcmask 253952
        %vm405 = vsmask.f32 256
        %vm406 = vmand %vm404, %vm405
        %v407 = vld [vmem:[%s403] sm:$0x1]
        %v408 = vsel %vm406, 0, %v407
        %409 = vst [vmem:[%s403] sm:$0x1] %v408
        %v410 = vld [vmem:[%s403 + $0xc] sm:$0x1]
        %v411 = vsel %vm406, 0, %v410
        %412 = vst [vmem:[%s403 + $0xc] sm:$0x1] %v411
        %v413 = vld [vmem:[%s403 + $0x18] sm:$0x1]
        %v414 = vsel %vm406, 0, %v413
        %415 = vst [vmem:[%s403 + $0x18] sm:$0x1] %v414
        %v416 = vld [vmem:[%s403 + $0x24] sm:$0x1]
        %v417 = vsel %vm406, 0, %v416
        %418 = vst [vmem:[%s403 + $0x24] sm:$0x1] %v417
        %v419 = vld [vmem:[%s403 + $0x30] sm:$0x1]
        %v420 = vsel %vm406, 0, %v419
        %421 = vst [vmem:[%s403 + $0x30] sm:$0x1] %v420
        %v422 = vld [vmem:[%s403 + $0x3c] sm:$0x1]
        %v423 = vsel %vm406, 0, %v422
        %424 = vst [vmem:[%s403 + $0x3c] sm:$0x1] %v423
        %v425 = vld [vmem:[%s403 + $0x48] sm:$0x1]
        %v426 = vsel %vm406, 0, %v425
        %427 = vst [vmem:[%s403 + $0x48] sm:$0x1] %v426
        %v428 = vld [vmem:[%s403 + $0x54] sm:$0x1]
        %v429 = vsel %vm406, 0, %v428
        %430 = vst [vmem:[%s403 + $0x54] sm:$0x1] %v429
        %v431 = vld [vmem:[%s403 + $0x60] sm:$0x1]
        %v432 = vsel %vm406, 0, %v431
        %433 = vst [vmem:[%s403 + $0x60] sm:$0x1] %v432
        %v434 = vld [vmem:[%s403 + $0x6c] sm:$0x1]
        %v435 = vsel %vm406, 0, %v434
        %436 = vst [vmem:[%s403 + $0x6c] sm:$0x1] %v435
        %v437 = vld [vmem:[%s403 + $0x78] sm:$0x1]
        %v438 = vsel %vm406, 0, %v437
        %439 = vst [vmem:[%s403 + $0x78] sm:$0x1] %v438
        %v440 = vld [vmem:[%s403 + $0x84] sm:$0x1]
        %v441 = vsel %vm406, 0, %v440
        %442 = vst [vmem:[%s403 + $0x84] sm:$0x1] %v441
        %v443 = vld [vmem:[%s403 + $0x90] sm:$0x1]
        %v444 = vsel %vm406, 0, %v443
        %445 = vst [vmem:[%s403 + $0x90] sm:$0x1] %v444
        %v446 = vld [vmem:[%s403 + $0x9c] sm:$0x1]
        %v447 = vsel %vm406, 0, %v446
        %448 = vst [vmem:[%s403 + $0x9c] sm:$0x1] %v447
        %v449 = vld [vmem:[%s403 + $0xa8] sm:$0x1]
        %v450 = vsel %vm406, 0, %v449
        %451 = vst [vmem:[%s403 + $0xa8] sm:$0x1] %v450
        %v452 = vld [vmem:[%s403 + $0xb4] sm:$0x1]
        %v453 = vsel %vm406, 0, %v452
        %454 = vst [vmem:[%s403 + $0xb4] sm:$0x1] %v453
        %vm455 = vsmask.f32 7938
        %vm456 = vmand %vm404, %vm455
        %v457 = vld [vmem:[%s403 + $0x8] sm:$0x1]
        %v458 = vsel %vm456, 0, %v457
        %459 = vst [vmem:[%s403 + $0x8] sm:$0x1] %v458
        %v460 = vld [vmem:[%s403 + $0x14] sm:$0x1]
        %v461 = vsel %vm456, 0, %v460
        %462 = vst [vmem:[%s403 + $0x14] sm:$0x1] %v461
        %v463 = vld [vmem:[%s403 + $0x20] sm:$0x1]
        %v464 = vsel %vm456, 0, %v463
        %465 = vst [vmem:[%s403 + $0x20] sm:$0x1] %v464
        %v466 = vld [vmem:[%s403 + $0x2c] sm:$0x1]
        %v467 = vsel %vm456, 0, %v466
        %468 = vst [vmem:[%s403 + $0x2c] sm:$0x1] %v467
        %v469 = vld [vmem:[%s403 + $0x38] sm:$0x1]
        %v470 = vsel %vm456, 0, %v469
        %471 = vst [vmem:[%s403 + $0x38] sm:$0x1] %v470
        %v472 = vld [vmem:[%s403 + $0x44] sm:$0x1]
        %v473 = vsel %vm456, 0, %v472
        %474 = vst [vmem:[%s403 + $0x44] sm:$0x1] %v473
        %v475 = vld [vmem:[%s403 + $0x50] sm:$0x1]
        %v476 = vsel %vm456, 0, %v475
        %477 = vst [vmem:[%s403 + $0x50] sm:$0x1] %v476
        %v478 = vld [vmem:[%s403 + $0x5c] sm:$0x1]
        %v479 = vsel %vm456, 0, %v478
        %480 = vst [vmem:[%s403 + $0x5c] sm:$0x1] %v479
        %v481 = vld [vmem:[%s403 + $0x68] sm:$0x1]
        %v482 = vsel %vm456, 0, %v481
        %483 = vst [vmem:[%s403 + $0x68] sm:$0x1] %v482
        %v484 = vld [vmem:[%s403 + $0x74] sm:$0x1]
        %v485 = vsel %vm456, 0, %v484
        %486 = vst [vmem:[%s403 + $0x74] sm:$0x1] %v485
        %v487 = vld [vmem:[%s403 + $0x80] sm:$0x1]
        %v488 = vsel %vm456, 0, %v487
        %489 = vst [vmem:[%s403 + $0x80] sm:$0x1] %v488
        %v490 = vld [vmem:[%s403 + $0x8c] sm:$0x1]
        %v491 = vsel %vm456, 0, %v490
        %492 = vst [vmem:[%s403 + $0x8c] sm:$0x1] %v491
        %v493 = vld [vmem:[%s403 + $0x98] sm:$0x1]
        %v494 = vsel %vm456, 0, %v493
        %495 = vst [vmem:[%s403 + $0x98] sm:$0x1] %v494
        %v496 = vld [vmem:[%s403 + $0xa4] sm:$0x1]
        %v497 = vsel %vm456, 0, %v496
        %498 = vst [vmem:[%s403 + $0xa4] sm:$0x1] %v497
        %v499 = vld [vmem:[%s403 + $0xb0] sm:$0x1]
        %v500 = vsel %vm456, 0, %v499
        %501 = vst [vmem:[%s403 + $0xb0] sm:$0x1] %v500
        %v502 = vld [vmem:[%s403 + $0xbc] sm:$0x1]
        %v503 = vsel %vm456, 0, %v502
        %504 = vst [vmem:[%s403 + $0xbc] sm:$0x1] %v503
        %v505 = vld [vmem:[%s352] sm:$0xf]
        %v506 = vld [vmem:[%s352 + $0x4] sm:$0xf]
        %v507 = vld [vmem:[%s352 + $0x8] sm:$0xf]
        %v508 = vld [vmem:[%s352 + $0xc] sm:$0xf]
        %v509 = vld [vmem:[%s352 + $0x10] sm:$0xf]
        %v510 = vld [vmem:[%s352 + $0x14] sm:$0xf]
        %v511 = vld [vmem:[%s352 + $0x18] sm:$0xf]
        %v512 = vld [vmem:[%s352 + $0x1c] sm:$0xf]
        %v513 = vld [vmem:[%s352 + $0x20] sm:$0xf]
        %v514 = vld [vmem:[%s352 + $0x24] sm:$0xf]
        %v515 = vld [vmem:[%s352 + $0x28] sm:$0xf]
        %v516 = vld [vmem:[%s352 + $0x2c] sm:$0xf]
        %v517 = vld [vmem:[%s352 + $0x30] sm:$0xf]
        %v518 = vld [vmem:[%s352 + $0x34] sm:$0xf]
        %v519 = vld [vmem:[%s352 + $0x38] sm:$0xf]
        %v520 = vld [vmem:[%s352 + $0x3c] sm:$0xf]
        %v521 = vld [vmem:[%s352 + $0x40] sm:$0xf]
        %v522 = vld [vmem:[%s352 + $0x44] sm:$0xf]
        %v523 = vld [vmem:[%s352 + $0x48] sm:$0xf]
        %v524 = vld [vmem:[%s352 + $0x4c] sm:$0xf]
        %v525 = vld [vmem:[%s352 + $0x50] sm:$0xf]
        %v526 = vld [vmem:[%s352 + $0x54] sm:$0xf]
        %v527 = vld [vmem:[%s352 + $0x58] sm:$0xf]
        %v528 = vld [vmem:[%s352 + $0x5c] sm:$0xf]
        %v529 = vld [vmem:[%s352 + $0x60] sm:$0xf]
        %v530 = vld [vmem:[%s352 + $0x64] sm:$0xf]
        %v531 = vld [vmem:[%s352 + $0x68] sm:$0xf]
        %v532 = vld [vmem:[%s352 + $0x6c] sm:$0xf]
        %v533 = vld [vmem:[%s352 + $0x70] sm:$0xf]
        %v534 = vld [vmem:[%s352 + $0x74] sm:$0xf]
        %v535 = vld [vmem:[%s352 + $0x78] sm:$0xf]
        %v536 = vld [vmem:[%s352 + $0x7c] sm:$0xf]
        %vm537 = vsmask.f32 4368
        %vm538 = vmor %vm405, %vm537
        %v540 = vshrl.u32 %v505, 16
        %v542 = vrot.slane %v540, 7
        %v543 = vshll.u32 %v505, 16
        %v545 = vor.u32 %v542, %v543
        %v546 = vrot.slane %v542, 4
        %v548 = vshrl.u32 %v506, 16
        %v550 = vrot.slane %v548, 7
        %v551 = vshll.u32 %v506, 16
        %v553 = vor.u32 %v550, %v551
        %v554 = vsel %vm538, %v546, %v553
        %v555 = vrot.slane %v550, 4
        %v557 = vshrl.u32 %v507, 16
        %v559 = vrot.slane %v557, 7
        %v560 = vshll.u32 %v507, 16
        %v562 = vor.u32 %v559, %v560
        %v563 = vrot.slane %v559, 4
        %v565 = vshrl.u32 %v508, 16
        %v567 = vrot.slane %v565, 7
        %v568 = vshll.u32 %v508, 16
        %v570 = vor.u32 %v567, %v568
        %v571 = vsel %vm538, %v563, %v570
        %v572 = vrot.slane %v567, 4
        %v574 = vshrl.u32 %v509, 16
        %v576 = vrot.slane %v574, 7
        %v577 = vshll.u32 %v509, 16
        %v579 = vor.u32 %v576, %v577
        %v580 = vrot.slane %v576, 4
        %v582 = vshrl.u32 %v510, 16
        %v584 = vrot.slane %v582, 7
        %v585 = vshll.u32 %v510, 16
        %v587 = vor.u32 %v584, %v585
        %v588 = vsel %vm538, %v580, %v587
        %v589 = vrot.slane %v584, 4
        %v591 = vshrl.u32 %v511, 16
        %v593 = vrot.slane %v591, 7
        %v594 = vshll.u32 %v511, 16
        %v596 = vor.u32 %v593, %v594
        %v597 = vrot.slane %v593, 4
        %v599 = vshrl.u32 %v512, 16
        %v601 = vrot.slane %v599, 7
        %v602 = vshll.u32 %v512, 16
        %v604 = vor.u32 %v601, %v602
        %v605 = vsel %vm538, %v597, %v604
        %v606 = vrot.slane %v601, 4
        %v608 = vshrl.u32 %v513, 16
        %v610 = vrot.slane %v608, 7
        %v611 = vshll.u32 %v513, 16
        %v613 = vor.u32 %v610, %v611
        %v614 = vrot.slane %v610, 4
        %v616 = vshrl.u32 %v514, 16
        %v618 = vrot.slane %v616, 7
        %v619 = vshll.u32 %v514, 16
        %v621 = vor.u32 %v618, %v619
        %v622 = vsel %vm538, %v614, %v621
        %v623 = vrot.slane %v618, 4
        %v625 = vshrl.u32 %v515, 16
        %v627 = vrot.slane %v625, 7
        %v628 = vshll.u32 %v515, 16
        %v630 = vor.u32 %v627, %v628
        %v631 = vrot.slane %v627, 4
        %v633 = vshrl.u32 %v516, 16
        %v635 = vrot.slane %v633, 7
        %v636 = vshll.u32 %v516, 16
        %v638 = vor.u32 %v635, %v636
        %v639 = vsel %vm538, %v631, %v638
        %v640 = vrot.slane %v635, 4
        %v642 = vshrl.u32 %v517, 16
        %v644 = vrot.slane %v642, 7
        %v645 = vshll.u32 %v517, 16
        %v647 = vor.u32 %v644, %v645
        %v648 = vrot.slane %v644, 4
        %v650 = vshrl.u32 %v518, 16
        %v652 = vrot.slane %v650, 7
        %v653 = vshll.u32 %v518, 16
        %v655 = vor.u32 %v652, %v653
        %v656 = vsel %vm538, %v648, %v655
        %v657 = vrot.slane %v652, 4
        %v659 = vshrl.u32 %v519, 16
        %v661 = vrot.slane %v659, 7
        %v662 = vshll.u32 %v519, 16
        %v664 = vor.u32 %v661, %v662
        %v665 = vrot.slane %v661, 4
        %v667 = vshrl.u32 %v520, 16
        %v669 = vrot.slane %v667, 7
        %v670 = vshll.u32 %v520, 16
        %v672 = vor.u32 %v669, %v670
        %v673 = vsel %vm538, %v665, %v672
        %v674 = vrot.slane %v669, 4
        %v676 = vshrl.u32 %v521, 16
        %v678 = vrot.slane %v676, 7
        %v679 = vshll.u32 %v521, 16
        %v681 = vor.u32 %v678, %v679
        %v682 = vrot.slane %v678, 4
        %v684 = vshrl.u32 %v522, 16
        %v686 = vrot.slane %v684, 7
        %v687 = vshll.u32 %v522, 16
        %v689 = vor.u32 %v686, %v687
        %v690 = vsel %vm538, %v682, %v689
        %v691 = vrot.slane %v686, 4
        %v693 = vshrl.u32 %v523, 16
        %v695 = vrot.slane %v693, 7
        %v696 = vshll.u32 %v523, 16
        %v698 = vor.u32 %v695, %v696
        %v699 = vrot.slane %v695, 4
        %v701 = vshrl.u32 %v524, 16
        %v703 = vrot.slane %v701, 7
        %v704 = vshll.u32 %v524, 16
        %v706 = vor.u32 %v703, %v704
        %v707 = vsel %vm538, %v699, %v706
        %v708 = vrot.slane %v703, 4
        %v710 = vshrl.u32 %v525, 16
        %v712 = vrot.slane %v710, 7
        %v713 = vshll.u32 %v525, 16
        %v715 = vor.u32 %v712, %v713
        %v716 = vrot.slane %v712, 4
        %v718 = vshrl.u32 %v526, 16
        %v720 = vrot.slane %v718, 7
        %v721 = vshll.u32 %v526, 16
        %v723 = vor.u32 %v720, %v721
        %v724 = vsel %vm538, %v716, %v723
        %v725 = vrot.slane %v720, 4
        %v727 = vshrl.u32 %v527, 16
        %v729 = vrot.slane %v727, 7
        %v730 = vshll.u32 %v527, 16
        %v732 = vor.u32 %v729, %v730
        %v733 = vrot.slane %v729, 4
        %v735 = vshrl.u32 %v528, 16
        %v737 = vrot.slane %v735, 7
        %v738 = vshll.u32 %v528, 16
        %v740 = vor.u32 %v737, %v738
        %v741 = vsel %vm538, %v733, %v740
        %v742 = vrot.slane %v737, 4
        %v744 = vshrl.u32 %v529, 16
        %v746 = vrot.slane %v744, 7
        %v747 = vshll.u32 %v529, 16
        %v749 = vor.u32 %v746, %v747
        %v750 = vrot.slane %v746, 4
        %v752 = vshrl.u32 %v530, 16
        %v754 = vrot.slane %v752, 7
        %v755 = vshll.u32 %v530, 16
        %v757 = vor.u32 %v754, %v755
        %v758 = vsel %vm538, %v750, %v757
        %v759 = vrot.slane %v754, 4
        %v761 = vshrl.u32 %v531, 16
        %v763 = vrot.slane %v761, 7
        %v764 = vshll.u32 %v531, 16
        %v766 = vor.u32 %v763, %v764
        %v767 = vrot.slane %v763, 4
        %v769 = vshrl.u32 %v532, 16
        %v771 = vrot.slane %v769, 7
        %v772 = vshll.u32 %v532, 16
        %v774 = vor.u32 %v771, %v772
        %v775 = vsel %vm538, %v767, %v774
        %v776 = vrot.slane %v771, 4
        %v778 = vshrl.u32 %v533, 16
        %v780 = vrot.slane %v778, 7
        %v781 = vshll.u32 %v533, 16
        %v783 = vor.u32 %v780, %v781
        %v784 = vrot.slane %v780, 4
        %v786 = vshrl.u32 %v534, 16
        %v788 = vrot.slane %v786, 7
        %v789 = vshll.u32 %v534, 16
        %v791 = vor.u32 %v788, %v789
        %v792 = vsel %vm538, %v784, %v791
        %v793 = vrot.slane %v788, 4
        %v795 = vshrl.u32 %v535, 16
        %v797 = vrot.slane %v795, 7
        %v798 = vshll.u32 %v535, 16
        %v800 = vor.u32 %v797, %v798
        %v801 = vrot.slane %v797, 4
        %v803 = vshrl.u32 %v536, 16
        %v805 = vrot.slane %v803, 7
        %v806 = vshll.u32 %v536, 16
        %v808 = vor.u32 %v805, %v806
        %v809 = vsel %vm538, %v801, %v808
        %v810 = vrot.slane %v805, 4
        %vm859 = vcmask 257024
        %vm860 = vmand %vm859, %vm455
        %v861 = vld [vmem:[%s403] sm:$0xf]
        %v862 = vsel %vm860, %v545, %v861
        %863 = vst [vmem:[%s403] sm:$0xf] %v862
        %864 = vst.msk [vmem:[%s403 + $0x4] sm:$0xf] %vm394, %v554
        %v865 = vld [vmem:[%s403 + $0x8] sm:$0x1]
        %v866 = vsel %vm406, %v555, %v865
        %867 = vst [vmem:[%s403 + $0x8] sm:$0x1] %v866
        %v868 = vld [vmem:[%s403 + $0xc] sm:$0xf]
        %v869 = vsel %vm860, %v562, %v868
        %870 = vst [vmem:[%s403 + $0xc] sm:$0xf] %v869
        %871 = vst.msk [vmem:[%s403 + $0x10] sm:$0xf] %vm394, %v571
        %v872 = vld [vmem:[%s403 + $0x14] sm:$0x1]
        %v873 = vsel %vm406, %v572, %v872
        %874 = vst [vmem:[%s403 + $0x14] sm:$0x1] %v873
        %v875 = vld [vmem:[%s403 + $0x18] sm:$0xf]
        %v876 = vsel %vm860, %v579, %v875
        %877 = vst [vmem:[%s403 + $0x18] sm:$0xf] %v876
        %878 = vst.msk [vmem:[%s403 + $0x1c] sm:$0xf] %vm394, %v588
        %v879 = vld [vmem:[%s403 + $0x20] sm:$0x1]
        %v880 = vsel %vm406, %v589, %v879
        %881 = vst [vmem:[%s403 + $0x20] sm:$0x1] %v880
        %v882 = vld [vmem:[%s403 + $0x24] sm:$0xf]
        %v883 = vsel %vm860, %v596, %v882
        %884 = vst [vmem:[%s403 + $0x24] sm:$0xf] %v883
        %885 = vst.msk [vmem:[%s403 + $0x28] sm:$0xf] %vm394, %v605
        %v886 = vld [vmem:[%s403 + $0x2c] sm:$0x1]
        %v887 = vsel %vm406, %v606, %v886
        %888 = vst [vmem:[%s403 + $0x2c] sm:$0x1] %v887
        %v889 = vld [vmem:[%s403 + $0x30] sm:$0xf]
        %v890 = vsel %vm860, %v613, %v889
        %891 = vst [vmem:[%s403 + $0x30] sm:$0xf] %v890
        %892 = vst.msk [vmem:[%s403 + $0x34] sm:$0xf] %vm394, %v622
        %v893 = vld [vmem:[%s403 + $0x38] sm:$0x1]
        %v894 = vsel %vm406, %v623, %v893
        %895 = vst [vmem:[%s403 + $0x38] sm:$0x1] %v894
        %v896 = vld [vmem:[%s403 + $0x3c] sm:$0xf]
        %v897 = vsel %vm860, %v630, %v896
        %898 = vst [vmem:[%s403 + $0x3c] sm:$0xf] %v897
        %899 = vst.msk [vmem:[%s403 + $0x40] sm:$0xf] %vm394, %v639
        %v900 = vld [vmem:[%s403 + $0x44] sm:$0x1]
        %v901 = vsel %vm406, %v640, %v900
        %902 = vst [vmem:[%s403 + $0x44] sm:$0x1] %v901
        %v903 = vld [vmem:[%s403 + $0x48] sm:$0xf]
        %v904 = vsel %vm860, %v647, %v903
        %905 = vst [vmem:[%s403 + $0x48] sm:$0xf] %v904
        %906 = vst.msk [vmem:[%s403 + $0x4c] sm:$0xf] %vm394, %v656
        %v907 = vld [vmem:[%s403 + $0x50] sm:$0x1]
        %v908 = vsel %vm406, %v657, %v907
        %909 = vst [vmem:[%s403 + $0x50] sm:$0x1] %v908
        %v910 = vld [vmem:[%s403 + $0x54] sm:$0xf]
        %v911 = vsel %vm860, %v664, %v910
        %912 = vst [vmem:[%s403 + $0x54] sm:$0xf] %v911
        %913 = vst.msk [vmem:[%s403 + $0x58] sm:$0xf] %vm394, %v673
        %v914 = vld [vmem:[%s403 + $0x5c] sm:$0x1]
        %v915 = vsel %vm406, %v674, %v914
        %916 = vst [vmem:[%s403 + $0x5c] sm:$0x1] %v915
        %v917 = vld [vmem:[%s403 + $0x60] sm:$0xf]
        %v918 = vsel %vm860, %v681, %v917
        %919 = vst [vmem:[%s403 + $0x60] sm:$0xf] %v918
        %920 = vst.msk [vmem:[%s403 + $0x64] sm:$0xf] %vm394, %v690
        %v921 = vld [vmem:[%s403 + $0x68] sm:$0x1]
        %v922 = vsel %vm406, %v691, %v921
        %923 = vst [vmem:[%s403 + $0x68] sm:$0x1] %v922
        %v924 = vld [vmem:[%s403 + $0x6c] sm:$0xf]
        %v925 = vsel %vm860, %v698, %v924
        %926 = vst [vmem:[%s403 + $0x6c] sm:$0xf] %v925
        %927 = vst.msk [vmem:[%s403 + $0x70] sm:$0xf] %vm394, %v707
        %v928 = vld [vmem:[%s403 + $0x74] sm:$0x1]
        %v929 = vsel %vm406, %v708, %v928
        %930 = vst [vmem:[%s403 + $0x74] sm:$0x1] %v929
        %v931 = vld [vmem:[%s403 + $0x78] sm:$0xf]
        %v932 = vsel %vm860, %v715, %v931
        %933 = vst [vmem:[%s403 + $0x78] sm:$0xf] %v932
        %934 = vst.msk [vmem:[%s403 + $0x7c] sm:$0xf] %vm394, %v724
        %v935 = vld [vmem:[%s403 + $0x80] sm:$0x1]
        %v936 = vsel %vm406, %v725, %v935
        %937 = vst [vmem:[%s403 + $0x80] sm:$0x1] %v936
        %v938 = vld [vmem:[%s403 + $0x84] sm:$0xf]
        %v939 = vsel %vm860, %v732, %v938
        %940 = vst [vmem:[%s403 + $0x84] sm:$0xf] %v939
        %941 = vst.msk [vmem:[%s403 + $0x88] sm:$0xf] %vm394, %v741
        %v942 = vld [vmem:[%s403 + $0x8c] sm:$0x1]
        %v943 = vsel %vm406, %v742, %v942
        %944 = vst [vmem:[%s403 + $0x8c] sm:$0x1] %v943
        %v945 = vld [vmem:[%s403 + $0x90] sm:$0xf]
        %v946 = vsel %vm860, %v749, %v945
        %947 = vst [vmem:[%s403 + $0x90] sm:$0xf] %v946
        %948 = vst.msk [vmem:[%s403 + $0x94] sm:$0xf] %vm394, %v758
        %v949 = vld [vmem:[%s403 + $0x98] sm:$0x1]
        %v950 = vsel %vm406, %v759, %v949
        %951 = vst [vmem:[%s403 + $0x98] sm:$0x1] %v950
        %v952 = vld [vmem:[%s403 + $0x9c] sm:$0xf]
        %v953 = vsel %vm860, %v766, %v952
        %954 = vst [vmem:[%s403 + $0x9c] sm:$0xf] %v953
        %955 = vst.msk [vmem:[%s403 + $0xa0] sm:$0xf] %vm394, %v775
        %v956 = vld [vmem:[%s403 + $0xa4] sm:$0x1]
        %v957 = vsel %vm406, %v776, %v956
        %958 = vst [vmem:[%s403 + $0xa4] sm:$0x1] %v957
        %v959 = vld [vmem:[%s403 + $0xa8] sm:$0xf]
        %v960 = vsel %vm860, %v783, %v959
        %961 = vst [vmem:[%s403 + $0xa8] sm:$0xf] %v960
        %962 = vst.msk [vmem:[%s403 + $0xac] sm:$0xf] %vm394, %v792
        %v963 = vld [vmem:[%s403 + $0xb0] sm:$0x1]
        %v964 = vsel %vm406, %v793, %v963
        %965 = vst [vmem:[%s403 + $0xb0] sm:$0x1] %v964
        %v966 = vld [vmem:[%s403 + $0xb4] sm:$0xf]
        %v967 = vsel %vm860, %v800, %v966
        %968 = vst [vmem:[%s403 + $0xb4] sm:$0xf] %v967
        %969 = vst.msk [vmem:[%s403 + $0xb8] sm:$0xf] %vm394, %v809
        %v970 = vld [vmem:[%s403 + $0xbc] sm:$0x1]
        %v971 = vsel %vm406, %v810, %v970
        %972 = vst [vmem:[%s403 + $0xbc] sm:$0x1] %v971
        %v973 = vld [vmem:[#allocation2] sm:$0xf]
        %v974 = vld [vmem:[#allocation2 + $0x4] sm:$0xf]
        %v975 = vld [vmem:[#allocation2 + $0xc] sm:$0xf]
        %v976 = vld [vmem:[#allocation2 + $0x10] sm:$0xf]
        %v977 = vld [vmem:[#allocation2 + $0x18] sm:$0xf]
        %v978 = vld [vmem:[#allocation2 + $0x1c] sm:$0xf]
        %v979 = vld [vmem:[#allocation2 + $0x24] sm:$0xf]
        %v980 = vld [vmem:[#allocation2 + $0x28] sm:$0xf]
        %v981 = vld [vmem:[#allocation2 + $0x30] sm:$0xf]
        %v982 = vld [vmem:[#allocation2 + $0x34] sm:$0xf]
        %v983 = vld [vmem:[#allocation2 + $0x3c] sm:$0xf]
        %v984 = vld [vmem:[#allocation2 + $0x40] sm:$0xf]
        %v985 = vld [vmem:[#allocation2 + $0x48] sm:$0xf]
        %v986 = vld [vmem:[#allocation2 + $0x4c] sm:$0xf]
        %v987 = vld [vmem:[#allocation2 + $0x54] sm:$0xf]
        %v988 = vld [vmem:[#allocation2 + $0x58] sm:$0xf]
        %v989 = vld [vmem:[#allocation2 + $0x60] sm:$0xf]
        %v990 = vld [vmem:[#allocation2 + $0x64] sm:$0xf]
        %v991 = vld [vmem:[#allocation2 + $0x6c] sm:$0xf]
        %v992 = vld [vmem:[#allocation2 + $0x70] sm:$0xf]
        %v993 = vld [vmem:[#allocation2 + $0x78] sm:$0xf]
        %v994 = vld [vmem:[#allocation2 + $0x7c] sm:$0xf]
        %v995 = vld [vmem:[#allocation2 + $0x84] sm:$0xf]
        %v996 = vld [vmem:[#allocation2 + $0x88] sm:$0xf]
        %v997 = vld [vmem:[#allocation2 + $0x90] sm:$0xf]
        %v998 = vld [vmem:[#allocation2 + $0x94] sm:$0xf]
        %v999 = vld [vmem:[#allocation2 + $0x9c] sm:$0xf]
        %v1000 = vld [vmem:[#allocation2 + $0xa0] sm:$0xf]
        %v1001 = vld [vmem:[#allocation2 + $0xa8] sm:$0xf]
        %v1002 = vld [vmem:[#allocation2 + $0xac] sm:$0xf]
        %v1003 = vld [vmem:[#allocation2 + $0xb4] sm:$0xf]
        %v1004 = vld [vmem:[#allocation2 + $0xb8] sm:$0xf]
        %1005 = vst.msk [vmem:[#allocation3] sm:$0xf] %vm394, %v973
        %1006 = vst.msk [vmem:[#allocation3 + $0xc] sm:$0xf] %vm394, %v974
        %1007 = vst.msk [vmem:[#allocation3 + $0x18] sm:$0xf] %vm394, %v975
        %1008 = vst.msk [vmem:[#allocation3 + $0x24] sm:$0xf] %vm394, %v976
        %1009 = vst.msk [vmem:[#allocation3 + $0x30] sm:$0xf] %vm394, %v977
        %1010 = vst.msk [vmem:[#allocation3 + $0x3c] sm:$0xf] %vm394, %v978
        %1011 = vst.msk [vmem:[#allocation3 + $0x48] sm:$0xf] %vm394, %v979
        %1012 = vst.msk [vmem:[#allocation3 + $0x54] sm:$0xf] %vm394, %v980
        %1013 = vst.msk [vmem:[#allocation3 + $0x60] sm:$0xf] %vm394, %v981
        %1014 = vst.msk [vmem:[#allocation3 + $0x6c] sm:$0xf] %vm394, %v982
        %1015 = vst.msk [vmem:[#allocation3 + $0x78] sm:$0xf] %vm394, %v983
        %1016 = vst.msk [vmem:[#allocation3 + $0x84] sm:$0xf] %vm394, %v984
        %1017 = vst.msk [vmem:[#allocation3 + $0x90] sm:$0xf] %vm394, %v985
        %1018 = vst.msk [vmem:[#allocation3 + $0x9c] sm:$0xf] %vm394, %v986
        %1019 = vst.msk [vmem:[#allocation3 + $0xa8] sm:$0xf] %vm394, %v987
        %1020 = vst.msk [vmem:[#allocation3 + $0xb4] sm:$0xf] %vm394, %v988
        %1021 = vst.msk [vmem:[#allocation3 + $0xc0] sm:$0xf] %vm394, %v989
        %1022 = vst.msk [vmem:[#allocation3 + $0xcc] sm:$0xf] %vm394, %v990
        %1023 = vst.msk [vmem:[#allocation3 + $0xd8] sm:$0xf] %vm394, %v991
        %1024 = vst.msk [vmem:[#allocation3 + $0xe4] sm:$0xf] %vm394, %v992
        %1025 = vst.msk [vmem:[#allocation3 + $0xf0] sm:$0xf] %vm394, %v993
        %1026 = vst.msk [vmem:[#allocation3 + $0xfc] sm:$0xf] %vm394, %v994
        %1027 = vst.msk [vmem:[#allocation3 + $0x108] sm:$0xf] %vm394, %v995
        %1028 = vst.msk [vmem:[#allocation3 + $0x114] sm:$0xf] %vm394, %v996
        %1029 = vst.msk [vmem:[#allocation3 + $0x120] sm:$0xf] %vm394, %v997
        %1030 = vst.msk [vmem:[#allocation3 + $0x12c] sm:$0xf] %vm394, %v998
        %1031 = vst.msk [vmem:[#allocation3 + $0x138] sm:$0xf] %vm394, %v999
        %1032 = vst.msk [vmem:[#allocation3 + $0x144] sm:$0xf] %vm394, %v1000
        %1033 = vst.msk [vmem:[#allocation3 + $0x150] sm:$0xf] %vm394, %v1001
        %1034 = vst.msk [vmem:[#allocation3 + $0x15c] sm:$0xf] %vm394, %v1002
        %1035 = vst.msk [vmem:[#allocation3 + $0x168] sm:$0xf] %vm394, %v1003
        %1036 = vst.msk [vmem:[#allocation3 + $0x174] sm:$0xf] %vm394, %v1004
        %v1037 = vld [vmem:[#allocation2] sm:$0xf]
        %v1038 = vld [vmem:[#allocation2 + $0x4] sm:$0xf]
        %v1039 = vld [vmem:[#allocation2 + $0x8] sm:$0x1]
        %v1040 = vld [vmem:[#allocation2 + $0xc] sm:$0xf]
        %v1041 = vld [vmem:[#allocation2 + $0x10] sm:$0xf]
        %v1042 = vld [vmem:[#allocation2 + $0x14] sm:$0x1]
        %v1043 = vld [vmem:[#allocation2 + $0x18] sm:$0xf]
        %v1044 = vld [vmem:[#allocation2 + $0x1c] sm:$0xf]
        %v1045 = vld [vmem:[#allocation2 + $0x20] sm:$0x1]
        %v1046 = vld [vmem:[#allocation2 + $0x24] sm:$0xf]
        %v1047 = vld [vmem:[#allocation2 + $0x28] sm:$0xf]
        %v1048 = vld [vmem:[#allocation2 + $0x2c] sm:$0x1]
        %v1049 = vld [vmem:[#allocation2 + $0x30] sm:$0xf]
        %v1050 = vld [vmem:[#allocation2 + $0x34] sm:$0xf]
        %v1051 = vld [vmem:[#allocation2 + $0x38] sm:$0x1]
        %v1052 = vld [vmem:[#allocation2 + $0x3c] sm:$0xf]
        %v1053 = vld [vmem:[#allocation2 + $0x40] sm:$0xf]
        %v1054 = vld [vmem:[#allocation2 + $0x44] sm:$0x1]
        %v1055 = vld [vmem:[#allocation2 + $0x48] sm:$0xf]
        %v1056 = vld [vmem:[#allocation2 + $0x4c] sm:$0xf]
        %v1057 = vld [vmem:[#allocation2 + $0x50] sm:$0x1]
        %v1058 = vld [vmem:[#allocation2 + $0x54] sm:$0xf]
        %v1059 = vld [vmem:[#allocation2 + $0x58] sm:$0xf]
        %v1060 = vld [vmem:[#allocation2 + $0x5c] sm:$0x1]
        %v1061 = vld [vmem:[#allocation2 + $0x60] sm:$0xf]
        %v1062 = vld [vmem:[#allocation2 + $0x64] sm:$0xf]
        %v1063 = vld [vmem:[#allocation2 + $0x68] sm:$0x1]
        %v1064 = vld [vmem:[#allocation2 + $0x6c] sm:$0xf]
        %v1065 = vld [vmem:[#allocation2 + $0x70] sm:$0xf]
        %v1066 = vld [vmem:[#allocation2 + $0x74] sm:$0x1]
        %v1067 = vld [vmem:[#allocation2 + $0x78] sm:$0xf]
        %v1068 = vld [vmem:[#allocation2 + $0x7c] sm:$0xf]
        %v1069 = vld [vmem:[#allocation2 + $0x80] sm:$0x1]
        %v1070 = vld [vmem:[#allocation2 + $0x84] sm:$0xf]
        %v1071 = vld [vmem:[#allocation2 + $0x88] sm:$0xf]
        %v1072 = vld [vmem:[#allocation2 + $0x8c] sm:$0x1]
        %v1073 = vld [vmem:[#allocation2 + $0x90] sm:$0xf]
        %v1074 = vld [vmem:[#allocation2 + $0x94] sm:$0xf]
        %v1075 = vld [vmem:[#allocation2 + $0x98] sm:$0x1]
        %v1076 = vld [vmem:[#allocation2 + $0x9c] sm:$0xf]
        %v1077 = vld [vmem:[#allocation2 + $0xa0] sm:$0xf]
        %v1078 = vld [vmem:[#allocation2 + $0xa4] sm:$0x1]
        %v1079 = vld [vmem:[#allocation2 + $0xa8] sm:$0xf]
        %v1080 = vld [vmem:[#allocation2 + $0xac] sm:$0xf]
        %v1081 = vld [vmem:[#allocation2 + $0xb0] sm:$0x1]
        %v1082 = vld [vmem:[#allocation2 + $0xb4] sm:$0xf]
        %v1083 = vld [vmem:[#allocation2 + $0xb8] sm:$0xf]
        %v1084 = vld [vmem:[#allocation2 + $0xbc] sm:$0x1]
        %vm1085 = vsmask.f32 3328
        %vm1086 = vsmask.f32 7440
        %vm1087 = vmor %vm1085, %vm1086
        %v1089 = vshrl.u32 %v1037, 16
        %v1091 = vrot.slane %v1089, 4
        %v1092 = vshll.u32 %v1037, 16
        %v1094 = vrot.slane %v1092, 5
        %v1095 = vor.u32 %v1091, %v1094
        %v1096 = vrot.slane %v1095, 4
        %v1098 = vshll.u32 %v1038, 16
        %v1100 = vrot.slane %v1098, 5
        %v1101 = vsel %vm1087, %v1096, %v1100
        %v1102 = vshrl.u32 %v1038, 16
        %v1104 = vrot.slane %v1102, 4
        %v1105 = vor.u32 %v1104, %v1100
        %v1106 = vrot.slane %v1105, 4
        %v1108 = vshll.u32 %v1039, 16
        %v1110 = vrot.slane %v1108, 5
        %v1111 = vsel %vm1087, %v1106, %v1110
        %v1113 = vshrl.u32 %v1040, 16
        %v1115 = vrot.slane %v1113, 4
        %v1116 = vshll.u32 %v1040, 16
        %v1118 = vrot.slane %v1116, 5
        %v1119 = vor.u32 %v1115, %v1118
        %v1120 = vrot.slane %v1119, 4
        %v1122 = vshll.u32 %v1041, 16
        %v1124 = vrot.slane %v1122, 5
        %v1125 = vsel %vm1087, %v1120, %v1124
        %v1126 = vshrl.u32 %v1041, 16
        %v1128 = vrot.slane %v1126, 4
        %v1129 = vor.u32 %v1128, %v1124
        %v1130 = vrot.slane %v1129, 4
        %v1132 = vshll.u32 %v1042, 16
        %v1134 = vrot.slane %v1132, 5
        %v1135 = vsel %vm1087, %v1130, %v1134
        %v1137 = vshrl.u32 %v1043, 16
        %v1139 = vrot.slane %v1137, 4
        %v1140 = vshll.u32 %v1043, 16
        %v1142 = vrot.slane %v1140, 5
        %v1143 = vor.u32 %v1139, %v1142
        %v1144 = vrot.slane %v1143, 4
        %v1146 = vshll.u32 %v1044, 16
        %v1148 = vrot.slane %v1146, 5
        %v1149 = vsel %vm1087, %v1144, %v1148
        %v1150 = vshrl.u32 %v1044, 16
        %v1152 = vrot.slane %v1150, 4
        %v1153 = vor.u32 %v1152, %v1148
        %v1154 = vrot.slane %v1153, 4
        %v1156 = vshll.u32 %v1045, 16
        %v1158 = vrot.slane %v1156, 5
        %v1159 = vsel %vm1087, %v1154, %v1158
        %v1161 = vshrl.u32 %v1046, 16
        %v1163 = vrot.slane %v1161, 4
        %v1164 = vshll.u32 %v1046, 16
        %v1166 = vrot.slane %v1164, 5
        %v1167 = vor.u32 %v1163, %v1166
        %v1168 = vrot.slane %v1167, 4
        %v1170 = vshll.u32 %v1047, 16
        %v1172 = vrot.slane %v1170, 5
        %v1173 = vsel %vm1087, %v1168, %v1172
        %v1174 = vshrl.u32 %v1047, 16
        %v1176 = vrot.slane %v1174, 4
        %v1177 = vor.u32 %v1176, %v1172
        %v1178 = vrot.slane %v1177, 4
        %v1180 = vshll.u32 %v1048, 16
        %v1182 = vrot.slane %v1180, 5
        %v1183 = vsel %vm1087, %v1178, %v1182
        %v1185 = vshrl.u32 %v1049, 16
        %v1187 = vrot.slane %v1185, 4
        %v1188 = vshll.u32 %v1049, 16
        %v1190 = vrot.slane %v1188, 5
        %v1191 = vor.u32 %v1187, %v1190
        %v1192 = vrot.slane %v1191, 4
        %v1194 = vshll.u32 %v1050, 16
        %v1196 = vrot.slane %v1194, 5
        %v1197 = vsel %vm1087, %v1192, %v1196
        %v1198 = vshrl.u32 %v1050, 16
        %v1200 = vrot.slane %v1198, 4
        %v1201 = vor.u32 %v1200, %v1196
        %v1202 = vrot.slane %v1201, 4
        %v1204 = vshll.u32 %v1051, 16
        %v1206 = vrot.slane %v1204, 5
        %v1207 = vsel %vm1087, %v1202, %v1206
        %v1209 = vshrl.u32 %v1052, 16
        %v1211 = vrot.slane %v1209, 4
        %v1212 = vshll.u32 %v1052, 16
        %v1214 = vrot.slane %v1212, 5
        %v1215 = vor.u32 %v1211, %v1214
        %v1216 = vrot.slane %v1215, 4
        %v1218 = vshll.u32 %v1053, 16
        %v1220 = vrot.slane %v1218, 5
        %v1221 = vsel %vm1087, %v1216, %v1220
        %v1222 = vshrl.u32 %v1053, 16
        %v1224 = vrot.slane %v1222, 4
        %v1225 = vor.u32 %v1224, %v1220
        %v1226 = vrot.slane %v1225, 4
        %v1228 = vshll.u32 %v1054, 16
        %v1230 = vrot.slane %v1228, 5
        %v1231 = vsel %vm1087, %v1226, %v1230
        %v1233 = vshrl.u32 %v1055, 16
        %v1235 = vrot.slane %v1233, 4
        %v1236 = vshll.u32 %v1055, 16
        %v1238 = vrot.slane %v1236, 5
        %v1239 = vor.u32 %v1235, %v1238
        %v1240 = vrot.slane %v1239, 4
        %v1242 = vshll.u32 %v1056, 16
        %v1244 = vrot.slane %v1242, 5
        %v1245 = vsel %vm1087, %v1240, %v1244
        %v1246 = vshrl.u32 %v1056, 16
        %v1248 = vrot.slane %v1246, 4
        %v1249 = vor.u32 %v1248, %v1244
        %v1250 = vrot.slane %v1249, 4
        %v1252 = vshll.u32 %v1057, 16
        %v1254 = vrot.slane %v1252, 5
        %v1255 = vsel %vm1087, %v1250, %v1254
        %v1257 = vshrl.u32 %v1058, 16
        %v1259 = vrot.slane %v1257, 4
        %v1260 = vshll.u32 %v1058, 16
        %v1262 = vrot.slane %v1260, 5
        %v1263 = vor.u32 %v1259, %v1262
        %v1264 = vrot.slane %v1263, 4
        %v1266 = vshll.u32 %v1059, 16
        %v1268 = vrot.slane %v1266, 5
        %v1269 = vsel %vm1087, %v1264, %v1268
        %v1270 = vshrl.u32 %v1059, 16
        %v1272 = vrot.slane %v1270, 4
        %v1273 = vor.u32 %v1272, %v1268
        %v1274 = vrot.slane %v1273, 4
        %v1276 = vshll.u32 %v1060, 16
        %v1278 = vrot.slane %v1276, 5
        %v1279 = vsel %vm1087, %v1274, %v1278
        %v1281 = vshrl.u32 %v1061, 16
        %v1283 = vrot.slane %v1281, 4
        %v1284 = vshll.u32 %v1061, 16
        %v1286 = vrot.slane %v1284, 5
        %v1287 = vor.u32 %v1283, %v1286
        %v1288 = vrot.slane %v1287, 4
        %v1290 = vshll.u32 %v1062, 16
        %v1292 = vrot.slane %v1290, 5
        %v1293 = vsel %vm1087, %v1288, %v1292
        %v1294 = vshrl.u32 %v1062, 16
        %v1296 = vrot.slane %v1294, 4
        %v1297 = vor.u32 %v1296, %v1292
        %v1298 = vrot.slane %v1297, 4
        %v1300 = vshll.u32 %v1063, 16
        %v1302 = vrot.slane %v1300, 5
        %v1303 = vsel %vm1087, %v1298, %v1302
        %v1305 = vshrl.u32 %v1064, 16
        %v1307 = vrot.slane %v1305, 4
        %v1308 = vshll.u32 %v1064, 16
        %v1310 = vrot.slane %v1308, 5
        %v1311 = vor.u32 %v1307, %v1310
        %v1312 = vrot.slane %v1311, 4
        %v1314 = vshll.u32 %v1065, 16
        %v1316 = vrot.slane %v1314, 5
        %v1317 = vsel %vm1087, %v1312, %v1316
        %v1318 = vshrl.u32 %v1065, 16
        %v1320 = vrot.slane %v1318, 4
        %v1321 = vor.u32 %v1320, %v1316
        %v1322 = vrot.slane %v1321, 4
        %v1324 = vshll.u32 %v1066, 16
        %v1326 = vrot.slane %v1324, 5
        %v1327 = vsel %vm1087, %v1322, %v1326
        %v1329 = vshrl.u32 %v1067, 16
        %v1331 = vrot.slane %v1329, 4
        %v1332 = vshll.u32 %v1067, 16
        %v1334 = vrot.slane %v1332, 5
        %v1335 = vor.u32 %v1331, %v1334
        %v1336 = vrot.slane %v1335, 4
        %v1338 = vshll.u32 %v1068, 16
        %v1340 = vrot.slane %v1338, 5
        %v1341 = vsel %vm1087, %v1336, %v1340
        %v1342 = vshrl.u32 %v1068, 16
        %v1344 = vrot.slane %v1342, 4
        %v1345 = vor.u32 %v1344, %v1340
        %v1346 = vrot.slane %v1345, 4
        %v1348 = vshll.u32 %v1069, 16
        %v1350 = vrot.slane %v1348, 5
        %v1351 = vsel %vm1087, %v1346, %v1350
        %v1353 = vshrl.u32 %v1070, 16
        %v1355 = vrot.slane %v1353, 4
        %v1356 = vshll.u32 %v1070, 16
        %v1358 = vrot.slane %v1356, 5
        %v1359 = vor.u32 %v1355, %v1358
        %v1360 = vrot.slane %v1359, 4
        %v1362 = vshll.u32 %v1071, 16
        %v1364 = vrot.slane %v1362, 5
        %v1365 = vsel %vm1087, %v1360, %v1364
        %v1366 = vshrl.u32 %v1071, 16
        %v1368 = vrot.slane %v1366, 4
        %v1369 = vor.u32 %v1368, %v1364
        %v1370 = vrot.slane %v1369, 4
        %v1372 = vshll.u32 %v1072, 16
        %v1374 = vrot.slane %v1372, 5
        %v1375 = vsel %vm1087, %v1370, %v1374
        %v1377 = vshrl.u32 %v1073, 16
        %v1379 = vrot.slane %v1377, 4
        %v1380 = vshll.u32 %v1073, 16
        %v1382 = vrot.slane %v1380, 5
        %v1383 = vor.u32 %v1379, %v1382
        %v1384 = vrot.slane %v1383, 4
        %v1386 = vshll.u32 %v1074, 16
        %v1388 = vrot.slane %v1386, 5
        %v1389 = vsel %vm1087, %v1384, %v1388
        %v1390 = vshrl.u32 %v1074, 16
        %v1392 = vrot.slane %v1390, 4
        %v1393 = vor.u32 %v1392, %v1388
        %v1394 = vrot.slane %v1393, 4
        %v1396 = vshll.u32 %v1075, 16
        %v1398 = vrot.slane %v1396, 5
        %v1399 = vsel %vm1087, %v1394, %v1398
        %v1401 = vshrl.u32 %v1076, 16
        %v1403 = vrot.slane %v1401, 4
        %v1404 = vshll.u32 %v1076, 16
        %v1406 = vrot.slane %v1404, 5
        %v1407 = vor.u32 %v1403, %v1406
        %v1408 = vrot.slane %v1407, 4
        %v1410 = vshll.u32 %v1077, 16
        %v1412 = vrot.slane %v1410, 5
        %v1413 = vsel %vm1087, %v1408, %v1412
        %v1414 = vshrl.u32 %v1077, 16
        %v1416 = vrot.slane %v1414, 4
        %v1417 = vor.u32 %v1416, %v1412
        %v1418 = vrot.slane %v1417, 4
        %v1420 = vshll.u32 %v1078, 16
        %v1422 = vrot.slane %v1420, 5
        %v1423 = vsel %vm1087, %v1418, %v1422
        %v1425 = vshrl.u32 %v1079, 16
        %v1427 = vrot.slane %v1425, 4
        %v1428 = vshll.u32 %v1079, 16
        %v1430 = vrot.slane %v1428, 5
        %v1431 = vor.u32 %v1427, %v1430
        %v1432 = vrot.slane %v1431, 4
        %v1434 = vshll.u32 %v1080, 16
        %v1436 = vrot.slane %v1434, 5
        %v1437 = vsel %vm1087, %v1432, %v1436
        %v1438 = vshrl.u32 %v1080, 16
        %v1440 = vrot.slane %v1438, 4
        %v1441 = vor.u32 %v1440, %v1436
        %v1442 = vrot.slane %v1441, 4
        %v1444 = vshll.u32 %v1081, 16
        %v1446 = vrot.slane %v1444, 5
        %v1447 = vsel %vm1087, %v1442, %v1446
        %v1449 = vshrl.u32 %v1082, 16
        %v1451 = vrot.slane %v1449, 4
        %v1452 = vshll.u32 %v1082, 16
        %v1454 = vrot.slane %v1452, 5
        %v1455 = vor.u32 %v1451, %v1454
        %v1456 = vrot.slane %v1455, 4
        %v1458 = vshll.u32 %v1083, 16
        %v1460 = vrot.slane %v1458, 5
        %v1461 = vsel %vm1087, %v1456, %v1460
        %v1462 = vshrl.u32 %v1083, 16
        %v1464 = vrot.slane %v1462, 4
        %v1465 = vor.u32 %v1464, %v1460
        %v1466 = vrot.slane %v1465, 4
        %v1468 = vshll.u32 %v1084, 16
        %v1470 = vrot.slane %v1468, 5
        %v1471 = vsel %vm1087, %v1466, %v1470
        %1472 = vrot.lane.b32.xlu0 %v1101, 32
        %v1473 = vpop.permute.xlu0 %1472
        %1474 = vrot.lane.b32.xlu0 %v1111, 32
        %v1475 = vpop.permute.xlu0 %1474
        %1476 = vrot.lane.b32.xlu0 %v1125, 32
        %v1477 = vpop.permute.xlu0 %1476
        %1478 = vrot.lane.b32.xlu0 %v1135, 32
        %v1479 = vpop.permute.xlu0 %1478
        %1480 = vrot.lane.b32.xlu0 %v1149, 32
        %v1481 = vpop.permute.xlu0 %1480
        %1482 = vrot.lane.b32.xlu0 %v1159, 32
        %v1483 = vpop.permute.xlu0 %1482
        %1484 = vrot.lane.b32.xlu0 %v1173, 32
        %v1485 = vpop.permute.xlu0 %1484
        %1486 = vrot.lane.b32.xlu0 %v1183, 32
        %v1487 = vpop.permute.xlu0 %1486
        %1488 = vrot.lane.b32.xlu0 %v1197, 32
        %v1489 = vpop.permute.xlu0 %1488
        %1490 = vrot.lane.b32.xlu0 %v1207, 32
        %v1491 = vpop.permute.xlu0 %1490
        %1492 = vrot.lane.b32.xlu0 %v1221, 32
        %v1493 = vpop.permute.xlu0 %1492
        %1494 = vrot.lane.b32.xlu0 %v1231, 32
        %v1495 = vpop.permute.xlu0 %1494
        %1496 = vrot.lane.b32.xlu0 %v1245, 32
        %v1497 = vpop.permute.xlu0 %1496
        %1498 = vrot.lane.b32.xlu0 %v1255, 32
        %v1499 = vpop.permute.xlu0 %1498
        %1500 = vrot.lane.b32.xlu0 %v1269, 32
        %v1501 = vpop.permute.xlu0 %1500
        %1502 = vrot.lane.b32.xlu0 %v1279, 32
        %v1503 = vpop.permute.xlu0 %1502
        %1504 = vrot.lane.b32.xlu0 %v1293, 32
        %v1505 = vpop.permute.xlu0 %1504
        %1506 = vrot.lane.b32.xlu0 %v1303, 32
        %v1507 = vpop.permute.xlu0 %1506
        %1508 = vrot.lane.b32.xlu0 %v1317, 32
        %v1509 = vpop.permute.xlu0 %1508
        %1510 = vrot.lane.b32.xlu0 %v1327, 32
        %v1511 = vpop.permute.xlu0 %1510
        %1512 = vrot.lane.b32.xlu0 %v1341, 32
        %v1513 = vpop.permute.xlu0 %1512
        %1514 = vrot.lane.b32.xlu0 %v1351, 32
        %v1515 = vpop.permute.xlu0 %1514
        %1516 = vrot.lane.b32.xlu0 %v1365, 32
        %v1517 = vpop.permute.xlu0 %1516
        %1518 = vrot.lane.b32.xlu0 %v1375, 32
        %v1519 = vpop.permute.xlu0 %1518
        %1520 = vrot.lane.b32.xlu0 %v1389, 32
        %v1521 = vpop.permute.xlu0 %1520
        %1522 = vrot.lane.b32.xlu0 %v1399, 32
        %v1523 = vpop.permute.xlu0 %1522
        %1524 = vrot.lane.b32.xlu0 %v1413, 32
        %v1525 = vpop.permute.xlu0 %1524
        %1526 = vrot.lane.b32.xlu0 %v1423, 32
        %v1527 = vpop.permute.xlu0 %1526
        %1528 = vrot.lane.b32.xlu0 %v1437, 32
        %v1529 = vpop.permute.xlu0 %1528
        %1530 = vrot.lane.b32.xlu0 %v1447, 32
        %v1531 = vpop.permute.xlu0 %1530
        %1532 = vrot.lane.b32.xlu0 %v1461, 32
        %v1533 = vpop.permute.xlu0 %1532
        %1534 = vrot.lane.b32.xlu0 %v1471, 32
        %v1535 = vpop.permute.xlu0 %1534
        %vm1568 = vcmask 519424
        %1569 = vst.msk [vmem:[#allocation3] sm:$0xf] %vm1568, %v1473
        %1570 = vst.msk [vmem:[#allocation3 + $0xc] sm:$0xf] %vm1568, %v1475
        %1571 = vst.msk [vmem:[#allocation3 + $0x18] sm:$0xf] %vm1568, %v1477
        %1572 = vst.msk [vmem:[#allocation3 + $0x24] sm:$0xf] %vm1568, %v1479
        %1573 = vst.msk [vmem:[#allocation3 + $0x30] sm:$0xf] %vm1568, %v1481
        %1574 = vst.msk [vmem:[#allocation3 + $0x3c] sm:$0xf] %vm1568, %v1483
        %1575 = vst.msk [vmem:[#allocation3 + $0x48] sm:$0xf] %vm1568, %v1485
        %1576 = vst.msk [vmem:[#allocation3 + $0x54] sm:$0xf] %vm1568, %v1487
        %1577 = vst.msk [vmem:[#allocation3 + $0x60] sm:$0xf] %vm1568, %v1489
        %1578 = vst.msk [vmem:[#allocation3 + $0x6c] sm:$0xf] %vm1568, %v1491
        %1579 = vst.msk [vmem:[#allocation3 + $0x78] sm:$0xf] %vm1568, %v1493
        %1580 = vst.msk [vmem:[#allocation3 + $0x84] sm:$0xf] %vm1568, %v1495
        %1581 = vst.msk [vmem:[#allocation3 + $0x90] sm:$0xf] %vm1568, %v1497
        %1582 = vst.msk [vmem:[#allocation3 + $0x9c] sm:$0xf] %vm1568, %v1499
        %1583 = vst.msk [vmem:[#allocation3 + $0xa8] sm:$0xf] %vm1568, %v1501
        %1584 = vst.msk [vmem:[#allocation3 + $0xb4] sm:$0xf] %vm1568, %v1503
        %1585 = vst.msk [vmem:[#allocation3 + $0xc0] sm:$0xf] %vm1568, %v1505
        %1586 = vst.msk [vmem:[#allocation3 + $0xcc] sm:$0xf] %vm1568, %v1507
        %1587 = vst.msk [vmem:[#allocation3 + $0xd8] sm:$0xf] %vm1568, %v1509
        %1588 = vst.msk [vmem:[#allocation3 + $0xe4] sm:$0xf] %vm1568, %v1511
        %1589 = vst.msk [vmem:[#allocation3 + $0xf0] sm:$0xf] %vm1568, %v1513
        %1590 = vst.msk [vmem:[#allocation3 + $0xfc] sm:$0xf] %vm1568, %v1515
        %1591 = vst.msk [vmem:[#allocation3 + $0x108] sm:$0xf] %vm1568, %v1517
        %1592 = vst.msk [vmem:[#allocation3 + $0x114] sm:$0xf] %vm1568, %v1519
        %1593 = vst.msk [vmem:[#allocation3 + $0x120] sm:$0xf] %vm1568, %v1521
        %1594 = vst.msk [vmem:[#allocation3 + $0x12c] sm:$0xf] %vm1568, %v1523
        %1595 = vst.msk [vmem:[#allocation3 + $0x138] sm:$0xf] %vm1568, %v1525
        %1596 = vst.msk [vmem:[#allocation3 + $0x144] sm:$0xf] %vm1568, %v1527
        %1597 = vst.msk [vmem:[#allocation3 + $0x150] sm:$0xf] %vm1568, %v1529
        %1598 = vst.msk [vmem:[#allocation3 + $0x15c] sm:$0xf] %vm1568, %v1531
        %1599 = vst.msk [vmem:[#allocation3 + $0x168] sm:$0xf] %vm1568, %v1533
        %1600 = vst.msk [vmem:[#allocation3 + $0x174] sm:$0xf] %vm1568, %v1535
        %v1601 = vld [vmem:[#allocation2] sm:$0xe]
        %v1602 = vld [vmem:[#allocation2 + $0x4] sm:$0xf]
        %v1603 = vld [vmem:[#allocation2 + $0x8] sm:$0x1]
        %v1604 = vld [vmem:[#allocation2 + $0xc] sm:$0xe]
        %v1605 = vld [vmem:[#allocation2 + $0x10] sm:$0xf]
        %v1606 = vld [vmem:[#allocation2 + $0x14] sm:$0x1]
        %v1607 = vld [vmem:[#allocation2 + $0x18] sm:$0xe]
        %v1608 = vld [vmem:[#allocation2 + $0x1c] sm:$0xf]
        %v1609 = vld [vmem:[#allocation2 + $0x20] sm:$0x1]
        %v1610 = vld [vmem:[#allocation2 + $0x24] sm:$0xe]
        %v1611 = vld [vmem:[#allocation2 + $0x28] sm:$0xf]
        %v1612 = vld [vmem:[#allocation2 + $0x2c] sm:$0x1]
        %v1613 = vld [vmem:[#allocation2 + $0x30] sm:$0xe]
        %v1614 = vld [vmem:[#allocation2 + $0x34] sm:$0xf]
        %v1615 = vld [vmem:[#allocation2 + $0x38] sm:$0x1]
        %v1616 = vld [vmem:[#allocation2 + $0x3c] sm:$0xe]
        %v1617 = vld [vmem:[#allocation2 + $0x40] sm:$0xf]
        %v1618 = vld [vmem:[#allocation2 + $0x44] sm:$0x1]
        %v1619 = vld [vmem:[#allocation2 + $0x48] sm:$0xe]
        %v1620 = vld [vmem:[#allocation2 + $0x4c] sm:$0xf]
        %v1621 = vld [vmem:[#allocation2 + $0x50] sm:$0x1]
        %v1622 = vld [vmem:[#allocation2 + $0x54] sm:$0xe]
        %v1623 = vld [vmem:[#allocation2 + $0x58] sm:$0xf]
        %v1624 = vld [vmem:[#allocation2 + $0x5c] sm:$0x1]
        %v1625 = vld [vmem:[#allocation2 + $0x60] sm:$0xe]
        %v1626 = vld [vmem:[#allocation2 + $0x64] sm:$0xf]
        %v1627 = vld [vmem:[#allocation2 + $0x68] sm:$0x1]
        %v1628 = vld [vmem:[#allocation2 + $0x6c] sm:$0xe]
        %v1629 = vld [vmem:[#allocation2 + $0x70] sm:$0xf]
        %v1630 = vld [vmem:[#allocation2 + $0x74] sm:$0x1]
        %v1631 = vld [vmem:[#allocation2 + $0x78] sm:$0xe]
        %v1632 = vld [vmem:[#allocation2 + $0x7c] sm:$0xf]
        %v1633 = vld [vmem:[#allocation2 + $0x80] sm:$0x1]
        %v1634 = vld [vmem:[#allocation2 + $0x84] sm:$0xe]
        %v1635 = vld [vmem:[#allocation2 + $0x88] sm:$0xf]
        %v1636 = vld [vmem:[#allocation2 + $0x8c] sm:$0x1]
        %v1637 = vld [vmem:[#allocation2 + $0x90] sm:$0xe]
        %v1638 = vld [vmem:[#allocation2 + $0x94] sm:$0xf]
        %v1639 = vld [vmem:[#allocation2 + $0x98] sm:$0x1]
        %v1640 = vld [vmem:[#allocation2 + $0x9c] sm:$0xe]
        %v1641 = vld [vmem:[#allocation2 + $0xa0] sm:$0xf]
        %v1642 = vld [vmem:[#allocation2 + $0xa4] sm:$0x1]
        %v1643 = vld [vmem:[#allocation2 + $0xa8] sm:$0xe]
        %v1644 = vld [vmem:[#allocation2 + $0xac] sm:$0xf]
        %v1645 = vld [vmem:[#allocation2 + $0xb0] sm:$0x1]
        %v1646 = vld [vmem:[#allocation2 + $0xb4] sm:$0xe]
        %v1647 = vld [vmem:[#allocation2 + $0xb8] sm:$0xf]
        %v1648 = vld [vmem:[#allocation2 + $0xbc] sm:$0x1]
        %vm1697 = vcmask 1042432
        %vm1698 = vcmask 1046532
        %vm1699 = vmor %vm1697, %vm1698
        %v1700 = vrot.slane %v1601, 5
        %v1701 = vrot.slane %v1700, 4
        %v1702 = vrot.slane %v1602, 5
        %v1703 = vsel %vm1699, %v1701, %v1702
        %v1704 = vrot.slane %v1702, 4
        %v1705 = vrot.slane %v1603, 5
        %v1706 = vsel %vm1699, %v1704, %v1705
        %v1707 = vrot.slane %v1604, 5
        %v1708 = vrot.slane %v1707, 4
        %v1709 = vrot.slane %v1605, 5
        %v1710 = vsel %vm1699, %v1708, %v1709
        %v1711 = vrot.slane %v1709, 4
        %v1712 = vrot.slane %v1606, 5
        %v1713 = vsel %vm1699, %v1711, %v1712
        %v1714 = vrot.slane %v1607, 5
        %v1715 = vrot.slane %v1714, 4
        %v1716 = vrot.slane %v1608, 5
        %v1717 = vsel %vm1699, %v1715, %v1716
        %v1718 = vrot.slane %v1716, 4
        %v1719 = vrot.slane %v1609, 5
        %v1720 = vsel %vm1699, %v1718, %v1719
        %v1721 = vrot.slane %v1610, 5
        %v1722 = vrot.slane %v1721, 4
        %v1723 = vrot.slane %v1611, 5
        %v1724 = vsel %vm1699, %v1722, %v1723
        %v1725 = vrot.slane %v1723, 4
        %v1726 = vrot.slane %v1612, 5
        %v1727 = vsel %vm1699, %v1725, %v1726
        %v1728 = vrot.slane %v1613, 5
        %v1729 = vrot.slane %v1728, 4
        %v1730 = vrot.slane %v1614, 5
        %v1731 = vsel %vm1699, %v1729, %v1730
        %v1732 = vrot.slane %v1730, 4
        %v1733 = vrot.slane %v1615, 5
        %v1734 = vsel %vm1699, %v1732, %v1733
        %v1735 = vrot.slane %v1616, 5
        %v1736 = vrot.slane %v1735, 4
        %v1737 = vrot.slane %v1617, 5
        %v1738 = vsel %vm1699, %v1736, %v1737
        %v1739 = vrot.slane %v1737, 4
        %v1740 = vrot.slane %v1618, 5
        %v1741 = vsel %vm1699, %v1739, %v1740
        %v1742 = vrot.slane %v1619, 5
        %v1743 = vrot.slane %v1742, 4
        %v1744 = vrot.slane %v1620, 5
        %v1745 = vsel %vm1699, %v1743, %v1744
        %v1746 = vrot.slane %v1744, 4
        %v1747 = vrot.slane %v1621, 5
        %v1748 = vsel %vm1699, %v1746, %v1747
        %v1749 = vrot.slane %v1622, 5
        %v1750 = vrot.slane %v1749, 4
        %v1751 = vrot.slane %v1623, 5
        %v1752 = vsel %vm1699, %v1750, %v1751
        %v1753 = vrot.slane %v1751, 4
        %v1754 = vrot.slane %v1624, 5
        %v1755 = vsel %vm1699, %v1753, %v1754
        %v1756 = vrot.slane %v1625, 5
        %v1757 = vrot.slane %v1756, 4
        %v1758 = vrot.slane %v1626, 5
        %v1759 = vsel %vm1699, %v1757, %v1758
        %v1760 = vrot.slane %v1758, 4
        %v1761 = vrot.slane %v1627, 5
        %v1762 = vsel %vm1699, %v1760, %v1761
        %v1763 = vrot.slane %v1628, 5
        %v1764 = vrot.slane %v1763, 4
        %v1765 = vrot.slane %v1629, 5
        %v1766 = vsel %vm1699, %v1764, %v1765
        %v1767 = vrot.slane %v1765, 4
        %v1768 = vrot.slane %v1630, 5
        %v1769 = vsel %vm1699, %v1767, %v1768
        %v1770 = vrot.slane %v1631, 5
        %v1771 = vrot.slane %v1770, 4
        %v1772 = vrot.slane %v1632, 5
        %v1773 = vsel %vm1699, %v1771, %v1772
        %v1774 = vrot.slane %v1772, 4
        %v1775 = vrot.slane %v1633, 5
        %v1776 = vsel %vm1699, %v1774, %v1775
        %v1777 = vrot.slane %v1634, 5
        %v1778 = vrot.slane %v1777, 4
        %v1779 = vrot.slane %v1635, 5
        %v1780 = vsel %vm1699, %v1778, %v1779
        %v1781 = vrot.slane %v1779, 4
        %v1782 = vrot.slane %v1636, 5
        %v1783 = vsel %vm1699, %v1781, %v1782
        %v1784 = vrot.slane %v1637, 5
        %v1785 = vrot.slane %v1784, 4
        %v1786 = vrot.slane %v1638, 5
        %v1787 = vsel %vm1699, %v1785, %v1786
        %v1788 = vrot.slane %v1786, 4
        %v1789 = vrot.slane %v1639, 5
        %v1790 = vsel %vm1699, %v1788, %v1789
        %v1791 = vrot.slane %v1640, 5
        %v1792 = vrot.slane %v1791, 4
        %v1793 = vrot.slane %v1641, 5
        %v1794 = vsel %vm1699, %v1792, %v1793
        %v1795 = vrot.slane %v1793, 4
        %v1796 = vrot.slane %v1642, 5
        %v1797 = vsel %vm1699, %v1795, %v1796
        %v1798 = vrot.slane %v1643, 5
        %v1799 = vrot.slane %v1798, 4
        %v1800 = vrot.slane %v1644, 5
        %v1801 = vsel %vm1699, %v1799, %v1800
        %v1802 = vrot.slane %v1800, 4
        %v1803 = vrot.slane %v1645, 5
        %v1804 = vsel %vm1699, %v1802, %v1803
        %v1805 = vrot.slane %v1646, 5
        %v1806 = vrot.slane %v1805, 4
        %v1807 = vrot.slane %v1647, 5
        %v1808 = vsel %vm1699, %v1806, %v1807
        %v1809 = vrot.slane %v1807, 4
        %v1810 = vrot.slane %v1648, 5
        %v1811 = vsel %vm1699, %v1809, %v1810
        %1812 = vrot.lane.b32.xlu0 %v1703, 64
        %v1813 = vpop.permute.xlu0 %1812
        %1814 = vrot.lane.b32.xlu0 %v1706, 64
        %v1815 = vpop.permute.xlu0 %1814
        %1816 = vrot.lane.b32.xlu0 %v1710, 64
        %v1817 = vpop.permute.xlu0 %1816
        %1818 = vrot.lane.b32.xlu0 %v1713, 64
        %v1819 = vpop.permute.xlu0 %1818
        %1820 = vrot.lane.b32.xlu0 %v1717, 64
        %v1821 = vpop.permute.xlu0 %1820
        %1822 = vrot.lane.b32.xlu0 %v1720, 64
        %v1823 = vpop.permute.xlu0 %1822
        %1824 = vrot.lane.b32.xlu0 %v1724, 64
        %v1825 = vpop.permute.xlu0 %1824
        %1826 = vrot.lane.b32.xlu0 %v1727, 64
        %v1827 = vpop.permute.xlu0 %1826
        %1828 = vrot.lane.b32.xlu0 %v1731, 64
        %v1829 = vpop.permute.xlu0 %1828
        %1830 = vrot.lane.b32.xlu0 %v1734, 64
        %v1831 = vpop.permute.xlu0 %1830
        %1832 = vrot.lane.b32.xlu0 %v1738, 64
        %v1833 = vpop.permute.xlu0 %1832
        %1834 = vrot.lane.b32.xlu0 %v1741, 64
        %v1835 = vpop.permute.xlu0 %1834
        %1836 = vrot.lane.b32.xlu0 %v1745, 64
        %v1837 = vpop.permute.xlu0 %1836
        %1838 = vrot.lane.b32.xlu0 %v1748, 64
        %v1839 = vpop.permute.xlu0 %1838
        %1840 = vrot.lane.b32.xlu0 %v1752, 64
        %v1841 = vpop.permute.xlu0 %1840
        %1842 = vrot.lane.b32.xlu0 %v1755, 64
        %v1843 = vpop.permute.xlu0 %1842
        %1844 = vrot.lane.b32.xlu0 %v1759, 64
        %v1845 = vpop.permute.xlu0 %1844
        %1846 = vrot.lane.b32.xlu0 %v1762, 64
        %v1847 = vpop.permute.xlu0 %1846
        %1848 = vrot.lane.b32.xlu0 %v1766, 64
        %v1849 = vpop.permute.xlu0 %1848
        %1850 = vrot.lane.b32.xlu0 %v1769, 64
        %v1851 = vpop.permute.xlu0 %1850
        %1852 = vrot.lane.b32.xlu0 %v1773, 64
        %v1853 = vpop.permute.xlu0 %1852
        %1854 = vrot.lane.b32.xlu0 %v1776, 64
        %v1855 = vpop.permute.xlu0 %1854
        %1856 = vrot.lane.b32.xlu0 %v1780, 64
        %v1857 = vpop.permute.xlu0 %1856
        %1858 = vrot.lane.b32.xlu0 %v1783, 64
        %v1859 = vpop.permute.xlu0 %1858
        %1860 = vrot.lane.b32.xlu0 %v1787, 64
        %v1861 = vpop.permute.xlu0 %1860
        %1862 = vrot.lane.b32.xlu0 %v1790, 64
        %v1863 = vpop.permute.xlu0 %1862
        %1864 = vrot.lane.b32.xlu0 %v1794, 64
        %v1865 = vpop.permute.xlu0 %1864
        %1866 = vrot.lane.b32.xlu0 %v1797, 64
        %v1867 = vpop.permute.xlu0 %1866
        %1868 = vrot.lane.b32.xlu0 %v1801, 64
        %v1869 = vpop.permute.xlu0 %1868
        %1870 = vrot.lane.b32.xlu0 %v1804, 64
        %v1871 = vpop.permute.xlu0 %1870
        %1872 = vrot.lane.b32.xlu0 %v1808, 64
        %v1873 = vpop.permute.xlu0 %1872
        %1874 = vrot.lane.b32.xlu0 %v1811, 64
        %v1875 = vpop.permute.xlu0 %1874
        %vm1908 = vcmask 781824
        %1909 = vst.msk [vmem:[#allocation3] sm:$0xf] %vm1908, %v1813
        %1910 = vst.msk [vmem:[#allocation3 + $0xc] sm:$0xf] %vm1908, %v1815
        %1911 = vst.msk [vmem:[#allocation3 + $0x18] sm:$0xf] %vm1908, %v1817
        %1912 = vst.msk [vmem:[#allocation3 + $0x24] sm:$0xf] %vm1908, %v1819
        %1913 = vst.msk [vmem:[#allocation3 + $0x30] sm:$0xf] %vm1908, %v1821
        %1914 = vst.msk [vmem:[#allocation3 + $0x3c] sm:$0xf] %vm1908, %v1823
        %1915 = vst.msk [vmem:[#allocation3 + $0x48] sm:$0xf] %vm1908, %v1825
        %1916 = vst.msk [vmem:[#allocation3 + $0x54] sm:$0xf] %vm1908, %v1827
        %1917 = vst.msk [vmem:[#allocation3 + $0x60] sm:$0xf] %vm1908, %v1829
        %1918 = vst.msk [vmem:[#allocation3 + $0x6c] sm:$0xf] %vm1908, %v1831
        %1919 = vst.msk [vmem:[#allocation3 + $0x78] sm:$0xf] %vm1908, %v1833
        %1920 = vst.msk [vmem:[#allocation3 + $0x84] sm:$0xf] %vm1908, %v1835
        %1921 = vst.msk [vmem:[#allocation3 + $0x90] sm:$0xf] %vm1908, %v1837
        %1922 = vst.msk [vmem:[#allocation3 + $0x9c] sm:$0xf] %vm1908, %v1839
        %1923 = vst.msk [vmem:[#allocation3 + $0xa8] sm:$0xf] %vm1908, %v1841
        %1924 = vst.msk [vmem:[#allocation3 + $0xb4] sm:$0xf] %vm1908, %v1843
        %1925 = vst.msk [vmem:[#allocation3 + $0xc0] sm:$0xf] %vm1908, %v1845
        %1926 = vst.msk [vmem:[#allocation3 + $0xcc] sm:$0xf] %vm1908, %v1847
        %1927 = vst.msk [vmem:[#allocation3 + $0xd8] sm:$0xf] %vm1908, %v1849
        %1928 = vst.msk [vmem:[#allocation3 + $0xe4] sm:$0xf] %vm1908, %v1851
        %1929 = vst.msk [vmem:[#allocation3 + $0xf0] sm:$0xf] %vm1908, %v1853
        %1930 = vst.msk [vmem:[#allocation3 + $0xfc] sm:$0xf] %vm1908, %v1855
        %1931 = vst.msk [vmem:[#allocation3 + $0x108] sm:$0xf] %vm1908, %v1857
        %1932 = vst.msk [vmem:[#allocation3 + $0x114] sm:$0xf] %vm1908, %v1859
        %1933 = vst.msk [vmem:[#allocation3 + $0x120] sm:$0xf] %vm1908, %v1861
        %1934 = vst.msk [vmem:[#allocation3 + $0x12c] sm:$0xf] %vm1908, %v1863
        %1935 = vst.msk [vmem:[#allocation3 + $0x138] sm:$0xf] %vm1908, %v1865
        %1936 = vst.msk [vmem:[#allocation3 + $0x144] sm:$0xf] %vm1908, %v1867
        %1937 = vst.msk [vmem:[#allocation3 + $0x150] sm:$0xf] %vm1908, %v1869
        %1938 = vst.msk [vmem:[#allocation3 + $0x15c] sm:$0xf] %vm1908, %v1871
        %1939 = vst.msk [vmem:[#allocation3 + $0x168] sm:$0xf] %vm1908, %v1873
        %1940 = vst.msk [vmem:[#allocation3 + $0x174] sm:$0xf] %vm1908, %v1875
        %v1941 = vld [vmem:[%s403] sm:$0xf]
        %v1942 = vld [vmem:[%s403 + $0x4] sm:$0xf]
        %v1943 = vld [vmem:[%s403 + $0xc] sm:$0xf]
        %v1944 = vld [vmem:[%s403 + $0x10] sm:$0xf]
        %v1945 = vld [vmem:[%s403 + $0x18] sm:$0xf]
        %v1946 = vld [vmem:[%s403 + $0x1c] sm:$0xf]
        %v1947 = vld [vmem:[%s403 + $0x24] sm:$0xf]
        %v1948 = vld [vmem:[%s403 + $0x28] sm:$0xf]
        %v1949 = vld [vmem:[%s403 + $0x30] sm:$0xf]
        %v1950 = vld [vmem:[%s403 + $0x34] sm:$0xf]
        %v1951 = vld [vmem:[%s403 + $0x3c] sm:$0xf]
        %v1952 = vld [vmem:[%s403 + $0x40] sm:$0xf]
        %v1953 = vld [vmem:[%s403 + $0x48] sm:$0xf]
        %v1954 = vld [vmem:[%s403 + $0x4c] sm:$0xf]
        %v1955 = vld [vmem:[%s403 + $0x54] sm:$0xf]
        %v1956 = vld [vmem:[%s403 + $0x58] sm:$0xf]
        %v1957 = vld [vmem:[%s403 + $0x60] sm:$0xf]
        %v1958 = vld [vmem:[%s403 + $0x64] sm:$0xf]
        %v1959 = vld [vmem:[%s403 + $0x6c] sm:$0xf]
        %v1960 = vld [vmem:[%s403 + $0x70] sm:$0xf]
        %v1961 = vld [vmem:[%s403 + $0x78] sm:$0xf]
        %v1962 = vld [vmem:[%s403 + $0x7c] sm:$0xf]
        %v1963 = vld [vmem:[%s403 + $0x84] sm:$0xf]
        %v1964 = vld [vmem:[%s403 + $0x88] sm:$0xf]
        %v1965 = vld [vmem:[%s403 + $0x90] sm:$0xf]
        %v1966 = vld [vmem:[%s403 + $0x94] sm:$0xf]
        %v1967 = vld [vmem:[%s403 + $0x9c] sm:$0xf]
        %v1968 = vld [vmem:[%s403 + $0xa0] sm:$0xf]
        %v1969 = vld [vmem:[%s403 + $0xa8] sm:$0xf]
        %v1970 = vld [vmem:[%s403 + $0xac] sm:$0xf]
        %v1971 = vld [vmem:[%s403 + $0xb4] sm:$0xf]
        %v1972 = vld [vmem:[%s403 + $0xb8] sm:$0xf]
        %2005 = vrot.lane.b32.xlu0 %v1941, 96
        %v2006 = vpop.permute.xlu0 %2005
        %2007 = vrot.lane.b32.xlu0 %v1942, 96
        %v2008 = vpop.permute.xlu0 %2007
        %2009 = vrot.lane.b32.xlu0 %v1943, 96
        %v2010 = vpop.permute.xlu0 %2009
        %2011 = vrot.lane.b32.xlu0 %v1944, 96
        %v2012 = vpop.permute.xlu0 %2011
        %2013 = vrot.lane.b32.xlu0 %v1945, 96
        %v2014 = vpop.permute.xlu0 %2013
        %2015 = vrot.lane.b32.xlu0 %v1946, 96
        %v2016 = vpop.permute.xlu0 %2015
        %2017 = vrot.lane.b32.xlu0 %v1947, 96
        %v2018 = vpop.permute.xlu0 %2017
        %2019 = vrot.lane.b32.xlu0 %v1948, 96
        %v2020 = vpop.permute.xlu0 %2019
        %2021 = vrot.lane.b32.xlu0 %v1949, 96
        %v2022 = vpop.permute.xlu0 %2021
        %2023 = vrot.lane.b32.xlu0 %v1950, 96
        %v2024 = vpop.permute.xlu0 %2023
        %2025 = vrot.lane.b32.xlu0 %v1951, 96
        %v2026 = vpop.permute.xlu0 %2025
        %2027 = vrot.lane.b32.xlu0 %v1952, 96
        %v2028 = vpop.permute.xlu0 %2027
        %2029 = vrot.lane.b32.xlu0 %v1953, 96
        %v2030 = vpop.permute.xlu0 %2029
        %2031 = vrot.lane.b32.xlu0 %v1954, 96
        %v2032 = vpop.permute.xlu0 %2031
        %2033 = vrot.lane.b32.xlu0 %v1955, 96
        %v2034 = vpop.permute.xlu0 %2033
        %2035 = vrot.lane.b32.xlu0 %v1956, 96
        %v2036 = vpop.permute.xlu0 %2035
        %2037 = vrot.lane.b32.xlu0 %v1957, 96
        %v2038 = vpop.permute.xlu0 %2037
        %2039 = vrot.lane.b32.xlu0 %v1958, 96
        %v2040 = vpop.permute.xlu0 %2039
        %2041 = vrot.lane.b32.xlu0 %v1959, 96
        %v2042 = vpop.permute.xlu0 %2041
        %2043 = vrot.lane.b32.xlu0 %v1960, 96
        %v2044 = vpop.permute.xlu0 %2043
        %2045 = vrot.lane.b32.xlu0 %v1961, 96
        %v2046 = vpop.permute.xlu0 %2045
        %2047 = vrot.lane.b32.xlu0 %v1962, 96
        %v2048 = vpop.permute.xlu0 %2047
        %2049 = vrot.lane.b32.xlu0 %v1963, 96
        %v2050 = vpop.permute.xlu0 %2049
        %2051 = vrot.lane.b32.xlu0 %v1964, 96
        %v2052 = vpop.permute.xlu0 %2051
        %2053 = vrot.lane.b32.xlu0 %v1965, 96
        %v2054 = vpop.permute.xlu0 %2053
        %2055 = vrot.lane.b32.xlu0 %v1966, 96
        %v2056 = vpop.permute.xlu0 %2055
        %2057 = vrot.lane.b32.xlu0 %v1967, 96
        %v2058 = vpop.permute.xlu0 %2057
        %2059 = vrot.lane.b32.xlu0 %v1968, 96
        %v2060 = vpop.permute.xlu0 %2059
        %2061 = vrot.lane.b32.xlu0 %v1969, 96
        %v2062 = vpop.permute.xlu0 %2061
        %2063 = vrot.lane.b32.xlu0 %v1970, 96
        %v2064 = vpop.permute.xlu0 %2063
        %2065 = vrot.lane.b32.xlu0 %v1971, 96
        %v2066 = vpop.permute.xlu0 %2065
        %2067 = vrot.lane.b32.xlu0 %v1972, 96
        %v2068 = vpop.permute.xlu0 %2067
        %vm2101 = vcmask 1044224
        %2102 = vst.msk [vmem:[#allocation3] sm:$0xf] %vm2101, %v2006
        %2103 = vst.msk [vmem:[#allocation3 + $0xc] sm:$0xf] %vm2101, %v2008
        %2104 = vst.msk [vmem:[#allocation3 + $0x18] sm:$0xf] %vm2101, %v2010
        %2105 = vst.msk [vmem:[#allocation3 + $0x24] sm:$0xf] %vm2101, %v2012
        %2106 = vst.msk [vmem:[#allocation3 + $0x30] sm:$0xf] %vm2101, %v2014
        %2107 = vst.msk [vmem:[#allocation3 + $0x3c] sm:$0xf] %vm2101, %v2016
        %2108 = vst.msk [vmem:[#allocation3 + $0x48] sm:$0xf] %vm2101, %v2018
        %2109 = vst.msk [vmem:[#allocation3 + $0x54] sm:$0xf] %vm2101, %v2020
        %2110 = vst.msk [vmem:[#allocation3 + $0x60] sm:$0xf] %vm2101, %v2022
        %2111 = vst.msk [vmem:[#allocation3 + $0x6c] sm:$0xf] %vm2101, %v2024
        %2112 = vst.msk [vmem:[#allocation3 + $0x78] sm:$0xf] %vm2101, %v2026
        %2113 = vst.msk [vmem:[#allocation3 + $0x84] sm:$0xf] %vm2101, %v2028
        %2114 = vst.msk [vmem:[#allocation3 + $0x90] sm:$0xf] %vm2101, %v2030
        %2115 = vst.msk [vmem:[#allocation3 + $0x9c] sm:$0xf] %vm2101, %v2032
        %2116 = vst.msk [vmem:[#allocation3 + $0xa8] sm:$0xf] %vm2101, %v2034
        %2117 = vst.msk [vmem:[#allocation3 + $0xb4] sm:$0xf] %vm2101, %v2036
        %2118 = vst.msk [vmem:[#allocation3 + $0xc0] sm:$0xf] %vm2101, %v2038
        %2119 = vst.msk [vmem:[#allocation3 + $0xcc] sm:$0xf] %vm2101, %v2040
        %2120 = vst.msk [vmem:[#allocation3 + $0xd8] sm:$0xf] %vm2101, %v2042
        %2121 = vst.msk [vmem:[#allocation3 + $0xe4] sm:$0xf] %vm2101, %v2044
        %2122 = vst.msk [vmem:[#allocation3 + $0xf0] sm:$0xf] %vm2101, %v2046
        %2123 = vst.msk [vmem:[#allocation3 + $0xfc] sm:$0xf] %vm2101, %v2048
        %2124 = vst.msk [vmem:[#allocation3 + $0x108] sm:$0xf] %vm2101, %v2050
        %2125 = vst.msk [vmem:[#allocation3 + $0x114] sm:$0xf] %vm2101, %v2052
        %2126 = vst.msk [vmem:[#allocation3 + $0x120] sm:$0xf] %vm2101, %v2054
        %2127 = vst.msk [vmem:[#allocation3 + $0x12c] sm:$0xf] %vm2101, %v2056
        %2128 = vst.msk [vmem:[#allocation3 + $0x138] sm:$0xf] %vm2101, %v2058
        %2129 = vst.msk [vmem:[#allocation3 + $0x144] sm:$0xf] %vm2101, %v2060
        %2130 = vst.msk [vmem:[#allocation3 + $0x150] sm:$0xf] %vm2101, %v2062
        %2131 = vst.msk [vmem:[#allocation3 + $0x15c] sm:$0xf] %vm2101, %v2064
        %2132 = vst.msk [vmem:[#allocation3 + $0x168] sm:$0xf] %vm2101, %v2066
        %2133 = vst.msk [vmem:[#allocation3 + $0x174] sm:$0xf] %vm2101, %v2068
        %v2134 = vld [vmem:[%s403] sm:$0xf]
        %v2135 = vld [vmem:[%s403 + $0x4] sm:$0xf]
        %v2136 = vld [vmem:[%s403 + $0x8] sm:$0x1]
        %v2137 = vld [vmem:[%s403 + $0xc] sm:$0xf]
        %v2138 = vld [vmem:[%s403 + $0x10] sm:$0xf]
        %v2139 = vld [vmem:[%s403 + $0x14] sm:$0x1]
        %v2140 = vld [vmem:[%s403 + $0x18] sm:$0xf]
        %v2141 = vld [vmem:[%s403 + $0x1c] sm:$0xf]
        %v2142 = vld [vmem:[%s403 + $0x20] sm:$0x1]
        %v2143 = vld [vmem:[%s403 + $0x24] sm:$0xf]
        %v2144 = vld [vmem:[%s403 + $0x28] sm:$0xf]
        %v2145 = vld [vmem:[%s403 + $0x2c] sm:$0x1]
        %v2146 = vld [vmem:[%s403 + $0x30] sm:$0xf]
        %v2147 = vld [vmem:[%s403 + $0x34] sm:$0xf]
        %v2148 = vld [vmem:[%s403 + $0x38] sm:$0x1]
        %v2149 = vld [vmem:[%s403 + $0x3c] sm:$0xf]
        %v2150 = vld [vmem:[%s403 + $0x40] sm:$0xf]
        %v2151 = vld [vmem:[%s403 + $0x44] sm:$0x1]
        %v2152 = vld [vmem:[%s403 + $0x48] sm:$0xf]
        %v2153 = vld [vmem:[%s403 + $0x4c] sm:$0xf]
        %v2154 = vld [vmem:[%s403 + $0x50] sm:$0x1]
        %v2155 = vld [vmem:[%s403 + $0x54] sm:$0xf]
        %v2156 = vld [vmem:[%s403 + $0x58] sm:$0xf]
        %v2157 = vld [vmem:[%s403 + $0x5c] sm:$0x1]
        %v2158 = vld [vmem:[%s403 + $0x60] sm:$0xf]
        %v2159 = vld [vmem:[%s403 + $0x64] sm:$0xf]
        %v2160 = vld [vmem:[%s403 + $0x68] sm:$0x1]
        %v2161 = vld [vmem:[%s403 + $0x6c] sm:$0xf]
        %v2162 = vld [vmem:[%s403 + $0x70] sm:$0xf]
        %v2163 = vld [vmem:[%s403 + $0x74] sm:$0x1]
        %v2164 = vld [vmem:[%s403 + $0x78] sm:$0xf]
        %v2165 = vld [vmem:[%s403 + $0x7c] sm:$0xf]
        %v2166 = vld [vmem:[%s403 + $0x80] sm:$0x1]
        %v2167 = vld [vmem:[%s403 + $0x84] sm:$0xf]
        %v2168 = vld [vmem:[%s403 + $0x88] sm:$0xf]
        %v2169 = vld [vmem:[%s403 + $0x8c] sm:$0x1]
        %v2170 = vld [vmem:[%s403 + $0x90] sm:$0xf]
        %v2171 = vld [vmem:[%s403 + $0x94] sm:$0xf]
        %v2172 = vld [vmem:[%s403 + $0x98] sm:$0x1]
        %v2173 = vld [vmem:[%s403 + $0x9c] sm:$0xf]
        %v2174 = vld [vmem:[%s403 + $0xa0] sm:$0xf]
        %v2175 = vld [vmem:[%s403 + $0xa4] sm:$0x1]
        %v2176 = vld [vmem:[%s403 + $0xa8] sm:$0xf]
        %v2177 = vld [vmem:[%s403 + $0xac] sm:$0xf]
        %v2178 = vld [vmem:[%s403 + $0xb0] sm:$0x1]
        %v2179 = vld [vmem:[%s403 + $0xb4] sm:$0xf]
        %v2180 = vld [vmem:[%s403 + $0xb8] sm:$0xf]
        %v2181 = vld [vmem:[%s403 + $0xbc] sm:$0x1]
        %v2183 = vshrl.u32 %v2134, 16
        %v2185 = vrot.slane %v2183, 4
        %v2186 = vshll.u32 %v2134, 16
        %v2188 = vrot.slane %v2186, 5
        %v2189 = vor.u32 %v2185, %v2188
        %v2190 = vrot.slane %v2189, 4
        %v2192 = vshll.u32 %v2135, 16
        %v2194 = vrot.slane %v2192, 5
        %v2195 = vsel %vm1087, %v2190, %v2194
        %v2196 = vshrl.u32 %v2135, 16
        %v2198 = vrot.slane %v2196, 4
        %v2199 = vor.u32 %v2198, %v2194
        %v2200 = vrot.slane %v2199, 4
        %v2202 = vshll.u32 %v2136, 16
        %v2204 = vrot.slane %v2202, 5
        %v2205 = vsel %vm1087, %v2200, %v2204
        %v2207 = vshrl.u32 %v2137, 16
        %v2209 = vrot.slane %v2207, 4
        %v2210 = vshll.u32 %v2137, 16
        %v2212 = vrot.slane %v2210, 5
        %v2213 = vor.u32 %v2209, %v2212
        %v2214 = vrot.slane %v2213, 4
        %v2216 = vshll.u32 %v2138, 16
        %v2218 = vrot.slane %v2216, 5
        %v2219 = vsel %vm1087, %v2214, %v2218
        %v2220 = vshrl.u32 %v2138, 16
        %v2222 = vrot.slane %v2220, 4
        %v2223 = vor.u32 %v2222, %v2218
        %v2224 = vrot.slane %v2223, 4
        %v2226 = vshll.u32 %v2139, 16
        %v2228 = vrot.slane %v2226, 5
        %v2229 = vsel %vm1087, %v2224, %v2228
        %v2231 = vshrl.u32 %v2140, 16
        %v2233 = vrot.slane %v2231, 4
        %v2234 = vshll.u32 %v2140, 16
        %v2236 = vrot.slane %v2234, 5
        %v2237 = vor.u32 %v2233, %v2236
        %v2238 = vrot.slane %v2237, 4
        %v2240 = vshll.u32 %v2141, 16
        %v2242 = vrot.slane %v2240, 5
        %v2243 = vsel %vm1087, %v2238, %v2242
        %v2244 = vshrl.u32 %v2141, 16
        %v2246 = vrot.slane %v2244, 4
        %v2247 = vor.u32 %v2246, %v2242
        %v2248 = vrot.slane %v2247, 4
        %v2250 = vshll.u32 %v2142, 16
        %v2252 = vrot.slane %v2250, 5
        %v2253 = vsel %vm1087, %v2248, %v2252
        %v2255 = vshrl.u32 %v2143, 16
        %v2257 = vrot.slane %v2255, 4
        %v2258 = vshll.u32 %v2143, 16
        %v2260 = vrot.slane %v2258, 5
        %v2261 = vor.u32 %v2257, %v2260
        %v2262 = vrot.slane %v2261, 4
        %v2264 = vshll.u32 %v2144, 16
        %v2266 = vrot.slane %v2264, 5
        %v2267 = vsel %vm1087, %v2262, %v2266
        %v2268 = vshrl.u32 %v2144, 16
        %v2270 = vrot.slane %v2268, 4
        %v2271 = vor.u32 %v2270, %v2266
        %v2272 = vrot.slane %v2271, 4
        %v2274 = vshll.u32 %v2145, 16
        %v2276 = vrot.slane %v2274, 5
        %v2277 = vsel %vm1087, %v2272, %v2276
        %v2279 = vshrl.u32 %v2146, 16
        %v2281 = vrot.slane %v2279, 4
        %v2282 = vshll.u32 %v2146, 16
        %v2284 = vrot.slane %v2282, 5
        %v2285 = vor.u32 %v2281, %v2284
        %v2286 = vrot.slane %v2285, 4
        %v2288 = vshll.u32 %v2147, 16
        %v2290 = vrot.slane %v2288, 5
        %v2291 = vsel %vm1087, %v2286, %v2290
        %v2292 = vshrl.u32 %v2147, 16
        %v2294 = vrot.slane %v2292, 4
        %v2295 = vor.u32 %v2294, %v2290
        %v2296 = vrot.slane %v2295, 4
        %v2298 = vshll.u32 %v2148, 16
        %v2300 = vrot.slane %v2298, 5
        %v2301 = vsel %vm1087, %v2296, %v2300
        %v2303 = vshrl.u32 %v2149, 16
        %v2305 = vrot.slane %v2303, 4
        %v2306 = vshll.u32 %v2149, 16
        %v2308 = vrot.slane %v2306, 5
        %v2309 = vor.u32 %v2305, %v2308
        %v2310 = vrot.slane %v2309, 4
        %v2312 = vshll.u32 %v2150, 16
        %v2314 = vrot.slane %v2312, 5
        %v2315 = vsel %vm1087, %v2310, %v2314
        %v2316 = vshrl.u32 %v2150, 16
        %v2318 = vrot.slane %v2316, 4
        %v2319 = vor.u32 %v2318, %v2314
        %v2320 = vrot.slane %v2319, 4
        %v2322 = vshll.u32 %v2151, 16
        %v2324 = vrot.slane %v2322, 5
        %v2325 = vsel %vm1087, %v2320, %v2324
        %v2327 = vshrl.u32 %v2152, 16
        %v2329 = vrot.slane %v2327, 4
        %v2330 = vshll.u32 %v2152, 16
        %v2332 = vrot.slane %v2330, 5
        %v2333 = vor.u32 %v2329, %v2332
        %v2334 = vrot.slane %v2333, 4
        %v2336 = vshll.u32 %v2153, 16
        %v2338 = vrot.slane %v2336, 5
        %v2339 = vsel %vm1087, %v2334, %v2338
        %v2340 = vshrl.u32 %v2153, 16
        %v2342 = vrot.slane %v2340, 4
        %v2343 = vor.u32 %v2342, %v2338
        %v2344 = vrot.slane %v2343, 4
        %v2346 = vshll.u32 %v2154, 16
        %v2348 = vrot.slane %v2346, 5
        %v2349 = vsel %vm1087, %v2344, %v2348
        %v2351 = vshrl.u32 %v2155, 16
        %v2353 = vrot.slane %v2351, 4
        %v2354 = vshll.u32 %v2155, 16
        %v2356 = vrot.slane %v2354, 5
        %v2357 = vor.u32 %v2353, %v2356
        %v2358 = vrot.slane %v2357, 4
        %v2360 = vshll.u32 %v2156, 16
        %v2362 = vrot.slane %v2360, 5
        %v2363 = vsel %vm1087, %v2358, %v2362
        %v2364 = vshrl.u32 %v2156, 16
        %v2366 = vrot.slane %v2364, 4
        %v2367 = vor.u32 %v2366, %v2362
        %v2368 = vrot.slane %v2367, 4
        %v2370 = vshll.u32 %v2157, 16
        %v2372 = vrot.slane %v2370, 5
        %v2373 = vsel %vm1087, %v2368, %v2372
        %v2375 = vshrl.u32 %v2158, 16
        %v2377 = vrot.slane %v2375, 4
        %v2378 = vshll.u32 %v2158, 16
        %v2380 = vrot.slane %v2378, 5
        %v2381 = vor.u32 %v2377, %v2380
        %v2382 = vrot.slane %v2381, 4
        %v2384 = vshll.u32 %v2159, 16
        %v2386 = vrot.slane %v2384, 5
        %v2387 = vsel %vm1087, %v2382, %v2386
        %v2388 = vshrl.u32 %v2159, 16
        %v2390 = vrot.slane %v2388, 4
        %v2391 = vor.u32 %v2390, %v2386
        %v2392 = vrot.slane %v2391, 4
        %v2394 = vshll.u32 %v2160, 16
        %v2396 = vrot.slane %v2394, 5
        %v2397 = vsel %vm1087, %v2392, %v2396
        %v2399 = vshrl.u32 %v2161, 16
        %v2401 = vrot.slane %v2399, 4
        %v2402 = vshll.u32 %v2161, 16
        %v2404 = vrot.slane %v2402, 5
        %v2405 = vor.u32 %v2401, %v2404
        %v2406 = vrot.slane %v2405, 4
        %v2408 = vshll.u32 %v2162, 16
        %v2410 = vrot.slane %v2408, 5
        %v2411 = vsel %vm1087, %v2406, %v2410
        %v2412 = vshrl.u32 %v2162, 16
        %v2414 = vrot.slane %v2412, 4
        %v2415 = vor.u32 %v2414, %v2410
        %v2416 = vrot.slane %v2415, 4
        %v2418 = vshll.u32 %v2163, 16
        %v2420 = vrot.slane %v2418, 5
        %v2421 = vsel %vm1087, %v2416, %v2420
        %v2423 = vshrl.u32 %v2164, 16
        %v2425 = vrot.slane %v2423, 4
        %v2426 = vshll.u32 %v2164, 16
        %v2428 = vrot.slane %v2426, 5
        %v2429 = vor.u32 %v2425, %v2428
        %v2430 = vrot.slane %v2429, 4
        %v2432 = vshll.u32 %v2165, 16
        %v2434 = vrot.slane %v2432, 5
        %v2435 = vsel %vm1087, %v2430, %v2434
        %v2436 = vshrl.u32 %v2165, 16
        %v2438 = vrot.slane %v2436, 4
        %v2439 = vor.u32 %v2438, %v2434
        %v2440 = vrot.slane %v2439, 4
        %v2442 = vshll.u32 %v2166, 16
        %v2444 = vrot.slane %v2442, 5
        %v2445 = vsel %vm1087, %v2440, %v2444
        %v2447 = vshrl.u32 %v2167, 16
        %v2449 = vrot.slane %v2447, 4
        %v2450 = vshll.u32 %v2167, 16
        %v2452 = vrot.slane %v2450, 5
        %v2453 = vor.u32 %v2449, %v2452
        %v2454 = vrot.slane %v2453, 4
        %v2456 = vshll.u32 %v2168, 16
        %v2458 = vrot.slane %v2456, 5
        %v2459 = vsel %vm1087, %v2454, %v2458
        %v2460 = vshrl.u32 %v2168, 16
        %v2462 = vrot.slane %v2460, 4
        %v2463 = vor.u32 %v2462, %v2458
        %v2464 = vrot.slane %v2463, 4
        %v2466 = vshll.u32 %v2169, 16
        %v2468 = vrot.slane %v2466, 5
        %v2469 = vsel %vm1087, %v2464, %v2468
        %v2471 = vshrl.u32 %v2170, 16
        %v2473 = vrot.slane %v2471, 4
        %v2474 = vshll.u32 %v2170, 16
        %v2476 = vrot.slane %v2474, 5
        %v2477 = vor.u32 %v2473, %v2476
        %v2478 = vrot.slane %v2477, 4
        %v2480 = vshll.u32 %v2171, 16
        %v2482 = vrot.slane %v2480, 5
        %v2483 = vsel %vm1087, %v2478, %v2482
        %v2484 = vshrl.u32 %v2171, 16
        %v2486 = vrot.slane %v2484, 4
        %v2487 = vor.u32 %v2486, %v2482
        %v2488 = vrot.slane %v2487, 4
        %v2490 = vshll.u32 %v2172, 16
        %v2492 = vrot.slane %v2490, 5
        %v2493 = vsel %vm1087, %v2488, %v2492
        %v2495 = vshrl.u32 %v2173, 16
        %v2497 = vrot.slane %v2495, 4
        %v2498 = vshll.u32 %v2173, 16
        %v2500 = vrot.slane %v2498, 5
        %v2501 = vor.u32 %v2497, %v2500
        %v2502 = vrot.slane %v2501, 4
        %v2504 = vshll.u32 %v2174, 16
        %v2506 = vrot.slane %v2504, 5
        %v2507 = vsel %vm1087, %v2502, %v2506
        %v2508 = vshrl.u32 %v2174, 16
        %v2510 = vrot.slane %v2508, 4
        %v2511 = vor.u32 %v2510, %v2506
        %v2512 = vrot.slane %v2511, 4
        %v2514 = vshll.u32 %v2175, 16
        %v2516 = vrot.slane %v2514, 5
        %v2517 = vsel %vm1087, %v2512, %v2516
        %v2519 = vshrl.u32 %v2176, 16
        %v2521 = vrot.slane %v2519, 4
        %v2522 = vshll.u32 %v2176, 16
        %v2524 = vrot.slane %v2522, 5
        %v2525 = vor.u32 %v2521, %v2524
        %v2526 = vrot.slane %v2525, 4
        %v2528 = vshll.u32 %v2177, 16
        %v2530 = vrot.slane %v2528, 5
        %v2531 = vsel %vm1087, %v2526, %v2530
        %v2532 = vshrl.u32 %v2177, 16
        %v2534 = vrot.slane %v2532, 4
        %v2535 = vor.u32 %v2534, %v2530
        %v2536 = vrot.slane %v2535, 4
        %v2538 = vshll.u32 %v2178, 16
        %v2540 = vrot.slane %v2538, 5
        %v2541 = vsel %vm1087, %v2536, %v2540
        %v2543 = vshrl.u32 %v2179, 16
        %v2545 = vrot.slane %v2543, 4
        %v2546 = vshll.u32 %v2179, 16
        %v2548 = vrot.slane %v2546, 5
        %v2549 = vor.u32 %v2545, %v2548
        %v2550 = vrot.slane %v2549, 4
        %v2552 = vshll.u32 %v2180, 16
        %v2554 = vrot.slane %v2552, 5
        %v2555 = vsel %vm1087, %v2550, %v2554
        %v2556 = vshrl.u32 %v2180, 16
        %v2558 = vrot.slane %v2556, 4
        %v2559 = vor.u32 %v2558, %v2554
        %v2560 = vrot.slane %v2559, 4
        %v2562 = vshll.u32 %v2181, 16
        %v2564 = vrot.slane %v2562, 5
        %v2565 = vsel %vm1087, %v2560, %v2564
        %2598 = vst.msk [vmem:[#allocation3 + $0x4] sm:$0xf] %vm394, %v2195
        %2599 = vst.msk [vmem:[#allocation3 + $0x10] sm:$0xf] %vm394, %v2205
        %2600 = vst.msk [vmem:[#allocation3 + $0x1c] sm:$0xf] %vm394, %v2219
        %2601 = vst.msk [vmem:[#allocation3 + $0x28] sm:$0xf] %vm394, %v2229
        %2602 = vst.msk [vmem:[#allocation3 + $0x34] sm:$0xf] %vm394, %v2243
        %2603 = vst.msk [vmem:[#allocation3 + $0x40] sm:$0xf] %vm394, %v2253
        %2604 = vst.msk [vmem:[#allocation3 + $0x4c] sm:$0xf] %vm394, %v2267
        %2605 = vst.msk [vmem:[#allocation3 + $0x58] sm:$0xf] %vm394, %v2277
        %2606 = vst.msk [vmem:[#allocation3 + $0x64] sm:$0xf] %vm394, %v2291
        %2607 = vst.msk [vmem:[#allocation3 + $0x70] sm:$0xf] %vm394, %v2301
        %2608 = vst.msk [vmem:[#allocation3 + $0x7c] sm:$0xf] %vm394, %v2315
        %2609 = vst.msk [vmem:[#allocation3 + $0x88] sm:$0xf] %vm394, %v2325
        %2610 = vst.msk [vmem:[#allocation3 + $0x94] sm:$0xf] %vm394, %v2339
        %2611 = vst.msk [vmem:[#allocation3 + $0xa0] sm:$0xf] %vm394, %v2349
        %2612 = vst.msk [vmem:[#allocation3 + $0xac] sm:$0xf] %vm394, %v2363
        %2613 = vst.msk [vmem:[#allocation3 + $0xb8] sm:$0xf] %vm394, %v2373
        %2614 = vst.msk [vmem:[#allocation3 + $0xc4] sm:$0xf] %vm394, %v2387
        %2615 = vst.msk [vmem:[#allocation3 + $0xd0] sm:$0xf] %vm394, %v2397
        %2616 = vst.msk [vmem:[#allocation3 + $0xdc] sm:$0xf] %vm394, %v2411
        %2617 = vst.msk [vmem:[#allocation3 + $0xe8] sm:$0xf] %vm394, %v2421
        %2618 = vst.msk [vmem:[#allocation3 + $0xf4] sm:$0xf] %vm394, %v2435
        %2619 = vst.msk [vmem:[#allocation3 + $0x100] sm:$0xf] %vm394, %v2445
        %2620 = vst.msk [vmem:[#allocation3 + $0x10c] sm:$0xf] %vm394, %v2459
        %2621 = vst.msk [vmem:[#allocation3 + $0x118] sm:$0xf] %vm394, %v2469
        %2622 = vst.msk [vmem:[#allocation3 + $0x124] sm:$0xf] %vm394, %v2483
        %2623 = vst.msk [vmem:[#allocation3 + $0x130] sm:$0xf] %vm394, %v2493
        %2624 = vst.msk [vmem:[#allocation3 + $0x13c] sm:$0xf] %vm394, %v2507
        %2625 = vst.msk [vmem:[#allocation3 + $0x148] sm:$0xf] %vm394, %v2517
        %2626 = vst.msk [vmem:[#allocation3 + $0x154] sm:$0xf] %vm394, %v2531
        %2627 = vst.msk [vmem:[#allocation3 + $0x160] sm:$0xf] %vm394, %v2541
        %2628 = vst.msk [vmem:[#allocation3 + $0x16c] sm:$0xf] %vm394, %v2555
        %2629 = vst.msk [vmem:[#allocation3 + $0x178] sm:$0xf] %vm394, %v2565
        %v2630 = vld [vmem:[%s403] sm:$0xe]
        %v2631 = vld [vmem:[%s403 + $0x4] sm:$0xf]
        %v2632 = vld [vmem:[%s403 + $0x8] sm:$0x1]
        %v2633 = vld [vmem:[%s403 + $0xc] sm:$0xe]
        %v2634 = vld [vmem:[%s403 + $0x10] sm:$0xf]
        %v2635 = vld [vmem:[%s403 + $0x14] sm:$0x1]
        %v2636 = vld [vmem:[%s403 + $0x18] sm:$0xe]
        %v2637 = vld [vmem:[%s403 + $0x1c] sm:$0xf]
        %v2638 = vld [vmem:[%s403 + $0x20] sm:$0x1]
        %v2639 = vld [vmem:[%s403 + $0x24] sm:$0xe]
        %v2640 = vld [vmem:[%s403 + $0x28] sm:$0xf]
        %v2641 = vld [vmem:[%s403 + $0x2c] sm:$0x1]
        %v2642 = vld [vmem:[%s403 + $0x30] sm:$0xe]
        %v2643 = vld [vmem:[%s403 + $0x34] sm:$0xf]
        %v2644 = vld [vmem:[%s403 + $0x38] sm:$0x1]
        %v2645 = vld [vmem:[%s403 + $0x3c] sm:$0xe]
        %v2646 = vld [vmem:[%s403 + $0x40] sm:$0xf]
        %v2647 = vld [vmem:[%s403 + $0x44] sm:$0x1]
        %v2648 = vld [vmem:[%s403 + $0x48] sm:$0xe]
        %v2649 = vld [vmem:[%s403 + $0x4c] sm:$0xf]
        %v2650 = vld [vmem:[%s403 + $0x50] sm:$0x1]
        %v2651 = vld [vmem:[%s403 + $0x54] sm:$0xe]
        %v2652 = vld [vmem:[%s403 + $0x58] sm:$0xf]
        %v2653 = vld [vmem:[%s403 + $0x5c] sm:$0x1]
        %v2654 = vld [vmem:[%s403 + $0x60] sm:$0xe]
        %v2655 = vld [vmem:[%s403 + $0x64] sm:$0xf]
        %v2656 = vld [vmem:[%s403 + $0x68] sm:$0x1]
        %v2657 = vld [vmem:[%s403 + $0x6c] sm:$0xe]
        %v2658 = vld [vmem:[%s403 + $0x70] sm:$0xf]
        %v2659 = vld [vmem:[%s403 + $0x74] sm:$0x1]
        %v2660 = vld [vmem:[%s403 + $0x78] sm:$0xe]
        %v2661 = vld [vmem:[%s403 + $0x7c] sm:$0xf]
        %v2662 = vld [vmem:[%s403 + $0x80] sm:$0x1]
        %v2663 = vld [vmem:[%s403 + $0x84] sm:$0xe]
        %v2664 = vld [vmem:[%s403 + $0x88] sm:$0xf]
        %v2665 = vld [vmem:[%s403 + $0x8c] sm:$0x1]
        %v2666 = vld [vmem:[%s403 + $0x90] sm:$0xe]
        %v2667 = vld [vmem:[%s403 + $0x94] sm:$0xf]
        %v2668 = vld [vmem:[%s403 + $0x98] sm:$0x1]
        %v2669 = vld [vmem:[%s403 + $0x9c] sm:$0xe]
        %v2670 = vld [vmem:[%s403 + $0xa0] sm:$0xf]
        %v2671 = vld [vmem:[%s403 + $0xa4] sm:$0x1]
        %v2672 = vld [vmem:[%s403 + $0xa8] sm:$0xe]
        %v2673 = vld [vmem:[%s403 + $0xac] sm:$0xf]
        %v2674 = vld [vmem:[%s403 + $0xb0] sm:$0x1]
        %v2675 = vld [vmem:[%s403 + $0xb4] sm:$0xe]
        %v2676 = vld [vmem:[%s403 + $0xb8] sm:$0xf]
        %v2677 = vld [vmem:[%s403 + $0xbc] sm:$0x1]
        %v2726 = vrot.slane %v2630, 5
        %v2727 = vrot.slane %v2726, 4
        %v2728 = vrot.slane %v2631, 5
        %v2729 = vsel %vm1699, %v2727, %v2728
        %v2730 = vrot.slane %v2728, 4
        %v2731 = vrot.slane %v2632, 5
        %v2732 = vsel %vm1699, %v2730, %v2731
        %v2733 = vrot.slane %v2633, 5
        %v2734 = vrot.slane %v2733, 4
        %v2735 = vrot.slane %v2634, 5
        %v2736 = vsel %vm1699, %v2734, %v2735
        %v2737 = vrot.slane %v2735, 4
        %v2738 = vrot.slane %v2635, 5
        %v2739 = vsel %vm1699, %v2737, %v2738
        %v2740 = vrot.slane %v2636, 5
        %v2741 = vrot.slane %v2740, 4
        %v2742 = vrot.slane %v2637, 5
        %v2743 = vsel %vm1699, %v2741, %v2742
        %v2744 = vrot.slane %v2742, 4
        %v2745 = vrot.slane %v2638, 5
        %v2746 = vsel %vm1699, %v2744, %v2745
        %v2747 = vrot.slane %v2639, 5
        %v2748 = vrot.slane %v2747, 4
        %v2749 = vrot.slane %v2640, 5
        %v2750 = vsel %vm1699, %v2748, %v2749
        %v2751 = vrot.slane %v2749, 4
        %v2752 = vrot.slane %v2641, 5
        %v2753 = vsel %vm1699, %v2751, %v2752
        %v2754 = vrot.slane %v2642, 5
        %v2755 = vrot.slane %v2754, 4
        %v2756 = vrot.slane %v2643, 5
        %v2757 = vsel %vm1699, %v2755, %v2756
        %v2758 = vrot.slane %v2756, 4
        %v2759 = vrot.slane %v2644, 5
        %v2760 = vsel %vm1699, %v2758, %v2759
        %v2761 = vrot.slane %v2645, 5
        %v2762 = vrot.slane %v2761, 4
        %v2763 = vrot.slane %v2646, 5
        %v2764 = vsel %vm1699, %v2762, %v2763
        %v2765 = vrot.slane %v2763, 4
        %v2766 = vrot.slane %v2647, 5
        %v2767 = vsel %vm1699, %v2765, %v2766
        %v2768 = vrot.slane %v2648, 5
        %v2769 = vrot.slane %v2768, 4
        %v2770 = vrot.slane %v2649, 5
        %v2771 = vsel %vm1699, %v2769, %v2770
        %v2772 = vrot.slane %v2770, 4
        %v2773 = vrot.slane %v2650, 5
        %v2774 = vsel %vm1699, %v2772, %v2773
        %v2775 = vrot.slane %v2651, 5
        %v2776 = vrot.slane %v2775, 4
        %v2777 = vrot.slane %v2652, 5
        %v2778 = vsel %vm1699, %v2776, %v2777
        %v2779 = vrot.slane %v2777, 4
        %v2780 = vrot.slane %v2653, 5
        %v2781 = vsel %vm1699, %v2779, %v2780
        %v2782 = vrot.slane %v2654, 5
        %v2783 = vrot.slane %v2782, 4
        %v2784 = vrot.slane %v2655, 5
        %v2785 = vsel %vm1699, %v2783, %v2784
        %v2786 = vrot.slane %v2784, 4
        %v2787 = vrot.slane %v2656, 5
        %v2788 = vsel %vm1699, %v2786, %v2787
        %v2789 = vrot.slane %v2657, 5
        %v2790 = vrot.slane %v2789, 4
        %v2791 = vrot.slane %v2658, 5
        %v2792 = vsel %vm1699, %v2790, %v2791
        %v2793 = vrot.slane %v2791, 4
        %v2794 = vrot.slane %v2659, 5
        %v2795 = vsel %vm1699, %v2793, %v2794
        %v2796 = vrot.slane %v2660, 5
        %v2797 = vrot.slane %v2796, 4
        %v2798 = vrot.slane %v2661, 5
        %v2799 = vsel %vm1699, %v2797, %v2798
        %v2800 = vrot.slane %v2798, 4
        %v2801 = vrot.slane %v2662, 5
        %v2802 = vsel %vm1699, %v2800, %v2801
        %v2803 = vrot.slane %v2663, 5
        %v2804 = vrot.slane %v2803, 4
        %v2805 = vrot.slane %v2664, 5
        %v2806 = vsel %vm1699, %v2804, %v2805
        %v2807 = vrot.slane %v2805, 4
        %v2808 = vrot.slane %v2665, 5
        %v2809 = vsel %vm1699, %v2807, %v2808
        %v2810 = vrot.slane %v2666, 5
        %v2811 = vrot.slane %v2810, 4
        %v2812 = vrot.slane %v2667, 5
        %v2813 = vsel %vm1699, %v2811, %v2812
        %v2814 = vrot.slane %v2812, 4
        %v2815 = vrot.slane %v2668, 5
        %v2816 = vsel %vm1699, %v2814, %v2815
        %v2817 = vrot.slane %v2669, 5
        %v2818 = vrot.slane %v2817, 4
        %v2819 = vrot.slane %v2670, 5
        %v2820 = vsel %vm1699, %v2818, %v2819
        %v2821 = vrot.slane %v2819, 4
        %v2822 = vrot.slane %v2671, 5
        %v2823 = vsel %vm1699, %v2821, %v2822
        %v2824 = vrot.slane %v2672, 5
        %v2825 = vrot.slane %v2824, 4
        %v2826 = vrot.slane %v2673, 5
        %v2827 = vsel %vm1699, %v2825, %v2826
        %v2828 = vrot.slane %v2826, 4
        %v2829 = vrot.slane %v2674, 5
        %v2830 = vsel %vm1699, %v2828, %v2829
        %v2831 = vrot.slane %v2675, 5
        %v2832 = vrot.slane %v2831, 4
        %v2833 = vrot.slane %v2676, 5
        %v2834 = vsel %vm1699, %v2832, %v2833
        %v2835 = vrot.slane %v2833, 4
        %v2836 = vrot.slane %v2677, 5
        %v2837 = vsel %vm1699, %v2835, %v2836
        %2838 = vrot.lane.b32.xlu0 %v2729, 32
        %v2839 = vpop.permute.xlu0 %2838
        %2840 = vrot.lane.b32.xlu0 %v2732, 32
        %v2841 = vpop.permute.xlu0 %2840
        %2842 = vrot.lane.b32.xlu0 %v2736, 32
        %v2843 = vpop.permute.xlu0 %2842
        %2844 = vrot.lane.b32.xlu0 %v2739, 32
        %v2845 = vpop.permute.xlu0 %2844
        %2846 = vrot.lane.b32.xlu0 %v2743, 32
        %v2847 = vpop.permute.xlu0 %2846
        %2848 = vrot.lane.b32.xlu0 %v2746, 32
        %v2849 = vpop.permute.xlu0 %2848
        %2850 = vrot.lane.b32.xlu0 %v2750, 32
        %v2851 = vpop.permute.xlu0 %2850
        %2852 = vrot.lane.b32.xlu0 %v2753, 32
        %v2853 = vpop.permute.xlu0 %2852
        %2854 = vrot.lane.b32.xlu0 %v2757, 32
        %v2855 = vpop.permute.xlu0 %2854
        %2856 = vrot.lane.b32.xlu0 %v2760, 32
        %v2857 = vpop.permute.xlu0 %2856
        %2858 = vrot.lane.b32.xlu0 %v2764, 32
        %v2859 = vpop.permute.xlu0 %2858
        %2860 = vrot.lane.b32.xlu0 %v2767, 32
        %v2861 = vpop.permute.xlu0 %2860
        %2862 = vrot.lane.b32.xlu0 %v2771, 32
        %v2863 = vpop.permute.xlu0 %2862
        %2864 = vrot.lane.b32.xlu0 %v2774, 32
        %v2865 = vpop.permute.xlu0 %2864
        %2866 = vrot.lane.b32.xlu0 %v2778, 32
        %v2867 = vpop.permute.xlu0 %2866
        %2868 = vrot.lane.b32.xlu0 %v2781, 32
        %v2869 = vpop.permute.xlu0 %2868
        %2870 = vrot.lane.b32.xlu0 %v2785, 32
        %v2871 = vpop.permute.xlu0 %2870
        %2872 = vrot.lane.b32.xlu0 %v2788, 32
        %v2873 = vpop.permute.xlu0 %2872
        %2874 = vrot.lane.b32.xlu0 %v2792, 32
        %v2875 = vpop.permute.xlu0 %2874
        %2876 = vrot.lane.b32.xlu0 %v2795, 32
        %v2877 = vpop.permute.xlu0 %2876
        %2878 = vrot.lane.b32.xlu0 %v2799, 32
        %v2879 = vpop.permute.xlu0 %2878
        %2880 = vrot.lane.b32.xlu0 %v2802, 32
        %v2881 = vpop.permute.xlu0 %2880
        %2882 = vrot.lane.b32.xlu0 %v2806, 32
        %v2883 = vpop.permute.xlu0 %2882
        %2884 = vrot.lane.b32.xlu0 %v2809, 32
        %v2885 = vpop.permute.xlu0 %2884
        %2886 = vrot.lane.b32.xlu0 %v2813, 32
        %v2887 = vpop.permute.xlu0 %2886
        %2888 = vrot.lane.b32.xlu0 %v2816, 32
        %v2889 = vpop.permute.xlu0 %2888
        %2890 = vrot.lane.b32.xlu0 %v2820, 32
        %v2891 = vpop.permute.xlu0 %2890
        %2892 = vrot.lane.b32.xlu0 %v2823, 32
        %v2893 = vpop.permute.xlu0 %2892
        %2894 = vrot.lane.b32.xlu0 %v2827, 32
        %v2895 = vpop.permute.xlu0 %2894
        %2896 = vrot.lane.b32.xlu0 %v2830, 32
        %v2897 = vpop.permute.xlu0 %2896
        %2898 = vrot.lane.b32.xlu0 %v2834, 32
        %v2899 = vpop.permute.xlu0 %2898
        %2900 = vrot.lane.b32.xlu0 %v2837, 32
        %v2901 = vpop.permute.xlu0 %2900
        %2934 = vst.msk [vmem:[#allocation3 + $0x4] sm:$0xf] %vm1568, %v2839
        %2935 = vst.msk [vmem:[#allocation3 + $0x10] sm:$0xf] %vm1568, %v2841
        %2936 = vst.msk [vmem:[#allocation3 + $0x1c] sm:$0xf] %vm1568, %v2843
        %2937 = vst.msk [vmem:[#allocation3 + $0x28] sm:$0xf] %vm1568, %v2845
        %2938 = vst.msk [vmem:[#allocation3 + $0x34] sm:$0xf] %vm1568, %v2847
        %2939 = vst.msk [vmem:[#allocation3 + $0x40] sm:$0xf] %vm1568, %v2849
        %2940 = vst.msk [vmem:[#allocation3 + $0x4c] sm:$0xf] %vm1568, %v2851
        %2941 = vst.msk [vmem:[#allocation3 + $0x58] sm:$0xf] %vm1568, %v2853
        %2942 = vst.msk [vmem:[#allocation3 + $0x64] sm:$0xf] %vm1568, %v2855
        %2943 = vst.msk [vmem:[#allocation3 + $0x70] sm:$0xf] %vm1568, %v2857
        %2944 = vst.msk [vmem:[#allocation3 + $0x7c] sm:$0xf] %vm1568, %v2859
        %2945 = vst.msk [vmem:[#allocation3 + $0x88] sm:$0xf] %vm1568, %v2861
        %2946 = vst.msk [vmem:[#allocation3 + $0x94] sm:$0xf] %vm1568, %v2863
        %2947 = vst.msk [vmem:[#allocation3 + $0xa0] sm:$0xf] %vm1568, %v2865
        %2948 = vst.msk [vmem:[#allocation3 + $0xac] sm:$0xf] %vm1568, %v2867
        %2949 = vst.msk [vmem:[#allocation3 + $0xb8] sm:$0xf] %vm1568, %v2869
        %2950 = vst.msk [vmem:[#allocation3 + $0xc4] sm:$0xf] %vm1568, %v2871
        %2951 = vst.msk [vmem:[#allocation3 + $0xd0] sm:$0xf] %vm1568, %v2873
        %2952 = vst.msk [vmem:[#allocation3 + $0xdc] sm:$0xf] %vm1568, %v2875
        %2953 = vst.msk [vmem:[#allocation3 + $0xe8] sm:$0xf] %vm1568, %v2877
        %2954 = vst.msk [vmem:[#allocation3 + $0xf4] sm:$0xf] %vm1568, %v2879
        %2955 = vst.msk [vmem:[#allocation3 + $0x100] sm:$0xf] %vm1568, %v2881
        %2956 = vst.msk [vmem:[#allocation3 + $0x10c] sm:$0xf] %vm1568, %v2883
        %2957 = vst.msk [vmem:[#allocation3 + $0x118] sm:$0xf] %vm1568, %v2885
        %2958 = vst.msk [vmem:[#allocation3 + $0x124] sm:$0xf] %vm1568, %v2887
        %2959 = vst.msk [vmem:[#allocation3 + $0x130] sm:$0xf] %vm1568, %v2889
        %2960 = vst.msk [vmem:[#allocation3 + $0x13c] sm:$0xf] %vm1568, %v2891
        %2961 = vst.msk [vmem:[#allocation3 + $0x148] sm:$0xf] %vm1568, %v2893
        %2962 = vst.msk [vmem:[#allocation3 + $0x154] sm:$0xf] %vm1568, %v2895
        %2963 = vst.msk [vmem:[#allocation3 + $0x160] sm:$0xf] %vm1568, %v2897
        %2964 = vst.msk [vmem:[#allocation3 + $0x16c] sm:$0xf] %vm1568, %v2899
        %2965 = vst.msk [vmem:[#allocation3 + $0x178] sm:$0xf] %vm1568, %v2901
        %s2966 = scalar_lea.vmem [#allocation2], 24
        %v2967 = vld [vmem:[%s2966] sm:$0xf]
        %v2968 = vld [vmem:[%s2966 + $0x4] sm:$0xf]
        %v2969 = vld [vmem:[%s2966 + $0xc] sm:$0xf]
        %v2970 = vld [vmem:[%s2966 + $0x10] sm:$0xf]
        %v2971 = vld [vmem:[%s2966 + $0x18] sm:$0xf]
        %v2972 = vld [vmem:[%s2966 + $0x1c] sm:$0xf]
        %v2973 = vld [vmem:[%s2966 + $0x24] sm:$0xf]
        %v2974 = vld [vmem:[%s2966 + $0x28] sm:$0xf]
        %v2975 = vld [vmem:[%s2966 + $0x30] sm:$0xf]
        %v2976 = vld [vmem:[%s2966 + $0x34] sm:$0xf]
        %v2977 = vld [vmem:[%s2966 + $0x3c] sm:$0xf]
        %v2978 = vld [vmem:[%s2966 + $0x40] sm:$0xf]
        %v2979 = vld [vmem:[%s2966 + $0x48] sm:$0xf]
        %v2980 = vld [vmem:[%s2966 + $0x4c] sm:$0xf]
        %v2981 = vld [vmem:[%s2966 + $0x54] sm:$0xf]
        %v2982 = vld [vmem:[%s2966 + $0x58] sm:$0xf]
        %v2983 = vld [vmem:[%s2966 + $0x60] sm:$0xf]
        %v2984 = vld [vmem:[%s2966 + $0x64] sm:$0xf]
        %v2985 = vld [vmem:[%s2966 + $0x6c] sm:$0xf]
        %v2986 = vld [vmem:[%s2966 + $0x70] sm:$0xf]
        %v2987 = vld [vmem:[%s2966 + $0x78] sm:$0xf]
        %v2988 = vld [vmem:[%s2966 + $0x7c] sm:$0xf]
        %v2989 = vld [vmem:[%s2966 + $0x84] sm:$0xf]
        %v2990 = vld [vmem:[%s2966 + $0x88] sm:$0xf]
        %v2991 = vld [vmem:[%s2966 + $0x90] sm:$0xf]
        %v2992 = vld [vmem:[%s2966 + $0x94] sm:$0xf]
        %v2993 = vld [vmem:[%s2966 + $0x9c] sm:$0xf]
        %v2994 = vld [vmem:[%s2966 + $0xa0] sm:$0xf]
        %v2995 = vld [vmem:[%s2966 + $0xa8] sm:$0xf]
        %v2996 = vld [vmem:[%s2966 + $0xac] sm:$0xf]
        %v2997 = vld [vmem:[%s2966 + $0xb4] sm:$0xf]
        %v2998 = vld [vmem:[%s2966 + $0xb8] sm:$0xf]
        %3031 = vrot.lane.b32.xlu0 %v2967, 64
        %v3032 = vpop.permute.xlu0 %3031
        %3033 = vrot.lane.b32.xlu0 %v2968, 64
        %v3034 = vpop.permute.xlu0 %3033
        %3035 = vrot.lane.b32.xlu0 %v2969, 64
        %v3036 = vpop.permute.xlu0 %3035
        %3037 = vrot.lane.b32.xlu0 %v2970, 64
        %v3038 = vpop.permute.xlu0 %3037
        %3039 = vrot.lane.b32.xlu0 %v2971, 64
        %v3040 = vpop.permute.xlu0 %3039
        %3041 = vrot.lane.b32.xlu0 %v2972, 64
        %v3042 = vpop.permute.xlu0 %3041
        %3043 = vrot.lane.b32.xlu0 %v2973, 64
        %v3044 = vpop.permute.xlu0 %3043
        %3045 = vrot.lane.b32.xlu0 %v2974, 64
        %v3046 = vpop.permute.xlu0 %3045
        %3047 = vrot.lane.b32.xlu0 %v2975, 64
        %v3048 = vpop.permute.xlu0 %3047
        %3049 = vrot.lane.b32.xlu0 %v2976, 64
        %v3050 = vpop.permute.xlu0 %3049
        %3051 = vrot.lane.b32.xlu0 %v2977, 64
        %v3052 = vpop.permute.xlu0 %3051
        %3053 = vrot.lane.b32.xlu0 %v2978, 64
        %v3054 = vpop.permute.xlu0 %3053
        %3055 = vrot.lane.b32.xlu0 %v2979, 64
        %v3056 = vpop.permute.xlu0 %3055
        %3057 = vrot.lane.b32.xlu0 %v2980, 64
        %v3058 = vpop.permute.xlu0 %3057
        %3059 = vrot.lane.b32.xlu0 %v2981, 64
        %v3060 = vpop.permute.xlu0 %3059
        %3061 = vrot.lane.b32.xlu0 %v2982, 64
        %v3062 = vpop.permute.xlu0 %3061
        %3063 = vrot.lane.b32.xlu0 %v2983, 64
        %v3064 = vpop.permute.xlu0 %3063
        %3065 = vrot.lane.b32.xlu0 %v2984, 64
        %v3066 = vpop.permute.xlu0 %3065
        %3067 = vrot.lane.b32.xlu0 %v2985, 64
        %v3068 = vpop.permute.xlu0 %3067
        %3069 = vrot.lane.b32.xlu0 %v2986, 64
        %v3070 = vpop.permute.xlu0 %3069
        %3071 = vrot.lane.b32.xlu0 %v2987, 64
        %v3072 = vpop.permute.xlu0 %3071
        %3073 = vrot.lane.b32.xlu0 %v2988, 64
        %v3074 = vpop.permute.xlu0 %3073
        %3075 = vrot.lane.b32.xlu0 %v2989, 64
        %v3076 = vpop.permute.xlu0 %3075
        %3077 = vrot.lane.b32.xlu0 %v2990, 64
        %v3078 = vpop.permute.xlu0 %3077
        %3079 = vrot.lane.b32.xlu0 %v2991, 64
        %v3080 = vpop.permute.xlu0 %3079
        %3081 = vrot.lane.b32.xlu0 %v2992, 64
        %v3082 = vpop.permute.xlu0 %3081
        %3083 = vrot.lane.b32.xlu0 %v2993, 64
        %v3084 = vpop.permute.xlu0 %3083
        %3085 = vrot.lane.b32.xlu0 %v2994, 64
        %v3086 = vpop.permute.xlu0 %3085
        %3087 = vrot.lane.b32.xlu0 %v2995, 64
        %v3088 = vpop.permute.xlu0 %3087
        %3089 = vrot.lane.b32.xlu0 %v2996, 64
        %v3090 = vpop.permute.xlu0 %3089
        %3091 = vrot.lane.b32.xlu0 %v2997, 64
        %v3092 = vpop.permute.xlu0 %3091
        %3093 = vrot.lane.b32.xlu0 %v2998, 64
        %v3094 = vpop.permute.xlu0 %3093
        %3127 = vst.msk [vmem:[#allocation3 + $0x4] sm:$0xf] %vm1908, %v3032
        %3128 = vst.msk [vmem:[#allocation3 + $0x10] sm:$0xf] %vm1908, %v3034
        %3129 = vst.msk [vmem:[#allocation3 + $0x1c] sm:$0xf] %vm1908, %v3036
        %3130 = vst.msk [vmem:[#allocation3 + $0x28] sm:$0xf] %vm1908, %v3038
        %3131 = vst.msk [vmem:[#allocation3 + $0x34] sm:$0xf] %vm1908, %v3040
        %3132 = vst.msk [vmem:[#allocation3 + $0x40] sm:$0xf] %vm1908, %v3042
        %3133 = vst.msk [vmem:[#allocation3 + $0x4c] sm:$0xf] %vm1908, %v3044
        %3134 = vst.msk [vmem:[#allocation3 + $0x58] sm:$0xf] %vm1908, %v3046
        %3135 = vst.msk [vmem:[#allocation3 + $0x64] sm:$0xf] %vm1908, %v3048
        %3136 = vst.msk [vmem:[#allocation3 + $0x70] sm:$0xf] %vm1908, %v3050
        %3137 = vst.msk [vmem:[#allocation3 + $0x7c] sm:$0xf] %vm1908, %v3052
        %3138 = vst.msk [vmem:[#allocation3 + $0x88] sm:$0xf] %vm1908, %v3054
        %3139 = vst.msk [vmem:[#allocation3 + $0x94] sm:$0xf] %vm1908, %v3056
        %3140 = vst.msk [vmem:[#allocation3 + $0xa0] sm:$0xf] %vm1908, %v3058
        %3141 = vst.msk [vmem:[#allocation3 + $0xac] sm:$0xf] %vm1908, %v3060
        %3142 = vst.msk [vmem:[#allocation3 + $0xb8] sm:$0xf] %vm1908, %v3062
        %3143 = vst.msk [vmem:[#allocation3 + $0xc4] sm:$0xf] %vm1908, %v3064
        %3144 = vst.msk [vmem:[#allocation3 + $0xd0] sm:$0xf] %vm1908, %v3066
        %3145 = vst.msk [vmem:[#allocation3 + $0xdc] sm:$0xf] %vm1908, %v3068
        %3146 = vst.msk [vmem:[#allocation3 + $0xe8] sm:$0xf] %vm1908, %v3070
        %3147 = vst.msk [vmem:[#allocation3 + $0xf4] sm:$0xf] %vm1908, %v3072
        %3148 = vst.msk [vmem:[#allocation3 + $0x100] sm:$0xf] %vm1908, %v3074
        %3149 = vst.msk [vmem:[#allocation3 + $0x10c] sm:$0xf] %vm1908, %v3076
        %3150 = vst.msk [vmem:[#allocation3 + $0x118] sm:$0xf] %vm1908, %v3078
        %3151 = vst.msk [vmem:[#allocation3 + $0x124] sm:$0xf] %vm1908, %v3080
        %3152 = vst.msk [vmem:[#allocation3 + $0x130] sm:$0xf] %vm1908, %v3082
        %3153 = vst.msk [vmem:[#allocation3 + $0x13c] sm:$0xf] %vm1908, %v3084
        %3154 = vst.msk [vmem:[#allocation3 + $0x148] sm:$0xf] %vm1908, %v3086
        %3155 = vst.msk [vmem:[#allocation3 + $0x154] sm:$0xf] %vm1908, %v3088
        %3156 = vst.msk [vmem:[#allocation3 + $0x160] sm:$0xf] %vm1908, %v3090
        %3157 = vst.msk [vmem:[#allocation3 + $0x16c] sm:$0xf] %vm1908, %v3092
        %3158 = vst.msk [vmem:[#allocation3 + $0x178] sm:$0xf] %vm1908, %v3094
        %v3159 = vld [vmem:[%s2966] sm:$0xf]
        %v3160 = vld [vmem:[%s2966 + $0x4] sm:$0xf]
        %v3161 = vld [vmem:[%s2966 + $0x8] sm:$0x1]
        %v3162 = vld [vmem:[%s2966 + $0xc] sm:$0xf]
        %v3163 = vld [vmem:[%s2966 + $0x10] sm:$0xf]
        %v3164 = vld [vmem:[%s2966 + $0x14] sm:$0x1]
        %v3165 = vld [vmem:[%s2966 + $0x18] sm:$0xf]
        %v3166 = vld [vmem:[%s2966 + $0x1c] sm:$0xf]
        %v3167 = vld [vmem:[%s2966 + $0x20] sm:$0x1]
        %v3168 = vld [vmem:[%s2966 + $0x24] sm:$0xf]
        %v3169 = vld [vmem:[%s2966 + $0x28] sm:$0xf]
        %v3170 = vld [vmem:[%s2966 + $0x2c] sm:$0x1]
        %v3171 = vld [vmem:[%s2966 + $0x30] sm:$0xf]
        %v3172 = vld [vmem:[%s2966 + $0x34] sm:$0xf]
        %v3173 = vld [vmem:[%s2966 + $0x38] sm:$0x1]
        %v3174 = vld [vmem:[%s2966 + $0x3c] sm:$0xf]
        %v3175 = vld [vmem:[%s2966 + $0x40] sm:$0xf]
        %v3176 = vld [vmem:[%s2966 + $0x44] sm:$0x1]
        %v3177 = vld [vmem:[%s2966 + $0x48] sm:$0xf]
        %v3178 = vld [vmem:[%s2966 + $0x4c] sm:$0xf]
        %v3179 = vld [vmem:[%s2966 + $0x50] sm:$0x1]
        %v3180 = vld [vmem:[%s2966 + $0x54] sm:$0xf]
        %v3181 = vld [vmem:[%s2966 + $0x58] sm:$0xf]
        %v3182 = vld [vmem:[%s2966 + $0x5c] sm:$0x1]
        %v3183 = vld [vmem:[%s2966 + $0x60] sm:$0xf]
        %v3184 = vld [vmem:[%s2966 + $0x64] sm:$0xf]
        %v3185 = vld [vmem:[%s2966 + $0x68] sm:$0x1]
        %v3186 = vld [vmem:[%s2966 + $0x6c] sm:$0xf]
        %v3187 = vld [vmem:[%s2966 + $0x70] sm:$0xf]
        %v3188 = vld [vmem:[%s2966 + $0x74] sm:$0x1]
        %v3189 = vld [vmem:[%s2966 + $0x78] sm:$0xf]
        %v3190 = vld [vmem:[%s2966 + $0x7c] sm:$0xf]
        %v3191 = vld [vmem:[%s2966 + $0x80] sm:$0x1]
        %v3192 = vld [vmem:[%s2966 + $0x84] sm:$0xf]
        %v3193 = vld [vmem:[%s2966 + $0x88] sm:$0xf]
        %v3194 = vld [vmem:[%s2966 + $0x8c] sm:$0x1]
        %v3195 = vld [vmem:[%s2966 + $0x90] sm:$0xf]
        %v3196 = vld [vmem:[%s2966 + $0x94] sm:$0xf]
        %v3197 = vld [vmem:[%s2966 + $0x98] sm:$0x1]
        %v3198 = vld [vmem:[%s2966 + $0x9c] sm:$0xf]
        %v3199 = vld [vmem:[%s2966 + $0xa0] sm:$0xf]
        %v3200 = vld [vmem:[%s2966 + $0xa4] sm:$0x1]
        %v3201 = vld [vmem:[%s2966 + $0xa8] sm:$0xf]
        %v3202 = vld [vmem:[%s2966 + $0xac] sm:$0xf]
        %v3203 = vld [vmem:[%s2966 + $0xb0] sm:$0x1]
        %v3204 = vld [vmem:[%s2966 + $0xb4] sm:$0xf]
        %v3205 = vld [vmem:[%s2966 + $0xb8] sm:$0xf]
        %v3206 = vld [vmem:[%s2966 + $0xbc] sm:$0x1]
        %v3208 = vshrl.u32 %v3159, 16
        %v3210 = vrot.slane %v3208, 4
        %v3211 = vshll.u32 %v3159, 16
        %v3213 = vrot.slane %v3211, 5
        %v3214 = vor.u32 %v3210, %v3213
        %v3215 = vrot.slane %v3214, 4
        %v3217 = vshll.u32 %v3160, 16
        %v3219 = vrot.slane %v3217, 5
        %v3220 = vsel %vm1087, %v3215, %v3219
        %v3221 = vshrl.u32 %v3160, 16
        %v3223 = vrot.slane %v3221, 4
        %v3224 = vor.u32 %v3223, %v3219
        %v3225 = vrot.slane %v3224, 4
        %v3227 = vshll.u32 %v3161, 16
        %v3229 = vrot.slane %v3227, 5
        %v3230 = vsel %vm1087, %v3225, %v3229
        %v3232 = vshrl.u32 %v3162, 16
        %v3234 = vrot.slane %v3232, 4
        %v3235 = vshll.u32 %v3162, 16
        %v3237 = vrot.slane %v3235, 5
        %v3238 = vor.u32 %v3234, %v3237
        %v3239 = vrot.slane %v3238, 4
        %v3241 = vshll.u32 %v3163, 16
        %v3243 = vrot.slane %v3241, 5
        %v3244 = vsel %vm1087, %v3239, %v3243
        %v3245 = vshrl.u32 %v3163, 16
        %v3247 = vrot.slane %v3245, 4
        %v3248 = vor.u32 %v3247, %v3243
        %v3249 = vrot.slane %v3248, 4
        %v3251 = vshll.u32 %v3164, 16
        %v3253 = vrot.slane %v3251, 5
        %v3254 = vsel %vm1087, %v3249, %v3253
        %v3256 = vshrl.u32 %v3165, 16
        %v3258 = vrot.slane %v3256, 4
        %v3259 = vshll.u32 %v3165, 16
        %v3261 = vrot.slane %v3259, 5
        %v3262 = vor.u32 %v3258, %v3261
        %v3263 = vrot.slane %v3262, 4
        %v3265 = vshll.u32 %v3166, 16
        %v3267 = vrot.slane %v3265, 5
        %v3268 = vsel %vm1087, %v3263, %v3267
        %v3269 = vshrl.u32 %v3166, 16
        %v3271 = vrot.slane %v3269, 4
        %v3272 = vor.u32 %v3271, %v3267
        %v3273 = vrot.slane %v3272, 4
        %v3275 = vshll.u32 %v3167, 16
        %v3277 = vrot.slane %v3275, 5
        %v3278 = vsel %vm1087, %v3273, %v3277
        %v3280 = vshrl.u32 %v3168, 16
        %v3282 = vrot.slane %v3280, 4
        %v3283 = vshll.u32 %v3168, 16
        %v3285 = vrot.slane %v3283, 5
        %v3286 = vor.u32 %v3282, %v3285
        %v3287 = vrot.slane %v3286, 4
        %v3289 = vshll.u32 %v3169, 16
        %v3291 = vrot.slane %v3289, 5
        %v3292 = vsel %vm1087, %v3287, %v3291
        %v3293 = vshrl.u32 %v3169, 16
        %v3295 = vrot.slane %v3293, 4
        %v3296 = vor.u32 %v3295, %v3291
        %v3297 = vrot.slane %v3296, 4
        %v3299 = vshll.u32 %v3170, 16
        %v3301 = vrot.slane %v3299, 5
        %v3302 = vsel %vm1087, %v3297, %v3301
        %v3304 = vshrl.u32 %v3171, 16
        %v3306 = vrot.slane %v3304, 4
        %v3307 = vshll.u32 %v3171, 16
        %v3309 = vrot.slane %v3307, 5
        %v3310 = vor.u32 %v3306, %v3309
        %v3311 = vrot.slane %v3310, 4
        %v3313 = vshll.u32 %v3172, 16
        %v3315 = vrot.slane %v3313, 5
        %v3316 = vsel %vm1087, %v3311, %v3315
        %v3317 = vshrl.u32 %v3172, 16
        %v3319 = vrot.slane %v3317, 4
        %v3320 = vor.u32 %v3319, %v3315
        %v3321 = vrot.slane %v3320, 4
        %v3323 = vshll.u32 %v3173, 16
        %v3325 = vrot.slane %v3323, 5
        %v3326 = vsel %vm1087, %v3321, %v3325
        %v3328 = vshrl.u32 %v3174, 16
        %v3330 = vrot.slane %v3328, 4
        %v3331 = vshll.u32 %v3174, 16
        %v3333 = vrot.slane %v3331, 5
        %v3334 = vor.u32 %v3330, %v3333
        %v3335 = vrot.slane %v3334, 4
        %v3337 = vshll.u32 %v3175, 16
        %v3339 = vrot.slane %v3337, 5
        %v3340 = vsel %vm1087, %v3335, %v3339
        %v3341 = vshrl.u32 %v3175, 16
        %v3343 = vrot.slane %v3341, 4
        %v3344 = vor.u32 %v3343, %v3339
        %v3345 = vrot.slane %v3344, 4
        %v3347 = vshll.u32 %v3176, 16
        %v3349 = vrot.slane %v3347, 5
        %v3350 = vsel %vm1087, %v3345, %v3349
        %v3352 = vshrl.u32 %v3177, 16
        %v3354 = vrot.slane %v3352, 4
        %v3355 = vshll.u32 %v3177, 16
        %v3357 = vrot.slane %v3355, 5
        %v3358 = vor.u32 %v3354, %v3357
        %v3359 = vrot.slane %v3358, 4
        %v3361 = vshll.u32 %v3178, 16
        %v3363 = vrot.slane %v3361, 5
        %v3364 = vsel %vm1087, %v3359, %v3363
        %v3365 = vshrl.u32 %v3178, 16
        %v3367 = vrot.slane %v3365, 4
        %v3368 = vor.u32 %v3367, %v3363
        %v3369 = vrot.slane %v3368, 4
        %v3371 = vshll.u32 %v3179, 16
        %v3373 = vrot.slane %v3371, 5
        %v3374 = vsel %vm1087, %v3369, %v3373
        %v3376 = vshrl.u32 %v3180, 16
        %v3378 = vrot.slane %v3376, 4
        %v3379 = vshll.u32 %v3180, 16
        %v3381 = vrot.slane %v3379, 5
        %v3382 = vor.u32 %v3378, %v3381
        %v3383 = vrot.slane %v3382, 4
        %v3385 = vshll.u32 %v3181, 16
        %v3387 = vrot.slane %v3385, 5
        %v3388 = vsel %vm1087, %v3383, %v3387
        %v3389 = vshrl.u32 %v3181, 16
        %v3391 = vrot.slane %v3389, 4
        %v3392 = vor.u32 %v3391, %v3387
        %v3393 = vrot.slane %v3392, 4
        %v3395 = vshll.u32 %v3182, 16
        %v3397 = vrot.slane %v3395, 5
        %v3398 = vsel %vm1087, %v3393, %v3397
        %v3400 = vshrl.u32 %v3183, 16
        %v3402 = vrot.slane %v3400, 4
        %v3403 = vshll.u32 %v3183, 16
        %v3405 = vrot.slane %v3403, 5
        %v3406 = vor.u32 %v3402, %v3405
        %v3407 = vrot.slane %v3406, 4
        %v3409 = vshll.u32 %v3184, 16
        %v3411 = vrot.slane %v3409, 5
        %v3412 = vsel %vm1087, %v3407, %v3411
        %v3413 = vshrl.u32 %v3184, 16
        %v3415 = vrot.slane %v3413, 4
        %v3416 = vor.u32 %v3415, %v3411
        %v3417 = vrot.slane %v3416, 4
        %v3419 = vshll.u32 %v3185, 16
        %v3421 = vrot.slane %v3419, 5
        %v3422 = vsel %vm1087, %v3417, %v3421
        %v3424 = vshrl.u32 %v3186, 16
        %v3426 = vrot.slane %v3424, 4
        %v3427 = vshll.u32 %v3186, 16
        %v3429 = vrot.slane %v3427, 5
        %v3430 = vor.u32 %v3426, %v3429
        %v3431 = vrot.slane %v3430, 4
        %v3433 = vshll.u32 %v3187, 16
        %v3435 = vrot.slane %v3433, 5
        %v3436 = vsel %vm1087, %v3431, %v3435
        %v3437 = vshrl.u32 %v3187, 16
        %v3439 = vrot.slane %v3437, 4
        %v3440 = vor.u32 %v3439, %v3435
        %v3441 = vrot.slane %v3440, 4
        %v3443 = vshll.u32 %v3188, 16
        %v3445 = vrot.slane %v3443, 5
        %v3446 = vsel %vm1087, %v3441, %v3445
        %v3448 = vshrl.u32 %v3189, 16
        %v3450 = vrot.slane %v3448, 4
        %v3451 = vshll.u32 %v3189, 16
        %v3453 = vrot.slane %v3451, 5
        %v3454 = vor.u32 %v3450, %v3453
        %v3455 = vrot.slane %v3454, 4
        %v3457 = vshll.u32 %v3190, 16
        %v3459 = vrot.slane %v3457, 5
        %v3460 = vsel %vm1087, %v3455, %v3459
        %v3461 = vshrl.u32 %v3190, 16
        %v3463 = vrot.slane %v3461, 4
        %v3464 = vor.u32 %v3463, %v3459
        %v3465 = vrot.slane %v3464, 4
        %v3467 = vshll.u32 %v3191, 16
        %v3469 = vrot.slane %v3467, 5
        %v3470 = vsel %vm1087, %v3465, %v3469
        %v3472 = vshrl.u32 %v3192, 16
        %v3474 = vrot.slane %v3472, 4
        %v3475 = vshll.u32 %v3192, 16
        %v3477 = vrot.slane %v3475, 5
        %v3478 = vor.u32 %v3474, %v3477
        %v3479 = vrot.slane %v3478, 4
        %v3481 = vshll.u32 %v3193, 16
        %v3483 = vrot.slane %v3481, 5
        %v3484 = vsel %vm1087, %v3479, %v3483
        %v3485 = vshrl.u32 %v3193, 16
        %v3487 = vrot.slane %v3485, 4
        %v3488 = vor.u32 %v3487, %v3483
        %v3489 = vrot.slane %v3488, 4
        %v3491 = vshll.u32 %v3194, 16
        %v3493 = vrot.slane %v3491, 5
        %v3494 = vsel %vm1087, %v3489, %v3493
        %v3496 = vshrl.u32 %v3195, 16
        %v3498 = vrot.slane %v3496, 4
        %v3499 = vshll.u32 %v3195, 16
        %v3501 = vrot.slane %v3499, 5
        %v3502 = vor.u32 %v3498, %v3501
        %v3503 = vrot.slane %v3502, 4
        %v3505 = vshll.u32 %v3196, 16
        %v3507 = vrot.slane %v3505, 5
        %v3508 = vsel %vm1087, %v3503, %v3507
        %v3509 = vshrl.u32 %v3196, 16
        %v3511 = vrot.slane %v3509, 4
        %v3512 = vor.u32 %v3511, %v3507
        %v3513 = vrot.slane %v3512, 4
        %v3515 = vshll.u32 %v3197, 16
        %v3517 = vrot.slane %v3515, 5
        %v3518 = vsel %vm1087, %v3513, %v3517
        %v3520 = vshrl.u32 %v3198, 16
        %v3522 = vrot.slane %v3520, 4
        %v3523 = vshll.u32 %v3198, 16
        %v3525 = vrot.slane %v3523, 5
        %v3526 = vor.u32 %v3522, %v3525
        %v3527 = vrot.slane %v3526, 4
        %v3529 = vshll.u32 %v3199, 16
        %v3531 = vrot.slane %v3529, 5
        %v3532 = vsel %vm1087, %v3527, %v3531
        %v3533 = vshrl.u32 %v3199, 16
        %v3535 = vrot.slane %v3533, 4
        %v3536 = vor.u32 %v3535, %v3531
        %v3537 = vrot.slane %v3536, 4
        %v3539 = vshll.u32 %v3200, 16
        %v3541 = vrot.slane %v3539, 5
        %v3542 = vsel %vm1087, %v3537, %v3541
        %v3544 = vshrl.u32 %v3201, 16
        %v3546 = vrot.slane %v3544, 4
        %v3547 = vshll.u32 %v3201, 16
        %v3549 = vrot.slane %v3547, 5
        %v3550 = vor.u32 %v3546, %v3549
        %v3551 = vrot.slane %v3550, 4
        %v3553 = vshll.u32 %v3202, 16
        %v3555 = vrot.slane %v3553, 5
        %v3556 = vsel %vm1087, %v3551, %v3555
        %v3557 = vshrl.u32 %v3202, 16
        %v3559 = vrot.slane %v3557, 4
        %v3560 = vor.u32 %v3559, %v3555
        %v3561 = vrot.slane %v3560, 4
        %v3563 = vshll.u32 %v3203, 16
        %v3565 = vrot.slane %v3563, 5
        %v3566 = vsel %vm1087, %v3561, %v3565
        %v3568 = vshrl.u32 %v3204, 16
        %v3570 = vrot.slane %v3568, 4
        %v3571 = vshll.u32 %v3204, 16
        %v3573 = vrot.slane %v3571, 5
        %v3574 = vor.u32 %v3570, %v3573
        %v3575 = vrot.slane %v3574, 4
        %v3577 = vshll.u32 %v3205, 16
        %v3579 = vrot.slane %v3577, 5
        %v3580 = vsel %vm1087, %v3575, %v3579
        %v3581 = vshrl.u32 %v3205, 16
        %v3583 = vrot.slane %v3581, 4
        %v3584 = vor.u32 %v3583, %v3579
        %v3585 = vrot.slane %v3584, 4
        %v3587 = vshll.u32 %v3206, 16
        %v3589 = vrot.slane %v3587, 5
        %v3590 = vsel %vm1087, %v3585, %v3589
        %3591 = vrot.lane.b32.xlu0 %v3220, 96
        %v3592 = vpop.permute.xlu0 %3591
        %3593 = vrot.lane.b32.xlu0 %v3230, 96
        %v3594 = vpop.permute.xlu0 %3593
        %3595 = vrot.lane.b32.xlu0 %v3244, 96
        %v3596 = vpop.permute.xlu0 %3595
        %3597 = vrot.lane.b32.xlu0 %v3254, 96
        %v3598 = vpop.permute.xlu0 %3597
        %3599 = vrot.lane.b32.xlu0 %v3268, 96
        %v3600 = vpop.permute.xlu0 %3599
        %3601 = vrot.lane.b32.xlu0 %v3278, 96
        %v3602 = vpop.permute.xlu0 %3601
        %3603 = vrot.lane.b32.xlu0 %v3292, 96
        %v3604 = vpop.permute.xlu0 %3603
        %3605 = vrot.lane.b32.xlu0 %v3302, 96
        %v3606 = vpop.permute.xlu0 %3605
        %3607 = vrot.lane.b32.xlu0 %v3316, 96
        %v3608 = vpop.permute.xlu0 %3607
        %3609 = vrot.lane.b32.xlu0 %v3326, 96
        %v3610 = vpop.permute.xlu0 %3609
        %3611 = vrot.lane.b32.xlu0 %v3340, 96
        %v3612 = vpop.permute.xlu0 %3611
        %3613 = vrot.lane.b32.xlu0 %v3350, 96
        %v3614 = vpop.permute.xlu0 %3613
        %3615 = vrot.lane.b32.xlu0 %v3364, 96
        %v3616 = vpop.permute.xlu0 %3615
        %3617 = vrot.lane.b32.xlu0 %v3374, 96
        %v3618 = vpop.permute.xlu0 %3617
        %3619 = vrot.lane.b32.xlu0 %v3388, 96
        %v3620 = vpop.permute.xlu0 %3619
        %3621 = vrot.lane.b32.xlu0 %v3398, 96
        %v3622 = vpop.permute.xlu0 %3621
        %3623 = vrot.lane.b32.xlu0 %v3412, 96
        %v3624 = vpop.permute.xlu0 %3623
        %3625 = vrot.lane.b32.xlu0 %v3422, 96
        %v3626 = vpop.permute.xlu0 %3625
        %3627 = vrot.lane.b32.xlu0 %v3436, 96
        %v3628 = vpop.permute.xlu0 %3627
        %3629 = vrot.lane.b32.xlu0 %v3446, 96
        %v3630 = vpop.permute.xlu0 %3629
        %3631 = vrot.lane.b32.xlu0 %v3460, 96
        %v3632 = vpop.permute.xlu0 %3631
        %3633 = vrot.lane.b32.xlu0 %v3470, 96
        %v3634 = vpop.permute.xlu0 %3633
        %3635 = vrot.lane.b32.xlu0 %v3484, 96
        %v3636 = vpop.permute.xlu0 %3635
        %3637 = vrot.lane.b32.xlu0 %v3494, 96
        %v3638 = vpop.permute.xlu0 %3637
        %3639 = vrot.lane.b32.xlu0 %v3508, 96
        %v3640 = vpop.permute.xlu0 %3639
        %3641 = vrot.lane.b32.xlu0 %v3518, 96
        %v3642 = vpop.permute.xlu0 %3641
        %3643 = vrot.lane.b32.xlu0 %v3532, 96
        %v3644 = vpop.permute.xlu0 %3643
        %3645 = vrot.lane.b32.xlu0 %v3542, 96
        %v3646 = vpop.permute.xlu0 %3645
        %3647 = vrot.lane.b32.xlu0 %v3556, 96
        %v3648 = vpop.permute.xlu0 %3647
        %3649 = vrot.lane.b32.xlu0 %v3566, 96
        %v3650 = vpop.permute.xlu0 %3649
        %3651 = vrot.lane.b32.xlu0 %v3580, 96
        %v3652 = vpop.permute.xlu0 %3651
        %3653 = vrot.lane.b32.xlu0 %v3590, 96
        %v3654 = vpop.permute.xlu0 %3653
        %3687 = vst.msk [vmem:[#allocation3 + $0x4] sm:$0xf] %vm2101, %v3592
        %3688 = vst.msk [vmem:[#allocation3 + $0x10] sm:$0xf] %vm2101, %v3594
        %3689 = vst.msk [vmem:[#allocation3 + $0x1c] sm:$0xf] %vm2101, %v3596
        %3690 = vst.msk [vmem:[#allocation3 + $0x28] sm:$0xf] %vm2101, %v3598
        %3691 = vst.msk [vmem:[#allocation3 + $0x34] sm:$0xf] %vm2101, %v3600
        %3692 = vst.msk [vmem:[#allocation3 + $0x40] sm:$0xf] %vm2101, %v3602
        %3693 = vst.msk [vmem:[#allocation3 + $0x4c] sm:$0xf] %vm2101, %v3604
        %3694 = vst.msk [vmem:[#allocation3 + $0x58] sm:$0xf] %vm2101, %v3606
        %3695 = vst.msk [vmem:[#allocation3 + $0x64] sm:$0xf] %vm2101, %v3608
        %3696 = vst.msk [vmem:[#allocation3 + $0x70] sm:$0xf] %vm2101, %v3610
        %3697 = vst.msk [vmem:[#allocation3 + $0x7c] sm:$0xf] %vm2101, %v3612
        %3698 = vst.msk [vmem:[#allocation3 + $0x88] sm:$0xf] %vm2101, %v3614
        %3699 = vst.msk [vmem:[#allocation3 + $0x94] sm:$0xf] %vm2101, %v3616
        %3700 = vst.msk [vmem:[#allocation3 + $0xa0] sm:$0xf] %vm2101, %v3618
        %3701 = vst.msk [vmem:[#allocation3 + $0xac] sm:$0xf] %vm2101, %v3620
        %3702 = vst.msk [vmem:[#allocation3 + $0xb8] sm:$0xf] %vm2101, %v3622
        %3703 = vst.msk [vmem:[#allocation3 + $0xc4] sm:$0xf] %vm2101, %v3624
        %3704 = vst.msk [vmem:[#allocation3 + $0xd0] sm:$0xf] %vm2101, %v3626
        %3705 = vst.msk [vmem:[#allocation3 + $0xdc] sm:$0xf] %vm2101, %v3628
        %3706 = vst.msk [vmem:[#allocation3 + $0xe8] sm:$0xf] %vm2101, %v3630
        %3707 = vst.msk [vmem:[#allocation3 + $0xf4] sm:$0xf] %vm2101, %v3632
        %3708 = vst.msk [vmem:[#allocation3 + $0x100] sm:$0xf] %vm2101, %v3634
        %3709 = vst.msk [vmem:[#allocation3 + $0x10c] sm:$0xf] %vm2101, %v3636
        %3710 = vst.msk [vmem:[#allocation3 + $0x118] sm:$0xf] %vm2101, %v3638
        %3711 = vst.msk [vmem:[#allocation3 + $0x124] sm:$0xf] %vm2101, %v3640
        %3712 = vst.msk [vmem:[#allocation3 + $0x130] sm:$0xf] %vm2101, %v3642
        %3713 = vst.msk [vmem:[#allocation3 + $0x13c] sm:$0xf] %vm2101, %v3644
        %3714 = vst.msk [vmem:[#allocation3 + $0x148] sm:$0xf] %vm2101, %v3646
        %3715 = vst.msk [vmem:[#allocation3 + $0x154] sm:$0xf] %vm2101, %v3648
        %3716 = vst.msk [vmem:[#allocation3 + $0x160] sm:$0xf] %vm2101, %v3650
        %3717 = vst.msk [vmem:[#allocation3 + $0x16c] sm:$0xf] %vm2101, %v3652
        %3718 = vst.msk [vmem:[#allocation3 + $0x178] sm:$0xf] %vm2101, %v3654
        %v3719 = vld [vmem:[%s2966] sm:$0xe]
        %v3720 = vld [vmem:[%s2966 + $0x4] sm:$0xf]
        %v3721 = vld [vmem:[%s2966 + $0x8] sm:$0x1]
        %v3722 = vld [vmem:[%s2966 + $0xc] sm:$0xe]
        %v3723 = vld [vmem:[%s2966 + $0x10] sm:$0xf]
        %v3724 = vld [vmem:[%s2966 + $0x14] sm:$0x1]
        %v3725 = vld [vmem:[%s2966 + $0x18] sm:$0xe]
        %v3726 = vld [vmem:[%s2966 + $0x1c] sm:$0xf]
        %v3727 = vld [vmem:[%s2966 + $0x20] sm:$0x1]
        %v3728 = vld [vmem:[%s2966 + $0x24] sm:$0xe]
        %v3729 = vld [vmem:[%s2966 + $0x28] sm:$0xf]
        %v3730 = vld [vmem:[%s2966 + $0x2c] sm:$0x1]
        %v3731 = vld [vmem:[%s2966 + $0x30] sm:$0xe]
        %v3732 = vld [vmem:[%s2966 + $0x34] sm:$0xf]
        %v3733 = vld [vmem:[%s2966 + $0x38] sm:$0x1]
        %v3734 = vld [vmem:[%s2966 + $0x3c] sm:$0xe]
        %v3735 = vld [vmem:[%s2966 + $0x40] sm:$0xf]
        %v3736 = vld [vmem:[%s2966 + $0x44] sm:$0x1]
        %v3737 = vld [vmem:[%s2966 + $0x48] sm:$0xe]
        %v3738 = vld [vmem:[%s2966 + $0x4c] sm:$0xf]
        %v3739 = vld [vmem:[%s2966 + $0x50] sm:$0x1]
        %v3740 = vld [vmem:[%s2966 + $0x54] sm:$0xe]
        %v3741 = vld [vmem:[%s2966 + $0x58] sm:$0xf]
        %v3742 = vld [vmem:[%s2966 + $0x5c] sm:$0x1]
        %v3743 = vld [vmem:[%s2966 + $0x60] sm:$0xe]
        %v3744 = vld [vmem:[%s2966 + $0x64] sm:$0xf]
        %v3745 = vld [vmem:[%s2966 + $0x68] sm:$0x1]
        %v3746 = vld [vmem:[%s2966 + $0x6c] sm:$0xe]
        %v3747 = vld [vmem:[%s2966 + $0x70] sm:$0xf]
        %v3748 = vld [vmem:[%s2966 + $0x74] sm:$0x1]
        %v3749 = vld [vmem:[%s2966 + $0x78] sm:$0xe]
        %v3750 = vld [vmem:[%s2966 + $0x7c] sm:$0xf]
        %v3751 = vld [vmem:[%s2966 + $0x80] sm:$0x1]
        %v3752 = vld [vmem:[%s2966 + $0x84] sm:$0xe]
        %v3753 = vld [vmem:[%s2966 + $0x88] sm:$0xf]
        %v3754 = vld [vmem:[%s2966 + $0x8c] sm:$0x1]
        %v3755 = vld [vmem:[%s2966 + $0x90] sm:$0xe]
        %v3756 = vld [vmem:[%s2966 + $0x94] sm:$0xf]
        %v3757 = vld [vmem:[%s2966 + $0x98] sm:$0x1]
        %v3758 = vld [vmem:[%s2966 + $0x9c] sm:$0xe]
        %v3759 = vld [vmem:[%s2966 + $0xa0] sm:$0xf]
        %v3760 = vld [vmem:[%s2966 + $0xa4] sm:$0x1]
        %v3761 = vld [vmem:[%s2966 + $0xa8] sm:$0xe]
        %v3762 = vld [vmem:[%s2966 + $0xac] sm:$0xf]
        %v3763 = vld [vmem:[%s2966 + $0xb0] sm:$0x1]
        %v3764 = vld [vmem:[%s2966 + $0xb4] sm:$0xe]
        %v3765 = vld [vmem:[%s2966 + $0xb8] sm:$0xf]
        %v3766 = vld [vmem:[%s2966 + $0xbc] sm:$0x1]
        %v3815 = vrot.slane %v3719, 5
        %v3816 = vrot.slane %v3815, 4
        %v3817 = vrot.slane %v3720, 5
        %v3818 = vsel %vm1699, %v3816, %v3817
        %v3819 = vrot.slane %v3817, 4
        %v3820 = vrot.slane %v3721, 5
        %v3821 = vsel %vm1699, %v3819, %v3820
        %v3822 = vrot.slane %v3722, 5
        %v3823 = vrot.slane %v3822, 4
        %v3824 = vrot.slane %v3723, 5
        %v3825 = vsel %vm1699, %v3823, %v3824
        %v3826 = vrot.slane %v3824, 4
        %v3827 = vrot.slane %v3724, 5
        %v3828 = vsel %vm1699, %v3826, %v3827
        %v3829 = vrot.slane %v3725, 5
        %v3830 = vrot.slane %v3829, 4
        %v3831 = vrot.slane %v3726, 5
        %v3832 = vsel %vm1699, %v3830, %v3831
        %v3833 = vrot.slane %v3831, 4
        %v3834 = vrot.slane %v3727, 5
        %v3835 = vsel %vm1699, %v3833, %v3834
        %v3836 = vrot.slane %v3728, 5
        %v3837 = vrot.slane %v3836, 4
        %v3838 = vrot.slane %v3729, 5
        %v3839 = vsel %vm1699, %v3837, %v3838
        %v3840 = vrot.slane %v3838, 4
        %v3841 = vrot.slane %v3730, 5
        %v3842 = vsel %vm1699, %v3840, %v3841
        %v3843 = vrot.slane %v3731, 5
        %v3844 = vrot.slane %v3843, 4
        %v3845 = vrot.slane %v3732, 5
        %v3846 = vsel %vm1699, %v3844, %v3845
        %v3847 = vrot.slane %v3845, 4
        %v3848 = vrot.slane %v3733, 5
        %v3849 = vsel %vm1699, %v3847, %v3848
        %v3850 = vrot.slane %v3734, 5
        %v3851 = vrot.slane %v3850, 4
        %v3852 = vrot.slane %v3735, 5
        %v3853 = vsel %vm1699, %v3851, %v3852
        %v3854 = vrot.slane %v3852, 4
        %v3855 = vrot.slane %v3736, 5
        %v3856 = vsel %vm1699, %v3854, %v3855
        %v3857 = vrot.slane %v3737, 5
        %v3858 = vrot.slane %v3857, 4
        %v3859 = vrot.slane %v3738, 5
        %v3860 = vsel %vm1699, %v3858, %v3859
        %v3861 = vrot.slane %v3859, 4
        %v3862 = vrot.slane %v3739, 5
        %v3863 = vsel %vm1699, %v3861, %v3862
        %v3864 = vrot.slane %v3740, 5
        %v3865 = vrot.slane %v3864, 4
        %v3866 = vrot.slane %v3741, 5
        %v3867 = vsel %vm1699, %v3865, %v3866
        %v3868 = vrot.slane %v3866, 4
        %v3869 = vrot.slane %v3742, 5
        %v3870 = vsel %vm1699, %v3868, %v3869
        %v3871 = vrot.slane %v3743, 5
        %v3872 = vrot.slane %v3871, 4
        %v3873 = vrot.slane %v3744, 5
        %v3874 = vsel %vm1699, %v3872, %v3873
        %v3875 = vrot.slane %v3873, 4
        %v3876 = vrot.slane %v3745, 5
        %v3877 = vsel %vm1699, %v3875, %v3876
        %v3878 = vrot.slane %v3746, 5
        %v3879 = vrot.slane %v3878, 4
        %v3880 = vrot.slane %v3747, 5
        %v3881 = vsel %vm1699, %v3879, %v3880
        %v3882 = vrot.slane %v3880, 4
        %v3883 = vrot.slane %v3748, 5
        %v3884 = vsel %vm1699, %v3882, %v3883
        %v3885 = vrot.slane %v3749, 5
        %v3886 = vrot.slane %v3885, 4
        %v3887 = vrot.slane %v3750, 5
        %v3888 = vsel %vm1699, %v3886, %v3887
        %v3889 = vrot.slane %v3887, 4
        %v3890 = vrot.slane %v3751, 5
        %v3891 = vsel %vm1699, %v3889, %v3890
        %v3892 = vrot.slane %v3752, 5
        %v3893 = vrot.slane %v3892, 4
        %v3894 = vrot.slane %v3753, 5
        %v3895 = vsel %vm1699, %v3893, %v3894
        %v3896 = vrot.slane %v3894, 4
        %v3897 = vrot.slane %v3754, 5
        %v3898 = vsel %vm1699, %v3896, %v3897
        %v3899 = vrot.slane %v3755, 5
        %v3900 = vrot.slane %v3899, 4
        %v3901 = vrot.slane %v3756, 5
        %v3902 = vsel %vm1699, %v3900, %v3901
        %v3903 = vrot.slane %v3901, 4
        %v3904 = vrot.slane %v3757, 5
        %v3905 = vsel %vm1699, %v3903, %v3904
        %v3906 = vrot.slane %v3758, 5
        %v3907 = vrot.slane %v3906, 4
        %v3908 = vrot.slane %v3759, 5
        %v3909 = vsel %vm1699, %v3907, %v3908
        %v3910 = vrot.slane %v3908, 4
        %v3911 = vrot.slane %v3760, 5
        %v3912 = vsel %vm1699, %v3910, %v3911
        %v3913 = vrot.slane %v3761, 5
        %v3914 = vrot.slane %v3913, 4
        %v3915 = vrot.slane %v3762, 5
        %v3916 = vsel %vm1699, %v3914, %v3915
        %v3917 = vrot.slane %v3915, 4
        %v3918 = vrot.slane %v3763, 5
        %v3919 = vsel %vm1699, %v3917, %v3918
        %v3920 = vrot.slane %v3764, 5
        %v3921 = vrot.slane %v3920, 4
        %v3922 = vrot.slane %v3765, 5
        %v3923 = vsel %vm1699, %v3921, %v3922
        %v3924 = vrot.slane %v3922, 4
        %v3925 = vrot.slane %v3766, 5
        %v3926 = vsel %vm1699, %v3924, %v3925
        %3959 = vst.msk [vmem:[#allocation3 + $0x8] sm:$0xf] %vm394, %v3818
        %3960 = vst.msk [vmem:[#allocation3 + $0x14] sm:$0xf] %vm394, %v3821
        %3961 = vst.msk [vmem:[#allocation3 + $0x20] sm:$0xf] %vm394, %v3825
        %3962 = vst.msk [vmem:[#allocation3 + $0x2c] sm:$0xf] %vm394, %v3828
        %3963 = vst.msk [vmem:[#allocation3 + $0x38] sm:$0xf] %vm394, %v3832
        %3964 = vst.msk [vmem:[#allocation3 + $0x44] sm:$0xf] %vm394, %v3835
        %3965 = vst.msk [vmem:[#allocation3 + $0x50] sm:$0xf] %vm394, %v3839
        %3966 = vst.msk [vmem:[#allocation3 + $0x5c] sm:$0xf] %vm394, %v3842
        %3967 = vst.msk [vmem:[#allocation3 + $0x68] sm:$0xf] %vm394, %v3846
        %3968 = vst.msk [vmem:[#allocation3 + $0x74] sm:$0xf] %vm394, %v3849
        %3969 = vst.msk [vmem:[#allocation3 + $0x80] sm:$0xf] %vm394, %v3853
        %3970 = vst.msk [vmem:[#allocation3 + $0x8c] sm:$0xf] %vm394, %v3856
        %3971 = vst.msk [vmem:[#allocation3 + $0x98] sm:$0xf] %vm394, %v3860
        %3972 = vst.msk [vmem:[#allocation3 + $0xa4] sm:$0xf] %vm394, %v3863
        %3973 = vst.msk [vmem:[#allocation3 + $0xb0] sm:$0xf] %vm394, %v3867
        %3974 = vst.msk [vmem:[#allocation3 + $0xbc] sm:$0xf] %vm394, %v3870
        %3975 = vst.msk [vmem:[#allocation3 + $0xc8] sm:$0xf] %vm394, %v3874
        %3976 = vst.msk [vmem:[#allocation3 + $0xd4] sm:$0xf] %vm394, %v3877
        %3977 = vst.msk [vmem:[#allocation3 + $0xe0] sm:$0xf] %vm394, %v3881
        %3978 = vst.msk [vmem:[#allocation3 + $0xec] sm:$0xf] %vm394, %v3884
        %3979 = vst.msk [vmem:[#allocation3 + $0xf8] sm:$0xf] %vm394, %v3888
        %3980 = vst.msk [vmem:[#allocation3 + $0x104] sm:$0xf] %vm394, %v3891
        %3981 = vst.msk [vmem:[#allocation3 + $0x110] sm:$0xf] %vm394, %v3895
        %3982 = vst.msk [vmem:[#allocation3 + $0x11c] sm:$0xf] %vm394, %v3898
        %3983 = vst.msk [vmem:[#allocation3 + $0x128] sm:$0xf] %vm394, %v3902
        %3984 = vst.msk [vmem:[#allocation3 + $0x134] sm:$0xf] %vm394, %v3905
        %3985 = vst.msk [vmem:[#allocation3 + $0x140] sm:$0xf] %vm394, %v3909
        %3986 = vst.msk [vmem:[#allocation3 + $0x14c] sm:$0xf] %vm394, %v3912
        %3987 = vst.msk [vmem:[#allocation3 + $0x158] sm:$0xf] %vm394, %v3916
        %3988 = vst.msk [vmem:[#allocation3 + $0x164] sm:$0xf] %vm394, %v3919
        %3989 = vst.msk [vmem:[#allocation3 + $0x170] sm:$0xf] %vm394, %v3923
        %3990 = vst.msk [vmem:[#allocation3 + $0x17c] sm:$0xf] %vm394, %v3926
        %v3991 = vld [vmem:[#allocation3] sm:$0xff]
        %v3992 = vld [vmem:[#allocation3 + $0x8] sm:$0xf]
        %v3993 = vld [vmem:[#allocation3 + $0xc] sm:$0xff]
        %v3994 = vld [vmem:[#allocation3 + $0x14] sm:$0xf]
        %v3995 = vld [vmem:[#allocation3 + $0x18] sm:$0xff]
        %v3996 = vld [vmem:[#allocation3 + $0x20] sm:$0xf]
        %v3997 = vld [vmem:[#allocation3 + $0x24] sm:$0xff]
        %v3998 = vld [vmem:[#allocation3 + $0x2c] sm:$0xf]
        %v3999 = vld [vmem:[#allocation3 + $0x30] sm:$0xff]
        %v4000 = vld [vmem:[#allocation3 + $0x38] sm:$0xf]
        %v4001 = vld [vmem:[#allocation3 + $0x3c] sm:$0xff]
        %v4002 = vld [vmem:[#allocation3 + $0x44] sm:$0xf]
        %v4003 = vld [vmem:[#allocation3 + $0x48] sm:$0xff]
        %v4004 = vld [vmem:[#allocation3 + $0x50] sm:$0xf]
        %v4005 = vld [vmem:[#allocation3 + $0x54] sm:$0xff]
        %v4006 = vld [vmem:[#allocation3 + $0x5c] sm:$0xf]
        %v4007 = vld [vmem:[#allocation3 + $0x60] sm:$0xff]
        %v4008 = vld [vmem:[#allocation3 + $0x68] sm:$0xf]
        %v4009 = vld [vmem:[#allocation3 + $0x6c] sm:$0xff]
        %v4010 = vld [vmem:[#allocation3 + $0x74] sm:$0xf]
        %v4011 = vld [vmem:[#allocation3 + $0x78] sm:$0xff]
        %v4012 = vld [vmem:[#allocation3 + $0x80] sm:$0xf]
        %v4013 = vld [vmem:[#allocation3 + $0x84] sm:$0xff]
        %v4014 = vld [vmem:[#allocation3 + $0x8c] sm:$0xf]
        %v4015 = vld [vmem:[#allocation3 + $0x90] sm:$0xff]
        %v4016 = vld [vmem:[#allocation3 + $0x98] sm:$0xf]
        %v4017 = vld [vmem:[#allocation3 + $0x9c] sm:$0xff]
        %v4018 = vld [vmem:[#allocation3 + $0xa4] sm:$0xf]
        %v4019 = vld [vmem:[#allocation3 + $0xa8] sm:$0xff]
        %v4020 = vld [vmem:[#allocation3 + $0xb0] sm:$0xf]
        %v4021 = vld [vmem:[#allocation3 + $0xb4] sm:$0xff]
        %v4022 = vld [vmem:[#allocation3 + $0xbc] sm:$0xf]
        %v4023 = vld [vmem:[#allocation3 + $0xc0] sm:$0xff]
        %v4024 = vld [vmem:[#allocation3 + $0xc8] sm:$0xf]
        %v4025 = vld [vmem:[#allocation3 + $0xcc] sm:$0xff]
        %v4026 = vld [vmem:[#allocation3 + $0xd4] sm:$0xf]
        %v4027 = vld [vmem:[#allocation3 + $0xd8] sm:$0xff]
        %v4028 = vld [vmem:[#allocation3 + $0xe0] sm:$0xf]
        %v4029 = vld [vmem:[#allocation3 + $0xe4] sm:$0xff]
        %v4030 = vld [vmem:[#allocation3 + $0xec] sm:$0xf]
        %v4031 = vld [vmem:[#allocation3 + $0xf0] sm:$0xff]
        %v4032 = vld [vmem:[#allocation3 + $0xf8] sm:$0xf]
        %v4033 = vld [vmem:[#allocation3 + $0xfc] sm:$0xff]
        %v4034 = vld [vmem:[#allocation3 + $0x104] sm:$0xf]
        %v4035 = vld [vmem:[#allocation3 + $0x108] sm:$0xff]
        %v4036 = vld [vmem:[#allocation3 + $0x110] sm:$0xf]
        %v4037 = vld [vmem:[#allocation3 + $0x114] sm:$0xff]
        %v4038 = vld [vmem:[#allocation3 + $0x11c] sm:$0xf]
        %v4039 = vld [vmem:[#allocation3 + $0x120] sm:$0xff]
        %v4040 = vld [vmem:[#allocation3 + $0x128] sm:$0xf]
        %v4041 = vld [vmem:[#allocation3 + $0x12c] sm:$0xff]
        %v4042 = vld [vmem:[#allocation3 + $0x134] sm:$0xf]
        %v4043 = vld [vmem:[#allocation3 + $0x138] sm:$0xff]
        %v4044 = vld [vmem:[#allocation3 + $0x140] sm:$0xf]
        %v4045 = vld [vmem:[#allocation3 + $0x144] sm:$0xff]
        %v4046 = vld [vmem:[#allocation3 + $0x14c] sm:$0xf]
        %v4047 = vld [vmem:[#allocation3 + $0x150] sm:$0xff]
        %v4048 = vld [vmem:[#allocation3 + $0x158] sm:$0xf]
        %v4049 = vld [vmem:[#allocation3 + $0x15c] sm:$0xff]
        %v4050 = vld [vmem:[#allocation3 + $0x164] sm:$0xf]
        %v4051 = vld [vmem:[#allocation3 + $0x168] sm:$0xff]
        %v4052 = vld [vmem:[#allocation3 + $0x170] sm:$0xf]
        %v4053 = vld [vmem:[#allocation3 + $0x174] sm:$0xff]
        %v4054 = vld [vmem:[#allocation3 + $0x17c] sm:$0xf]
        %v4055 = vld [vmem:[%s1] sm:$0xf]
        %v4056 = vld [vmem:[%s1 + $0x4] sm:$0xf]
        %v4057 = vld [vmem:[%s1 + $0x8] sm:$0xf]
        %v4058 = vld [vmem:[%s1 + $0xc] sm:$0xf]
        %v4059 = vld [vmem:[%s1 + $0x10] sm:$0xf]
        %v4060 = vld [vmem:[%s1 + $0x14] sm:$0xf]
        %v4061 = vld [vmem:[%s1 + $0x18] sm:$0xf]
        %v4062 = vld [vmem:[%s1 + $0x1c] sm:$0xf]
        %v4063 = vld [vmem:[%s1 + $0x20] sm:$0xf]
        %v4064 = vld [vmem:[%s1 + $0x24] sm:$0xf]
        %v4065 = vld [vmem:[%s1 + $0x28] sm:$0xf]
        %v4066 = vld [vmem:[%s1 + $0x2c] sm:$0xf]
        %v4067 = vld [vmem:[%s1 + $0x30] sm:$0xf]
        %v4068 = vld [vmem:[%s1 + $0x34] sm:$0xf]
        %v4069 = vld [vmem:[%s1 + $0x38] sm:$0xf]
        %v4070 = vld [vmem:[%s1 + $0x3c] sm:$0xf]
        %v4071 = vld [vmem:[%s1 + $0x40] sm:$0xf]
        %v4072 = vld [vmem:[%s1 + $0x44] sm:$0xf]
        %v4073 = vld [vmem:[%s1 + $0x48] sm:$0xf]
        %v4074 = vld [vmem:[%s1 + $0x4c] sm:$0xf]
        %v4075 = vld [vmem:[%s1 + $0x50] sm:$0xf]
        %v4076 = vld [vmem:[%s1 + $0x54] sm:$0xf]
        %v4077 = vld [vmem:[%s1 + $0x58] sm:$0xf]
        %v4078 = vld [vmem:[%s1 + $0x5c] sm:$0xf]
        %v4079 = vld [vmem:[%s1 + $0x60] sm:$0xf]
        %v4080 = vld [vmem:[%s1 + $0x64] sm:$0xf]
        %v4081 = vld [vmem:[%s1 + $0x68] sm:$0xf]
        %v4082 = vld [vmem:[%s1 + $0x6c] sm:$0xf]
        %v4083 = vld [vmem:[%s1 + $0x70] sm:$0xf]
        %v4084 = vld [vmem:[%s1 + $0x74] sm:$0xf]
        %v4085 = vld [vmem:[%s1 + $0x78] sm:$0xf]
        %v4086 = vld [vmem:[%s1 + $0x7c] sm:$0xf]
        %v4087 = vld [vmem:[%s1 + $0x80] sm:$0xf]
        %v4088 = vld [vmem:[%s1 + $0x84] sm:$0xf]
        %v4089 = vld [vmem:[%s1 + $0x88] sm:$0xf]
        %v4090 = vld [vmem:[%s1 + $0x8c] sm:$0xf]
        %v4155 = vunpack.c.l.b16 %v3991
        %v4156 = vunpack.c.h.b16 %v3991
        %v4157 = vunpack.c.l.b16 %v3992
        %v4158 = vunpack.c.l.b16 %v3993
        %v4159 = vunpack.c.h.b16 %v3993
        %v4160 = vunpack.c.l.b16 %v3994
        %v4161 = vunpack.c.l.b16 %v3995
        %v4162 = vunpack.c.h.b16 %v3995
        %v4163 = vunpack.c.l.b16 %v3996
        %v4164 = vunpack.c.l.b16 %v3997
        %v4165 = vunpack.c.h.b16 %v3997
        %v4166 = vunpack.c.l.b16 %v3998
        %v4167 = vunpack.c.l.b16 %v3999
        %v4168 = vunpack.c.h.b16 %v3999
        %v4169 = vunpack.c.l.b16 %v4000
        %v4170 = vunpack.c.l.b16 %v4001
        %v4171 = vunpack.c.h.b16 %v4001
        %v4172 = vunpack.c.l.b16 %v4002
        %v4173 = vunpack.c.l.b16 %v4003
        %v4174 = vunpack.c.h.b16 %v4003
        %v4175 = vunpack.c.l.b16 %v4004
        %v4176 = vunpack.c.l.b16 %v4005
        %v4177 = vunpack.c.h.b16 %v4005
        %v4178 = vunpack.c.l.b16 %v4006
        %v4179 = vunpack.c.l.b16 %v4007
        %v4180 = vunpack.c.h.b16 %v4007
        %v4181 = vunpack.c.l.b16 %v4008
        %v4182 = vunpack.c.l.b16 %v4009
        %v4183 = vunpack.c.h.b16 %v4009
        %v4184 = vunpack.c.l.b16 %v4010
        %v4185 = vunpack.c.l.b16 %v4011
        %v4186 = vunpack.c.h.b16 %v4011
        %v4187 = vunpack.c.l.b16 %v4012
        %v4188 = vunpack.c.l.b16 %v4013
        %v4189 = vunpack.c.h.b16 %v4013
        %v4190 = vunpack.c.l.b16 %v4014
        %v4191 = vunpack.c.l.b16 %v4015
        %v4192 = vunpack.c.h.b16 %v4015
        %v4193 = vunpack.c.l.b16 %v4016
        %v4194 = vunpack.c.l.b16 %v4017
        %v4195 = vunpack.c.h.b16 %v4017
        %v4196 = vunpack.c.l.b16 %v4018
        %v4197 = vunpack.c.l.b16 %v4019
        %v4198 = vunpack.c.h.b16 %v4019
        %v4199 = vunpack.c.l.b16 %v4020
        %v4200 = vunpack.c.l.b16 %v4021
        %v4201 = vunpack.c.h.b16 %v4021
        %v4202 = vunpack.c.l.b16 %v4022
        %v4203 = vunpack.c.l.b16 %v4023
        %v4204 = vunpack.c.h.b16 %v4023
        %v4205 = vunpack.c.l.b16 %v4024
        %v4206 = vunpack.c.l.b16 %v4025
        %v4207 = vunpack.c.h.b16 %v4025
        %v4208 = vunpack.c.l.b16 %v4026
        %v4209 = vunpack.c.l.b16 %v4027
        %v4210 = vunpack.c.h.b16 %v4027
        %v4211 = vunpack.c.l.b16 %v4028
        %v4212 = vunpack.c.l.b16 %v4029
        %v4213 = vunpack.c.h.b16 %v4029
        %v4214 = vunpack.c.l.b16 %v4030
        %v4215 = vunpack.c.l.b16 %v4031
        %v4216 = vunpack.c.h.b16 %v4031
        %v4217 = vunpack.c.l.b16 %v4032
        %v4218 = vunpack.c.l.b16 %v4033
        %v4219 = vunpack.c.h.b16 %v4033
        %v4220 = vunpack.c.l.b16 %v4034
        %v4221 = vunpack.c.l.b16 %v4035
        %v4222 = vunpack.c.h.b16 %v4035
        %v4223 = vunpack.c.l.b16 %v4036
        %v4224 = vunpack.c.l.b16 %v4037
        %v4225 = vunpack.c.h.b16 %v4037
        %v4226 = vunpack.c.l.b16 %v4038
        %v4227 = vunpack.c.l.b16 %v4039
        %v4228 = vunpack.c.h.b16 %v4039
        %v4229 = vunpack.c.l.b16 %v4040
        %v4230 = vunpack.c.l.b16 %v4041
        %v4231 = vunpack.c.h.b16 %v4041
        %v4232 = vunpack.c.l.b16 %v4042
        %v4233 = vunpack.c.l.b16 %v4043
        %v4234 = vunpack.c.h.b16 %v4043
        %v4235 = vunpack.c.l.b16 %v4044
        %v4236 = vunpack.c.l.b16 %v4045
        %v4237 = vunpack.c.h.b16 %v4045
        %v4238 = vunpack.c.l.b16 %v4046
        %v4239 = vunpack.c.l.b16 %v4047
        %v4240 = vunpack.c.h.b16 %v4047
        %v4241 = vunpack.c.l.b16 %v4048
        %v4242 = vunpack.c.l.b16 %v4049
        %v4243 = vunpack.c.h.b16 %v4049
        %v4244 = vunpack.c.l.b16 %v4050
        %v4245 = vunpack.c.l.b16 %v4051
        %v4246 = vunpack.c.h.b16 %v4051
        %v4247 = vunpack.c.l.b16 %v4052
        %v4248 = vunpack.c.l.b16 %v4053
        %v4249 = vunpack.c.h.b16 %v4053
        %v4250 = vunpack.c.l.b16 %v4054
        %v4251 = vpack.c.b16 %v4158, %v4155
        %v4252 = vpack.c.b16 %v4159, %v4156
        %v4253 = vpack.c.b16 %v4160, %v4157
        %v4254 = vpack.c.b16 %v4164, %v4161
        %v4255 = vpack.c.b16 %v4165, %v4162
        %v4256 = vpack.c.b16 %v4166, %v4163
        %v4257 = vpack.c.b16 %v4170, %v4167
        %v4258 = vpack.c.b16 %v4171, %v4168
        %v4259 = vpack.c.b16 %v4172, %v4169
        %v4260 = vpack.c.b16 %v4176, %v4173
        %v4261 = vpack.c.b16 %v4177, %v4174
        %v4262 = vpack.c.b16 %v4178, %v4175
        %v4263 = vpack.c.b16 %v4182, %v4179
        %v4264 = vpack.c.b16 %v4183, %v4180
        %v4265 = vpack.c.b16 %v4184, %v4181
        %v4266 = vpack.c.b16 %v4188, %v4185
        %v4267 = vpack.c.b16 %v4189, %v4186
        %v4268 = vpack.c.b16 %v4190, %v4187
        %v4269 = vpack.c.b16 %v4194, %v4191
        %v4270 = vpack.c.b16 %v4195, %v4192
        %v4271 = vpack.c.b16 %v4196, %v4193
        %v4272 = vpack.c.b16 %v4200, %v4197
        %v4273 = vpack.c.b16 %v4201, %v4198
        %v4274 = vpack.c.b16 %v4202, %v4199
        %v4275 = vpack.c.b16 %v4206, %v4203
        %v4276 = vpack.c.b16 %v4207, %v4204
        %v4277 = vpack.c.b16 %v4208, %v4205
        %v4278 = vpack.c.b16 %v4212, %v4209
        %v4279 = vpack.c.b16 %v4213, %v4210
        %v4280 = vpack.c.b16 %v4214, %v4211
        %v4281 = vpack.c.b16 %v4218, %v4215
        %v4282 = vpack.c.b16 %v4219, %v4216
        %v4283 = vpack.c.b16 %v4220, %v4217
        %v4284 = vpack.c.b16 %v4224, %v4221
        %v4285 = vpack.c.b16 %v4225, %v4222
        %v4286 = vpack.c.b16 %v4226, %v4223
        %v4287 = vpack.c.b16 %v4230, %v4227
        %v4288 = vpack.c.b16 %v4231, %v4228
        %v4289 = vpack.c.b16 %v4232, %v4229
        %v4290 = vpack.c.b16 %v4236, %v4233
        %v4291 = vpack.c.b16 %v4237, %v4234
        %v4292 = vpack.c.b16 %v4238, %v4235
        %v4293 = vpack.c.b16 %v4242, %v4239
        %v4294 = vpack.c.b16 %v4243, %v4240
        %v4295 = vpack.c.b16 %v4244, %v4241
        %v4296 = vpack.c.b16 %v4248, %v4245
        %v4297 = vpack.c.b16 %v4249, %v4246
        %v4298 = vpack.c.b16 %v4250, %v4247
        %v4367 = vunpack.c.l.b16 %v4055
        %v4368 = vunpack.c.l.b16 %v4056
        %v4369 = vunpack.c.l.b16 %v4057
        %v4370 = vunpack.c.l.b16 %v4058
        %v4371 = vunpack.c.l.b16 %v4059
        %v4372 = vunpack.c.l.b16 %v4060
        %v4373 = vunpack.c.l.b16 %v4061
        %v4374 = vunpack.c.l.b16 %v4062
        %v4375 = vunpack.c.l.b16 %v4063
        %v4376 = vunpack.c.l.b16 %v4064
        %v4377 = vunpack.c.l.b16 %v4065
        %v4378 = vunpack.c.l.b16 %v4066
        %v4379 = vunpack.c.l.b16 %v4067
        %v4380 = vunpack.c.l.b16 %v4068
        %v4381 = vunpack.c.l.b16 %v4069
        %v4382 = vunpack.c.l.b16 %v4070
        %v4383 = vunpack.c.l.b16 %v4071
        %v4384 = vunpack.c.l.b16 %v4072
        %v4385 = vunpack.c.l.b16 %v4073
        %v4386 = vunpack.c.l.b16 %v4074
        %v4387 = vunpack.c.l.b16 %v4075
        %v4388 = vunpack.c.l.b16 %v4076
        %v4389 = vunpack.c.l.b16 %v4077
        %v4390 = vunpack.c.l.b16 %v4078
        %v4391 = vunpack.c.l.b16 %v4079
        %v4392 = vunpack.c.l.b16 %v4080
        %v4393 = vunpack.c.l.b16 %v4081
        %v4394 = vunpack.c.l.b16 %v4082
        %v4395 = vunpack.c.l.b16 %v4083
        %v4396 = vunpack.c.l.b16 %v4084
        %v4397 = vunpack.c.l.b16 %v4085
        %v4398 = vunpack.c.l.b16 %v4086
        %v4399 = vunpack.c.l.b16 %v4087
        %v4400 = vunpack.c.l.b16 %v4088
        %v4401 = vunpack.c.l.b16 %v4089
        %v4402 = vunpack.c.l.b16 %v4090
        %v4403 = vpack.c.b16 %v4368, %v4367
        %v4404 = vpack.c.b16 %v4370, %v4369
        %v4405 = vpack.c.b16 %v4372, %v4371
        %v4406 = vpack.c.b16 %v4374, %v4373
        %v4407 = vpack.c.b16 %v4376, %v4375
        %v4408 = vpack.c.b16 %v4378, %v4377
        %v4409 = vpack.c.b16 %v4380, %v4379
        %v4410 = vpack.c.b16 %v4382, %v4381
        %v4411 = vpack.c.b16 %v4384, %v4383
        %v4412 = vpack.c.b16 %v4386, %v4385
        %v4413 = vpack.c.b16 %v4388, %v4387
        %v4414 = vpack.c.b16 %v4390, %v4389
        %v4415 = vpack.c.b16 %v4392, %v4391
        %v4416 = vpack.c.b16 %v4394, %v4393
        %v4417 = vpack.c.b16 %v4396, %v4395
        %v4418 = vpack.c.b16 %v4398, %v4397
        %v4419 = vpack.c.b16 %v4400, %v4399
        %v4420 = vpack.c.b16 %v4402, %v4401
        %vm4439 = vcmask 261120
        %v4441 = vsel %vm4439, %v4253, 0
        %v4444 = vsel %vm4439, %v4256, 0
        %v4447 = vsel %vm4439, %v4259, 0
        %v4450 = vsel %vm4439, %v4262, 0
        %v4453 = vsel %vm4439, %v4265, 0
        %v4456 = vsel %vm4439, %v4268, 0
        %v4459 = vsel %vm4439, %v4271, 0
        %v4462 = vsel %vm4439, %v4274, 0
        %v4465 = vsel %vm4439, %v4277, 0
        %v4468 = vsel %vm4439, %v4280, 0
        %v4471 = vsel %vm4439, %v4283, 0
        %v4474 = vsel %vm4439, %v4286, 0
        %v4477 = vsel %vm4439, %v4289, 0
        %v4480 = vsel %vm4439, %v4292, 0
        %v4483 = vsel %vm4439, %v4295, 0
        %v4486 = vsel %vm4439, %v4298, 0
        %4488 = vmatprep.subr.bf16.mxu0 0
        %4489 = vmatpush1.bf16.msra.mxu0 %v4410
        %4490 = vmatprep.subr.bf16.mxu0 0
        %4491 = vmatpush1.bf16.msra.mxu0 %v4409
        %4492 = vmatprep.subr.bf16.mxu0 0
        %4493 = vmatpush1.bf16.msra.mxu0 %v4408
        %4494 = vmatprep.subr.bf16.mxu0 0
        %4495 = vmatpush1.bf16.msra.mxu0 %v4407
        %4496 = vmatprep.subr.bf16.mxu0 0
        %4497 = vmatpush1.bf16.msra.mxu0 %v4406
        %4498 = vmatprep.subr.bf16.mxu0 0
        %4499 = vmatpush1.bf16.msra.mxu0 %v4405
        %4500 = vmatprep.subr.bf16.mxu0 0
        %4501 = vmatpush1.bf16.msra.mxu0 %v4404
        %4502 = vmatprep.subr.bf16.mxu0 0
        %4503 = vmatpush1.bf16.msra.mxu0 %v4403
        %4504 = vmatprep.subr.bf16.mxu0 0
        %4505 = vmatpush2.bf16.msra.mxu0 %v4418
        %4506 = vmatprep.subr.bf16.mxu0 0
        %4507 = vmatpush2.bf16.msra.mxu0 %v4417
        %4508 = vmatprep.subr.bf16.mxu0 0
        %4509 = vmatpush2.bf16.msra.mxu0 %v4416
        %4510 = vmatprep.subr.bf16.mxu0 0
        %4511 = vmatpush2.bf16.msra.mxu0 %v4415
        %4512 = vmatprep.subr.bf16.mxu0 0
        %4513 = vmatpush2.bf16.msra.mxu0 %v4414
        %4514 = vmatprep.subr.bf16.mxu0 0
        %4515 = vmatpush2.bf16.msra.mxu0 %v4413
        %4516 = vmatprep.subr.bf16.mxu0 0
        %4517 = vmatpush2.bf16.msra.mxu0 %v4412
        %4518 = vmatprep.subr.bf16.mxu0 0
        %4519 = vmatpush2.bf16.msra.mxu0 %v4411
        %4520 = vmatprep.mubr.bf16.mxu0 %v4252
        %4521 = vmatmul.mubr.bf16.gmra.mxu0 %v4251
        %v4522 = vpop.f32.mrf.mxu0
        %v4523 = vadd.f32 0.0, %v4522
        %v4524 = vpop.f32.mrf.mxu0
        %v4525 = vpop.f32.mrf.mxu0
        %v4526 = vadd.f32 0.0, %v4525
        %v4527 = vpop.f32.mrf.mxu0
        %4528 = vmatprep.mubr.bf16.mxu0 %v4255
        %4529 = vmatmul.mubr.bf16.gmra.mxu0 %v4254
        %v4530 = vpop.f32.mrf.mxu0
        %v4531 = vadd.f32 0.0, %v4530
        %v4532 = vpop.f32.mrf.mxu0
        %v4533 = vpop.f32.mrf.mxu0
        %v4534 = vadd.f32 0.0, %v4533
        %v4535 = vpop.f32.mrf.mxu0
        %4536 = vmatprep.mubr.bf16.mxu0 %v4258
        %4537 = vmatmul.mubr.bf16.gmra.mxu0 %v4257
        %v4538 = vpop.f32.mrf.mxu0
        %v4539 = vadd.f32 0.0, %v4538
        %v4540 = vpop.f32.mrf.mxu0
        %v4541 = vpop.f32.mrf.mxu0
        %v4542 = vadd.f32 0.0, %v4541
        %v4543 = vpop.f32.mrf.mxu0
        %4544 = vmatprep.mubr.bf16.mxu0 %v4261
        %4545 = vmatmul.mubr.bf16.gmra.mxu0 %v4260
        %v4546 = vpop.f32.mrf.mxu0
        %v4547 = vadd.f32 0.0, %v4546
        %v4548 = vpop.f32.mrf.mxu0
        %v4549 = vpop.f32.mrf.mxu0
        %v4550 = vadd.f32 0.0, %v4549
        %v4551 = vpop.f32.mrf.mxu0
        %4552 = vmatprep.mubr.bf16.mxu0 %v4264
        %4553 = vmatmul.mubr.bf16.gmra.mxu0 %v4263
        %v4554 = vpop.f32.mrf.mxu0
        %v4555 = vadd.f32 0.0, %v4554
        %v4556 = vpop.f32.mrf.mxu0
        %v4557 = vpop.f32.mrf.mxu0
        %v4558 = vadd.f32 0.0, %v4557
        %v4559 = vpop.f32.mrf.mxu0
        %4560 = vmatprep.mubr.bf16.mxu0 %v4267
        %4561 = vmatmul.mubr.bf16.gmra.mxu0 %v4266
        %v4562 = vpop.f32.mrf.mxu0
        %v4563 = vadd.f32 0.0, %v4562
        %v4564 = vpop.f32.mrf.mxu0
        %v4565 = vpop.f32.mrf.mxu0
        %v4566 = vadd.f32 0.0, %v4565
        %v4567 = vpop.f32.mrf.mxu0
        %4568 = vmatprep.mubr.bf16.mxu0 %v4270
        %4569 = vmatmul.mubr.bf16.gmra.mxu0 %v4269
        %v4570 = vpop.f32.mrf.mxu0
        %v4571 = vadd.f32 0.0, %v4570
        %v4572 = vpop.f32.mrf.mxu0
        %v4573 = vpop.f32.mrf.mxu0
        %v4574 = vadd.f32 0.0, %v4573
        %v4575 = vpop.f32.mrf.mxu0
        %4576 = vmatprep.mubr.bf16.mxu0 %v4273
        %4577 = vmatmul.mubr.bf16.gmra.mxu0 %v4272
        %v4578 = vpop.f32.mrf.mxu0
        %v4579 = vadd.f32 0.0, %v4578
        %v4580 = vpop.f32.mrf.mxu0
        %v4581 = vpop.f32.mrf.mxu0
        %v4582 = vadd.f32 0.0, %v4581
        %v4583 = vpop.f32.mrf.mxu0
        %4584 = vmatprep.mubr.bf16.mxu0 %v4276
        %4585 = vmatmul.mubr.bf16.gmra.mxu0 %v4275
        %v4586 = vpop.f32.mrf.mxu0
        %v4587 = vadd.f32 0.0, %v4586
        %v4588 = vpop.f32.mrf.mxu0
        %v4589 = vpop.f32.mrf.mxu0
        %v4590 = vadd.f32 0.0, %v4589
        %v4591 = vpop.f32.mrf.mxu0
        %4592 = vmatprep.mubr.bf16.mxu0 %v4279
        %4593 = vmatmul.mubr.bf16.gmra.mxu0 %v4278
        %v4594 = vpop.f32.mrf.mxu0
        %v4595 = vadd.f32 0.0, %v4594
        %v4596 = vpop.f32.mrf.mxu0
        %v4597 = vpop.f32.mrf.mxu0
        %v4598 = vadd.f32 0.0, %v4597
        %v4599 = vpop.f32.mrf.mxu0
        %4600 = vmatprep.mubr.bf16.mxu0 %v4282
        %4601 = vmatmul.mubr.bf16.gmra.mxu0 %v4281
        %v4602 = vpop.f32.mrf.mxu0
        %v4603 = vadd.f32 0.0, %v4602
        %v4604 = vpop.f32.mrf.mxu0
        %v4605 = vpop.f32.mrf.mxu0
        %v4606 = vadd.f32 0.0, %v4605
        %v4607 = vpop.f32.mrf.mxu0
        %4608 = vmatprep.mubr.bf16.mxu0 %v4285
        %4609 = vmatmul.mubr.bf16.gmra.mxu0 %v4284
        %v4610 = vpop.f32.mrf.mxu0
        %v4611 = vadd.f32 0.0, %v4610
        %v4612 = vpop.f32.mrf.mxu0
        %v4613 = vpop.f32.mrf.mxu0
        %v4614 = vadd.f32 0.0, %v4613
        %v4615 = vpop.f32.mrf.mxu0
        %4616 = vmatprep.mubr.bf16.mxu0 %v4288
        %4617 = vmatmul.mubr.bf16.gmra.mxu0 %v4287
        %v4618 = vpop.f32.mrf.mxu0
        %v4619 = vadd.f32 0.0, %v4618
        %v4620 = vpop.f32.mrf.mxu0
        %v4621 = vpop.f32.mrf.mxu0
        %v4622 = vadd.f32 0.0, %v4621
        %v4623 = vpop.f32.mrf.mxu0
        %4624 = vmatprep.mubr.bf16.mxu0 %v4291
        %4625 = vmatmul.mubr.bf16.gmra.mxu0 %v4290
        %v4626 = vpop.f32.mrf.mxu0
        %v4627 = vadd.f32 0.0, %v4626
        %v4628 = vpop.f32.mrf.mxu0
        %v4629 = vpop.f32.mrf.mxu0
        %v4630 = vadd.f32 0.0, %v4629
        %v4631 = vpop.f32.mrf.mxu0
        %4632 = vmatprep.mubr.bf16.mxu0 %v4294
        %4633 = vmatmul.mubr.bf16.gmra.mxu0 %v4293
        %v4634 = vpop.f32.mrf.mxu0
        %v4635 = vadd.f32 0.0, %v4634
        %v4636 = vpop.f32.mrf.mxu0
        %v4637 = vpop.f32.mrf.mxu0
        %v4638 = vadd.f32 0.0, %v4637
        %v4639 = vpop.f32.mrf.mxu0
        %4640 = vmatprep.mubr.bf16.mxu0 %v4297
        %4641 = vmatmul.mubr.bf16.gmra.mxu0 %v4296
        %v4642 = vpop.f32.mrf.mxu0
        %v4643 = vadd.f32 0.0, %v4642
        %v4644 = vpop.f32.mrf.mxu0
        %v4645 = vpop.f32.mrf.mxu0
        %v4646 = vadd.f32 0.0, %v4645
        %v4647 = vpop.f32.mrf.mxu0
        %4648 = vdwg.mxu0
        %4649 = vmatprep.subr.bf16.mxu0 0
        %4650 = vmatpush1.bf16.msra.mxu0 0
        %4651 = vmatprep.subr.bf16.mxu0 0
        %4652 = vmatpush1.bf16.msra.mxu0 0
        %4653 = vmatprep.subr.bf16.mxu0 0
        %4654 = vmatpush1.bf16.msra.mxu0 0
        %4655 = vmatprep.subr.bf16.mxu0 0
        %4656 = vmatpush1.bf16.msra.mxu0 0
        %4657 = vmatprep.subr.bf16.mxu0 0
        %4658 = vmatpush1.bf16.msra.mxu0 0
        %4659 = vmatprep.subr.bf16.mxu0 0
        %4660 = vmatpush1.bf16.msra.mxu0 0
        %4661 = vmatprep.subr.bf16.mxu0 0
        %4662 = vmatpush1.bf16.msra.mxu0 %v4420
        %4663 = vmatprep.subr.bf16.mxu0 0
        %4664 = vmatpush1.bf16.msra.mxu0 %v4419
        %4665 = vmatprep.subr.bf16.mxu0 0
        %4666 = vmatpush2.bf16.msra.mxu0 0
        %4667 = vmatprep.subr.bf16.mxu0 0
        %4668 = vmatpush2.bf16.msra.mxu0 0
        %4669 = vmatprep.subr.bf16.mxu0 0
        %4670 = vmatpush2.bf16.msra.mxu0 0
        %4671 = vmatprep.subr.bf16.mxu0 0
        %4672 = vmatpush2.bf16.msra.mxu0 0
        %4673 = vmatprep.subr.bf16.mxu0 0
        %4674 = vmatpush2.bf16.msra.mxu0 0
        %4675 = vmatprep.subr.bf16.mxu0 0
        %4676 = vmatpush2.bf16.msra.mxu0 0
        %4677 = vmatprep.subr.bf16.mxu0 0
        %4678 = vmatpush2.bf16.msra.mxu0 0
        %4679 = vmatprep.subr.bf16.mxu0 0
        %4680 = vmatpush2.bf16.msra.mxu0 0
        %4681 = vmatprep.mubr.bf16.mxu0 0
        %4682 = vmatmul.mubr.bf16.gmra.mxu0 %v4441
        %v4683 = vpop.f32.mrf.mxu0
        %v4684 = vadd.f32 %v4523, %v4683
        %v4685 = vpop.f32.mrf.mxu0
        %v4686 = vpop.f32.mrf.mxu0
        %v4687 = vadd.f32 %v4526, %v4686
        %v4688 = vpop.f32.mrf.mxu0
        %4689 = vmatprep.mubr.bf16.mxu0 0
        %4690 = vmatmul.mubr.bf16.gmra.mxu0 %v4444
        %v4691 = vpop.f32.mrf.mxu0
        %v4692 = vadd.f32 %v4531, %v4691
        %v4693 = vpop.f32.mrf.mxu0
        %v4694 = vpop.f32.mrf.mxu0
        %v4695 = vadd.f32 %v4534, %v4694
        %v4696 = vpop.f32.mrf.mxu0
        %4697 = vmatprep.mubr.bf16.mxu0 0
        %4698 = vmatmul.mubr.bf16.gmra.mxu0 %v4447
        %v4699 = vpop.f32.mrf.mxu0
        %v4700 = vadd.f32 %v4539, %v4699
        %v4701 = vpop.f32.mrf.mxu0
        %v4702 = vpop.f32.mrf.mxu0
        %v4703 = vadd.f32 %v4542, %v4702
        %v4704 = vpop.f32.mrf.mxu0
        %4705 = vmatprep.mubr.bf16.mxu0 0
        %4706 = vmatmul.mubr.bf16.gmra.mxu0 %v4450
        %v4707 = vpop.f32.mrf.mxu0
        %v4708 = vadd.f32 %v4547, %v4707
        %v4709 = vpop.f32.mrf.mxu0
        %v4710 = vpop.f32.mrf.mxu0
        %v4711 = vadd.f32 %v4550, %v4710
        %v4712 = vpop.f32.mrf.mxu0
        %4713 = vmatprep.mubr.bf16.mxu0 0
        %4714 = vmatmul.mubr.bf16.gmra.mxu0 %v4453
        %v4715 = vpop.f32.mrf.mxu0
        %v4716 = vadd.f32 %v4555, %v4715
        %v4717 = vpop.f32.mrf.mxu0
        %v4718 = vpop.f32.mrf.mxu0
        %v4719 = vadd.f32 %v4558, %v4718
        %v4720 = vpop.f32.mrf.mxu0
        %4721 = vmatprep.mubr.bf16.mxu0 0
        %4722 = vmatmul.mubr.bf16.gmra.mxu0 %v4456
        %v4723 = vpop.f32.mrf.mxu0
        %v4724 = vadd.f32 %v4563, %v4723
        %v4725 = vpop.f32.mrf.mxu0
        %v4726 = vpop.f32.mrf.mxu0
        %v4727 = vadd.f32 %v4566, %v4726
        %v4728 = vpop.f32.mrf.mxu0
        %4729 = vmatprep.mubr.bf16.mxu0 0
        %4730 = vmatmul.mubr.bf16.gmra.mxu0 %v4459
        %v4731 = vpop.f32.mrf.mxu0
        %v4732 = vadd.f32 %v4571, %v4731
        %v4733 = vpop.f32.mrf.mxu0
        %v4734 = vpop.f32.mrf.mxu0
        %v4735 = vadd.f32 %v4574, %v4734
        %v4736 = vpop.f32.mrf.mxu0
        %4737 = vmatprep.mubr.bf16.mxu0 0
        %4738 = vmatmul.mubr.bf16.gmra.mxu0 %v4462
        %v4739 = vpop.f32.mrf.mxu0
        %v4740 = vadd.f32 %v4579, %v4739
        %v4741 = vpop.f32.mrf.mxu0
        %v4742 = vpop.f32.mrf.mxu0
        %v4743 = vadd.f32 %v4582, %v4742
        %v4744 = vpop.f32.mrf.mxu0
        %4745 = vmatprep.mubr.bf16.mxu0 0
        %4746 = vmatmul.mubr.bf16.gmra.mxu0 %v4465
        %v4747 = vpop.f32.mrf.mxu0
        %v4748 = vadd.f32 %v4587, %v4747
        %v4749 = vpop.f32.mrf.mxu0
        %v4750 = vpop.f32.mrf.mxu0
        %v4751 = vadd.f32 %v4590, %v4750
        %v4752 = vpop.f32.mrf.mxu0
        %4753 = vmatprep.mubr.bf16.mxu0 0
        %4754 = vmatmul.mubr.bf16.gmra.mxu0 %v4468
        %v4755 = vpop.f32.mrf.mxu0
        %v4756 = vadd.f32 %v4595, %v4755
        %v4757 = vpop.f32.mrf.mxu0
        %v4758 = vpop.f32.mrf.mxu0
        %v4759 = vadd.f32 %v4598, %v4758
        %v4760 = vpop.f32.mrf.mxu0
        %4761 = vmatprep.mubr.bf16.mxu0 0
        %4762 = vmatmul.mubr.bf16.gmra.mxu0 %v4471
        %v4763 = vpop.f32.mrf.mxu0
        %v4764 = vadd.f32 %v4603, %v4763
        %v4765 = vpop.f32.mrf.mxu0
        %v4766 = vpop.f32.mrf.mxu0
        %v4767 = vadd.f32 %v4606, %v4766
        %v4768 = vpop.f32.mrf.mxu0
        %4769 = vmatprep.mubr.bf16.mxu0 0
        %4770 = vmatmul.mubr.bf16.gmra.mxu0 %v4474
        %v4771 = vpop.f32.mrf.mxu0
        %v4772 = vadd.f32 %v4611, %v4771
        %v4773 = vpop.f32.mrf.mxu0
        %v4774 = vpop.f32.mrf.mxu0
        %v4775 = vadd.f32 %v4614, %v4774
        %v4776 = vpop.f32.mrf.mxu0
        %4777 = vmatprep.mubr.bf16.mxu0 0
        %4778 = vmatmul.mubr.bf16.gmra.mxu0 %v4477
        %v4779 = vpop.f32.mrf.mxu0
        %v4780 = vadd.f32 %v4619, %v4779
        %v4781 = vpop.f32.mrf.mxu0
        %v4782 = vpop.f32.mrf.mxu0
        %v4783 = vadd.f32 %v4622, %v4782
        %v4784 = vpop.f32.mrf.mxu0
        %4785 = vmatprep.mubr.bf16.mxu0 0
        %4786 = vmatmul.mubr.bf16.gmra.mxu0 %v4480
        %v4787 = vpop.f32.mrf.mxu0
        %v4788 = vadd.f32 %v4627, %v4787
        %v4789 = vpop.f32.mrf.mxu0
        %v4790 = vpop.f32.mrf.mxu0
        %v4791 = vadd.f32 %v4630, %v4790
        %v4792 = vpop.f32.mrf.mxu0
        %4793 = vmatprep.mubr.bf16.mxu0 0
        %4794 = vmatmul.mubr.bf16.gmra.mxu0 %v4483
        %v4795 = vpop.f32.mrf.mxu0
        %v4796 = vadd.f32 %v4635, %v4795
        %v4797 = vpop.f32.mrf.mxu0
        %v4798 = vpop.f32.mrf.mxu0
        %v4799 = vadd.f32 %v4638, %v4798
        %v4800 = vpop.f32.mrf.mxu0
        %4801 = vmatprep.mubr.bf16.mxu0 0
        %4802 = vmatmul.mubr.bf16.gmra.mxu0 %v4486
        %v4803 = vpop.f32.mrf.mxu0
        %v4804 = vadd.f32 %v4643, %v4803
        %v4805 = vpop.f32.mrf.mxu0
        %v4806 = vpop.f32.mrf.mxu0
        %v4807 = vadd.f32 %v4646, %v4806
        %v4808 = vpop.f32.mrf.mxu0
        %4809 = vdwg.mxu0
        %v4810 = vld [vmem:[%s2] sm:$0x1]
        %v4812 = vlaneseq
        %v4813 = vshrl.u32 %v4812, 7
        %v4814 = vsub.s32 0, %v4813
        %v4815 = vrot.slane %v4810, %v4814
        %v4817 = vmul.f32 %v4684, %v4815
        %v4818 = vmul.f32 %v4687, %v4815
        %v4819 = vmul.f32 %v4692, %v4815
        %v4820 = vmul.f32 %v4695, %v4815
        %v4821 = vmul.f32 %v4700, %v4815
        %v4822 = vmul.f32 %v4703, %v4815
        %v4823 = vmul.f32 %v4708, %v4815
        %v4824 = vmul.f32 %v4711, %v4815
        %v4825 = vmul.f32 %v4716, %v4815
        %v4826 = vmul.f32 %v4719, %v4815
        %v4827 = vmul.f32 %v4724, %v4815
        %v4828 = vmul.f32 %v4727, %v4815
        %v4829 = vmul.f32 %v4732, %v4815
        %v4830 = vmul.f32 %v4735, %v4815
        %v4831 = vmul.f32 %v4740, %v4815
        %v4832 = vmul.f32 %v4743, %v4815
        %v4833 = vmul.f32 %v4748, %v4815
        %v4834 = vmul.f32 %v4751, %v4815
        %v4835 = vmul.f32 %v4756, %v4815
        %v4836 = vmul.f32 %v4759, %v4815
        %v4837 = vmul.f32 %v4764, %v4815
        %v4838 = vmul.f32 %v4767, %v4815
        %v4839 = vmul.f32 %v4772, %v4815
        %v4840 = vmul.f32 %v4775, %v4815
        %v4841 = vmul.f32 %v4780, %v4815
        %v4842 = vmul.f32 %v4783, %v4815
        %v4843 = vmul.f32 %v4788, %v4815
        %v4844 = vmul.f32 %v4791, %v4815
        %v4845 = vmul.f32 %v4796, %v4815
        %v4846 = vmul.f32 %v4799, %v4815
        %v4847 = vmul.f32 %v4804, %v4815
        %v4848 = vmul.f32 %v4807, %v4815
        %v4849 = vld [vmem:[%s3] sm:$0x1]
        %v4851 = vlaneseq
        %v4852 = vshrl.u32 %v4851, 7
        %v4853 = vsub.s32 0, %v4852
        %v4854 = vrot.slane %v4849, %v4853
        %v4856 = vadd.f32 %v4817, %v4854
        %v4857 = vadd.f32 %v4818, %v4854
        %v4858 = vadd.f32 %v4819, %v4854
        %v4859 = vadd.f32 %v4820, %v4854
        %v4860 = vadd.f32 %v4821, %v4854
        %v4861 = vadd.f32 %v4822, %v4854
        %v4862 = vadd.f32 %v4823, %v4854
        %v4863 = vadd.f32 %v4824, %v4854
        %v4864 = vadd.f32 %v4825, %v4854
        %v4865 = vadd.f32 %v4826, %v4854
        %v4866 = vadd.f32 %v4827, %v4854
        %v4867 = vadd.f32 %v4828, %v4854
        %v4868 = vadd.f32 %v4829, %v4854
        %v4869 = vadd.f32 %v4830, %v4854
        %v4870 = vadd.f32 %v4831, %v4854
        %v4871 = vadd.f32 %v4832, %v4854
        %v4872 = vadd.f32 %v4833, %v4854
        %v4873 = vadd.f32 %v4834, %v4854
        %v4874 = vadd.f32 %v4835, %v4854
        %v4875 = vadd.f32 %v4836, %v4854
        %v4876 = vadd.f32 %v4837, %v4854
        %v4877 = vadd.f32 %v4838, %v4854
        %v4878 = vadd.f32 %v4839, %v4854
        %v4879 = vadd.f32 %v4840, %v4854
        %v4880 = vadd.f32 %v4841, %v4854
        %v4881 = vadd.f32 %v4842, %v4854
        %v4882 = vadd.f32 %v4843, %v4854
        %v4883 = vadd.f32 %v4844, %v4854
        %v4884 = vadd.f32 %v4845, %v4854
        %v4885 = vadd.f32 %v4846, %v4854
        %v4886 = vadd.f32 %v4847, %v4854
        %v4887 = vadd.f32 %v4848, %v4854
        %v4888 = vmax.f32 %v4856, 0.0
        %v4889 = vmax.f32 %v4857, 0.0
        %v4890 = vmax.f32 %v4858, 0.0
        %v4891 = vmax.f32 %v4859, 0.0
        %v4892 = vmax.f32 %v4860, 0.0
        %v4893 = vmax.f32 %v4861, 0.0
        %v4894 = vmax.f32 %v4862, 0.0
        %v4895 = vmax.f32 %v4863, 0.0
        %v4896 = vmax.f32 %v4864, 0.0
        %v4897 = vmax.f32 %v4865, 0.0
        %v4898 = vmax.f32 %v4866, 0.0
        %v4899 = vmax.f32 %v4867, 0.0
        %v4900 = vmax.f32 %v4868, 0.0
        %v4901 = vmax.f32 %v4869, 0.0
        %v4902 = vmax.f32 %v4870, 0.0
        %v4903 = vmax.f32 %v4871, 0.0
        %v4904 = vmax.f32 %v4872, 0.0
        %v4905 = vmax.f32 %v4873, 0.0
        %v4906 = vmax.f32 %v4874, 0.0
        %v4907 = vmax.f32 %v4875, 0.0
        %v4908 = vmax.f32 %v4876, 0.0
        %v4909 = vmax.f32 %v4877, 0.0
        %v4910 = vmax.f32 %v4878, 0.0
        %v4911 = vmax.f32 %v4879, 0.0
        %v4912 = vmax.f32 %v4880, 0.0
        %v4913 = vmax.f32 %v4881, 0.0
        %v4914 = vmax.f32 %v4882, 0.0
        %v4915 = vmax.f32 %v4883, 0.0
        %v4916 = vmax.f32 %v4884, 0.0
        %v4917 = vmax.f32 %v4885, 0.0
        %v4918 = vmax.f32 %v4886, 0.0
        %v4919 = vmax.f32 %v4887, 0.0
        %v4920 = vpack.c.bf16 %v4889, %v4888
        %v4921 = vpack.c.bf16 %v4891, %v4890
        %v4922 = vpack.c.bf16 %v4893, %v4892
        %v4923 = vpack.c.bf16 %v4895, %v4894
        %v4924 = vpack.c.bf16 %v4897, %v4896
        %v4925 = vpack.c.bf16 %v4899, %v4898
        %v4926 = vpack.c.bf16 %v4901, %v4900
        %v4927 = vpack.c.bf16 %v4903, %v4902
        %v4928 = vpack.c.bf16 %v4905, %v4904
        %v4929 = vpack.c.bf16 %v4907, %v4906
        %v4930 = vpack.c.bf16 %v4909, %v4908
        %v4931 = vpack.c.bf16 %v4911, %v4910
        %v4932 = vpack.c.bf16 %v4913, %v4912
        %v4933 = vpack.c.bf16 %v4915, %v4914
        %v4934 = vpack.c.bf16 %v4917, %v4916
        %v4935 = vpack.c.bf16 %v4919, %v4918
        %vm4936 = vcmask 519168
        %4937 = vst.msk [vmem:[#allocation4] sm:$0xf] %vm4936, 0
        %4938 = vst.msk [vmem:[#allocation4 + $0x4] sm:$0xf] %vm4936, 0
        %vm4939 = vcmask 516096
        %4940 = vst.msk [vmem:[#allocation4 + $0x8] sm:$0x1] %vm4939, 0
        %s4941 = scalar_lea.vmem [#allocation4], 204
        %4942 = vst.msk [vmem:[%s4941] sm:$0xf] %vm4936, 0
        %4943 = vst.msk [vmem:[%s4941 + $0x4] sm:$0xf] %vm4936, 0
        %4944 = vst.msk [vmem:[%s4941 + $0x8] sm:$0x1] %vm4939, 0
        %s4945 = scalar_lea.vmem [#allocation4], 12
        %vm4946 = vcmask 516096
        %vm4947 = vmand %vm4946, %vm405
        %v4948 = vld [vmem:[%s4945] sm:$0x1]
        %v4949 = vsel %vm4947, 0, %v4948
        %4950 = vst [vmem:[%s4945] sm:$0x1] %v4949
        %v4951 = vld [vmem:[%s4945 + $0xc] sm:$0x1]
        %v4952 = vsel %vm4947, 0, %v4951
        %4953 = vst [vmem:[%s4945 + $0xc] sm:$0x1] %v4952
        %v4954 = vld [vmem:[%s4945 + $0x18] sm:$0x1]
        %v4955 = vsel %vm4947, 0, %v4954
        %4956 = vst [vmem:[%s4945 + $0x18] sm:$0x1] %v4955
        %v4957 = vld [vmem:[%s4945 + $0x24] sm:$0x1]
        %v4958 = vsel %vm4947, 0, %v4957
        %4959 = vst [vmem:[%s4945 + $0x24] sm:$0x1] %v4958
        %v4960 = vld [vmem:[%s4945 + $0x30] sm:$0x1]
        %v4961 = vsel %vm4947, 0, %v4960
        %4962 = vst [vmem:[%s4945 + $0x30] sm:$0x1] %v4961
        %v4963 = vld [vmem:[%s4945 + $0x3c] sm:$0x1]
        %v4964 = vsel %vm4947, 0, %v4963
        %4965 = vst [vmem:[%s4945 + $0x3c] sm:$0x1] %v4964
        %v4966 = vld [vmem:[%s4945 + $0x48] sm:$0x1]
        %v4967 = vsel %vm4947, 0, %v4966
        %4968 = vst [vmem:[%s4945 + $0x48] sm:$0x1] %v4967
        %v4969 = vld [vmem:[%s4945 + $0x54] sm:$0x1]
        %v4970 = vsel %vm4947, 0, %v4969
        %4971 = vst [vmem:[%s4945 + $0x54] sm:$0x1] %v4970
        %v4972 = vld [vmem:[%s4945 + $0x60] sm:$0x1]
        %v4973 = vsel %vm4947, 0, %v4972
        %4974 = vst [vmem:[%s4945 + $0x60] sm:$0x1] %v4973
        %v4975 = vld [vmem:[%s4945 + $0x6c] sm:$0x1]
        %v4976 = vsel %vm4947, 0, %v4975
        %4977 = vst [vmem:[%s4945 + $0x6c] sm:$0x1] %v4976
        %v4978 = vld [vmem:[%s4945 + $0x78] sm:$0x1]
        %v4979 = vsel %vm4947, 0, %v4978
        %4980 = vst [vmem:[%s4945 + $0x78] sm:$0x1] %v4979
        %v4981 = vld [vmem:[%s4945 + $0x84] sm:$0x1]
        %v4982 = vsel %vm4947, 0, %v4981
        %4983 = vst [vmem:[%s4945 + $0x84] sm:$0x1] %v4982
        %v4984 = vld [vmem:[%s4945 + $0x90] sm:$0x1]
        %v4985 = vsel %vm4947, 0, %v4984
        %4986 = vst [vmem:[%s4945 + $0x90] sm:$0x1] %v4985
        %v4987 = vld [vmem:[%s4945 + $0x9c] sm:$0x1]
        %v4988 = vsel %vm4947, 0, %v4987
        %4989 = vst [vmem:[%s4945 + $0x9c] sm:$0x1] %v4988
        %v4990 = vld [vmem:[%s4945 + $0xa8] sm:$0x1]
        %v4991 = vsel %vm4947, 0, %v4990
        %4992 = vst [vmem:[%s4945 + $0xa8] sm:$0x1] %v4991
        %v4993 = vld [vmem:[%s4945 + $0xb4] sm:$0x1]
        %v4994 = vsel %vm4947, 0, %v4993
        %4995 = vst [vmem:[%s4945 + $0xb4] sm:$0x1] %v4994
        %vm4996 = vmand %vm4946, %vm455
        %v4997 = vld [vmem:[%s4945 + $0x8] sm:$0x1]
        %v4998 = vsel %vm4996, 0, %v4997
        %4999 = vst [vmem:[%s4945 + $0x8] sm:$0x1] %v4998
        %v5000 = vld [vmem:[%s4945 + $0x14] sm:$0x1]
        %v5001 = vsel %vm4996, 0, %v5000
        %5002 = vst [vmem:[%s4945 + $0x14] sm:$0x1] %v5001
        %v5003 = vld [vmem:[%s4945 + $0x20] sm:$0x1]
        %v5004 = vsel %vm4996, 0, %v5003
        %5005 = vst [vmem:[%s4945 + $0x20] sm:$0x1] %v5004
        %v5006 = vld [vmem:[%s4945 + $0x2c] sm:$0x1]
        %v5007 = vsel %vm4996, 0, %v5006
        %5008 = vst [vmem:[%s4945 + $0x2c] sm:$0x1] %v5007
        %v5009 = vld [vmem:[%s4945 + $0x38] sm:$0x1]
        %v5010 = vsel %vm4996, 0, %v5009
        %5011 = vst [vmem:[%s4945 + $0x38] sm:$0x1] %v5010
        %v5012 = vld [vmem:[%s4945 + $0x44] sm:$0x1]
        %v5013 = vsel %vm4996, 0, %v5012
        %5014 = vst [vmem:[%s4945 + $0x44] sm:$0x1] %v5013
        %v5015 = vld [vmem:[%s4945 + $0x50] sm:$0x1]
        %v5016 = vsel %vm4996, 0, %v5015
        %5017 = vst [vmem:[%s4945 + $0x50] sm:$0x1] %v5016
        %v5018 = vld [vmem:[%s4945 + $0x5c] sm:$0x1]
        %v5019 = vsel %vm4996, 0, %v5018
        %5020 = vst [vmem:[%s4945 + $0x5c] sm:$0x1] %v5019
        %v5021 = vld [vmem:[%s4945 + $0x68] sm:$0x1]
        %v5022 = vsel %vm4996, 0, %v5021
        %5023 = vst [vmem:[%s4945 + $0x68] sm:$0x1] %v5022
        %v5024 = vld [vmem:[%s4945 + $0x74] sm:$0x1]
        %v5025 = vsel %vm4996, 0, %v5024
        %5026 = vst [vmem:[%s4945 + $0x74] sm:$0x1] %v5025
        %v5027 = vld [vmem:[%s4945 + $0x80] sm:$0x1]
        %v5028 = vsel %vm4996, 0, %v5027
        %5029 = vst [vmem:[%s4945 + $0x80] sm:$0x1] %v5028
        %v5030 = vld [vmem:[%s4945 + $0x8c] sm:$0x1]
        %v5031 = vsel %vm4996, 0, %v5030
        %5032 = vst [vmem:[%s4945 + $0x8c] sm:$0x1] %v5031
        %v5033 = vld [vmem:[%s4945 + $0x98] sm:$0x1]
        %v5034 = vsel %vm4996, 0, %v5033
        %5035 = vst [vmem:[%s4945 + $0x98] sm:$0x1] %v5034
        %v5036 = vld [vmem:[%s4945 + $0xa4] sm:$0x1]
        %v5037 = vsel %vm4996, 0, %v5036
        %5038 = vst [vmem:[%s4945 + $0xa4] sm:$0x1] %v5037
        %v5039 = vld [vmem:[%s4945 + $0xb0] sm:$0x1]
        %v5040 = vsel %vm4996, 0, %v5039
        %5041 = vst [vmem:[%s4945 + $0xb0] sm:$0x1] %v5040
        %v5042 = vld [vmem:[%s4945 + $0xbc] sm:$0x1]
        %v5043 = vsel %vm4996, 0, %v5042
        %5044 = vst [vmem:[%s4945 + $0xbc] sm:$0x1] %v5043
        %v5061 = vunpack.c.l.b16 %v4920
        %v5062 = vunpack.c.h.b16 %v4920
        %v5063 = vunpack.c.l.b16 %v4921
        %v5064 = vunpack.c.h.b16 %v4921
        %v5065 = vunpack.c.l.b16 %v4922
        %v5066 = vunpack.c.h.b16 %v4922
        %v5067 = vunpack.c.l.b16 %v4923
        %v5068 = vunpack.c.h.b16 %v4923
        %v5069 = vunpack.c.l.b16 %v4924
        %v5070 = vunpack.c.h.b16 %v4924
        %v5071 = vunpack.c.l.b16 %v4925
        %v5072 = vunpack.c.h.b16 %v4925
        %v5073 = vunpack.c.l.b16 %v4926
        %v5074 = vunpack.c.h.b16 %v4926
        %v5075 = vunpack.c.l.b16 %v4927
        %v5076 = vunpack.c.h.b16 %v4927
        %v5077 = vunpack.c.l.b16 %v4928
        %v5078 = vunpack.c.h.b16 %v4928
        %v5079 = vunpack.c.l.b16 %v4929
        %v5080 = vunpack.c.h.b16 %v4929
        %v5081 = vunpack.c.l.b16 %v4930
        %v5082 = vunpack.c.h.b16 %v4930
        %v5083 = vunpack.c.l.b16 %v4931
        %v5084 = vunpack.c.h.b16 %v4931
        %v5085 = vunpack.c.l.b16 %v4932
        %v5086 = vunpack.c.h.b16 %v4932
        %v5087 = vunpack.c.l.b16 %v4933
        %v5088 = vunpack.c.h.b16 %v4933
        %v5089 = vunpack.c.l.b16 %v4934
        %v5090 = vunpack.c.h.b16 %v4934
        %v5091 = vunpack.c.l.b16 %v4935
        %v5092 = vunpack.c.h.b16 %v4935
        %v5093 = vpack.c.b16 %v5061, %v5061
        %v5094 = vpack.c.b16 %v5062, %v5062
        %v5095 = vpack.c.b16 %v5063, %v5063
        %v5096 = vpack.c.b16 %v5064, %v5064
        %v5097 = vpack.c.b16 %v5065, %v5065
        %v5098 = vpack.c.b16 %v5066, %v5066
        %v5099 = vpack.c.b16 %v5067, %v5067
        %v5100 = vpack.c.b16 %v5068, %v5068
        %v5101 = vpack.c.b16 %v5069, %v5069
        %v5102 = vpack.c.b16 %v5070, %v5070
        %v5103 = vpack.c.b16 %v5071, %v5071
        %v5104 = vpack.c.b16 %v5072, %v5072
        %v5105 = vpack.c.b16 %v5073, %v5073
        %v5106 = vpack.c.b16 %v5074, %v5074
        %v5107 = vpack.c.b16 %v5075, %v5075
        %v5108 = vpack.c.b16 %v5076, %v5076
        %v5109 = vpack.c.b16 %v5077, %v5077
        %v5110 = vpack.c.b16 %v5078, %v5078
        %v5111 = vpack.c.b16 %v5079, %v5079
        %v5112 = vpack.c.b16 %v5080, %v5080
        %v5113 = vpack.c.b16 %v5081, %v5081
        %v5114 = vpack.c.b16 %v5082, %v5082
        %v5115 = vpack.c.b16 %v5083, %v5083
        %v5116 = vpack.c.b16 %v5084, %v5084
        %v5117 = vpack.c.b16 %v5085, %v5085
        %v5118 = vpack.c.b16 %v5086, %v5086
        %v5119 = vpack.c.b16 %v5087, %v5087
        %v5120 = vpack.c.b16 %v5088, %v5088
        %v5121 = vpack.c.b16 %v5089, %v5089
        %v5122 = vpack.c.b16 %v5090, %v5090
        %v5123 = vpack.c.b16 %v5091, %v5091
        %v5124 = vpack.c.b16 %v5092, %v5092
        %v5126 = vshrl.u32 %v5093, 16
        %v5128 = vrot.slane %v5126, 7
        %v5129 = vshll.u32 %v5093, 16
        %v5131 = vor.u32 %v5128, %v5129
        %v5132 = vrot.slane %v5128, 4
        %v5134 = vshrl.u32 %v5094, 16
        %v5136 = vrot.slane %v5134, 7
        %v5137 = vshll.u32 %v5094, 16
        %v5139 = vor.u32 %v5136, %v5137
        %v5140 = vsel %vm538, %v5132, %v5139
        %v5141 = vrot.slane %v5136, 4
        %v5143 = vshrl.u32 %v5095, 16
        %v5145 = vrot.slane %v5143, 7
        %v5146 = vshll.u32 %v5095, 16
        %v5148 = vor.u32 %v5145, %v5146
        %v5149 = vrot.slane %v5145, 4
        %v5151 = vshrl.u32 %v5096, 16
        %v5153 = vrot.slane %v5151, 7
        %v5154 = vshll.u32 %v5096, 16
        %v5156 = vor.u32 %v5153, %v5154
        %v5157 = vsel %vm538, %v5149, %v5156
        %v5158 = vrot.slane %v5153, 4
        %v5160 = vshrl.u32 %v5097, 16
        %v5162 = vrot.slane %v5160, 7
        %v5163 = vshll.u32 %v5097, 16
        %v5165 = vor.u32 %v5162, %v5163
        %v5166 = vrot.slane %v5162, 4
        %v5168 = vshrl.u32 %v5098, 16
        %v5170 = vrot.slane %v5168, 7
        %v5171 = vshll.u32 %v5098, 16
        %v5173 = vor.u32 %v5170, %v5171
        %v5174 = vsel %vm538, %v5166, %v5173
        %v5175 = vrot.slane %v5170, 4
        %v5177 = vshrl.u32 %v5099, 16
        %v5179 = vrot.slane %v5177, 7
        %v5180 = vshll.u32 %v5099, 16
        %v5182 = vor.u32 %v5179, %v5180
        %v5183 = vrot.slane %v5179, 4
        %v5185 = vshrl.u32 %v5100, 16
        %v5187 = vrot.slane %v5185, 7
        %v5188 = vshll.u32 %v5100, 16
        %v5190 = vor.u32 %v5187, %v5188
        %v5191 = vsel %vm538, %v5183, %v5190
        %v5192 = vrot.slane %v5187, 4
        %v5194 = vshrl.u32 %v5101, 16
        %v5196 = vrot.slane %v5194, 7
        %v5197 = vshll.u32 %v5101, 16
        %v5199 = vor.u32 %v5196, %v5197
        %v5200 = vrot.slane %v5196, 4
        %v5202 = vshrl.u32 %v5102, 16
        %v5204 = vrot.slane %v5202, 7
        %v5205 = vshll.u32 %v5102, 16
        %v5207 = vor.u32 %v5204, %v5205
        %v5208 = vsel %vm538, %v5200, %v5207
        %v5209 = vrot.slane %v5204, 4
        %v5211 = vshrl.u32 %v5103, 16
        %v5213 = vrot.slane %v5211, 7
        %v5214 = vshll.u32 %v5103, 16
        %v5216 = vor.u32 %v5213, %v5214
        %v5217 = vrot.slane %v5213, 4
        %v5219 = vshrl.u32 %v5104, 16
        %v5221 = vrot.slane %v5219, 7
        %v5222 = vshll.u32 %v5104, 16
        %v5224 = vor.u32 %v5221, %v5222
        %v5225 = vsel %vm538, %v5217, %v5224
        %v5226 = vrot.slane %v5221, 4
        %v5228 = vshrl.u32 %v5105, 16
        %v5230 = vrot.slane %v5228, 7
        %v5231 = vshll.u32 %v5105, 16
        %v5233 = vor.u32 %v5230, %v5231
        %v5234 = vrot.slane %v5230, 4
        %v5236 = vshrl.u32 %v5106, 16
        %v5238 = vrot.slane %v5236, 7
        %v5239 = vshll.u32 %v5106, 16
        %v5241 = vor.u32 %v5238, %v5239
        %v5242 = vsel %vm538, %v5234, %v5241
        %v5243 = vrot.slane %v5238, 4
        %v5245 = vshrl.u32 %v5107, 16
        %v5247 = vrot.slane %v5245, 7
        %v5248 = vshll.u32 %v5107, 16
        %v5250 = vor.u32 %v5247, %v5248
        %v5251 = vrot.slane %v5247, 4
        %v5253 = vshrl.u32 %v5108, 16
        %v5255 = vrot.slane %v5253, 7
        %v5256 = vshll.u32 %v5108, 16
        %v5258 = vor.u32 %v5255, %v5256
        %v5259 = vsel %vm538, %v5251, %v5258
        %v5260 = vrot.slane %v5255, 4
        %v5262 = vshrl.u32 %v5109, 16
        %v5264 = vrot.slane %v5262, 7
        %v5265 = vshll.u32 %v5109, 16
        %v5267 = vor.u32 %v5264, %v5265
        %v5268 = vrot.slane %v5264, 4
        %v5270 = vshrl.u32 %v5110, 16
        %v5272 = vrot.slane %v5270, 7
        %v5273 = vshll.u32 %v5110, 16
        %v5275 = vor.u32 %v5272, %v5273
        %v5276 = vsel %vm538, %v5268, %v5275
        %v5277 = vrot.slane %v5272, 4
        %v5279 = vshrl.u32 %v5111, 16
        %v5281 = vrot.slane %v5279, 7
        %v5282 = vshll.u32 %v5111, 16
        %v5284 = vor.u32 %v5281, %v5282
        %v5285 = vrot.slane %v5281, 4
        %v5287 = vshrl.u32 %v5112, 16
        %v5289 = vrot.slane %v5287, 7
        %v5290 = vshll.u32 %v5112, 16
        %v5292 = vor.u32 %v5289, %v5290
        %v5293 = vsel %vm538, %v5285, %v5292
        %v5294 = vrot.slane %v5289, 4
        %v5296 = vshrl.u32 %v5113, 16
        %v5298 = vrot.slane %v5296, 7
        %v5299 = vshll.u32 %v5113, 16
        %v5301 = vor.u32 %v5298, %v5299
        %v5302 = vrot.slane %v5298, 4
        %v5304 = vshrl.u32 %v5114, 16
        %v5306 = vrot.slane %v5304, 7
        %v5307 = vshll.u32 %v5114, 16
        %v5309 = vor.u32 %v5306, %v5307
        %v5310 = vsel %vm538, %v5302, %v5309
        %v5311 = vrot.slane %v5306, 4
        %v5313 = vshrl.u32 %v5115, 16
        %v5315 = vrot.slane %v5313, 7
        %v5316 = vshll.u32 %v5115, 16
        %v5318 = vor.u32 %v5315, %v5316
        %v5319 = vrot.slane %v5315, 4
        %v5321 = vshrl.u32 %v5116, 16
        %v5323 = vrot.slane %v5321, 7
        %v5324 = vshll.u32 %v5116, 16
        %v5326 = vor.u32 %v5323, %v5324
        %v5327 = vsel %vm538, %v5319, %v5326
        %v5328 = vrot.slane %v5323, 4
        %v5330 = vshrl.u32 %v5117, 16
        %v5332 = vrot.slane %v5330, 7
        %v5333 = vshll.u32 %v5117, 16
        %v5335 = vor.u32 %v5332, %v5333
        %v5336 = vrot.slane %v5332, 4
        %v5338 = vshrl.u32 %v5118, 16
        %v5340 = vrot.slane %v5338, 7
        %v5341 = vshll.u32 %v5118, 16
        %v5343 = vor.u32 %v5340, %v5341
        %v5344 = vsel %vm538, %v5336, %v5343
        %v5345 = vrot.slane %v5340, 4
        %v5347 = vshrl.u32 %v5119, 16
        %v5349 = vrot.slane %v5347, 7
        %v5350 = vshll.u32 %v5119, 16
        %v5352 = vor.u32 %v5349, %v5350
        %v5353 = vrot.slane %v5349, 4
        %v5355 = vshrl.u32 %v5120, 16
        %v5357 = vrot.slane %v5355, 7
        %v5358 = vshll.u32 %v5120, 16
        %v5360 = vor.u32 %v5357, %v5358
        %v5361 = vsel %vm538, %v5353, %v5360
        %v5362 = vrot.slane %v5357, 4
        %v5364 = vshrl.u32 %v5121, 16
        %v5366 = vrot.slane %v5364, 7
        %v5367 = vshll.u32 %v5121, 16
        %v5369 = vor.u32 %v5366, %v5367
        %v5370 = vrot.slane %v5366, 4
        %v5372 = vshrl.u32 %v5122, 16
        %v5374 = vrot.slane %v5372, 7
        %v5375 = vshll.u32 %v5122, 16
        %v5377 = vor.u32 %v5374, %v5375
        %v5378 = vsel %vm538, %v5370, %v5377
        %v5379 = vrot.slane %v5374, 4
        %v5381 = vshrl.u32 %v5123, 16
        %v5383 = vrot.slane %v5381, 7
        %v5384 = vshll.u32 %v5123, 16
        %v5386 = vor.u32 %v5383, %v5384
        %v5387 = vrot.slane %v5383, 4
        %v5389 = vshrl.u32 %v5124, 16
        %v5391 = vrot.slane %v5389, 7
        %v5392 = vshll.u32 %v5124, 16
        %v5394 = vor.u32 %v5391, %v5392
        %v5395 = vsel %vm538, %v5387, %v5394
        %v5396 = vrot.slane %v5391, 4
        %vm5445 = vcmask 519168
        %vm5446 = vmand %vm5445, %vm455
        %v5447 = vld [vmem:[%s4945] sm:$0xf]
        %v5448 = vsel %vm5446, %v5131, %v5447
        %5449 = vst [vmem:[%s4945] sm:$0xf] %v5448
        %5450 = vst.msk [vmem:[%s4945 + $0x4] sm:$0xf] %vm4936, %v5140
        %v5451 = vld [vmem:[%s4945 + $0x8] sm:$0x1]
        %v5452 = vsel %vm4947, %v5141, %v5451
        %5453 = vst [vmem:[%s4945 + $0x8] sm:$0x1] %v5452
        %v5454 = vld [vmem:[%s4945 + $0xc] sm:$0xf]
        %v5455 = vsel %vm5446, %v5148, %v5454
        %5456 = vst [vmem:[%s4945 + $0xc] sm:$0xf] %v5455
        %5457 = vst.msk [vmem:[%s4945 + $0x10] sm:$0xf] %vm4936, %v5157
        %v5458 = vld [vmem:[%s4945 + $0x14] sm:$0x1]
        %v5459 = vsel %vm4947, %v5158, %v5458
        %5460 = vst [vmem:[%s4945 + $0x14] sm:$0x1] %v5459
        %v5461 = vld [vmem:[%s4945 + $0x18] sm:$0xf]
        %v5462 = vsel %vm5446, %v5165, %v5461
        %5463 = vst [vmem:[%s4945 + $0x18] sm:$0xf] %v5462
        %5464 = vst.msk [vmem:[%s4945 + $0x1c] sm:$0xf] %vm4936, %v5174
        %v5465 = vld [vmem:[%s4945 + $0x20] sm:$0x1]
        %v5466 = vsel %vm4947, %v5175, %v5465
        %5467 = vst [vmem:[%s4945 + $0x20] sm:$0x1] %v5466
        %v5468 = vld [vmem:[%s4945 + $0x24] sm:$0xf]
        %v5469 = vsel %vm5446, %v5182, %v5468
        %5470 = vst [vmem:[%s4945 + $0x24] sm:$0xf] %v5469
        %5471 = vst.msk [vmem:[%s4945 + $0x28] sm:$0xf] %vm4936, %v5191
        %v5472 = vld [vmem:[%s4945 + $0x2c] sm:$0x1]
        %v5473 = vsel %vm4947, %v5192, %v5472
        %5474 = vst [vmem:[%s4945 + $0x2c] sm:$0x1] %v5473
        %v5475 = vld [vmem:[%s4945 + $0x30] sm:$0xf]
        %v5476 = vsel %vm5446, %v5199, %v5475
        %5477 = vst [vmem:[%s4945 + $0x30] sm:$0xf] %v5476
        %5478 = vst.msk [vmem:[%s4945 + $0x34] sm:$0xf] %vm4936, %v5208
        %v5479 = vld [vmem:[%s4945 + $0x38] sm:$0x1]
        %v5480 = vsel %vm4947, %v5209, %v5479
        %5481 = vst [vmem:[%s4945 + $0x38] sm:$0x1] %v5480
        %v5482 = vld [vmem:[%s4945 + $0x3c] sm:$0xf]
        %v5483 = vsel %vm5446, %v5216, %v5482
        %5484 = vst [vmem:[%s4945 + $0x3c] sm:$0xf] %v5483
        %5485 = vst.msk [vmem:[%s4945 + $0x40] sm:$0xf] %vm4936, %v5225
        %v5486 = vld [vmem:[%s4945 + $0x44] sm:$0x1]
        %v5487 = vsel %vm4947, %v5226, %v5486
        %5488 = vst [vmem:[%s4945 + $0x44] sm:$0x1] %v5487
        %v5489 = vld [vmem:[%s4945 + $0x48] sm:$0xf]
        %v5490 = vsel %vm5446, %v5233, %v5489
        %5491 = vst [vmem:[%s4945 + $0x48] sm:$0xf] %v5490
        %5492 = vst.msk [vmem:[%s4945 + $0x4c] sm:$0xf] %vm4936, %v5242
        %v5493 = vld [vmem:[%s4945 + $0x50] sm:$0x1]
        %v5494 = vsel %vm4947, %v5243, %v5493
        %5495 = vst [vmem:[%s4945 + $0x50] sm:$0x1] %v5494
        %v5496 = vld [vmem:[%s4945 + $0x54] sm:$0xf]
        %v5497 = vsel %vm5446, %v5250, %v5496
        %5498 = vst [vmem:[%s4945 + $0x54] sm:$0xf] %v5497
        %5499 = vst.msk [vmem:[%s4945 + $0x58] sm:$0xf] %vm4936, %v5259
        %v5500 = vld [vmem:[%s4945 + $0x5c] sm:$0x1]
        %v5501 = vsel %vm4947, %v5260, %v5500
        %5502 = vst [vmem:[%s4945 + $0x5c] sm:$0x1] %v5501
        %v5503 = vld [vmem:[%s4945 + $0x60] sm:$0xf]
        %v5504 = vsel %vm5446, %v5267, %v5503
        %5505 = vst [vmem:[%s4945 + $0x60] sm:$0xf] %v5504
        %5506 = vst.msk [vmem:[%s4945 + $0x64] sm:$0xf] %vm4936, %v5276
        %v5507 = vld [vmem:[%s4945 + $0x68] sm:$0x1]
        %v5508 = vsel %vm4947, %v5277, %v5507
        %5509 = vst [vmem:[%s4945 + $0x68] sm:$0x1] %v5508
        %v5510 = vld [vmem:[%s4945 + $0x6c] sm:$0xf]
        %v5511 = vsel %vm5446, %v5284, %v5510
        %5512 = vst [vmem:[%s4945 + $0x6c] sm:$0xf] %v5511
        %5513 = vst.msk [vmem:[%s4945 + $0x70] sm:$0xf] %vm4936, %v5293
        %v5514 = vld [vmem:[%s4945 + $0x74] sm:$0x1]
        %v5515 = vsel %vm4947, %v5294, %v5514
        %5516 = vst [vmem:[%s4945 + $0x74] sm:$0x1] %v5515
        %v5517 = vld [vmem:[%s4945 + $0x78] sm:$0xf]
        %v5518 = vsel %vm5446, %v5301, %v5517
        %5519 = vst [vmem:[%s4945 + $0x78] sm:$0xf] %v5518
        %5520 = vst.msk [vmem:[%s4945 + $0x7c] sm:$0xf] %vm4936, %v5310
        %v5521 = vld [vmem:[%s4945 + $0x80] sm:$0x1]
        %v5522 = vsel %vm4947, %v5311, %v5521
        %5523 = vst [vmem:[%s4945 + $0x80] sm:$0x1] %v5522
        %v5524 = vld [vmem:[%s4945 + $0x84] sm:$0xf]
        %v5525 = vsel %vm5446, %v5318, %v5524
        %5526 = vst [vmem:[%s4945 + $0x84] sm:$0xf] %v5525
        %5527 = vst.msk [vmem:[%s4945 + $0x88] sm:$0xf] %vm4936, %v5327
        %v5528 = vld [vmem:[%s4945 + $0x8c] sm:$0x1]
        %v5529 = vsel %vm4947, %v5328, %v5528
        %5530 = vst [vmem:[%s4945 + $0x8c] sm:$0x1] %v5529
        %v5531 = vld [vmem:[%s4945 + $0x90] sm:$0xf]
        %v5532 = vsel %vm5446, %v5335, %v5531
        %5533 = vst [vmem:[%s4945 + $0x90] sm:$0xf] %v5532
        %5534 = vst.msk [vmem:[%s4945 + $0x94] sm:$0xf] %vm4936, %v5344
        %v5535 = vld [vmem:[%s4945 + $0x98] sm:$0x1]
        %v5536 = vsel %vm4947, %v5345, %v5535
        %5537 = vst [vmem:[%s4945 + $0x98] sm:$0x1] %v5536
        %v5538 = vld [vmem:[%s4945 + $0x9c] sm:$0xf]
        %v5539 = vsel %vm5446, %v5352, %v5538
        %5540 = vst [vmem:[%s4945 + $0x9c] sm:$0xf] %v5539
        %5541 = vst.msk [vmem:[%s4945 + $0xa0] sm:$0xf] %vm4936, %v5361
        %v5542 = vld [vmem:[%s4945 + $0xa4] sm:$0x1]
        %v5543 = vsel %vm4947, %v5362, %v5542
        %5544 = vst [vmem:[%s4945 + $0xa4] sm:$0x1] %v5543
        %v5545 = vld [vmem:[%s4945 + $0xa8] sm:$0xf]
        %v5546 = vsel %vm5446, %v5369, %v5545
        %5547 = vst [vmem:[%s4945 + $0xa8] sm:$0xf] %v5546
        %5548 = vst.msk [vmem:[%s4945 + $0xac] sm:$0xf] %vm4936, %v5378
        %v5549 = vld [vmem:[%s4945 + $0xb0] sm:$0x1]
        %v5550 = vsel %vm4947, %v5379, %v5549
        %5551 = vst [vmem:[%s4945 + $0xb0] sm:$0x1] %v5550
        %v5552 = vld [vmem:[%s4945 + $0xb4] sm:$0xf]
        %v5553 = vsel %vm5446, %v5386, %v5552
        %5554 = vst [vmem:[%s4945 + $0xb4] sm:$0xf] %v5553
        %5555 = vst.msk [vmem:[%s4945 + $0xb8] sm:$0xf] %vm4936, %v5395
        %v5556 = vld [vmem:[%s4945 + $0xbc] sm:$0x1]
        %v5557 = vsel %vm4947, %v5396, %v5556
        %5558 = vst [vmem:[%s4945 + $0xbc] sm:$0x1] %v5557
        %v5559 = vld [vmem:[#allocation4] sm:$0xf]
        %v5560 = vld [vmem:[#allocation4 + $0x4] sm:$0xf]
        %v5561 = vld [vmem:[#allocation4 + $0xc] sm:$0xf]
        %v5562 = vld [vmem:[#allocation4 + $0x10] sm:$0xf]
        %v5563 = vld [vmem:[#allocation4 + $0x18] sm:$0xf]
        %v5564 = vld [vmem:[#allocation4 + $0x1c] sm:$0xf]
        %v5565 = vld [vmem:[#allocation4 + $0x24] sm:$0xf]
        %v5566 = vld [vmem:[#allocation4 + $0x28] sm:$0xf]
        %v5567 = vld [vmem:[#allocation4 + $0x30] sm:$0xf]
        %v5568 = vld [vmem:[#allocation4 + $0x34] sm:$0xf]
        %v5569 = vld [vmem:[#allocation4 + $0x3c] sm:$0xf]
        %v5570 = vld [vmem:[#allocation4 + $0x40] sm:$0xf]
        %v5571 = vld [vmem:[#allocation4 + $0x48] sm:$0xf]
        %v5572 = vld [vmem:[#allocation4 + $0x4c] sm:$0xf]
        %v5573 = vld [vmem:[#allocation4 + $0x54] sm:$0xf]
        %v5574 = vld [vmem:[#allocation4 + $0x58] sm:$0xf]
        %v5575 = vld [vmem:[#allocation4 + $0x60] sm:$0xf]
        %v5576 = vld [vmem:[#allocation4 + $0x64] sm:$0xf]
        %v5577 = vld [vmem:[#allocation4 + $0x6c] sm:$0xf]
        %v5578 = vld [vmem:[#allocation4 + $0x70] sm:$0xf]
        %v5579 = vld [vmem:[#allocation4 + $0x78] sm:$0xf]
        %v5580 = vld [vmem:[#allocation4 + $0x7c] sm:$0xf]
        %v5581 = vld [vmem:[#allocation4 + $0x84] sm:$0xf]
        %v5582 = vld [vmem:[#allocation4 + $0x88] sm:$0xf]
        %v5583 = vld [vmem:[#allocation4 + $0x90] sm:$0xf]
        %v5584 = vld [vmem:[#allocation4 + $0x94] sm:$0xf]
        %v5585 = vld [vmem:[#allocation4 + $0x9c] sm:$0xf]
        %v5586 = vld [vmem:[#allocation4 + $0xa0] sm:$0xf]
        %v5587 = vld [vmem:[#allocation4 + $0xa8] sm:$0xf]
        %v5588 = vld [vmem:[#allocation4 + $0xac] sm:$0xf]
        %v5589 = vld [vmem:[#allocation4 + $0xb4] sm:$0xf]
        %v5590 = vld [vmem:[#allocation4 + $0xb8] sm:$0xf]
        %5591 = vst.msk [vmem:[#allocation5] sm:$0xf] %vm4936, %v5559
        %5592 = vst.msk [vmem:[#allocation5 + $0x14] sm:$0xf] %vm4936, %v5560
        %5593 = vst.msk [vmem:[#allocation5 + $0x28] sm:$0xf] %vm4936, %v5561
        %5594 = vst.msk [vmem:[#allocation5 + $0x3c] sm:$0xf] %vm4936, %v5562
        %5595 = vst.msk [vmem:[#allocation5 + $0x50] sm:$0xf] %vm4936, %v5563
        %5596 = vst.msk [vmem:[#allocation5 + $0x64] sm:$0xf] %vm4936, %v5564
        %5597 = vst.msk [vmem:[#allocation5 + $0x78] sm:$0xf] %vm4936, %v5565
        %5598 = vst.msk [vmem:[#allocation5 + $0x8c] sm:$0xf] %vm4936, %v5566
        %5599 = vst.msk [vmem:[#allocation5 + $0xa0] sm:$0xf] %vm4936, %v5567
        %5600 = vst.msk [vmem:[#allocation5 + $0xb4] sm:$0xf] %vm4936, %v5568
        %5601 = vst.msk [vmem:[#allocation5 + $0xc8] sm:$0xf] %vm4936, %v5569
        %5602 = vst.msk [vmem:[#allocation5 + $0xdc] sm:$0xf] %vm4936, %v5570
        %5603 = vst.msk [vmem:[#allocation5 + $0xf0] sm:$0xf] %vm4936, %v5571
        %5604 = vst.msk [vmem:[#allocation5 + $0x104] sm:$0xf] %vm4936, %v5572
        %5605 = vst.msk [vmem:[#allocation5 + $0x118] sm:$0xf] %vm4936, %v5573
        %5606 = vst.msk [vmem:[#allocation5 + $0x12c] sm:$0xf] %vm4936, %v5574
        %5607 = vst.msk [vmem:[#allocation5 + $0x140] sm:$0xf] %vm4936, %v5575
        %5608 = vst.msk [vmem:[#allocation5 + $0x154] sm:$0xf] %vm4936, %v5576
        %5609 = vst.msk [vmem:[#allocation5 + $0x168] sm:$0xf] %vm4936, %v5577
        %5610 = vst.msk [vmem:[#allocation5 + $0x17c] sm:$0xf] %vm4936, %v5578
        %5611 = vst.msk [vmem:[#allocation5 + $0x190] sm:$0xf] %vm4936, %v5579
        %5612 = vst.msk [vmem:[#allocation5 + $0x1a4] sm:$0xf] %vm4936, %v5580
        %5613 = vst.msk [vmem:[#allocation5 + $0x1b8] sm:$0xf] %vm4936, %v5581
        %5614 = vst.msk [vmem:[#allocation5 + $0x1cc] sm:$0xf] %vm4936, %v5582
        %5615 = vst.msk [vmem:[#allocation5 + $0x1e0] sm:$0xf] %vm4936, %v5583
        %5616 = vst.msk [vmem:[#allocation5 + $0x1f4] sm:$0xf] %vm4936, %v5584
        %5617 = vst.msk [vmem:[#allocation5 + $0x208] sm:$0xf] %vm4936, %v5585
        %5618 = vst.msk [vmem:[#allocation5 + $0x21c] sm:$0xf] %vm4936, %v5586
        %5619 = vst.msk [vmem:[#allocation5 + $0x230] sm:$0xf] %vm4936, %v5587
        %5620 = vst.msk [vmem:[#allocation5 + $0x244] sm:$0xf] %vm4936, %v5588
        %5621 = vst.msk [vmem:[#allocation5 + $0x258] sm:$0xf] %vm4936, %v5589
        %5622 = vst.msk [vmem:[#allocation5 + $0x26c] sm:$0xf] %vm4936, %v5590
        %v5623 = vld [vmem:[#allocation4] sm:$0xf]
        %v5624 = vld [vmem:[#allocation4 + $0x4] sm:$0xf]
        %v5625 = vld [vmem:[#allocation4 + $0x8] sm:$0x1]
        %v5626 = vld [vmem:[#allocation4 + $0xc] sm:$0xf]
        %v5627 = vld [vmem:[#allocation4 + $0x10] sm:$0xf]
        %v5628 = vld [vmem:[#allocation4 + $0x14] sm:$0x1]
        %v5629 = vld [vmem:[#allocation4 + $0x18] sm:$0xf]
        %v5630 = vld [vmem:[#allocation4 + $0x1c] sm:$0xf]
        %v5631 = vld [vmem:[#allocation4 + $0x20] sm:$0x1]
        %v5632 = vld [vmem:[#allocation4 + $0x24] sm:$0xf]
        %v5633 = vld [vmem:[#allocation4 + $0x28] sm:$0xf]
        %v5634 = vld [vmem:[#allocation4 + $0x2c] sm:$0x1]
        %v5635 = vld [vmem:[#allocation4 + $0x30] sm:$0xf]
        %v5636 = vld [vmem:[#allocation4 + $0x34] sm:$0xf]
        %v5637 = vld [vmem:[#allocation4 + $0x38] sm:$0x1]
        %v5638 = vld [vmem:[#allocation4 + $0x3c] sm:$0xf]
        %v5639 = vld [vmem:[#allocation4 + $0x40] sm:$0xf]
        %v5640 = vld [vmem:[#allocation4 + $0x44] sm:$0x1]
        %v5641 = vld [vmem:[#allocation4 + $0x48] sm:$0xf]
        %v5642 = vld [vmem:[#allocation4 + $0x4c] sm:$0xf]
        %v5643 = vld [vmem:[#allocation4 + $0x50] sm:$0x1]
        %v5644 = vld [vmem:[#allocation4 + $0x54] sm:$0xf]
        %v5645 = vld [vmem:[#allocation4 + $0x58] sm:$0xf]
        %v5646 = vld [vmem:[#allocation4 + $0x5c] sm:$0x1]
        %v5647 = vld [vmem:[#allocation4 + $0x60] sm:$0xf]
        %v5648 = vld [vmem:[#allocation4 + $0x64] sm:$0xf]
        %v5649 = vld [vmem:[#allocation4 + $0x68] sm:$0x1]
        %v5650 = vld [vmem:[#allocation4 + $0x6c] sm:$0xf]
        %v5651 = vld [vmem:[#allocation4 + $0x70] sm:$0xf]
        %v5652 = vld [vmem:[#allocation4 + $0x74] sm:$0x1]
        %v5653 = vld [vmem:[#allocation4 + $0x78] sm:$0xf]
        %v5654 = vld [vmem:[#allocation4 + $0x7c] sm:$0xf]
        %v5655 = vld [vmem:[#allocation4 + $0x80] sm:$0x1]
        %v5656 = vld [vmem:[#allocation4 + $0x84] sm:$0xf]
        %v5657 = vld [vmem:[#allocation4 + $0x88] sm:$0xf]
        %v5658 = vld [vmem:[#allocation4 + $0x8c] sm:$0x1]
        %v5659 = vld [vmem:[#allocation4 + $0x90] sm:$0xf]
        %v5660 = vld [vmem:[#allocation4 + $0x94] sm:$0xf]
        %v5661 = vld [vmem:[#allocation4 + $0x98] sm:$0x1]
        %v5662 = vld [vmem:[#allocation4 + $0x9c] sm:$0xf]
        %v5663 = vld [vmem:[#allocation4 + $0xa0] sm:$0xf]
        %v5664 = vld [vmem:[#allocation4 + $0xa4] sm:$0x1]
        %v5665 = vld [vmem:[#allocation4 + $0xa8] sm:$0xf]
        %v5666 = vld [vmem:[#allocation4 + $0xac] sm:$0xf]
        %v5667 = vld [vmem:[#allocation4 + $0xb0] sm:$0x1]
        %v5668 = vld [vmem:[#allocation4 + $0xb4] sm:$0xf]
        %v5669 = vld [vmem:[#allocation4 + $0xb8] sm:$0xf]
        %v5670 = vld [vmem:[#allocation4 + $0xbc] sm:$0x1]
        %v5672 = vshrl.u32 %v5623, 16
        %v5674 = vrot.slane %v5672, 4
        %v5675 = vshll.u32 %v5623, 16
        %v5677 = vrot.slane %v5675, 5
        %v5678 = vor.u32 %v5674, %v5677
        %v5679 = vrot.slane %v5678, 4
        %v5681 = vshll.u32 %v5624, 16
        %v5683 = vrot.slane %v5681, 5
        %v5684 = vsel %vm1087, %v5679, %v5683
        %v5685 = vshrl.u32 %v5624, 16
        %v5687 = vrot.slane %v5685, 4
        %v5688 = vor.u32 %v5687, %v5683
        %v5689 = vrot.slane %v5688, 4
        %v5691 = vshll.u32 %v5625, 16
        %v5693 = vrot.slane %v5691, 5
        %v5694 = vsel %vm1087, %v5689, %v5693
        %v5696 = vshrl.u32 %v5626, 16
        %v5698 = vrot.slane %v5696, 4
        %v5699 = vshll.u32 %v5626, 16
        %v5701 = vrot.slane %v5699, 5
        %v5702 = vor.u32 %v5698, %v5701
        %v5703 = vrot.slane %v5702, 4
        %v5705 = vshll.u32 %v5627, 16
        %v5707 = vrot.slane %v5705, 5
        %v5708 = vsel %vm1087, %v5703, %v5707
        %v5709 = vshrl.u32 %v5627, 16
        %v5711 = vrot.slane %v5709, 4
        %v5712 = vor.u32 %v5711, %v5707
        %v5713 = vrot.slane %v5712, 4
        %v5715 = vshll.u32 %v5628, 16
        %v5717 = vrot.slane %v5715, 5
        %v5718 = vsel %vm1087, %v5713, %v5717
        %v5720 = vshrl.u32 %v5629, 16
        %v5722 = vrot.slane %v5720, 4
        %v5723 = vshll.u32 %v5629, 16
        %v5725 = vrot.slane %v5723, 5
        %v5726 = vor.u32 %v5722, %v5725
        %v5727 = vrot.slane %v5726, 4
        %v5729 = vshll.u32 %v5630, 16
        %v5731 = vrot.slane %v5729, 5
        %v5732 = vsel %vm1087, %v5727, %v5731
        %v5733 = vshrl.u32 %v5630, 16
        %v5735 = vrot.slane %v5733, 4
        %v5736 = vor.u32 %v5735, %v5731
        %v5737 = vrot.slane %v5736, 4
        %v5739 = vshll.u32 %v5631, 16
        %v5741 = vrot.slane %v5739, 5
        %v5742 = vsel %vm1087, %v5737, %v5741
        %v5744 = vshrl.u32 %v5632, 16
        %v5746 = vrot.slane %v5744, 4
        %v5747 = vshll.u32 %v5632, 16
        %v5749 = vrot.slane %v5747, 5
        %v5750 = vor.u32 %v5746, %v5749
        %v5751 = vrot.slane %v5750, 4
        %v5753 = vshll.u32 %v5633, 16
        %v5755 = vrot.slane %v5753, 5
        %v5756 = vsel %vm1087, %v5751, %v5755
        %v5757 = vshrl.u32 %v5633, 16
        %v5759 = vrot.slane %v5757, 4
        %v5760 = vor.u32 %v5759, %v5755
        %v5761 = vrot.slane %v5760, 4
        %v5763 = vshll.u32 %v5634, 16
        %v5765 = vrot.slane %v5763, 5
        %v5766 = vsel %vm1087, %v5761, %v5765
        %v5768 = vshrl.u32 %v5635, 16
        %v5770 = vrot.slane %v5768, 4
        %v5771 = vshll.u32 %v5635, 16
        %v5773 = vrot.slane %v5771, 5
        %v5774 = vor.u32 %v5770, %v5773
        %v5775 = vrot.slane %v5774, 4
        %v5777 = vshll.u32 %v5636, 16
        %v5779 = vrot.slane %v5777, 5
        %v5780 = vsel %vm1087, %v5775, %v5779
        %v5781 = vshrl.u32 %v5636, 16
        %v5783 = vrot.slane %v5781, 4
        %v5784 = vor.u32 %v5783, %v5779
        %v5785 = vrot.slane %v5784, 4
        %v5787 = vshll.u32 %v5637, 16
        %v5789 = vrot.slane %v5787, 5
        %v5790 = vsel %vm1087, %v5785, %v5789
        %v5792 = vshrl.u32 %v5638, 16
        %v5794 = vrot.slane %v5792, 4
        %v5795 = vshll.u32 %v5638, 16
        %v5797 = vrot.slane %v5795, 5
        %v5798 = vor.u32 %v5794, %v5797
        %v5799 = vrot.slane %v5798, 4
        %v5801 = vshll.u32 %v5639, 16
        %v5803 = vrot.slane %v5801, 5
        %v5804 = vsel %vm1087, %v5799, %v5803
        %v5805 = vshrl.u32 %v5639, 16
        %v5807 = vrot.slane %v5805, 4
        %v5808 = vor.u32 %v5807, %v5803
        %v5809 = vrot.slane %v5808, 4
        %v5811 = vshll.u32 %v5640, 16
        %v5813 = vrot.slane %v5811, 5
        %v5814 = vsel %vm1087, %v5809, %v5813
        %v5816 = vshrl.u32 %v5641, 16
        %v5818 = vrot.slane %v5816, 4
        %v5819 = vshll.u32 %v5641, 16
        %v5821 = vrot.slane %v5819, 5
        %v5822 = vor.u32 %v5818, %v5821
        %v5823 = vrot.slane %v5822, 4
        %v5825 = vshll.u32 %v5642, 16
        %v5827 = vrot.slane %v5825, 5
        %v5828 = vsel %vm1087, %v5823, %v5827
        %v5829 = vshrl.u32 %v5642, 16
        %v5831 = vrot.slane %v5829, 4
        %v5832 = vor.u32 %v5831, %v5827
        %v5833 = vrot.slane %v5832, 4
        %v5835 = vshll.u32 %v5643, 16
        %v5837 = vrot.slane %v5835, 5
        %v5838 = vsel %vm1087, %v5833, %v5837
        %v5840 = vshrl.u32 %v5644, 16
        %v5842 = vrot.slane %v5840, 4
        %v5843 = vshll.u32 %v5644, 16
        %v5845 = vrot.slane %v5843, 5
        %v5846 = vor.u32 %v5842, %v5845
        %v5847 = vrot.slane %v5846, 4
        %v5849 = vshll.u32 %v5645, 16
        %v5851 = vrot.slane %v5849, 5
        %v5852 = vsel %vm1087, %v5847, %v5851
        %v5853 = vshrl.u32 %v5645, 16
        %v5855 = vrot.slane %v5853, 4
        %v5856 = vor.u32 %v5855, %v5851
        %v5857 = vrot.slane %v5856, 4
        %v5859 = vshll.u32 %v5646, 16
        %v5861 = vrot.slane %v5859, 5
        %v5862 = vsel %vm1087, %v5857, %v5861
        %v5864 = vshrl.u32 %v5647, 16
        %v5866 = vrot.slane %v5864, 4
        %v5867 = vshll.u32 %v5647, 16
        %v5869 = vrot.slane %v5867, 5
        %v5870 = vor.u32 %v5866, %v5869
        %v5871 = vrot.slane %v5870, 4
        %v5873 = vshll.u32 %v5648, 16
        %v5875 = vrot.slane %v5873, 5
        %v5876 = vsel %vm1087, %v5871, %v5875
        %v5877 = vshrl.u32 %v5648, 16
        %v5879 = vrot.slane %v5877, 4
        %v5880 = vor.u32 %v5879, %v5875
        %v5881 = vrot.slane %v5880, 4
        %v5883 = vshll.u32 %v5649, 16
        %v5885 = vrot.slane %v5883, 5
        %v5886 = vsel %vm1087, %v5881, %v5885
        %v5888 = vshrl.u32 %v5650, 16
        %v5890 = vrot.slane %v5888, 4
        %v5891 = vshll.u32 %v5650, 16
        %v5893 = vrot.slane %v5891, 5
        %v5894 = vor.u32 %v5890, %v5893
        %v5895 = vrot.slane %v5894, 4
        %v5897 = vshll.u32 %v5651, 16
        %v5899 = vrot.slane %v5897, 5
        %v5900 = vsel %vm1087, %v5895, %v5899
        %v5901 = vshrl.u32 %v5651, 16
        %v5903 = vrot.slane %v5901, 4
        %v5904 = vor.u32 %v5903, %v5899
        %v5905 = vrot.slane %v5904, 4
        %v5907 = vshll.u32 %v5652, 16
        %v5909 = vrot.slane %v5907, 5
        %v5910 = vsel %vm1087, %v5905, %v5909
        %v5912 = vshrl.u32 %v5653, 16
        %v5914 = vrot.slane %v5912, 4
        %v5915 = vshll.u32 %v5653, 16
        %v5917 = vrot.slane %v5915, 5
        %v5918 = vor.u32 %v5914, %v5917
        %v5919 = vrot.slane %v5918, 4
        %v5921 = vshll.u32 %v5654, 16
        %v5923 = vrot.slane %v5921, 5
        %v5924 = vsel %vm1087, %v5919, %v5923
        %v5925 = vshrl.u32 %v5654, 16
        %v5927 = vrot.slane %v5925, 4
        %v5928 = vor.u32 %v5927, %v5923
        %v5929 = vrot.slane %v5928, 4
        %v5931 = vshll.u32 %v5655, 16
        %v5933 = vrot.slane %v5931, 5
        %v5934 = vsel %vm1087, %v5929, %v5933
        %v5936 = vshrl.u32 %v5656, 16
        %v5938 = vrot.slane %v5936, 4
        %v5939 = vshll.u32 %v5656, 16
        %v5941 = vrot.slane %v5939, 5
        %v5942 = vor.u32 %v5938, %v5941
        %v5943 = vrot.slane %v5942, 4
        %v5945 = vshll.u32 %v5657, 16
        %v5947 = vrot.slane %v5945, 5
        %v5948 = vsel %vm1087, %v5943, %v5947
        %v5949 = vshrl.u32 %v5657, 16
        %v5951 = vrot.slane %v5949, 4
        %v5952 = vor.u32 %v5951, %v5947
        %v5953 = vrot.slane %v5952, 4
        %v5955 = vshll.u32 %v5658, 16
        %v5957 = vrot.slane %v5955, 5
        %v5958 = vsel %vm1087, %v5953, %v5957
        %v5960 = vshrl.u32 %v5659, 16
        %v5962 = vrot.slane %v5960, 4
        %v5963 = vshll.u32 %v5659, 16
        %v5965 = vrot.slane %v5963, 5
        %v5966 = vor.u32 %v5962, %v5965
        %v5967 = vrot.slane %v5966, 4
        %v5969 = vshll.u32 %v5660, 16
        %v5971 = vrot.slane %v5969, 5
        %v5972 = vsel %vm1087, %v5967, %v5971
        %v5973 = vshrl.u32 %v5660, 16
        %v5975 = vrot.slane %v5973, 4
        %v5976 = vor.u32 %v5975, %v5971
        %v5977 = vrot.slane %v5976, 4
        %v5979 = vshll.u32 %v5661, 16
        %v5981 = vrot.slane %v5979, 5
        %v5982 = vsel %vm1087, %v5977, %v5981
        %v5984 = vshrl.u32 %v5662, 16
        %v5986 = vrot.slane %v5984, 4
        %v5987 = vshll.u32 %v5662, 16
        %v5989 = vrot.slane %v5987, 5
        %v5990 = vor.u32 %v5986, %v5989
        %v5991 = vrot.slane %v5990, 4
        %v5993 = vshll.u32 %v5663, 16
        %v5995 = vrot.slane %v5993, 5
        %v5996 = vsel %vm1087, %v5991, %v5995
        %v5997 = vshrl.u32 %v5663, 16
        %v5999 = vrot.slane %v5997, 4
        %v6000 = vor.u32 %v5999, %v5995
        %v6001 = vrot.slane %v6000, 4
        %v6003 = vshll.u32 %v5664, 16
        %v6005 = vrot.slane %v6003, 5
        %v6006 = vsel %vm1087, %v6001, %v6005
        %v6008 = vshrl.u32 %v5665, 16
        %v6010 = vrot.slane %v6008, 4
        %v6011 = vshll.u32 %v5665, 16
        %v6013 = vrot.slane %v6011, 5
        %v6014 = vor.u32 %v6010, %v6013
        %v6015 = vrot.slane %v6014, 4
        %v6017 = vshll.u32 %v5666, 16
        %v6019 = vrot.slane %v6017, 5
        %v6020 = vsel %vm1087, %v6015, %v6019
        %v6021 = vshrl.u32 %v5666, 16
        %v6023 = vrot.slane %v6021, 4
        %v6024 = vor.u32 %v6023, %v6019
        %v6025 = vrot.slane %v6024, 4
        %v6027 = vshll.u32 %v5667, 16
        %v6029 = vrot.slane %v6027, 5
        %v6030 = vsel %vm1087, %v6025, %v6029
        %v6032 = vshrl.u32 %v5668, 16
        %v6034 = vrot.slane %v6032, 4
        %v6035 = vshll.u32 %v5668, 16
        %v6037 = vrot.slane %v6035, 5
        %v6038 = vor.u32 %v6034, %v6037
        %v6039 = vrot.slane %v6038, 4
        %v6041 = vshll.u32 %v5669, 16
        %v6043 = vrot.slane %v6041, 5
        %v6044 = vsel %vm1087, %v6039, %v6043
        %v6045 = vshrl.u32 %v5669, 16
        %v6047 = vrot.slane %v6045, 4
        %v6048 = vor.u32 %v6047, %v6043
        %v6049 = vrot.slane %v6048, 4
        %v6051 = vshll.u32 %v5670, 16
        %v6053 = vrot.slane %v6051, 5
        %v6054 = vsel %vm1087, %v6049, %v6053
        %6055 = vrot.lane.b32.xlu0 %v5684, 64
        %v6056 = vpop.permute.xlu0 %6055
        %6057 = vrot.lane.b32.xlu0 %v5694, 64
        %v6058 = vpop.permute.xlu0 %6057
        %6059 = vrot.lane.b32.xlu0 %v5708, 64
        %v6060 = vpop.permute.xlu0 %6059
        %6061 = vrot.lane.b32.xlu0 %v5718, 64
        %v6062 = vpop.permute.xlu0 %6061
        %6063 = vrot.lane.b32.xlu0 %v5732, 64
        %v6064 = vpop.permute.xlu0 %6063
        %6065 = vrot.lane.b32.xlu0 %v5742, 64
        %v6066 = vpop.permute.xlu0 %6065
        %6067 = vrot.lane.b32.xlu0 %v5756, 64
        %v6068 = vpop.permute.xlu0 %6067
        %6069 = vrot.lane.b32.xlu0 %v5766, 64
        %v6070 = vpop.permute.xlu0 %6069
        %6071 = vrot.lane.b32.xlu0 %v5780, 64
        %v6072 = vpop.permute.xlu0 %6071
        %6073 = vrot.lane.b32.xlu0 %v5790, 64
        %v6074 = vpop.permute.xlu0 %6073
        %6075 = vrot.lane.b32.xlu0 %v5804, 64
        %v6076 = vpop.permute.xlu0 %6075
        %6077 = vrot.lane.b32.xlu0 %v5814, 64
        %v6078 = vpop.permute.xlu0 %6077
        %6079 = vrot.lane.b32.xlu0 %v5828, 64
        %v6080 = vpop.permute.xlu0 %6079
        %6081 = vrot.lane.b32.xlu0 %v5838, 64
        %v6082 = vpop.permute.xlu0 %6081
        %6083 = vrot.lane.b32.xlu0 %v5852, 64
        %v6084 = vpop.permute.xlu0 %6083
        %6085 = vrot.lane.b32.xlu0 %v5862, 64
        %v6086 = vpop.permute.xlu0 %6085
        %6087 = vrot.lane.b32.xlu0 %v5876, 64
        %v6088 = vpop.permute.xlu0 %6087
        %6089 = vrot.lane.b32.xlu0 %v5886, 64
        %v6090 = vpop.permute.xlu0 %6089
        %6091 = vrot.lane.b32.xlu0 %v5900, 64
        %v6092 = vpop.permute.xlu0 %6091
        %6093 = vrot.lane.b32.xlu0 %v5910, 64
        %v6094 = vpop.permute.xlu0 %6093
        %6095 = vrot.lane.b32.xlu0 %v5924, 64
        %v6096 = vpop.permute.xlu0 %6095
        %6097 = vrot.lane.b32.xlu0 %v5934, 64
        %v6098 = vpop.permute.xlu0 %6097
        %6099 = vrot.lane.b32.xlu0 %v5948, 64
        %v6100 = vpop.permute.xlu0 %6099
        %6101 = vrot.lane.b32.xlu0 %v5958, 64
        %v6102 = vpop.permute.xlu0 %6101
        %6103 = vrot.lane.b32.xlu0 %v5972, 64
        %v6104 = vpop.permute.xlu0 %6103
        %6105 = vrot.lane.b32.xlu0 %v5982, 64
        %v6106 = vpop.permute.xlu0 %6105
        %6107 = vrot.lane.b32.xlu0 %v5996, 64
        %v6108 = vpop.permute.xlu0 %6107
        %6109 = vrot.lane.b32.xlu0 %v6006, 64
        %v6110 = vpop.permute.xlu0 %6109
        %6111 = vrot.lane.b32.xlu0 %v6020, 64
        %v6112 = vpop.permute.xlu0 %6111
        %6113 = vrot.lane.b32.xlu0 %v6030, 64
        %v6114 = vpop.permute.xlu0 %6113
        %6115 = vrot.lane.b32.xlu0 %v6044, 64
        %v6116 = vpop.permute.xlu0 %6115
        %6117 = vrot.lane.b32.xlu0 %v6054, 64
        %v6118 = vpop.permute.xlu0 %6117
        %vm6151 = vcmask 1043968
        %6152 = vst.msk [vmem:[#allocation5] sm:$0xf] %vm6151, %v6056
        %6153 = vst.msk [vmem:[#allocation5 + $0x14] sm:$0xf] %vm6151, %v6058
        %6154 = vst.msk [vmem:[#allocation5 + $0x28] sm:$0xf] %vm6151, %v6060
        %6155 = vst.msk [vmem:[#allocation5 + $0x3c] sm:$0xf] %vm6151, %v6062
        %6156 = vst.msk [vmem:[#allocation5 + $0x50] sm:$0xf] %vm6151, %v6064
        %6157 = vst.msk [vmem:[#allocation5 + $0x64] sm:$0xf] %vm6151, %v6066
        %6158 = vst.msk [vmem:[#allocation5 + $0x78] sm:$0xf] %vm6151, %v6068
        %6159 = vst.msk [vmem:[#allocation5 + $0x8c] sm:$0xf] %vm6151, %v6070
        %6160 = vst.msk [vmem:[#allocation5 + $0xa0] sm:$0xf] %vm6151, %v6072
        %6161 = vst.msk [vmem:[#allocation5 + $0xb4] sm:$0xf] %vm6151, %v6074
        %6162 = vst.msk [vmem:[#allocation5 + $0xc8] sm:$0xf] %vm6151, %v6076
        %6163 = vst.msk [vmem:[#allocation5 + $0xdc] sm:$0xf] %vm6151, %v6078
        %6164 = vst.msk [vmem:[#allocation5 + $0xf0] sm:$0xf] %vm6151, %v6080
        %6165 = vst.msk [vmem:[#allocation5 + $0x104] sm:$0xf] %vm6151, %v6082
        %6166 = vst.msk [vmem:[#allocation5 + $0x118] sm:$0xf] %vm6151, %v6084
        %6167 = vst.msk [vmem:[#allocation5 + $0x12c] sm:$0xf] %vm6151, %v6086
        %6168 = vst.msk [vmem:[#allocation5 + $0x140] sm:$0xf] %vm6151, %v6088
        %6169 = vst.msk [vmem:[#allocation5 + $0x154] sm:$0xf] %vm6151, %v6090
        %6170 = vst.msk [vmem:[#allocation5 + $0x168] sm:$0xf] %vm6151, %v6092
        %6171 = vst.msk [vmem:[#allocation5 + $0x17c] sm:$0xf] %vm6151, %v6094
        %6172 = vst.msk [vmem:[#allocation5 + $0x190] sm:$0xf] %vm6151, %v6096
        %6173 = vst.msk [vmem:[#allocation5 + $0x1a4] sm:$0xf] %vm6151, %v6098
        %6174 = vst.msk [vmem:[#allocation5 + $0x1b8] sm:$0xf] %vm6151, %v6100
        %6175 = vst.msk [vmem:[#allocation5 + $0x1cc] sm:$0xf] %vm6151, %v6102
        %6176 = vst.msk [vmem:[#allocation5 + $0x1e0] sm:$0xf] %vm6151, %v6104
        %6177 = vst.msk [vmem:[#allocation5 + $0x1f4] sm:$0xf] %vm6151, %v6106
        %6178 = vst.msk [vmem:[#allocation5 + $0x208] sm:$0xf] %vm6151, %v6108
        %6179 = vst.msk [vmem:[#allocation5 + $0x21c] sm:$0xf] %vm6151, %v6110
        %6180 = vst.msk [vmem:[#allocation5 + $0x230] sm:$0xf] %vm6151, %v6112
        %6181 = vst.msk [vmem:[#allocation5 + $0x244] sm:$0xf] %vm6151, %v6114
        %6182 = vst.msk [vmem:[#allocation5 + $0x258] sm:$0xf] %vm6151, %v6116
        %6183 = vst.msk [vmem:[#allocation5 + $0x26c] sm:$0xf] %vm6151, %v6118
        %v6184 = vld [vmem:[#allocation4] sm:$0xe]
        %v6185 = vld [vmem:[#allocation4 + $0x4] sm:$0xf]
        %v6186 = vld [vmem:[#allocation4 + $0x8] sm:$0x1]
        %v6187 = vld [vmem:[#allocation4 + $0xc] sm:$0xe]
        %v6188 = vld [vmem:[#allocation4 + $0x10] sm:$0xf]
        %v6189 = vld [vmem:[#allocation4 + $0x14] sm:$0x1]
        %v6190 = vld [vmem:[#allocation4 + $0x18] sm:$0xe]
        %v6191 = vld [vmem:[#allocation4 + $0x1c] sm:$0xf]
        %v6192 = vld [vmem:[#allocation4 + $0x20] sm:$0x1]
        %v6193 = vld [vmem:[#allocation4 + $0x24] sm:$0xe]
        %v6194 = vld [vmem:[#allocation4 + $0x28] sm:$0xf]
        %v6195 = vld [vmem:[#allocation4 + $0x2c] sm:$0x1]
        %v6196 = vld [vmem:[#allocation4 + $0x30] sm:$0xe]
        %v6197 = vld [vmem:[#allocation4 + $0x34] sm:$0xf]
        %v6198 = vld [vmem:[#allocation4 + $0x38] sm:$0x1]
        %v6199 = vld [vmem:[#allocation4 + $0x3c] sm:$0xe]
        %v6200 = vld [vmem:[#allocation4 + $0x40] sm:$0xf]
        %v6201 = vld [vmem:[#allocation4 + $0x44] sm:$0x1]
        %v6202 = vld [vmem:[#allocation4 + $0x48] sm:$0xe]
        %v6203 = vld [vmem:[#allocation4 + $0x4c] sm:$0xf]
        %v6204 = vld [vmem:[#allocation4 + $0x50] sm:$0x1]
        %v6205 = vld [vmem:[#allocation4 + $0x54] sm:$0xe]
        %v6206 = vld [vmem:[#allocation4 + $0x58] sm:$0xf]
        %v6207 = vld [vmem:[#allocation4 + $0x5c] sm:$0x1]
        %v6208 = vld [vmem:[#allocation4 + $0x60] sm:$0xe]
        %v6209 = vld [vmem:[#allocation4 + $0x64] sm:$0xf]
        %v6210 = vld [vmem:[#allocation4 + $0x68] sm:$0x1]
        %v6211 = vld [vmem:[#allocation4 + $0x6c] sm:$0xe]
        %v6212 = vld [vmem:[#allocation4 + $0x70] sm:$0xf]
        %v6213 = vld [vmem:[#allocation4 + $0x74] sm:$0x1]
        %v6214 = vld [vmem:[#allocation4 + $0x78] sm:$0xe]
        %v6215 = vld [vmem:[#allocation4 + $0x7c] sm:$0xf]
        %v6216 = vld [vmem:[#allocation4 + $0x80] sm:$0x1]
        %v6217 = vld [vmem:[#allocation4 + $0x84] sm:$0xe]
        %v6218 = vld [vmem:[#allocation4 + $0x88] sm:$0xf]
        %v6219 = vld [vmem:[#allocation4 + $0x8c] sm:$0x1]
        %v6220 = vld [vmem:[#allocation4 + $0x90] sm:$0xe]
        %v6221 = vld [vmem:[#allocation4 + $0x94] sm:$0xf]
        %v6222 = vld [vmem:[#allocation4 + $0x98] sm:$0x1]
        %v6223 = vld [vmem:[#allocation4 + $0x9c] sm:$0xe]
        %v6224 = vld [vmem:[#allocation4 + $0xa0] sm:$0xf]
        %v6225 = vld [vmem:[#allocation4 + $0xa4] sm:$0x1]
        %v6226 = vld [vmem:[#allocation4 + $0xa8] sm:$0xe]
        %v6227 = vld [vmem:[#allocation4 + $0xac] sm:$0xf]
        %v6228 = vld [vmem:[#allocation4 + $0xb0] sm:$0x1]
        %v6229 = vld [vmem:[#allocation4 + $0xb4] sm:$0xe]
        %v6230 = vld [vmem:[#allocation4 + $0xb8] sm:$0xf]
        %v6231 = vld [vmem:[#allocation4 + $0xbc] sm:$0x1]
        %v6280 = vrot.slane %v6184, 5
        %v6281 = vrot.slane %v6280, 4
        %v6282 = vrot.slane %v6185, 5
        %v6283 = vsel %vm1699, %v6281, %v6282
        %v6284 = vrot.slane %v6282, 4
        %v6285 = vrot.slane %v6186, 5
        %v6286 = vsel %vm1699, %v6284, %v6285
        %v6287 = vrot.slane %v6187, 5
        %v6288 = vrot.slane %v6287, 4
        %v6289 = vrot.slane %v6188, 5
        %v6290 = vsel %vm1699, %v6288, %v6289
        %v6291 = vrot.slane %v6289, 4
        %v6292 = vrot.slane %v6189, 5
        %v6293 = vsel %vm1699, %v6291, %v6292
        %v6294 = vrot.slane %v6190, 5
        %v6295 = vrot.slane %v6294, 4
        %v6296 = vrot.slane %v6191, 5
        %v6297 = vsel %vm1699, %v6295, %v6296
        %v6298 = vrot.slane %v6296, 4
        %v6299 = vrot.slane %v6192, 5
        %v6300 = vsel %vm1699, %v6298, %v6299
        %v6301 = vrot.slane %v6193, 5
        %v6302 = vrot.slane %v6301, 4
        %v6303 = vrot.slane %v6194, 5
        %v6304 = vsel %vm1699, %v6302, %v6303
        %v6305 = vrot.slane %v6303, 4
        %v6306 = vrot.slane %v6195, 5
        %v6307 = vsel %vm1699, %v6305, %v6306
        %v6308 = vrot.slane %v6196, 5
        %v6309 = vrot.slane %v6308, 4
        %v6310 = vrot.slane %v6197, 5
        %v6311 = vsel %vm1699, %v6309, %v6310
        %v6312 = vrot.slane %v6310, 4
        %v6313 = vrot.slane %v6198, 5
        %v6314 = vsel %vm1699, %v6312, %v6313
        %v6315 = vrot.slane %v6199, 5
        %v6316 = vrot.slane %v6315, 4
        %v6317 = vrot.slane %v6200, 5
        %v6318 = vsel %vm1699, %v6316, %v6317
        %v6319 = vrot.slane %v6317, 4
        %v6320 = vrot.slane %v6201, 5
        %v6321 = vsel %vm1699, %v6319, %v6320
        %v6322 = vrot.slane %v6202, 5
        %v6323 = vrot.slane %v6322, 4
        %v6324 = vrot.slane %v6203, 5
        %v6325 = vsel %vm1699, %v6323, %v6324
        %v6326 = vrot.slane %v6324, 4
        %v6327 = vrot.slane %v6204, 5
        %v6328 = vsel %vm1699, %v6326, %v6327
        %v6329 = vrot.slane %v6205, 5
        %v6330 = vrot.slane %v6329, 4
        %v6331 = vrot.slane %v6206, 5
        %v6332 = vsel %vm1699, %v6330, %v6331
        %v6333 = vrot.slane %v6331, 4
        %v6334 = vrot.slane %v6207, 5
        %v6335 = vsel %vm1699, %v6333, %v6334
        %v6336 = vrot.slane %v6208, 5
        %v6337 = vrot.slane %v6336, 4
        %v6338 = vrot.slane %v6209, 5
        %v6339 = vsel %vm1699, %v6337, %v6338
        %v6340 = vrot.slane %v6338, 4
        %v6341 = vrot.slane %v6210, 5
        %v6342 = vsel %vm1699, %v6340, %v6341
        %v6343 = vrot.slane %v6211, 5
        %v6344 = vrot.slane %v6343, 4
        %v6345 = vrot.slane %v6212, 5
        %v6346 = vsel %vm1699, %v6344, %v6345
        %v6347 = vrot.slane %v6345, 4
        %v6348 = vrot.slane %v6213, 5
        %v6349 = vsel %vm1699, %v6347, %v6348
        %v6350 = vrot.slane %v6214, 5
        %v6351 = vrot.slane %v6350, 4
        %v6352 = vrot.slane %v6215, 5
        %v6353 = vsel %vm1699, %v6351, %v6352
        %v6354 = vrot.slane %v6352, 4
        %v6355 = vrot.slane %v6216, 5
        %v6356 = vsel %vm1699, %v6354, %v6355
        %v6357 = vrot.slane %v6217, 5
        %v6358 = vrot.slane %v6357, 4
        %v6359 = vrot.slane %v6218, 5
        %v6360 = vsel %vm1699, %v6358, %v6359
        %v6361 = vrot.slane %v6359, 4
        %v6362 = vrot.slane %v6219, 5
        %v6363 = vsel %vm1699, %v6361, %v6362
        %v6364 = vrot.slane %v6220, 5
        %v6365 = vrot.slane %v6364, 4
        %v6366 = vrot.slane %v6221, 5
        %v6367 = vsel %vm1699, %v6365, %v6366
        %v6368 = vrot.slane %v6366, 4
        %v6369 = vrot.slane %v6222, 5
        %v6370 = vsel %vm1699, %v6368, %v6369
        %v6371 = vrot.slane %v6223, 5
        %v6372 = vrot.slane %v6371, 4
        %v6373 = vrot.slane %v6224, 5
        %v6374 = vsel %vm1699, %v6372, %v6373
        %v6375 = vrot.slane %v6373, 4
        %v6376 = vrot.slane %v6225, 5
        %v6377 = vsel %vm1699, %v6375, %v6376
        %v6378 = vrot.slane %v6226, 5
        %v6379 = vrot.slane %v6378, 4
        %v6380 = vrot.slane %v6227, 5
        %v6381 = vsel %vm1699, %v6379, %v6380
        %v6382 = vrot.slane %v6380, 4
        %v6383 = vrot.slane %v6228, 5
        %v6384 = vsel %vm1699, %v6382, %v6383
        %v6385 = vrot.slane %v6229, 5
        %v6386 = vrot.slane %v6385, 4
        %v6387 = vrot.slane %v6230, 5
        %v6388 = vsel %vm1699, %v6386, %v6387
        %v6389 = vrot.slane %v6387, 4
        %v6390 = vrot.slane %v6231, 5
        %v6391 = vsel %vm1699, %v6389, %v6390
        %6424 = vst.msk [vmem:[#allocation5 + $0x4] sm:$0xf] %vm4936, %v6283
        %6425 = vst.msk [vmem:[#allocation5 + $0x18] sm:$0xf] %vm4936, %v6286
        %6426 = vst.msk [vmem:[#allocation5 + $0x2c] sm:$0xf] %vm4936, %v6290
        %6427 = vst.msk [vmem:[#allocation5 + $0x40] sm:$0xf] %vm4936, %v6293
        %6428 = vst.msk [vmem:[#allocation5 + $0x54] sm:$0xf] %vm4936, %v6297
        %6429 = vst.msk [vmem:[#allocation5 + $0x68] sm:$0xf] %vm4936, %v6300
        %6430 = vst.msk [vmem:[#allocation5 + $0x7c] sm:$0xf] %vm4936, %v6304
        %6431 = vst.msk [vmem:[#allocation5 + $0x90] sm:$0xf] %vm4936, %v6307
        %6432 = vst.msk [vmem:[#allocation5 + $0xa4] sm:$0xf] %vm4936, %v6311
        %6433 = vst.msk [vmem:[#allocation5 + $0xb8] sm:$0xf] %vm4936, %v6314
        %6434 = vst.msk [vmem:[#allocation5 + $0xcc] sm:$0xf] %vm4936, %v6318
        %6435 = vst.msk [vmem:[#allocation5 + $0xe0] sm:$0xf] %vm4936, %v6321
        %6436 = vst.msk [vmem:[#allocation5 + $0xf4] sm:$0xf] %vm4936, %v6325
        %6437 = vst.msk [vmem:[#allocation5 + $0x108] sm:$0xf] %vm4936, %v6328
        %6438 = vst.msk [vmem:[#allocation5 + $0x11c] sm:$0xf] %vm4936, %v6332
        %6439 = vst.msk [vmem:[#allocation5 + $0x130] sm:$0xf] %vm4936, %v6335
        %6440 = vst.msk [vmem:[#allocation5 + $0x144] sm:$0xf] %vm4936, %v6339
        %6441 = vst.msk [vmem:[#allocation5 + $0x158] sm:$0xf] %vm4936, %v6342
        %6442 = vst.msk [vmem:[#allocation5 + $0x16c] sm:$0xf] %vm4936, %v6346
        %6443 = vst.msk [vmem:[#allocation5 + $0x180] sm:$0xf] %vm4936, %v6349
        %6444 = vst.msk [vmem:[#allocation5 + $0x194] sm:$0xf] %vm4936, %v6353
        %6445 = vst.msk [vmem:[#allocation5 + $0x1a8] sm:$0xf] %vm4936, %v6356
        %6446 = vst.msk [vmem:[#allocation5 + $0x1bc] sm:$0xf] %vm4936, %v6360
        %6447 = vst.msk [vmem:[#allocation5 + $0x1d0] sm:$0xf] %vm4936, %v6363
        %6448 = vst.msk [vmem:[#allocation5 + $0x1e4] sm:$0xf] %vm4936, %v6367
        %6449 = vst.msk [vmem:[#allocation5 + $0x1f8] sm:$0xf] %vm4936, %v6370
        %6450 = vst.msk [vmem:[#allocation5 + $0x20c] sm:$0xf] %vm4936, %v6374
        %6451 = vst.msk [vmem:[#allocation5 + $0x220] sm:$0xf] %vm4936, %v6377
        %6452 = vst.msk [vmem:[#allocation5 + $0x234] sm:$0xf] %vm4936, %v6381
        %6453 = vst.msk [vmem:[#allocation5 + $0x248] sm:$0xf] %vm4936, %v6384
        %6454 = vst.msk [vmem:[#allocation5 + $0x25c] sm:$0xf] %vm4936, %v6388
        %6455 = vst.msk [vmem:[#allocation5 + $0x270] sm:$0xf] %vm4936, %v6391
        %v6456 = vld [vmem:[%s4945] sm:$0xf]
        %v6457 = vld [vmem:[%s4945 + $0x4] sm:$0xf]
        %v6458 = vld [vmem:[%s4945 + $0xc] sm:$0xf]
        %v6459 = vld [vmem:[%s4945 + $0x10] sm:$0xf]
        %v6460 = vld [vmem:[%s4945 + $0x18] sm:$0xf]
        %v6461 = vld [vmem:[%s4945 + $0x1c] sm:$0xf]
        %v6462 = vld [vmem:[%s4945 + $0x24] sm:$0xf]
        %v6463 = vld [vmem:[%s4945 + $0x28] sm:$0xf]
        %v6464 = vld [vmem:[%s4945 + $0x30] sm:$0xf]
        %v6465 = vld [vmem:[%s4945 + $0x34] sm:$0xf]
        %v6466 = vld [vmem:[%s4945 + $0x3c] sm:$0xf]
        %v6467 = vld [vmem:[%s4945 + $0x40] sm:$0xf]
        %v6468 = vld [vmem:[%s4945 + $0x48] sm:$0xf]
        %v6469 = vld [vmem:[%s4945 + $0x4c] sm:$0xf]
        %v6470 = vld [vmem:[%s4945 + $0x54] sm:$0xf]
        %v6471 = vld [vmem:[%s4945 + $0x58] sm:$0xf]
        %v6472 = vld [vmem:[%s4945 + $0x60] sm:$0xf]
        %v6473 = vld [vmem:[%s4945 + $0x64] sm:$0xf]
        %v6474 = vld [vmem:[%s4945 + $0x6c] sm:$0xf]
        %v6475 = vld [vmem:[%s4945 + $0x70] sm:$0xf]
        %v6476 = vld [vmem:[%s4945 + $0x78] sm:$0xf]
        %v6477 = vld [vmem:[%s4945 + $0x7c] sm:$0xf]
        %v6478 = vld [vmem:[%s4945 + $0x84] sm:$0xf]
        %v6479 = vld [vmem:[%s4945 + $0x88] sm:$0xf]
        %v6480 = vld [vmem:[%s4945 + $0x90] sm:$0xf]
        %v6481 = vld [vmem:[%s4945 + $0x94] sm:$0xf]
        %v6482 = vld [vmem:[%s4945 + $0x9c] sm:$0xf]
        %v6483 = vld [vmem:[%s4945 + $0xa0] sm:$0xf]
        %v6484 = vld [vmem:[%s4945 + $0xa8] sm:$0xf]
        %v6485 = vld [vmem:[%s4945 + $0xac] sm:$0xf]
        %v6486 = vld [vmem:[%s4945 + $0xb4] sm:$0xf]
        %v6487 = vld [vmem:[%s4945 + $0xb8] sm:$0xf]
        %6520 = vrot.lane.b32.xlu0 %v6456, 64
        %v6521 = vpop.permute.xlu0 %6520
        %6522 = vrot.lane.b32.xlu0 %v6457, 64
        %v6523 = vpop.permute.xlu0 %6522
        %6524 = vrot.lane.b32.xlu0 %v6458, 64
        %v6525 = vpop.permute.xlu0 %6524
        %6526 = vrot.lane.b32.xlu0 %v6459, 64
        %v6527 = vpop.permute.xlu0 %6526
        %6528 = vrot.lane.b32.xlu0 %v6460, 64
        %v6529 = vpop.permute.xlu0 %6528
        %6530 = vrot.lane.b32.xlu0 %v6461, 64
        %v6531 = vpop.permute.xlu0 %6530
        %6532 = vrot.lane.b32.xlu0 %v6462, 64
        %v6533 = vpop.permute.xlu0 %6532
        %6534 = vrot.lane.b32.xlu0 %v6463, 64
        %v6535 = vpop.permute.xlu0 %6534
        %6536 = vrot.lane.b32.xlu0 %v6464, 64
        %v6537 = vpop.permute.xlu0 %6536
        %6538 = vrot.lane.b32.xlu0 %v6465, 64
        %v6539 = vpop.permute.xlu0 %6538
        %6540 = vrot.lane.b32.xlu0 %v6466, 64
        %v6541 = vpop.permute.xlu0 %6540
        %6542 = vrot.lane.b32.xlu0 %v6467, 64
        %v6543 = vpop.permute.xlu0 %6542
        %6544 = vrot.lane.b32.xlu0 %v6468, 64
        %v6545 = vpop.permute.xlu0 %6544
        %6546 = vrot.lane.b32.xlu0 %v6469, 64
        %v6547 = vpop.permute.xlu0 %6546
        %6548 = vrot.lane.b32.xlu0 %v6470, 64
        %v6549 = vpop.permute.xlu0 %6548
        %6550 = vrot.lane.b32.xlu0 %v6471, 64
        %v6551 = vpop.permute.xlu0 %6550
        %6552 = vrot.lane.b32.xlu0 %v6472, 64
        %v6553 = vpop.permute.xlu0 %6552
        %6554 = vrot.lane.b32.xlu0 %v6473, 64
        %v6555 = vpop.permute.xlu0 %6554
        %6556 = vrot.lane.b32.xlu0 %v6474, 64
        %v6557 = vpop.permute.xlu0 %6556
        %6558 = vrot.lane.b32.xlu0 %v6475, 64
        %v6559 = vpop.permute.xlu0 %6558
        %6560 = vrot.lane.b32.xlu0 %v6476, 64
        %v6561 = vpop.permute.xlu0 %6560
        %6562 = vrot.lane.b32.xlu0 %v6477, 64
        %v6563 = vpop.permute.xlu0 %6562
        %6564 = vrot.lane.b32.xlu0 %v6478, 64
        %v6565 = vpop.permute.xlu0 %6564
        %6566 = vrot.lane.b32.xlu0 %v6479, 64
        %v6567 = vpop.permute.xlu0 %6566
        %6568 = vrot.lane.b32.xlu0 %v6480, 64
        %v6569 = vpop.permute.xlu0 %6568
        %6570 = vrot.lane.b32.xlu0 %v6481, 64
        %v6571 = vpop.permute.xlu0 %6570
        %6572 = vrot.lane.b32.xlu0 %v6482, 64
        %v6573 = vpop.permute.xlu0 %6572
        %6574 = vrot.lane.b32.xlu0 %v6483, 64
        %v6575 = vpop.permute.xlu0 %6574
        %6576 = vrot.lane.b32.xlu0 %v6484, 64
        %v6577 = vpop.permute.xlu0 %6576
        %6578 = vrot.lane.b32.xlu0 %v6485, 64
        %v6579 = vpop.permute.xlu0 %6578
        %6580 = vrot.lane.b32.xlu0 %v6486, 64
        %v6581 = vpop.permute.xlu0 %6580
        %6582 = vrot.lane.b32.xlu0 %v6487, 64
        %v6583 = vpop.permute.xlu0 %6582
        %6616 = vst.msk [vmem:[#allocation5 + $0x4] sm:$0xf] %vm6151, %v6521
        %6617 = vst.msk [vmem:[#allocation5 + $0x18] sm:$0xf] %vm6151, %v6523
        %6618 = vst.msk [vmem:[#allocation5 + $0x2c] sm:$0xf] %vm6151, %v6525
        %6619 = vst.msk [vmem:[#allocation5 + $0x40] sm:$0xf] %vm6151, %v6527
        %6620 = vst.msk [vmem:[#allocation5 + $0x54] sm:$0xf] %vm6151, %v6529
        %6621 = vst.msk [vmem:[#allocation5 + $0x68] sm:$0xf] %vm6151, %v6531
        %6622 = vst.msk [vmem:[#allocation5 + $0x7c] sm:$0xf] %vm6151, %v6533
        %6623 = vst.msk [vmem:[#allocation5 + $0x90] sm:$0xf] %vm6151, %v6535
        %6624 = vst.msk [vmem:[#allocation5 + $0xa4] sm:$0xf] %vm6151, %v6537
        %6625 = vst.msk [vmem:[#allocation5 + $0xb8] sm:$0xf] %vm6151, %v6539
        %6626 = vst.msk [vmem:[#allocation5 + $0xcc] sm:$0xf] %vm6151, %v6541
        %6627 = vst.msk [vmem:[#allocation5 + $0xe0] sm:$0xf] %vm6151, %v6543
        %6628 = vst.msk [vmem:[#allocation5 + $0xf4] sm:$0xf] %vm6151, %v6545
        %6629 = vst.msk [vmem:[#allocation5 + $0x108] sm:$0xf] %vm6151, %v6547
        %6630 = vst.msk [vmem:[#allocation5 + $0x11c] sm:$0xf] %vm6151, %v6549
        %6631 = vst.msk [vmem:[#allocation5 + $0x130] sm:$0xf] %vm6151, %v6551
        %6632 = vst.msk [vmem:[#allocation5 + $0x144] sm:$0xf] %vm6151, %v6553
        %6633 = vst.msk [vmem:[#allocation5 + $0x158] sm:$0xf] %vm6151, %v6555
        %6634 = vst.msk [vmem:[#allocation5 + $0x16c] sm:$0xf] %vm6151, %v6557
        %6635 = vst.msk [vmem:[#allocation5 + $0x180] sm:$0xf] %vm6151, %v6559
        %6636 = vst.msk [vmem:[#allocation5 + $0x194] sm:$0xf] %vm6151, %v6561
        %6637 = vst.msk [vmem:[#allocation5 + $0x1a8] sm:$0xf] %vm6151, %v6563
        %6638 = vst.msk [vmem:[#allocation5 + $0x1bc] sm:$0xf] %vm6151, %v6565
        %6639 = vst.msk [vmem:[#allocation5 + $0x1d0] sm:$0xf] %vm6151, %v6567
        %6640 = vst.msk [vmem:[#allocation5 + $0x1e4] sm:$0xf] %vm6151, %v6569
        %6641 = vst.msk [vmem:[#allocation5 + $0x1f8] sm:$0xf] %vm6151, %v6571
        %6642 = vst.msk [vmem:[#allocation5 + $0x20c] sm:$0xf] %vm6151, %v6573
        %6643 = vst.msk [vmem:[#allocation5 + $0x220] sm:$0xf] %vm6151, %v6575
        %6644 = vst.msk [vmem:[#allocation5 + $0x234] sm:$0xf] %vm6151, %v6577
        %6645 = vst.msk [vmem:[#allocation5 + $0x248] sm:$0xf] %vm6151, %v6579
        %6646 = vst.msk [vmem:[#allocation5 + $0x25c] sm:$0xf] %vm6151, %v6581
        %6647 = vst.msk [vmem:[#allocation5 + $0x270] sm:$0xf] %vm6151, %v6583
        %v6648 = vld [vmem:[%s4945] sm:$0xf]
        %v6649 = vld [vmem:[%s4945 + $0x4] sm:$0xf]
        %v6650 = vld [vmem:[%s4945 + $0x8] sm:$0x1]
        %v6651 = vld [vmem:[%s4945 + $0xc] sm:$0xf]
        %v6652 = vld [vmem:[%s4945 + $0x10] sm:$0xf]
        %v6653 = vld [vmem:[%s4945 + $0x14] sm:$0x1]
        %v6654 = vld [vmem:[%s4945 + $0x18] sm:$0xf]
        %v6655 = vld [vmem:[%s4945 + $0x1c] sm:$0xf]
        %v6656 = vld [vmem:[%s4945 + $0x20] sm:$0x1]
        %v6657 = vld [vmem:[%s4945 + $0x24] sm:$0xf]
        %v6658 = vld [vmem:[%s4945 + $0x28] sm:$0xf]
        %v6659 = vld [vmem:[%s4945 + $0x2c] sm:$0x1]
        %v6660 = vld [vmem:[%s4945 + $0x30] sm:$0xf]
        %v6661 = vld [vmem:[%s4945 + $0x34] sm:$0xf]
        %v6662 = vld [vmem:[%s4945 + $0x38] sm:$0x1]
        %v6663 = vld [vmem:[%s4945 + $0x3c] sm:$0xf]
        %v6664 = vld [vmem:[%s4945 + $0x40] sm:$0xf]
        %v6665 = vld [vmem:[%s4945 + $0x44] sm:$0x1]
        %v6666 = vld [vmem:[%s4945 + $0x48] sm:$0xf]
        %v6667 = vld [vmem:[%s4945 + $0x4c] sm:$0xf]
        %v6668 = vld [vmem:[%s4945 + $0x50] sm:$0x1]
        %v6669 = vld [vmem:[%s4945 + $0x54] sm:$0xf]
        %v6670 = vld [vmem:[%s4945 + $0x58] sm:$0xf]
        %v6671 = vld [vmem:[%s4945 + $0x5c] sm:$0x1]
        %v6672 = vld [vmem:[%s4945 + $0x60] sm:$0xf]
        %v6673 = vld [vmem:[%s4945 + $0x64] sm:$0xf]
        %v6674 = vld [vmem:[%s4945 + $0x68] sm:$0x1]
        %v6675 = vld [vmem:[%s4945 + $0x6c] sm:$0xf]
        %v6676 = vld [vmem:[%s4945 + $0x70] sm:$0xf]
        %v6677 = vld [vmem:[%s4945 + $0x74] sm:$0x1]
        %v6678 = vld [vmem:[%s4945 + $0x78] sm:$0xf]
        %v6679 = vld [vmem:[%s4945 + $0x7c] sm:$0xf]
        %v6680 = vld [vmem:[%s4945 + $0x80] sm:$0x1]
        %v6681 = vld [vmem:[%s4945 + $0x84] sm:$0xf]
        %v6682 = vld [vmem:[%s4945 + $0x88] sm:$0xf]
        %v6683 = vld [vmem:[%s4945 + $0x8c] sm:$0x1]
        %v6684 = vld [vmem:[%s4945 + $0x90] sm:$0xf]
        %v6685 = vld [vmem:[%s4945 + $0x94] sm:$0xf]
        %v6686 = vld [vmem:[%s4945 + $0x98] sm:$0x1]
        %v6687 = vld [vmem:[%s4945 + $0x9c] sm:$0xf]
        %v6688 = vld [vmem:[%s4945 + $0xa0] sm:$0xf]
        %v6689 = vld [vmem:[%s4945 + $0xa4] sm:$0x1]
        %v6690 = vld [vmem:[%s4945 + $0xa8] sm:$0xf]
        %v6691 = vld [vmem:[%s4945 + $0xac] sm:$0xf]
        %v6692 = vld [vmem:[%s4945 + $0xb0] sm:$0x1]
        %v6693 = vld [vmem:[%s4945 + $0xb4] sm:$0xf]
        %v6694 = vld [vmem:[%s4945 + $0xb8] sm:$0xf]
        %v6695 = vld [vmem:[%s4945 + $0xbc] sm:$0x1]
        %v6697 = vshrl.u32 %v6648, 16
        %v6699 = vrot.slane %v6697, 4
        %v6700 = vshll.u32 %v6648, 16
        %v6702 = vrot.slane %v6700, 5
        %v6703 = vor.u32 %v6699, %v6702
        %v6704 = vrot.slane %v6703, 4
        %v6706 = vshll.u32 %v6649, 16
        %v6708 = vrot.slane %v6706, 5
        %v6709 = vsel %vm1087, %v6704, %v6708
        %v6710 = vshrl.u32 %v6649, 16
        %v6712 = vrot.slane %v6710, 4
        %v6713 = vor.u32 %v6712, %v6708
        %v6714 = vrot.slane %v6713, 4
        %v6716 = vshll.u32 %v6650, 16
        %v6718 = vrot.slane %v6716, 5
        %v6719 = vsel %vm1087, %v6714, %v6718
        %v6721 = vshrl.u32 %v6651, 16
        %v6723 = vrot.slane %v6721, 4
        %v6724 = vshll.u32 %v6651, 16
        %v6726 = vrot.slane %v6724, 5
        %v6727 = vor.u32 %v6723, %v6726
        %v6728 = vrot.slane %v6727, 4
        %v6730 = vshll.u32 %v6652, 16
        %v6732 = vrot.slane %v6730, 5
        %v6733 = vsel %vm1087, %v6728, %v6732
        %v6734 = vshrl.u32 %v6652, 16
        %v6736 = vrot.slane %v6734, 4
        %v6737 = vor.u32 %v6736, %v6732
        %v6738 = vrot.slane %v6737, 4
        %v6740 = vshll.u32 %v6653, 16
        %v6742 = vrot.slane %v6740, 5
        %v6743 = vsel %vm1087, %v6738, %v6742
        %v6745 = vshrl.u32 %v6654, 16
        %v6747 = vrot.slane %v6745, 4
        %v6748 = vshll.u32 %v6654, 16
        %v6750 = vrot.slane %v6748, 5
        %v6751 = vor.u32 %v6747, %v6750
        %v6752 = vrot.slane %v6751, 4
        %v6754 = vshll.u32 %v6655, 16
        %v6756 = vrot.slane %v6754, 5
        %v6757 = vsel %vm1087, %v6752, %v6756
        %v6758 = vshrl.u32 %v6655, 16
        %v6760 = vrot.slane %v6758, 4
        %v6761 = vor.u32 %v6760, %v6756
        %v6762 = vrot.slane %v6761, 4
        %v6764 = vshll.u32 %v6656, 16
        %v6766 = vrot.slane %v6764, 5
        %v6767 = vsel %vm1087, %v6762, %v6766
        %v6769 = vshrl.u32 %v6657, 16
        %v6771 = vrot.slane %v6769, 4
        %v6772 = vshll.u32 %v6657, 16
        %v6774 = vrot.slane %v6772, 5
        %v6775 = vor.u32 %v6771, %v6774
        %v6776 = vrot.slane %v6775, 4
        %v6778 = vshll.u32 %v6658, 16
        %v6780 = vrot.slane %v6778, 5
        %v6781 = vsel %vm1087, %v6776, %v6780
        %v6782 = vshrl.u32 %v6658, 16
        %v6784 = vrot.slane %v6782, 4
        %v6785 = vor.u32 %v6784, %v6780
        %v6786 = vrot.slane %v6785, 4
        %v6788 = vshll.u32 %v6659, 16
        %v6790 = vrot.slane %v6788, 5
        %v6791 = vsel %vm1087, %v6786, %v6790
        %v6793 = vshrl.u32 %v6660, 16
        %v6795 = vrot.slane %v6793, 4
        %v6796 = vshll.u32 %v6660, 16
        %v6798 = vrot.slane %v6796, 5
        %v6799 = vor.u32 %v6795, %v6798
        %v6800 = vrot.slane %v6799, 4
        %v6802 = vshll.u32 %v6661, 16
        %v6804 = vrot.slane %v6802, 5
        %v6805 = vsel %vm1087, %v6800, %v6804
        %v6806 = vshrl.u32 %v6661, 16
        %v6808 = vrot.slane %v6806, 4
        %v6809 = vor.u32 %v6808, %v6804
        %v6810 = vrot.slane %v6809, 4
        %v6812 = vshll.u32 %v6662, 16
        %v6814 = vrot.slane %v6812, 5
        %v6815 = vsel %vm1087, %v6810, %v6814
        %v6817 = vshrl.u32 %v6663, 16
        %v6819 = vrot.slane %v6817, 4
        %v6820 = vshll.u32 %v6663, 16
        %v6822 = vrot.slane %v6820, 5
        %v6823 = vor.u32 %v6819, %v6822
        %v6824 = vrot.slane %v6823, 4
        %v6826 = vshll.u32 %v6664, 16
        %v6828 = vrot.slane %v6826, 5
        %v6829 = vsel %vm1087, %v6824, %v6828
        %v6830 = vshrl.u32 %v6664, 16
        %v6832 = vrot.slane %v6830, 4
        %v6833 = vor.u32 %v6832, %v6828
        %v6834 = vrot.slane %v6833, 4
        %v6836 = vshll.u32 %v6665, 16
        %v6838 = vrot.slane %v6836, 5
        %v6839 = vsel %vm1087, %v6834, %v6838
        %v6841 = vshrl.u32 %v6666, 16
        %v6843 = vrot.slane %v6841, 4
        %v6844 = vshll.u32 %v6666, 16
        %v6846 = vrot.slane %v6844, 5
        %v6847 = vor.u32 %v6843, %v6846
        %v6848 = vrot.slane %v6847, 4
        %v6850 = vshll.u32 %v6667, 16
        %v6852 = vrot.slane %v6850, 5
        %v6853 = vsel %vm1087, %v6848, %v6852
        %v6854 = vshrl.u32 %v6667, 16
        %v6856 = vrot.slane %v6854, 4
        %v6857 = vor.u32 %v6856, %v6852
        %v6858 = vrot.slane %v6857, 4
        %v6860 = vshll.u32 %v6668, 16
        %v6862 = vrot.slane %v6860, 5
        %v6863 = vsel %vm1087, %v6858, %v6862
        %v6865 = vshrl.u32 %v6669, 16
        %v6867 = vrot.slane %v6865, 4
        %v6868 = vshll.u32 %v6669, 16
        %v6870 = vrot.slane %v6868, 5
        %v6871 = vor.u32 %v6867, %v6870
        %v6872 = vrot.slane %v6871, 4
        %v6874 = vshll.u32 %v6670, 16
        %v6876 = vrot.slane %v6874, 5
        %v6877 = vsel %vm1087, %v6872, %v6876
        %v6878 = vshrl.u32 %v6670, 16
        %v6880 = vrot.slane %v6878, 4
        %v6881 = vor.u32 %v6880, %v6876
        %v6882 = vrot.slane %v6881, 4
        %v6884 = vshll.u32 %v6671, 16
        %v6886 = vrot.slane %v6884, 5
        %v6887 = vsel %vm1087, %v6882, %v6886
        %v6889 = vshrl.u32 %v6672, 16
        %v6891 = vrot.slane %v6889, 4
        %v6892 = vshll.u32 %v6672, 16
        %v6894 = vrot.slane %v6892, 5
        %v6895 = vor.u32 %v6891, %v6894
        %v6896 = vrot.slane %v6895, 4
        %v6898 = vshll.u32 %v6673, 16
        %v6900 = vrot.slane %v6898, 5
        %v6901 = vsel %vm1087, %v6896, %v6900
        %v6902 = vshrl.u32 %v6673, 16
        %v6904 = vrot.slane %v6902, 4
        %v6905 = vor.u32 %v6904, %v6900
        %v6906 = vrot.slane %v6905, 4
        %v6908 = vshll.u32 %v6674, 16
        %v6910 = vrot.slane %v6908, 5
        %v6911 = vsel %vm1087, %v6906, %v6910
        %v6913 = vshrl.u32 %v6675, 16
        %v6915 = vrot.slane %v6913, 4
        %v6916 = vshll.u32 %v6675, 16
        %v6918 = vrot.slane %v6916, 5
        %v6919 = vor.u32 %v6915, %v6918
        %v6920 = vrot.slane %v6919, 4
        %v6922 = vshll.u32 %v6676, 16
        %v6924 = vrot.slane %v6922, 5
        %v6925 = vsel %vm1087, %v6920, %v6924
        %v6926 = vshrl.u32 %v6676, 16
        %v6928 = vrot.slane %v6926, 4
        %v6929 = vor.u32 %v6928, %v6924
        %v6930 = vrot.slane %v6929, 4
        %v6932 = vshll.u32 %v6677, 16
        %v6934 = vrot.slane %v6932, 5
        %v6935 = vsel %vm1087, %v6930, %v6934
        %v6937 = vshrl.u32 %v6678, 16
        %v6939 = vrot.slane %v6937, 4
        %v6940 = vshll.u32 %v6678, 16
        %v6942 = vrot.slane %v6940, 5
        %v6943 = vor.u32 %v6939, %v6942
        %v6944 = vrot.slane %v6943, 4
        %v6946 = vshll.u32 %v6679, 16
        %v6948 = vrot.slane %v6946, 5
        %v6949 = vsel %vm1087, %v6944, %v6948
        %v6950 = vshrl.u32 %v6679, 16
        %v6952 = vrot.slane %v6950, 4
        %v6953 = vor.u32 %v6952, %v6948
        %v6954 = vrot.slane %v6953, 4
        %v6956 = vshll.u32 %v6680, 16
        %v6958 = vrot.slane %v6956, 5
        %v6959 = vsel %vm1087, %v6954, %v6958
        %v6961 = vshrl.u32 %v6681, 16
        %v6963 = vrot.slane %v6961, 4
        %v6964 = vshll.u32 %v6681, 16
        %v6966 = vrot.slane %v6964, 5
        %v6967 = vor.u32 %v6963, %v6966
        %v6968 = vrot.slane %v6967, 4
        %v6970 = vshll.u32 %v6682, 16
        %v6972 = vrot.slane %v6970, 5
        %v6973 = vsel %vm1087, %v6968, %v6972
        %v6974 = vshrl.u32 %v6682, 16
        %v6976 = vrot.slane %v6974, 4
        %v6977 = vor.u32 %v6976, %v6972
        %v6978 = vrot.slane %v6977, 4
        %v6980 = vshll.u32 %v6683, 16
        %v6982 = vrot.slane %v6980, 5
        %v6983 = vsel %vm1087, %v6978, %v6982
        %v6985 = vshrl.u32 %v6684, 16
        %v6987 = vrot.slane %v6985, 4
        %v6988 = vshll.u32 %v6684, 16
        %v6990 = vrot.slane %v6988, 5
        %v6991 = vor.u32 %v6987, %v6990
        %v6992 = vrot.slane %v6991, 4
        %v6994 = vshll.u32 %v6685, 16
        %v6996 = vrot.slane %v6994, 5
        %v6997 = vsel %vm1087, %v6992, %v6996
        %v6998 = vshrl.u32 %v6685, 16
        %v7000 = vrot.slane %v6998, 4
        %v7001 = vor.u32 %v7000, %v6996
        %v7002 = vrot.slane %v7001, 4
        %v7004 = vshll.u32 %v6686, 16
        %v7006 = vrot.slane %v7004, 5
        %v7007 = vsel %vm1087, %v7002, %v7006
        %v7009 = vshrl.u32 %v6687, 16
        %v7011 = vrot.slane %v7009, 4
        %v7012 = vshll.u32 %v6687, 16
        %v7014 = vrot.slane %v7012, 5
        %v7015 = vor.u32 %v7011, %v7014
        %v7016 = vrot.slane %v7015, 4
        %v7018 = vshll.u32 %v6688, 16
        %v7020 = vrot.slane %v7018, 5
        %v7021 = vsel %vm1087, %v7016, %v7020
        %v7022 = vshrl.u32 %v6688, 16
        %v7024 = vrot.slane %v7022, 4
        %v7025 = vor.u32 %v7024, %v7020
        %v7026 = vrot.slane %v7025, 4
        %v7028 = vshll.u32 %v6689, 16
        %v7030 = vrot.slane %v7028, 5
        %v7031 = vsel %vm1087, %v7026, %v7030
        %v7033 = vshrl.u32 %v6690, 16
        %v7035 = vrot.slane %v7033, 4
        %v7036 = vshll.u32 %v6690, 16
        %v7038 = vrot.slane %v7036, 5
        %v7039 = vor.u32 %v7035, %v7038
        %v7040 = vrot.slane %v7039, 4
        %v7042 = vshll.u32 %v6691, 16
        %v7044 = vrot.slane %v7042, 5
        %v7045 = vsel %vm1087, %v7040, %v7044
        %v7046 = vshrl.u32 %v6691, 16
        %v7048 = vrot.slane %v7046, 4
        %v7049 = vor.u32 %v7048, %v7044
        %v7050 = vrot.slane %v7049, 4
        %v7052 = vshll.u32 %v6692, 16
        %v7054 = vrot.slane %v7052, 5
        %v7055 = vsel %vm1087, %v7050, %v7054
        %v7057 = vshrl.u32 %v6693, 16
        %v7059 = vrot.slane %v7057, 4
        %v7060 = vshll.u32 %v6693, 16
        %v7062 = vrot.slane %v7060, 5
        %v7063 = vor.u32 %v7059, %v7062
        %v7064 = vrot.slane %v7063, 4
        %v7066 = vshll.u32 %v6694, 16
        %v7068 = vrot.slane %v7066, 5
        %v7069 = vsel %vm1087, %v7064, %v7068
        %v7070 = vshrl.u32 %v6694, 16
        %v7072 = vrot.slane %v7070, 4
        %v7073 = vor.u32 %v7072, %v7068
        %v7074 = vrot.slane %v7073, 4
        %v7076 = vshll.u32 %v6695, 16
        %v7078 = vrot.slane %v7076, 5
        %v7079 = vsel %vm1087, %v7074, %v7078
        %7112 = vst.msk [vmem:[#allocation5 + $0x8] sm:$0xf] %vm4936, %v6709
        %7113 = vst.msk [vmem:[#allocation5 + $0x1c] sm:$0xf] %vm4936, %v6719
        %7114 = vst.msk [vmem:[#allocation5 + $0x30] sm:$0xf] %vm4936, %v6733
        %7115 = vst.msk [vmem:[#allocation5 + $0x44] sm:$0xf] %vm4936, %v6743
        %7116 = vst.msk [vmem:[#allocation5 + $0x58] sm:$0xf] %vm4936, %v6757
        %7117 = vst.msk [vmem:[#allocation5 + $0x6c] sm:$0xf] %vm4936, %v6767
        %7118 = vst.msk [vmem:[#allocation5 + $0x80] sm:$0xf] %vm4936, %v6781
        %7119 = vst.msk [vmem:[#allocation5 + $0x94] sm:$0xf] %vm4936, %v6791
        %7120 = vst.msk [vmem:[#allocation5 + $0xa8] sm:$0xf] %vm4936, %v6805
        %7121 = vst.msk [vmem:[#allocation5 + $0xbc] sm:$0xf] %vm4936, %v6815
        %7122 = vst.msk [vmem:[#allocation5 + $0xd0] sm:$0xf] %vm4936, %v6829
        %7123 = vst.msk [vmem:[#allocation5 + $0xe4] sm:$0xf] %vm4936, %v6839
        %7124 = vst.msk [vmem:[#allocation5 + $0xf8] sm:$0xf] %vm4936, %v6853
        %7125 = vst.msk [vmem:[#allocation5 + $0x10c] sm:$0xf] %vm4936, %v6863
        %7126 = vst.msk [vmem:[#allocation5 + $0x120] sm:$0xf] %vm4936, %v6877
        %7127 = vst.msk [vmem:[#allocation5 + $0x134] sm:$0xf] %vm4936, %v6887
        %7128 = vst.msk [vmem:[#allocation5 + $0x148] sm:$0xf] %vm4936, %v6901
        %7129 = vst.msk [vmem:[#allocation5 + $0x15c] sm:$0xf] %vm4936, %v6911
        %7130 = vst.msk [vmem:[#allocation5 + $0x170] sm:$0xf] %vm4936, %v6925
        %7131 = vst.msk [vmem:[#allocation5 + $0x184] sm:$0xf] %vm4936, %v6935
        %7132 = vst.msk [vmem:[#allocation5 + $0x198] sm:$0xf] %vm4936, %v6949
        %7133 = vst.msk [vmem:[#allocation5 + $0x1ac] sm:$0xf] %vm4936, %v6959
        %7134 = vst.msk [vmem:[#allocation5 + $0x1c0] sm:$0xf] %vm4936, %v6973
        %7135 = vst.msk [vmem:[#allocation5 + $0x1d4] sm:$0xf] %vm4936, %v6983
        %7136 = vst.msk [vmem:[#allocation5 + $0x1e8] sm:$0xf] %vm4936, %v6997
        %7137 = vst.msk [vmem:[#allocation5 + $0x1fc] sm:$0xf] %vm4936, %v7007
        %7138 = vst.msk [vmem:[#allocation5 + $0x210] sm:$0xf] %vm4936, %v7021
        %7139 = vst.msk [vmem:[#allocation5 + $0x224] sm:$0xf] %vm4936, %v7031
        %7140 = vst.msk [vmem:[#allocation5 + $0x238] sm:$0xf] %vm4936, %v7045
        %7141 = vst.msk [vmem:[#allocation5 + $0x24c] sm:$0xf] %vm4936, %v7055
        %7142 = vst.msk [vmem:[#allocation5 + $0x260] sm:$0xf] %vm4936, %v7069
        %7143 = vst.msk [vmem:[#allocation5 + $0x274] sm:$0xf] %vm4936, %v7079
        %v7144 = vld [vmem:[%s4945] sm:$0xe]
        %v7145 = vld [vmem:[%s4945 + $0x4] sm:$0xf]
        %v7146 = vld [vmem:[%s4945 + $0x8] sm:$0x1]
        %v7147 = vld [vmem:[%s4945 + $0xc] sm:$0xe]
        %v7148 = vld [vmem:[%s4945 + $0x10] sm:$0xf]
        %v7149 = vld [vmem:[%s4945 + $0x14] sm:$0x1]
        %v7150 = vld [vmem:[%s4945 + $0x18] sm:$0xe]
        %v7151 = vld [vmem:[%s4945 + $0x1c] sm:$0xf]
        %v7152 = vld [vmem:[%s4945 + $0x20] sm:$0x1]
        %v7153 = vld [vmem:[%s4945 + $0x24] sm:$0xe]
        %v7154 = vld [vmem:[%s4945 + $0x28] sm:$0xf]
        %v7155 = vld [vmem:[%s4945 + $0x2c] sm:$0x1]
        %v7156 = vld [vmem:[%s4945 + $0x30] sm:$0xe]
        %v7157 = vld [vmem:[%s4945 + $0x34] sm:$0xf]
        %v7158 = vld [vmem:[%s4945 + $0x38] sm:$0x1]
        %v7159 = vld [vmem:[%s4945 + $0x3c] sm:$0xe]
        %v7160 = vld [vmem:[%s4945 + $0x40] sm:$0xf]
        %v7161 = vld [vmem:[%s4945 + $0x44] sm:$0x1]
        %v7162 = vld [vmem:[%s4945 + $0x48] sm:$0xe]
        %v7163 = vld [vmem:[%s4945 + $0x4c] sm:$0xf]
        %v7164 = vld [vmem:[%s4945 + $0x50] sm:$0x1]
        %v7165 = vld [vmem:[%s4945 + $0x54] sm:$0xe]
        %v7166 = vld [vmem:[%s4945 + $0x58] sm:$0xf]
        %v7167 = vld [vmem:[%s4945 + $0x5c] sm:$0x1]
        %v7168 = vld [vmem:[%s4945 + $0x60] sm:$0xe]
        %v7169 = vld [vmem:[%s4945 + $0x64] sm:$0xf]
        %v7170 = vld [vmem:[%s4945 + $0x68] sm:$0x1]
        %v7171 = vld [vmem:[%s4945 + $0x6c] sm:$0xe]
        %v7172 = vld [vmem:[%s4945 + $0x70] sm:$0xf]
        %v7173 = vld [vmem:[%s4945 + $0x74] sm:$0x1]
        %v7174 = vld [vmem:[%s4945 + $0x78] sm:$0xe]
        %v7175 = vld [vmem:[%s4945 + $0x7c] sm:$0xf]
        %v7176 = vld [vmem:[%s4945 + $0x80] sm:$0x1]
        %v7177 = vld [vmem:[%s4945 + $0x84] sm:$0xe]
        %v7178 = vld [vmem:[%s4945 + $0x88] sm:$0xf]
        %v7179 = vld [vmem:[%s4945 + $0x8c] sm:$0x1]
        %v7180 = vld [vmem:[%s4945 + $0x90] sm:$0xe]
        %v7181 = vld [vmem:[%s4945 + $0x94] sm:$0xf]
        %v7182 = vld [vmem:[%s4945 + $0x98] sm:$0x1]
        %v7183 = vld [vmem:[%s4945 + $0x9c] sm:$0xe]
        %v7184 = vld [vmem:[%s4945 + $0xa0] sm:$0xf]
        %v7185 = vld [vmem:[%s4945 + $0xa4] sm:$0x1]
        %v7186 = vld [vmem:[%s4945 + $0xa8] sm:$0xe]
        %v7187 = vld [vmem:[%s4945 + $0xac] sm:$0xf]
        %v7188 = vld [vmem:[%s4945 + $0xb0] sm:$0x1]
        %v7189 = vld [vmem:[%s4945 + $0xb4] sm:$0xe]
        %v7190 = vld [vmem:[%s4945 + $0xb8] sm:$0xf]
        %v7191 = vld [vmem:[%s4945 + $0xbc] sm:$0x1]
        %v7240 = vrot.slane %v7144, 5
        %v7241 = vrot.slane %v7240, 4
        %v7242 = vrot.slane %v7145, 5
        %v7243 = vsel %vm1699, %v7241, %v7242
        %v7244 = vrot.slane %v7242, 4
        %v7245 = vrot.slane %v7146, 5
        %v7246 = vsel %vm1699, %v7244, %v7245
        %v7247 = vrot.slane %v7147, 5
        %v7248 = vrot.slane %v7247, 4
        %v7249 = vrot.slane %v7148, 5
        %v7250 = vsel %vm1699, %v7248, %v7249
        %v7251 = vrot.slane %v7249, 4
        %v7252 = vrot.slane %v7149, 5
        %v7253 = vsel %vm1699, %v7251, %v7252
        %v7254 = vrot.slane %v7150, 5
        %v7255 = vrot.slane %v7254, 4
        %v7256 = vrot.slane %v7151, 5
        %v7257 = vsel %vm1699, %v7255, %v7256
        %v7258 = vrot.slane %v7256, 4
        %v7259 = vrot.slane %v7152, 5
        %v7260 = vsel %vm1699, %v7258, %v7259
        %v7261 = vrot.slane %v7153, 5
        %v7262 = vrot.slane %v7261, 4
        %v7263 = vrot.slane %v7154, 5
        %v7264 = vsel %vm1699, %v7262, %v7263
        %v7265 = vrot.slane %v7263, 4
        %v7266 = vrot.slane %v7155, 5
        %v7267 = vsel %vm1699, %v7265, %v7266
        %v7268 = vrot.slane %v7156, 5
        %v7269 = vrot.slane %v7268, 4
        %v7270 = vrot.slane %v7157, 5
        %v7271 = vsel %vm1699, %v7269, %v7270
        %v7272 = vrot.slane %v7270, 4
        %v7273 = vrot.slane %v7158, 5
        %v7274 = vsel %vm1699, %v7272, %v7273
        %v7275 = vrot.slane %v7159, 5
        %v7276 = vrot.slane %v7275, 4
        %v7277 = vrot.slane %v7160, 5
        %v7278 = vsel %vm1699, %v7276, %v7277
        %v7279 = vrot.slane %v7277, 4
        %v7280 = vrot.slane %v7161, 5
        %v7281 = vsel %vm1699, %v7279, %v7280
        %v7282 = vrot.slane %v7162, 5
        %v7283 = vrot.slane %v7282, 4
        %v7284 = vrot.slane %v7163, 5
        %v7285 = vsel %vm1699, %v7283, %v7284
        %v7286 = vrot.slane %v7284, 4
        %v7287 = vrot.slane %v7164, 5
        %v7288 = vsel %vm1699, %v7286, %v7287
        %v7289 = vrot.slane %v7165, 5
        %v7290 = vrot.slane %v7289, 4
        %v7291 = vrot.slane %v7166, 5
        %v7292 = vsel %vm1699, %v7290, %v7291
        %v7293 = vrot.slane %v7291, 4
        %v7294 = vrot.slane %v7167, 5
        %v7295 = vsel %vm1699, %v7293, %v7294
        %v7296 = vrot.slane %v7168, 5
        %v7297 = vrot.slane %v7296, 4
        %v7298 = vrot.slane %v7169, 5
        %v7299 = vsel %vm1699, %v7297, %v7298
        %v7300 = vrot.slane %v7298, 4
        %v7301 = vrot.slane %v7170, 5
        %v7302 = vsel %vm1699, %v7300, %v7301
        %v7303 = vrot.slane %v7171, 5
        %v7304 = vrot.slane %v7303, 4
        %v7305 = vrot.slane %v7172, 5
        %v7306 = vsel %vm1699, %v7304, %v7305
        %v7307 = vrot.slane %v7305, 4
        %v7308 = vrot.slane %v7173, 5
        %v7309 = vsel %vm1699, %v7307, %v7308
        %v7310 = vrot.slane %v7174, 5
        %v7311 = vrot.slane %v7310, 4
        %v7312 = vrot.slane %v7175, 5
        %v7313 = vsel %vm1699, %v7311, %v7312
        %v7314 = vrot.slane %v7312, 4
        %v7315 = vrot.slane %v7176, 5
        %v7316 = vsel %vm1699, %v7314, %v7315
        %v7317 = vrot.slane %v7177, 5
        %v7318 = vrot.slane %v7317, 4
        %v7319 = vrot.slane %v7178, 5
        %v7320 = vsel %vm1699, %v7318, %v7319
        %v7321 = vrot.slane %v7319, 4
        %v7322 = vrot.slane %v7179, 5
        %v7323 = vsel %vm1699, %v7321, %v7322
        %v7324 = vrot.slane %v7180, 5
        %v7325 = vrot.slane %v7324, 4
        %v7326 = vrot.slane %v7181, 5
        %v7327 = vsel %vm1699, %v7325, %v7326
        %v7328 = vrot.slane %v7326, 4
        %v7329 = vrot.slane %v7182, 5
        %v7330 = vsel %vm1699, %v7328, %v7329
        %v7331 = vrot.slane %v7183, 5
        %v7332 = vrot.slane %v7331, 4
        %v7333 = vrot.slane %v7184, 5
        %v7334 = vsel %vm1699, %v7332, %v7333
        %v7335 = vrot.slane %v7333, 4
        %v7336 = vrot.slane %v7185, 5
        %v7337 = vsel %vm1699, %v7335, %v7336
        %v7338 = vrot.slane %v7186, 5
        %v7339 = vrot.slane %v7338, 4
        %v7340 = vrot.slane %v7187, 5
        %v7341 = vsel %vm1699, %v7339, %v7340
        %v7342 = vrot.slane %v7340, 4
        %v7343 = vrot.slane %v7188, 5
        %v7344 = vsel %vm1699, %v7342, %v7343
        %v7345 = vrot.slane %v7189, 5
        %v7346 = vrot.slane %v7345, 4
        %v7347 = vrot.slane %v7190, 5
        %v7348 = vsel %vm1699, %v7346, %v7347
        %v7349 = vrot.slane %v7347, 4
        %v7350 = vrot.slane %v7191, 5
        %v7351 = vsel %vm1699, %v7349, %v7350
        %7352 = vrot.lane.b32.xlu0 %v7243, 64
        %v7353 = vpop.permute.xlu0 %7352
        %7354 = vrot.lane.b32.xlu0 %v7246, 64
        %v7355 = vpop.permute.xlu0 %7354
        %7356 = vrot.lane.b32.xlu0 %v7250, 64
        %v7357 = vpop.permute.xlu0 %7356
        %7358 = vrot.lane.b32.xlu0 %v7253, 64
        %v7359 = vpop.permute.xlu0 %7358
        %7360 = vrot.lane.b32.xlu0 %v7257, 64
        %v7361 = vpop.permute.xlu0 %7360
        %7362 = vrot.lane.b32.xlu0 %v7260, 64
        %v7363 = vpop.permute.xlu0 %7362
        %7364 = vrot.lane.b32.xlu0 %v7264, 64
        %v7365 = vpop.permute.xlu0 %7364
        %7366 = vrot.lane.b32.xlu0 %v7267, 64
        %v7367 = vpop.permute.xlu0 %7366
        %7368 = vrot.lane.b32.xlu0 %v7271, 64
        %v7369 = vpop.permute.xlu0 %7368
        %7370 = vrot.lane.b32.xlu0 %v7274, 64
        %v7371 = vpop.permute.xlu0 %7370
        %7372 = vrot.lane.b32.xlu0 %v7278, 64
        %v7373 = vpop.permute.xlu0 %7372
        %7374 = vrot.lane.b32.xlu0 %v7281, 64
        %v7375 = vpop.permute.xlu0 %7374
        %7376 = vrot.lane.b32.xlu0 %v7285, 64
        %v7377 = vpop.permute.xlu0 %7376
        %7378 = vrot.lane.b32.xlu0 %v7288, 64
        %v7379 = vpop.permute.xlu0 %7378
        %7380 = vrot.lane.b32.xlu0 %v7292, 64
        %v7381 = vpop.permute.xlu0 %7380
        %7382 = vrot.lane.b32.xlu0 %v7295, 64
        %v7383 = vpop.permute.xlu0 %7382
        %7384 = vrot.lane.b32.xlu0 %v7299, 64
        %v7385 = vpop.permute.xlu0 %7384
        %7386 = vrot.lane.b32.xlu0 %v7302, 64
        %v7387 = vpop.permute.xlu0 %7386
        %7388 = vrot.lane.b32.xlu0 %v7306, 64
        %v7389 = vpop.permute.xlu0 %7388
        %7390 = vrot.lane.b32.xlu0 %v7309, 64
        %v7391 = vpop.permute.xlu0 %7390
        %7392 = vrot.lane.b32.xlu0 %v7313, 64
        %v7393 = vpop.permute.xlu0 %7392
        %7394 = vrot.lane.b32.xlu0 %v7316, 64
        %v7395 = vpop.permute.xlu0 %7394
        %7396 = vrot.lane.b32.xlu0 %v7320, 64
        %v7397 = vpop.permute.xlu0 %7396
        %7398 = vrot.lane.b32.xlu0 %v7323, 64
        %v7399 = vpop.permute.xlu0 %7398
        %7400 = vrot.lane.b32.xlu0 %v7327, 64
        %v7401 = vpop.permute.xlu0 %7400
        %7402 = vrot.lane.b32.xlu0 %v7330, 64
        %v7403 = vpop.permute.xlu0 %7402
        %7404 = vrot.lane.b32.xlu0 %v7334, 64
        %v7405 = vpop.permute.xlu0 %7404
        %7406 = vrot.lane.b32.xlu0 %v7337, 64
        %v7407 = vpop.permute.xlu0 %7406
        %7408 = vrot.lane.b32.xlu0 %v7341, 64
        %v7409 = vpop.permute.xlu0 %7408
        %7410 = vrot.lane.b32.xlu0 %v7344, 64
        %v7411 = vpop.permute.xlu0 %7410
        %7412 = vrot.lane.b32.xlu0 %v7348, 64
        %v7413 = vpop.permute.xlu0 %7412
        %7414 = vrot.lane.b32.xlu0 %v7351, 64
        %v7415 = vpop.permute.xlu0 %7414
        %7448 = vst.msk [vmem:[#allocation5 + $0x8] sm:$0xf] %vm6151, %v7353
        %7449 = vst.msk [vmem:[#allocation5 + $0x1c] sm:$0xf] %vm6151, %v7355
        %7450 = vst.msk [vmem:[#allocation5 + $0x30] sm:$0xf] %vm6151, %v7357
        %7451 = vst.msk [vmem:[#allocation5 + $0x44] sm:$0xf] %vm6151, %v7359
        %7452 = vst.msk [vmem:[#allocation5 + $0x58] sm:$0xf] %vm6151, %v7361
        %7453 = vst.msk [vmem:[#allocation5 + $0x6c] sm:$0xf] %vm6151, %v7363
        %7454 = vst.msk [vmem:[#allocation5 + $0x80] sm:$0xf] %vm6151, %v7365
        %7455 = vst.msk [vmem:[#allocation5 + $0x94] sm:$0xf] %vm6151, %v7367
        %7456 = vst.msk [vmem:[#allocation5 + $0xa8] sm:$0xf] %vm6151, %v7369
        %7457 = vst.msk [vmem:[#allocation5 + $0xbc] sm:$0xf] %vm6151, %v7371
        %7458 = vst.msk [vmem:[#allocation5 + $0xd0] sm:$0xf] %vm6151, %v7373
        %7459 = vst.msk [vmem:[#allocation5 + $0xe4] sm:$0xf] %vm6151, %v7375
        %7460 = vst.msk [vmem:[#allocation5 + $0xf8] sm:$0xf] %vm6151, %v7377
        %7461 = vst.msk [vmem:[#allocation5 + $0x10c] sm:$0xf] %vm6151, %v7379
        %7462 = vst.msk [vmem:[#allocation5 + $0x120] sm:$0xf] %vm6151, %v7381
        %7463 = vst.msk [vmem:[#allocation5 + $0x134] sm:$0xf] %vm6151, %v7383
        %7464 = vst.msk [vmem:[#allocation5 + $0x148] sm:$0xf] %vm6151, %v7385
        %7465 = vst.msk [vmem:[#allocation5 + $0x15c] sm:$0xf] %vm6151, %v7387
        %7466 = vst.msk [vmem:[#allocation5 + $0x170] sm:$0xf] %vm6151, %v7389
        %7467 = vst.msk [vmem:[#allocation5 + $0x184] sm:$0xf] %vm6151, %v7391
        %7468 = vst.msk [vmem:[#allocation5 + $0x198] sm:$0xf] %vm6151, %v7393
        %7469 = vst.msk [vmem:[#allocation5 + $0x1ac] sm:$0xf] %vm6151, %v7395
        %7470 = vst.msk [vmem:[#allocation5 + $0x1c0] sm:$0xf] %vm6151, %v7397
        %7471 = vst.msk [vmem:[#allocation5 + $0x1d4] sm:$0xf] %vm6151, %v7399
        %7472 = vst.msk [vmem:[#allocation5 + $0x1e8] sm:$0xf] %vm6151, %v7401
        %7473 = vst.msk [vmem:[#allocation5 + $0x1fc] sm:$0xf] %vm6151, %v7403
        %7474 = vst.msk [vmem:[#allocation5 + $0x210] sm:$0xf] %vm6151, %v7405
        %7475 = vst.msk [vmem:[#allocation5 + $0x224] sm:$0xf] %vm6151, %v7407
        %7476 = vst.msk [vmem:[#allocation5 + $0x238] sm:$0xf] %vm6151, %v7409
        %7477 = vst.msk [vmem:[#allocation5 + $0x24c] sm:$0xf] %vm6151, %v7411
        %7478 = vst.msk [vmem:[#allocation5 + $0x260] sm:$0xf] %vm6151, %v7413
        %7479 = vst.msk [vmem:[#allocation5 + $0x274] sm:$0xf] %vm6151, %v7415
        %s7480 = scalar_lea.vmem [#allocation4], 24
        %v7481 = vld [vmem:[%s7480] sm:$0xf]
        %v7482 = vld [vmem:[%s7480 + $0x4] sm:$0xf]
        %v7483 = vld [vmem:[%s7480 + $0xc] sm:$0xf]
        %v7484 = vld [vmem:[%s7480 + $0x10] sm:$0xf]
        %v7485 = vld [vmem:[%s7480 + $0x18] sm:$0xf]
        %v7486 = vld [vmem:[%s7480 + $0x1c] sm:$0xf]
        %v7487 = vld [vmem:[%s7480 + $0x24] sm:$0xf]
        %v7488 = vld [vmem:[%s7480 + $0x28] sm:$0xf]
        %v7489 = vld [vmem:[%s7480 + $0x30] sm:$0xf]
        %v7490 = vld [vmem:[%s7480 + $0x34] sm:$0xf]
        %v7491 = vld [vmem:[%s7480 + $0x3c] sm:$0xf]
        %v7492 = vld [vmem:[%s7480 + $0x40] sm:$0xf]
        %v7493 = vld [vmem:[%s7480 + $0x48] sm:$0xf]
        %v7494 = vld [vmem:[%s7480 + $0x4c] sm:$0xf]
        %v7495 = vld [vmem:[%s7480 + $0x54] sm:$0xf]
        %v7496 = vld [vmem:[%s7480 + $0x58] sm:$0xf]
        %v7497 = vld [vmem:[%s7480 + $0x60] sm:$0xf]
        %v7498 = vld [vmem:[%s7480 + $0x64] sm:$0xf]
        %v7499 = vld [vmem:[%s7480 + $0x6c] sm:$0xf]
        %v7500 = vld [vmem:[%s7480 + $0x70] sm:$0xf]
        %v7501 = vld [vmem:[%s7480 + $0x78] sm:$0xf]
        %v7502 = vld [vmem:[%s7480 + $0x7c] sm:$0xf]
        %v7503 = vld [vmem:[%s7480 + $0x84] sm:$0xf]
        %v7504 = vld [vmem:[%s7480 + $0x88] sm:$0xf]
        %v7505 = vld [vmem:[%s7480 + $0x90] sm:$0xf]
        %v7506 = vld [vmem:[%s7480 + $0x94] sm:$0xf]
        %v7507 = vld [vmem:[%s7480 + $0x9c] sm:$0xf]
        %v7508 = vld [vmem:[%s7480 + $0xa0] sm:$0xf]
        %v7509 = vld [vmem:[%s7480 + $0xa8] sm:$0xf]
        %v7510 = vld [vmem:[%s7480 + $0xac] sm:$0xf]
        %v7511 = vld [vmem:[%s7480 + $0xb4] sm:$0xf]
        %v7512 = vld [vmem:[%s7480 + $0xb8] sm:$0xf]
        %7513 = vst.msk [vmem:[#allocation5 + $0xc] sm:$0xf] %vm4936, %v7481
        %7514 = vst.msk [vmem:[#allocation5 + $0x20] sm:$0xf] %vm4936, %v7482
        %7515 = vst.msk [vmem:[#allocation5 + $0x34] sm:$0xf] %vm4936, %v7483
        %7516 = vst.msk [vmem:[#allocation5 + $0x48] sm:$0xf] %vm4936, %v7484
        %7517 = vst.msk [vmem:[#allocation5 + $0x5c] sm:$0xf] %vm4936, %v7485
        %7518 = vst.msk [vmem:[#allocation5 + $0x70] sm:$0xf] %vm4936, %v7486
        %7519 = vst.msk [vmem:[#allocation5 + $0x84] sm:$0xf] %vm4936, %v7487
        %7520 = vst.msk [vmem:[#allocation5 + $0x98] sm:$0xf] %vm4936, %v7488
        %7521 = vst.msk [vmem:[#allocation5 + $0xac] sm:$0xf] %vm4936, %v7489
        %7522 = vst.msk [vmem:[#allocation5 + $0xc0] sm:$0xf] %vm4936, %v7490
        %7523 = vst.msk [vmem:[#allocation5 + $0xd4] sm:$0xf] %vm4936, %v7491
        %7524 = vst.msk [vmem:[#allocation5 + $0xe8] sm:$0xf] %vm4936, %v7492
        %7525 = vst.msk [vmem:[#allocation5 + $0xfc] sm:$0xf] %vm4936, %v7493
        %7526 = vst.msk [vmem:[#allocation5 + $0x110] sm:$0xf] %vm4936, %v7494
        %7527 = vst.msk [vmem:[#allocation5 + $0x124] sm:$0xf] %vm4936, %v7495
        %7528 = vst.msk [vmem:[#allocation5 + $0x138] sm:$0xf] %vm4936, %v7496
        %7529 = vst.msk [vmem:[#allocation5 + $0x14c] sm:$0xf] %vm4936, %v7497
        %7530 = vst.msk [vmem:[#allocation5 + $0x160] sm:$0xf] %vm4936, %v7498
        %7531 = vst.msk [vmem:[#allocation5 + $0x174] sm:$0xf] %vm4936, %v7499
        %7532 = vst.msk [vmem:[#allocation5 + $0x188] sm:$0xf] %vm4936, %v7500
        %7533 = vst.msk [vmem:[#allocation5 + $0x19c] sm:$0xf] %vm4936, %v7501
        %7534 = vst.msk [vmem:[#allocation5 + $0x1b0] sm:$0xf] %vm4936, %v7502
        %7535 = vst.msk [vmem:[#allocation5 + $0x1c4] sm:$0xf] %vm4936, %v7503
        %7536 = vst.msk [vmem:[#allocation5 + $0x1d8] sm:$0xf] %vm4936, %v7504
        %7537 = vst.msk [vmem:[#allocation5 + $0x1ec] sm:$0xf] %vm4936, %v7505
        %7538 = vst.msk [vmem:[#allocation5 + $0x200] sm:$0xf] %vm4936, %v7506
        %7539 = vst.msk [vmem:[#allocation5 + $0x214] sm:$0xf] %vm4936, %v7507
        %7540 = vst.msk [vmem:[#allocation5 + $0x228] sm:$0xf] %vm4936, %v7508
        %7541 = vst.msk [vmem:[#allocation5 + $0x23c] sm:$0xf] %vm4936, %v7509
        %7542 = vst.msk [vmem:[#allocation5 + $0x250] sm:$0xf] %vm4936, %v7510
        %7543 = vst.msk [vmem:[#allocation5 + $0x264] sm:$0xf] %vm4936, %v7511
        %7544 = vst.msk [vmem:[#allocation5 + $0x278] sm:$0xf] %vm4936, %v7512
        %v7545 = vld [vmem:[%s7480] sm:$0xf]
        %v7546 = vld [vmem:[%s7480 + $0x4] sm:$0xf]
        %v7547 = vld [vmem:[%s7480 + $0x8] sm:$0x1]
        %v7548 = vld [vmem:[%s7480 + $0xc] sm:$0xf]
        %v7549 = vld [vmem:[%s7480 + $0x10] sm:$0xf]
        %v7550 = vld [vmem:[%s7480 + $0x14] sm:$0x1]
        %v7551 = vld [vmem:[%s7480 + $0x18] sm:$0xf]
        %v7552 = vld [vmem:[%s7480 + $0x1c] sm:$0xf]
        %v7553 = vld [vmem:[%s7480 + $0x20] sm:$0x1]
        %v7554 = vld [vmem:[%s7480 + $0x24] sm:$0xf]
        %v7555 = vld [vmem:[%s7480 + $0x28] sm:$0xf]
        %v7556 = vld [vmem:[%s7480 + $0x2c] sm:$0x1]
        %v7557 = vld [vmem:[%s7480 + $0x30] sm:$0xf]
        %v7558 = vld [vmem:[%s7480 + $0x34] sm:$0xf]
        %v7559 = vld [vmem:[%s7480 + $0x38] sm:$0x1]
        %v7560 = vld [vmem:[%s7480 + $0x3c] sm:$0xf]
        %v7561 = vld [vmem:[%s7480 + $0x40] sm:$0xf]
        %v7562 = vld [vmem:[%s7480 + $0x44] sm:$0x1]
        %v7563 = vld [vmem:[%s7480 + $0x48] sm:$0xf]
        %v7564 = vld [vmem:[%s7480 + $0x4c] sm:$0xf]
        %v7565 = vld [vmem:[%s7480 + $0x50] sm:$0x1]
        %v7566 = vld [vmem:[%s7480 + $0x54] sm:$0xf]
        %v7567 = vld [vmem:[%s7480 + $0x58] sm:$0xf]
        %v7568 = vld [vmem:[%s7480 + $0x5c] sm:$0x1]
        %v7569 = vld [vmem:[%s7480 + $0x60] sm:$0xf]
        %v7570 = vld [vmem:[%s7480 + $0x64] sm:$0xf]
        %v7571 = vld [vmem:[%s7480 + $0x68] sm:$0x1]
        %v7572 = vld [vmem:[%s7480 + $0x6c] sm:$0xf]
        %v7573 = vld [vmem:[%s7480 + $0x70] sm:$0xf]
        %v7574 = vld [vmem:[%s7480 + $0x74] sm:$0x1]
        %v7575 = vld [vmem:[%s7480 + $0x78] sm:$0xf]
        %v7576 = vld [vmem:[%s7480 + $0x7c] sm:$0xf]
        %v7577 = vld [vmem:[%s7480 + $0x80] sm:$0x1]
        %v7578 = vld [vmem:[%s7480 + $0x84] sm:$0xf]
        %v7579 = vld [vmem:[%s7480 + $0x88] sm:$0xf]
        %v7580 = vld [vmem:[%s7480 + $0x8c] sm:$0x1]
        %v7581 = vld [vmem:[%s7480 + $0x90] sm:$0xf]
        %v7582 = vld [vmem:[%s7480 + $0x94] sm:$0xf]
        %v7583 = vld [vmem:[%s7480 + $0x98] sm:$0x1]
        %v7584 = vld [vmem:[%s7480 + $0x9c] sm:$0xf]
        %v7585 = vld [vmem:[%s7480 + $0xa0] sm:$0xf]
        %v7586 = vld [vmem:[%s7480 + $0xa4] sm:$0x1]
        %v7587 = vld [vmem:[%s7480 + $0xa8] sm:$0xf]
        %v7588 = vld [vmem:[%s7480 + $0xac] sm:$0xf]
        %v7589 = vld [vmem:[%s7480 + $0xb0] sm:$0x1]
        %v7590 = vld [vmem:[%s7480 + $0xb4] sm:$0xf]
        %v7591 = vld [vmem:[%s7480 + $0xb8] sm:$0xf]
        %v7592 = vld [vmem:[%s7480 + $0xbc] sm:$0x1]
        %v7594 = vshrl.u32 %v7545, 16
        %v7596 = vrot.slane %v7594, 4
        %v7597 = vshll.u32 %v7545, 16
        %v7599 = vrot.slane %v7597, 5
        %v7600 = vor.u32 %v7596, %v7599
        %v7601 = vrot.slane %v7600, 4
        %v7603 = vshll.u32 %v7546, 16
        %v7605 = vrot.slane %v7603, 5
        %v7606 = vsel %vm1087, %v7601, %v7605
        %v7607 = vshrl.u32 %v7546, 16
        %v7609 = vrot.slane %v7607, 4
        %v7610 = vor.u32 %v7609, %v7605
        %v7611 = vrot.slane %v7610, 4
        %v7613 = vshll.u32 %v7547, 16
        %v7615 = vrot.slane %v7613, 5
        %v7616 = vsel %vm1087, %v7611, %v7615
        %v7618 = vshrl.u32 %v7548, 16
        %v7620 = vrot.slane %v7618, 4
        %v7621 = vshll.u32 %v7548, 16
        %v7623 = vrot.slane %v7621, 5
        %v7624 = vor.u32 %v7620, %v7623
        %v7625 = vrot.slane %v7624, 4
        %v7627 = vshll.u32 %v7549, 16
        %v7629 = vrot.slane %v7627, 5
        %v7630 = vsel %vm1087, %v7625, %v7629
        %v7631 = vshrl.u32 %v7549, 16
        %v7633 = vrot.slane %v7631, 4
        %v7634 = vor.u32 %v7633, %v7629
        %v7635 = vrot.slane %v7634, 4
        %v7637 = vshll.u32 %v7550, 16
        %v7639 = vrot.slane %v7637, 5
        %v7640 = vsel %vm1087, %v7635, %v7639
        %v7642 = vshrl.u32 %v7551, 16
        %v7644 = vrot.slane %v7642, 4
        %v7645 = vshll.u32 %v7551, 16
        %v7647 = vrot.slane %v7645, 5
        %v7648 = vor.u32 %v7644, %v7647
        %v7649 = vrot.slane %v7648, 4
        %v7651 = vshll.u32 %v7552, 16
        %v7653 = vrot.slane %v7651, 5
        %v7654 = vsel %vm1087, %v7649, %v7653
        %v7655 = vshrl.u32 %v7552, 16
        %v7657 = vrot.slane %v7655, 4
        %v7658 = vor.u32 %v7657, %v7653
        %v7659 = vrot.slane %v7658, 4
        %v7661 = vshll.u32 %v7553, 16
        %v7663 = vrot.slane %v7661, 5
        %v7664 = vsel %vm1087, %v7659, %v7663
        %v7666 = vshrl.u32 %v7554, 16
        %v7668 = vrot.slane %v7666, 4
        %v7669 = vshll.u32 %v7554, 16
        %v7671 = vrot.slane %v7669, 5
        %v7672 = vor.u32 %v7668, %v7671
        %v7673 = vrot.slane %v7672, 4
        %v7675 = vshll.u32 %v7555, 16
        %v7677 = vrot.slane %v7675, 5
        %v7678 = vsel %vm1087, %v7673, %v7677
        %v7679 = vshrl.u32 %v7555, 16
        %v7681 = vrot.slane %v7679, 4
        %v7682 = vor.u32 %v7681, %v7677
        %v7683 = vrot.slane %v7682, 4
        %v7685 = vshll.u32 %v7556, 16
        %v7687 = vrot.slane %v7685, 5
        %v7688 = vsel %vm1087, %v7683, %v7687
        %v7690 = vshrl.u32 %v7557, 16
        %v7692 = vrot.slane %v7690, 4
        %v7693 = vshll.u32 %v7557, 16
        %v7695 = vrot.slane %v7693, 5
        %v7696 = vor.u32 %v7692, %v7695
        %v7697 = vrot.slane %v7696, 4
        %v7699 = vshll.u32 %v7558, 16
        %v7701 = vrot.slane %v7699, 5
        %v7702 = vsel %vm1087, %v7697, %v7701
        %v7703 = vshrl.u32 %v7558, 16
        %v7705 = vrot.slane %v7703, 4
        %v7706 = vor.u32 %v7705, %v7701
        %v7707 = vrot.slane %v7706, 4
        %v7709 = vshll.u32 %v7559, 16
        %v7711 = vrot.slane %v7709, 5
        %v7712 = vsel %vm1087, %v7707, %v7711
        %v7714 = vshrl.u32 %v7560, 16
        %v7716 = vrot.slane %v7714, 4
        %v7717 = vshll.u32 %v7560, 16
        %v7719 = vrot.slane %v7717, 5
        %v7720 = vor.u32 %v7716, %v7719
        %v7721 = vrot.slane %v7720, 4
        %v7723 = vshll.u32 %v7561, 16
        %v7725 = vrot.slane %v7723, 5
        %v7726 = vsel %vm1087, %v7721, %v7725
        %v7727 = vshrl.u32 %v7561, 16
        %v7729 = vrot.slane %v7727, 4
        %v7730 = vor.u32 %v7729, %v7725
        %v7731 = vrot.slane %v7730, 4
        %v7733 = vshll.u32 %v7562, 16
        %v7735 = vrot.slane %v7733, 5
        %v7736 = vsel %vm1087, %v7731, %v7735
        %v7738 = vshrl.u32 %v7563, 16
        %v7740 = vrot.slane %v7738, 4
        %v7741 = vshll.u32 %v7563, 16
        %v7743 = vrot.slane %v7741, 5
        %v7744 = vor.u32 %v7740, %v7743
        %v7745 = vrot.slane %v7744, 4
        %v7747 = vshll.u32 %v7564, 16
        %v7749 = vrot.slane %v7747, 5
        %v7750 = vsel %vm1087, %v7745, %v7749
        %v7751 = vshrl.u32 %v7564, 16
        %v7753 = vrot.slane %v7751, 4
        %v7754 = vor.u32 %v7753, %v7749
        %v7755 = vrot.slane %v7754, 4
        %v7757 = vshll.u32 %v7565, 16
        %v7759 = vrot.slane %v7757, 5
        %v7760 = vsel %vm1087, %v7755, %v7759
        %v7762 = vshrl.u32 %v7566, 16
        %v7764 = vrot.slane %v7762, 4
        %v7765 = vshll.u32 %v7566, 16
        %v7767 = vrot.slane %v7765, 5
        %v7768 = vor.u32 %v7764, %v7767
        %v7769 = vrot.slane %v7768, 4
        %v7771 = vshll.u32 %v7567, 16
        %v7773 = vrot.slane %v7771, 5
        %v7774 = vsel %vm1087, %v7769, %v7773
        %v7775 = vshrl.u32 %v7567, 16
        %v7777 = vrot.slane %v7775, 4
        %v7778 = vor.u32 %v7777, %v7773
        %v7779 = vrot.slane %v7778, 4
        %v7781 = vshll.u32 %v7568, 16
        %v7783 = vrot.slane %v7781, 5
        %v7784 = vsel %vm1087, %v7779, %v7783
        %v7786 = vshrl.u32 %v7569, 16
        %v7788 = vrot.slane %v7786, 4
        %v7789 = vshll.u32 %v7569, 16
        %v7791 = vrot.slane %v7789, 5
        %v7792 = vor.u32 %v7788, %v7791
        %v7793 = vrot.slane %v7792, 4
        %v7795 = vshll.u32 %v7570, 16
        %v7797 = vrot.slane %v7795, 5
        %v7798 = vsel %vm1087, %v7793, %v7797
        %v7799 = vshrl.u32 %v7570, 16
        %v7801 = vrot.slane %v7799, 4
        %v7802 = vor.u32 %v7801, %v7797
        %v7803 = vrot.slane %v7802, 4
        %v7805 = vshll.u32 %v7571, 16
        %v7807 = vrot.slane %v7805, 5
        %v7808 = vsel %vm1087, %v7803, %v7807
        %v7810 = vshrl.u32 %v7572, 16
        %v7812 = vrot.slane %v7810, 4
        %v7813 = vshll.u32 %v7572, 16
        %v7815 = vrot.slane %v7813, 5
        %v7816 = vor.u32 %v7812, %v7815
        %v7817 = vrot.slane %v7816, 4
        %v7819 = vshll.u32 %v7573, 16
        %v7821 = vrot.slane %v7819, 5
        %v7822 = vsel %vm1087, %v7817, %v7821
        %v7823 = vshrl.u32 %v7573, 16
        %v7825 = vrot.slane %v7823, 4
        %v7826 = vor.u32 %v7825, %v7821
        %v7827 = vrot.slane %v7826, 4
        %v7829 = vshll.u32 %v7574, 16
        %v7831 = vrot.slane %v7829, 5
        %v7832 = vsel %vm1087, %v7827, %v7831
        %v7834 = vshrl.u32 %v7575, 16
        %v7836 = vrot.slane %v7834, 4
        %v7837 = vshll.u32 %v7575, 16
        %v7839 = vrot.slane %v7837, 5
        %v7840 = vor.u32 %v7836, %v7839
        %v7841 = vrot.slane %v7840, 4
        %v7843 = vshll.u32 %v7576, 16
        %v7845 = vrot.slane %v7843, 5
        %v7846 = vsel %vm1087, %v7841, %v7845
        %v7847 = vshrl.u32 %v7576, 16
        %v7849 = vrot.slane %v7847, 4
        %v7850 = vor.u32 %v7849, %v7845
        %v7851 = vrot.slane %v7850, 4
        %v7853 = vshll.u32 %v7577, 16
        %v7855 = vrot.slane %v7853, 5
        %v7856 = vsel %vm1087, %v7851, %v7855
        %v7858 = vshrl.u32 %v7578, 16
        %v7860 = vrot.slane %v7858, 4
        %v7861 = vshll.u32 %v7578, 16
        %v7863 = vrot.slane %v7861, 5
        %v7864 = vor.u32 %v7860, %v7863
        %v7865 = vrot.slane %v7864, 4
        %v7867 = vshll.u32 %v7579, 16
        %v7869 = vrot.slane %v7867, 5
        %v7870 = vsel %vm1087, %v7865, %v7869
        %v7871 = vshrl.u32 %v7579, 16
        %v7873 = vrot.slane %v7871, 4
        %v7874 = vor.u32 %v7873, %v7869
        %v7875 = vrot.slane %v7874, 4
        %v7877 = vshll.u32 %v7580, 16
        %v7879 = vrot.slane %v7877, 5
        %v7880 = vsel %vm1087, %v7875, %v7879
        %v7882 = vshrl.u32 %v7581, 16
        %v7884 = vrot.slane %v7882, 4
        %v7885 = vshll.u32 %v7581, 16
        %v7887 = vrot.slane %v7885, 5
        %v7888 = vor.u32 %v7884, %v7887
        %v7889 = vrot.slane %v7888, 4
        %v7891 = vshll.u32 %v7582, 16
        %v7893 = vrot.slane %v7891, 5
        %v7894 = vsel %vm1087, %v7889, %v7893
        %v7895 = vshrl.u32 %v7582, 16
        %v7897 = vrot.slane %v7895, 4
        %v7898 = vor.u32 %v7897, %v7893
        %v7899 = vrot.slane %v7898, 4
        %v7901 = vshll.u32 %v7583, 16
        %v7903 = vrot.slane %v7901, 5
        %v7904 = vsel %vm1087, %v7899, %v7903
        %v7906 = vshrl.u32 %v7584, 16
        %v7908 = vrot.slane %v7906, 4
        %v7909 = vshll.u32 %v7584, 16
        %v7911 = vrot.slane %v7909, 5
        %v7912 = vor.u32 %v7908, %v7911
        %v7913 = vrot.slane %v7912, 4
        %v7915 = vshll.u32 %v7585, 16
        %v7917 = vrot.slane %v7915, 5
        %v7918 = vsel %vm1087, %v7913, %v7917
        %v7919 = vshrl.u32 %v7585, 16
        %v7921 = vrot.slane %v7919, 4
        %v7922 = vor.u32 %v7921, %v7917
        %v7923 = vrot.slane %v7922, 4
        %v7925 = vshll.u32 %v7586, 16
        %v7927 = vrot.slane %v7925, 5
        %v7928 = vsel %vm1087, %v7923, %v7927
        %v7930 = vshrl.u32 %v7587, 16
        %v7932 = vrot.slane %v7930, 4
        %v7933 = vshll.u32 %v7587, 16
        %v7935 = vrot.slane %v7933, 5
        %v7936 = vor.u32 %v7932, %v7935
        %v7937 = vrot.slane %v7936, 4
        %v7939 = vshll.u32 %v7588, 16
        %v7941 = vrot.slane %v7939, 5
        %v7942 = vsel %vm1087, %v7937, %v7941
        %v7943 = vshrl.u32 %v7588, 16
        %v7945 = vrot.slane %v7943, 4
        %v7946 = vor.u32 %v7945, %v7941
        %v7947 = vrot.slane %v7946, 4
        %v7949 = vshll.u32 %v7589, 16
        %v7951 = vrot.slane %v7949, 5
        %v7952 = vsel %vm1087, %v7947, %v7951
        %v7954 = vshrl.u32 %v7590, 16
        %v7956 = vrot.slane %v7954, 4
        %v7957 = vshll.u32 %v7590, 16
        %v7959 = vrot.slane %v7957, 5
        %v7960 = vor.u32 %v7956, %v7959
        %v7961 = vrot.slane %v7960, 4
        %v7963 = vshll.u32 %v7591, 16
        %v7965 = vrot.slane %v7963, 5
        %v7966 = vsel %vm1087, %v7961, %v7965
        %v7967 = vshrl.u32 %v7591, 16
        %v7969 = vrot.slane %v7967, 4
        %v7970 = vor.u32 %v7969, %v7965
        %v7971 = vrot.slane %v7970, 4
        %v7973 = vshll.u32 %v7592, 16
        %v7975 = vrot.slane %v7973, 5
        %v7976 = vsel %vm1087, %v7971, %v7975
        %7977 = vrot.lane.b32.xlu0 %v7606, 64
        %v7978 = vpop.permute.xlu0 %7977
        %7979 = vrot.lane.b32.xlu0 %v7616, 64
        %v7980 = vpop.permute.xlu0 %7979
        %7981 = vrot.lane.b32.xlu0 %v7630, 64
        %v7982 = vpop.permute.xlu0 %7981
        %7983 = vrot.lane.b32.xlu0 %v7640, 64
        %v7984 = vpop.permute.xlu0 %7983
        %7985 = vrot.lane.b32.xlu0 %v7654, 64
        %v7986 = vpop.permute.xlu0 %7985
        %7987 = vrot.lane.b32.xlu0 %v7664, 64
        %v7988 = vpop.permute.xlu0 %7987
        %7989 = vrot.lane.b32.xlu0 %v7678, 64
        %v7990 = vpop.permute.xlu0 %7989
        %7991 = vrot.lane.b32.xlu0 %v7688, 64
        %v7992 = vpop.permute.xlu0 %7991
        %7993 = vrot.lane.b32.xlu0 %v7702, 64
        %v7994 = vpop.permute.xlu0 %7993
        %7995 = vrot.lane.b32.xlu0 %v7712, 64
        %v7996 = vpop.permute.xlu0 %7995
        %7997 = vrot.lane.b32.xlu0 %v7726, 64
        %v7998 = vpop.permute.xlu0 %7997
        %7999 = vrot.lane.b32.xlu0 %v7736, 64
        %v8000 = vpop.permute.xlu0 %7999
        %8001 = vrot.lane.b32.xlu0 %v7750, 64
        %v8002 = vpop.permute.xlu0 %8001
        %8003 = vrot.lane.b32.xlu0 %v7760, 64
        %v8004 = vpop.permute.xlu0 %8003
        %8005 = vrot.lane.b32.xlu0 %v7774, 64
        %v8006 = vpop.permute.xlu0 %8005
        %8007 = vrot.lane.b32.xlu0 %v7784, 64
        %v8008 = vpop.permute.xlu0 %8007
        %8009 = vrot.lane.b32.xlu0 %v7798, 64
        %v8010 = vpop.permute.xlu0 %8009
        %8011 = vrot.lane.b32.xlu0 %v7808, 64
        %v8012 = vpop.permute.xlu0 %8011
        %8013 = vrot.lane.b32.xlu0 %v7822, 64
        %v8014 = vpop.permute.xlu0 %8013
        %8015 = vrot.lane.b32.xlu0 %v7832, 64
        %v8016 = vpop.permute.xlu0 %8015
        %8017 = vrot.lane.b32.xlu0 %v7846, 64
        %v8018 = vpop.permute.xlu0 %8017
        %8019 = vrot.lane.b32.xlu0 %v7856, 64
        %v8020 = vpop.permute.xlu0 %8019
        %8021 = vrot.lane.b32.xlu0 %v7870, 64
        %v8022 = vpop.permute.xlu0 %8021
        %8023 = vrot.lane.b32.xlu0 %v7880, 64
        %v8024 = vpop.permute.xlu0 %8023
        %8025 = vrot.lane.b32.xlu0 %v7894, 64
        %v8026 = vpop.permute.xlu0 %8025
        %8027 = vrot.lane.b32.xlu0 %v7904, 64
        %v8028 = vpop.permute.xlu0 %8027
        %8029 = vrot.lane.b32.xlu0 %v7918, 64
        %v8030 = vpop.permute.xlu0 %8029
        %8031 = vrot.lane.b32.xlu0 %v7928, 64
        %v8032 = vpop.permute.xlu0 %8031
        %8033 = vrot.lane.b32.xlu0 %v7942, 64
        %v8034 = vpop.permute.xlu0 %8033
        %8035 = vrot.lane.b32.xlu0 %v7952, 64
        %v8036 = vpop.permute.xlu0 %8035
        %8037 = vrot.lane.b32.xlu0 %v7966, 64
        %v8038 = vpop.permute.xlu0 %8037
        %8039 = vrot.lane.b32.xlu0 %v7976, 64
        %v8040 = vpop.permute.xlu0 %8039
        %8073 = vst.msk [vmem:[#allocation5 + $0xc] sm:$0xf] %vm6151, %v7978
        %8074 = vst.msk [vmem:[#allocation5 + $0x20] sm:$0xf] %vm6151, %v7980
        %8075 = vst.msk [vmem:[#allocation5 + $0x34] sm:$0xf] %vm6151, %v7982
        %8076 = vst.msk [vmem:[#allocation5 + $0x48] sm:$0xf] %vm6151, %v7984
        %8077 = vst.msk [vmem:[#allocation5 + $0x5c] sm:$0xf] %vm6151, %v7986
        %8078 = vst.msk [vmem:[#allocation5 + $0x70] sm:$0xf] %vm6151, %v7988
        %8079 = vst.msk [vmem:[#allocation5 + $0x84] sm:$0xf] %vm6151, %v7990
        %8080 = vst.msk [vmem:[#allocation5 + $0x98] sm:$0xf] %vm6151, %v7992
        %8081 = vst.msk [vmem:[#allocation5 + $0xac] sm:$0xf] %vm6151, %v7994
        %8082 = vst.msk [vmem:[#allocation5 + $0xc0] sm:$0xf] %vm6151, %v7996
        %8083 = vst.msk [vmem:[#allocation5 + $0xd4] sm:$0xf] %vm6151, %v7998
        %8084 = vst.msk [vmem:[#allocation5 + $0xe8] sm:$0xf] %vm6151, %v8000
        %8085 = vst.msk [vmem:[#allocation5 + $0xfc] sm:$0xf] %vm6151, %v8002
        %8086 = vst.msk [vmem:[#allocation5 + $0x110] sm:$0xf] %vm6151, %v8004
        %8087 = vst.msk [vmem:[#allocation5 + $0x124] sm:$0xf] %vm6151, %v8006
        %8088 = vst.msk [vmem:[#allocation5 + $0x138] sm:$0xf] %vm6151, %v8008
        %8089 = vst.msk [vmem:[#allocation5 + $0x14c] sm:$0xf] %vm6151, %v8010
        %8090 = vst.msk [vmem:[#allocation5 + $0x160] sm:$0xf] %vm6151, %v8012
        %8091 = vst.msk [vmem:[#allocation5 + $0x174] sm:$0xf] %vm6151, %v8014
        %8092 = vst.msk [vmem:[#allocation5 + $0x188] sm:$0xf] %vm6151, %v8016
        %8093 = vst.msk [vmem:[#allocation5 + $0x19c] sm:$0xf] %vm6151, %v8018
        %8094 = vst.msk [vmem:[#allocation5 + $0x1b0] sm:$0xf] %vm6151, %v8020
        %8095 = vst.msk [vmem:[#allocation5 + $0x1c4] sm:$0xf] %vm6151, %v8022
        %8096 = vst.msk [vmem:[#allocation5 + $0x1d8] sm:$0xf] %vm6151, %v8024
        %8097 = vst.msk [vmem:[#allocation5 + $0x1ec] sm:$0xf] %vm6151, %v8026
        %8098 = vst.msk [vmem:[#allocation5 + $0x200] sm:$0xf] %vm6151, %v8028
        %8099 = vst.msk [vmem:[#allocation5 + $0x214] sm:$0xf] %vm6151, %v8030
        %8100 = vst.msk [vmem:[#allocation5 + $0x228] sm:$0xf] %vm6151, %v8032
        %8101 = vst.msk [vmem:[#allocation5 + $0x23c] sm:$0xf] %vm6151, %v8034
        %8102 = vst.msk [vmem:[#allocation5 + $0x250] sm:$0xf] %vm6151, %v8036
        %8103 = vst.msk [vmem:[#allocation5 + $0x264] sm:$0xf] %vm6151, %v8038
        %8104 = vst.msk [vmem:[#allocation5 + $0x278] sm:$0xf] %vm6151, %v8040
        %v8105 = vld [vmem:[%s7480] sm:$0xe]
        %v8106 = vld [vmem:[%s7480 + $0x4] sm:$0xf]
        %v8107 = vld [vmem:[%s7480 + $0x8] sm:$0x1]
        %v8108 = vld [vmem:[%s7480 + $0xc] sm:$0xe]
        %v8109 = vld [vmem:[%s7480 + $0x10] sm:$0xf]
        %v8110 = vld [vmem:[%s7480 + $0x14] sm:$0x1]
        %v8111 = vld [vmem:[%s7480 + $0x18] sm:$0xe]
        %v8112 = vld [vmem:[%s7480 + $0x1c] sm:$0xf]
        %v8113 = vld [vmem:[%s7480 + $0x20] sm:$0x1]
        %v8114 = vld [vmem:[%s7480 + $0x24] sm:$0xe]
        %v8115 = vld [vmem:[%s7480 + $0x28] sm:$0xf]
        %v8116 = vld [vmem:[%s7480 + $0x2c] sm:$0x1]
        %v8117 = vld [vmem:[%s7480 + $0x30] sm:$0xe]
        %v8118 = vld [vmem:[%s7480 + $0x34] sm:$0xf]
        %v8119 = vld [vmem:[%s7480 + $0x38] sm:$0x1]
        %v8120 = vld [vmem:[%s7480 + $0x3c] sm:$0xe]
        %v8121 = vld [vmem:[%s7480 + $0x40] sm:$0xf]
        %v8122 = vld [vmem:[%s7480 + $0x44] sm:$0x1]
        %v8123 = vld [vmem:[%s7480 + $0x48] sm:$0xe]
        %v8124 = vld [vmem:[%s7480 + $0x4c] sm:$0xf]
        %v8125 = vld [vmem:[%s7480 + $0x50] sm:$0x1]
        %v8126 = vld [vmem:[%s7480 + $0x54] sm:$0xe]
        %v8127 = vld [vmem:[%s7480 + $0x58] sm:$0xf]
        %v8128 = vld [vmem:[%s7480 + $0x5c] sm:$0x1]
        %v8129 = vld [vmem:[%s7480 + $0x60] sm:$0xe]
        %v8130 = vld [vmem:[%s7480 + $0x64] sm:$0xf]
        %v8131 = vld [vmem:[%s7480 + $0x68] sm:$0x1]
        %v8132 = vld [vmem:[%s7480 + $0x6c] sm:$0xe]
        %v8133 = vld [vmem:[%s7480 + $0x70] sm:$0xf]
        %v8134 = vld [vmem:[%s7480 + $0x74] sm:$0x1]
        %v8135 = vld [vmem:[%s7480 + $0x78] sm:$0xe]
        %v8136 = vld [vmem:[%s7480 + $0x7c] sm:$0xf]
        %v8137 = vld [vmem:[%s7480 + $0x80] sm:$0x1]
        %v8138 = vld [vmem:[%s7480 + $0x84] sm:$0xe]
        %v8139 = vld [vmem:[%s7480 + $0x88] sm:$0xf]
        %v8140 = vld [vmem:[%s7480 + $0x8c] sm:$0x1]
        %v8141 = vld [vmem:[%s7480 + $0x90] sm:$0xe]
        %v8142 = vld [vmem:[%s7480 + $0x94] sm:$0xf]
        %v8143 = vld [vmem:[%s7480 + $0x98] sm:$0x1]
        %v8144 = vld [vmem:[%s7480 + $0x9c] sm:$0xe]
        %v8145 = vld [vmem:[%s7480 + $0xa0] sm:$0xf]
        %v8146 = vld [vmem:[%s7480 + $0xa4] sm:$0x1]
        %v8147 = vld [vmem:[%s7480 + $0xa8] sm:$0xe]
        %v8148 = vld [vmem:[%s7480 + $0xac] sm:$0xf]
        %v8149 = vld [vmem:[%s7480 + $0xb0] sm:$0x1]
        %v8150 = vld [vmem:[%s7480 + $0xb4] sm:$0xe]
        %v8151 = vld [vmem:[%s7480 + $0xb8] sm:$0xf]
        %v8152 = vld [vmem:[%s7480 + $0xbc] sm:$0x1]
        %v8201 = vrot.slane %v8105, 5
        %v8202 = vrot.slane %v8201, 4
        %v8203 = vrot.slane %v8106, 5
        %v8204 = vsel %vm1699, %v8202, %v8203
        %v8205 = vrot.slane %v8203, 4
        %v8206 = vrot.slane %v8107, 5
        %v8207 = vsel %vm1699, %v8205, %v8206
        %v8208 = vrot.slane %v8108, 5
        %v8209 = vrot.slane %v8208, 4
        %v8210 = vrot.slane %v8109, 5
        %v8211 = vsel %vm1699, %v8209, %v8210
        %v8212 = vrot.slane %v8210, 4
        %v8213 = vrot.slane %v8110, 5
        %v8214 = vsel %vm1699, %v8212, %v8213
        %v8215 = vrot.slane %v8111, 5
        %v8216 = vrot.slane %v8215, 4
        %v8217 = vrot.slane %v8112, 5
        %v8218 = vsel %vm1699, %v8216, %v8217
        %v8219 = vrot.slane %v8217, 4
        %v8220 = vrot.slane %v8113, 5
        %v8221 = vsel %vm1699, %v8219, %v8220
        %v8222 = vrot.slane %v8114, 5
        %v8223 = vrot.slane %v8222, 4
        %v8224 = vrot.slane %v8115, 5
        %v8225 = vsel %vm1699, %v8223, %v8224
        %v8226 = vrot.slane %v8224, 4
        %v8227 = vrot.slane %v8116, 5
        %v8228 = vsel %vm1699, %v8226, %v8227
        %v8229 = vrot.slane %v8117, 5
        %v8230 = vrot.slane %v8229, 4
        %v8231 = vrot.slane %v8118, 5
        %v8232 = vsel %vm1699, %v8230, %v8231
        %v8233 = vrot.slane %v8231, 4
        %v8234 = vrot.slane %v8119, 5
        %v8235 = vsel %vm1699, %v8233, %v8234
        %v8236 = vrot.slane %v8120, 5
        %v8237 = vrot.slane %v8236, 4
        %v8238 = vrot.slane %v8121, 5
        %v8239 = vsel %vm1699, %v8237, %v8238
        %v8240 = vrot.slane %v8238, 4
        %v8241 = vrot.slane %v8122, 5
        %v8242 = vsel %vm1699, %v8240, %v8241
        %v8243 = vrot.slane %v8123, 5
        %v8244 = vrot.slane %v8243, 4
        %v8245 = vrot.slane %v8124, 5
        %v8246 = vsel %vm1699, %v8244, %v8245
        %v8247 = vrot.slane %v8245, 4
        %v8248 = vrot.slane %v8125, 5
        %v8249 = vsel %vm1699, %v8247, %v8248
        %v8250 = vrot.slane %v8126, 5
        %v8251 = vrot.slane %v8250, 4
        %v8252 = vrot.slane %v8127, 5
        %v8253 = vsel %vm1699, %v8251, %v8252
        %v8254 = vrot.slane %v8252, 4
        %v8255 = vrot.slane %v8128, 5
        %v8256 = vsel %vm1699, %v8254, %v8255
        %v8257 = vrot.slane %v8129, 5
        %v8258 = vrot.slane %v8257, 4
        %v8259 = vrot.slane %v8130, 5
        %v8260 = vsel %vm1699, %v8258, %v8259
        %v8261 = vrot.slane %v8259, 4
        %v8262 = vrot.slane %v8131, 5
        %v8263 = vsel %vm1699, %v8261, %v8262
        %v8264 = vrot.slane %v8132, 5
        %v8265 = vrot.slane %v8264, 4
        %v8266 = vrot.slane %v8133, 5
        %v8267 = vsel %vm1699, %v8265, %v8266
        %v8268 = vrot.slane %v8266, 4
        %v8269 = vrot.slane %v8134, 5
        %v8270 = vsel %vm1699, %v8268, %v8269
        %v8271 = vrot.slane %v8135, 5
        %v8272 = vrot.slane %v8271, 4
        %v8273 = vrot.slane %v8136, 5
        %v8274 = vsel %vm1699, %v8272, %v8273
        %v8275 = vrot.slane %v8273, 4
        %v8276 = vrot.slane %v8137, 5
        %v8277 = vsel %vm1699, %v8275, %v8276
        %v8278 = vrot.slane %v8138, 5
        %v8279 = vrot.slane %v8278, 4
        %v8280 = vrot.slane %v8139, 5
        %v8281 = vsel %vm1699, %v8279, %v8280
        %v8282 = vrot.slane %v8280, 4
        %v8283 = vrot.slane %v8140, 5
        %v8284 = vsel %vm1699, %v8282, %v8283
        %v8285 = vrot.slane %v8141, 5
        %v8286 = vrot.slane %v8285, 4
        %v8287 = vrot.slane %v8142, 5
        %v8288 = vsel %vm1699, %v8286, %v8287
        %v8289 = vrot.slane %v8287, 4
        %v8290 = vrot.slane %v8143, 5
        %v8291 = vsel %vm1699, %v8289, %v8290
        %v8292 = vrot.slane %v8144, 5
        %v8293 = vrot.slane %v8292, 4
        %v8294 = vrot.slane %v8145, 5
        %v8295 = vsel %vm1699, %v8293, %v8294
        %v8296 = vrot.slane %v8294, 4
        %v8297 = vrot.slane %v8146, 5
        %v8298 = vsel %vm1699, %v8296, %v8297
        %v8299 = vrot.slane %v8147, 5
        %v8300 = vrot.slane %v8299, 4
        %v8301 = vrot.slane %v8148, 5
        %v8302 = vsel %vm1699, %v8300, %v8301
        %v8303 = vrot.slane %v8301, 4
        %v8304 = vrot.slane %v8149, 5
        %v8305 = vsel %vm1699, %v8303, %v8304
        %v8306 = vrot.slane %v8150, 5
        %v8307 = vrot.slane %v8306, 4
        %v8308 = vrot.slane %v8151, 5
        %v8309 = vsel %vm1699, %v8307, %v8308
        %v8310 = vrot.slane %v8308, 4
        %v8311 = vrot.slane %v8152, 5
        %v8312 = vsel %vm1699, %v8310, %v8311
        %8345 = vst.msk [vmem:[#allocation5 + $0x10] sm:$0xf] %vm4936, %v8204
        %8346 = vst.msk [vmem:[#allocation5 + $0x24] sm:$0xf] %vm4936, %v8207
        %8347 = vst.msk [vmem:[#allocation5 + $0x38] sm:$0xf] %vm4936, %v8211
        %8348 = vst.msk [vmem:[#allocation5 + $0x4c] sm:$0xf] %vm4936, %v8214
        %8349 = vst.msk [vmem:[#allocation5 + $0x60] sm:$0xf] %vm4936, %v8218
        %8350 = vst.msk [vmem:[#allocation5 + $0x74] sm:$0xf] %vm4936, %v8221
        %8351 = vst.msk [vmem:[#allocation5 + $0x88] sm:$0xf] %vm4936, %v8225
        %8352 = vst.msk [vmem:[#allocation5 + $0x9c] sm:$0xf] %vm4936, %v8228
        %8353 = vst.msk [vmem:[#allocation5 + $0xb0] sm:$0xf] %vm4936, %v8232
        %8354 = vst.msk [vmem:[#allocation5 + $0xc4] sm:$0xf] %vm4936, %v8235
        %8355 = vst.msk [vmem:[#allocation5 + $0xd8] sm:$0xf] %vm4936, %v8239
        %8356 = vst.msk [vmem:[#allocation5 + $0xec] sm:$0xf] %vm4936, %v8242
        %8357 = vst.msk [vmem:[#allocation5 + $0x100] sm:$0xf] %vm4936, %v8246
        %8358 = vst.msk [vmem:[#allocation5 + $0x114] sm:$0xf] %vm4936, %v8249
        %8359 = vst.msk [vmem:[#allocation5 + $0x128] sm:$0xf] %vm4936, %v8253
        %8360 = vst.msk [vmem:[#allocation5 + $0x13c] sm:$0xf] %vm4936, %v8256
        %8361 = vst.msk [vmem:[#allocation5 + $0x150] sm:$0xf] %vm4936, %v8260
        %8362 = vst.msk [vmem:[#allocation5 + $0x164] sm:$0xf] %vm4936, %v8263
        %8363 = vst.msk [vmem:[#allocation5 + $0x178] sm:$0xf] %vm4936, %v8267
        %8364 = vst.msk [vmem:[#allocation5 + $0x18c] sm:$0xf] %vm4936, %v8270
        %8365 = vst.msk [vmem:[#allocation5 + $0x1a0] sm:$0xf] %vm4936, %v8274
        %8366 = vst.msk [vmem:[#allocation5 + $0x1b4] sm:$0xf] %vm4936, %v8277
        %8367 = vst.msk [vmem:[#allocation5 + $0x1c8] sm:$0xf] %vm4936, %v8281
        %8368 = vst.msk [vmem:[#allocation5 + $0x1dc] sm:$0xf] %vm4936, %v8284
        %8369 = vst.msk [vmem:[#allocation5 + $0x1f0] sm:$0xf] %vm4936, %v8288
        %8370 = vst.msk [vmem:[#allocation5 + $0x204] sm:$0xf] %vm4936, %v8291
        %8371 = vst.msk [vmem:[#allocation5 + $0x218] sm:$0xf] %vm4936, %v8295
        %8372 = vst.msk [vmem:[#allocation5 + $0x22c] sm:$0xf] %vm4936, %v8298
        %8373 = vst.msk [vmem:[#allocation5 + $0x240] sm:$0xf] %vm4936, %v8302
        %8374 = vst.msk [vmem:[#allocation5 + $0x254] sm:$0xf] %vm4936, %v8305
        %8375 = vst.msk [vmem:[#allocation5 + $0x268] sm:$0xf] %vm4936, %v8309
        %8376 = vst.msk [vmem:[#allocation5 + $0x27c] sm:$0xf] %vm4936, %v8312
        %v8377 = vld [vmem:[#allocation5] sm:$0xff]
        %v8378 = vld [vmem:[#allocation5 + $0x8] sm:$0xff]
        %v8379 = vld [vmem:[#allocation5 + $0x10] sm:$0xf]
        %v8380 = vld [vmem:[#allocation5 + $0x14] sm:$0xff]
        %v8381 = vld [vmem:[#allocation5 + $0x1c] sm:$0xff]
        %v8382 = vld [vmem:[#allocation5 + $0x24] sm:$0xf]
        %v8383 = vld [vmem:[#allocation5 + $0x28] sm:$0xff]
        %v8384 = vld [vmem:[#allocation5 + $0x30] sm:$0xff]
        %v8385 = vld [vmem:[#allocation5 + $0x38] sm:$0xf]
        %v8386 = vld [vmem:[#allocation5 + $0x3c] sm:$0xff]
        %v8387 = vld [vmem:[#allocation5 + $0x44] sm:$0xff]
        %v8388 = vld [vmem:[#allocation5 + $0x4c] sm:$0xf]
        %v8389 = vld [vmem:[#allocation5 + $0x50] sm:$0xff]
        %v8390 = vld [vmem:[#allocation5 + $0x58] sm:$0xff]
        %v8391 = vld [vmem:[#allocation5 + $0x60] sm:$0xf]
        %v8392 = vld [vmem:[#allocation5 + $0x64] sm:$0xff]
        %v8393 = vld [vmem:[#allocation5 + $0x6c] sm:$0xff]
        %v8394 = vld [vmem:[#allocation5 + $0x74] sm:$0xf]
        %v8395 = vld [vmem:[#allocation5 + $0x78] sm:$0xff]
        %v8396 = vld [vmem:[#allocation5 + $0x80] sm:$0xff]
        %v8397 = vld [vmem:[#allocation5 + $0x88] sm:$0xf]
        %v8398 = vld [vmem:[#allocation5 + $0x8c] sm:$0xff]
        %v8399 = vld [vmem:[#allocation5 + $0x94] sm:$0xff]
        %v8400 = vld [vmem:[#allocation5 + $0x9c] sm:$0xf]
        %v8401 = vld [vmem:[#allocation5 + $0xa0] sm:$0xff]
        %v8402 = vld [vmem:[#allocation5 + $0xa8] sm:$0xff]
        %v8403 = vld [vmem:[#allocation5 + $0xb0] sm:$0xf]
        %v8404 = vld [vmem:[#allocation5 + $0xb4] sm:$0xff]
        %v8405 = vld [vmem:[#allocation5 + $0xbc] sm:$0xff]
        %v8406 = vld [vmem:[#allocation5 + $0xc4] sm:$0xf]
        %v8407 = vld [vmem:[#allocation5 + $0xc8] sm:$0xff]
        %v8408 = vld [vmem:[#allocation5 + $0xd0] sm:$0xff]
        %v8409 = vld [vmem:[#allocation5 + $0xd8] sm:$0xf]
        %v8410 = vld [vmem:[#allocation5 + $0xdc] sm:$0xff]
        %v8411 = vld [vmem:[#allocation5 + $0xe4] sm:$0xff]
        %v8412 = vld [vmem:[#allocation5 + $0xec] sm:$0xf]
        %v8413 = vld [vmem:[#allocation5 + $0xf0] sm:$0xff]
        %v8414 = vld [vmem:[#allocation5 + $0xf8] sm:$0xff]
        %v8415 = vld [vmem:[#allocation5 + $0x100] sm:$0xf]
        %v8416 = vld [vmem:[#allocation5 + $0x104] sm:$0xff]
        %v8417 = vld [vmem:[#allocation5 + $0x10c] sm:$0xff]
        %v8418 = vld [vmem:[#allocation5 + $0x114] sm:$0xf]
        %v8419 = vld [vmem:[#allocation5 + $0x118] sm:$0xff]
        %v8420 = vld [vmem:[#allocation5 + $0x120] sm:$0xff]
        %v8421 = vld [vmem:[#allocation5 + $0x128] sm:$0xf]
        %v8422 = vld [vmem:[#allocation5 + $0x12c] sm:$0xff]
        %v8423 = vld [vmem:[#allocation5 + $0x134] sm:$0xff]
        %v8424 = vld [vmem:[#allocation5 + $0x13c] sm:$0xf]
        %v8425 = vld [vmem:[#allocation5 + $0x140] sm:$0xff]
        %v8426 = vld [vmem:[#allocation5 + $0x148] sm:$0xff]
        %v8427 = vld [vmem:[#allocation5 + $0x150] sm:$0xf]
        %v8428 = vld [vmem:[#allocation5 + $0x154] sm:$0xff]
        %v8429 = vld [vmem:[#allocation5 + $0x15c] sm:$0xff]
        %v8430 = vld [vmem:[#allocation5 + $0x164] sm:$0xf]
        %v8431 = vld [vmem:[#allocation5 + $0x168] sm:$0xff]
        %v8432 = vld [vmem:[#allocation5 + $0x170] sm:$0xff]
        %v8433 = vld [vmem:[#allocation5 + $0x178] sm:$0xf]
        %v8434 = vld [vmem:[#allocation5 + $0x17c] sm:$0xff]
        %v8435 = vld [vmem:[#allocation5 + $0x184] sm:$0xff]
        %v8436 = vld [vmem:[#allocation5 + $0x18c] sm:$0xf]
        %v8437 = vld [vmem:[#allocation5 + $0x190] sm:$0xff]
        %v8438 = vld [vmem:[#allocation5 + $0x198] sm:$0xff]
        %v8439 = vld [vmem:[#allocation5 + $0x1a0] sm:$0xf]
        %v8440 = vld [vmem:[#allocation5 + $0x1a4] sm:$0xff]
        %v8441 = vld [vmem:[#allocation5 + $0x1ac] sm:$0xff]
        %v8442 = vld [vmem:[#allocation5 + $0x1b4] sm:$0xf]
        %v8443 = vld [vmem:[#allocation5 + $0x1b8] sm:$0xff]
        %v8444 = vld [vmem:[#allocation5 + $0x1c0] sm:$0xff]
        %v8445 = vld [vmem:[#allocation5 + $0x1c8] sm:$0xf]
        %v8446 = vld [vmem:[#allocation5 + $0x1cc] sm:$0xff]
        %v8447 = vld [vmem:[#allocation5 + $0x1d4] sm:$0xff]
        %v8448 = vld [vmem:[#allocation5 + $0x1dc] sm:$0xf]
        %v8449 = vld [vmem:[#allocation5 + $0x1e0] sm:$0xff]
        %v8450 = vld [vmem:[#allocation5 + $0x1e8] sm:$0xff]
        %v8451 = vld [vmem:[#allocation5 + $0x1f0] sm:$0xf]
        %v8452 = vld [vmem:[#allocation5 + $0x1f4] sm:$0xff]
        %v8453 = vld [vmem:[#allocation5 + $0x1fc] sm:$0xff]
        %v8454 = vld [vmem:[#allocation5 + $0x204] sm:$0xf]
        %v8455 = vld [vmem:[#allocation5 + $0x208] sm:$0xff]
        %v8456 = vld [vmem:[#allocation5 + $0x210] sm:$0xff]
        %v8457 = vld [vmem:[#allocation5 + $0x218] sm:$0xf]
        %v8458 = vld [vmem:[#allocation5 + $0x21c] sm:$0xff]
        %v8459 = vld [vmem:[#allocation5 + $0x224] sm:$0xff]
        %v8460 = vld [vmem:[#allocation5 + $0x22c] sm:$0xf]
        %v8461 = vld [vmem:[#allocation5 + $0x230] sm:$0xff]
        %v8462 = vld [vmem:[#allocation5 + $0x238] sm:$0xff]
        %v8463 = vld [vmem:[#allocation5 + $0x240] sm:$0xf]
        %v8464 = vld [vmem:[#allocation5 + $0x244] sm:$0xff]
        %v8465 = vld [vmem:[#allocation5 + $0x24c] sm:$0xff]
        %v8466 = vld [vmem:[#allocation5 + $0x254] sm:$0xf]
        %v8467 = vld [vmem:[#allocation5 + $0x258] sm:$0xff]
        %v8468 = vld [vmem:[#allocation5 + $0x260] sm:$0xff]
        %v8469 = vld [vmem:[#allocation5 + $0x268] sm:$0xf]
        %v8470 = vld [vmem:[#allocation5 + $0x26c] sm:$0xff]
        %v8471 = vld [vmem:[#allocation5 + $0x274] sm:$0xff]
        %v8472 = vld [vmem:[#allocation5 + $0x27c] sm:$0xf]
        %v8473 = vld [vmem:[#allocation9] sm:$0xf]
        %v8474 = vld [vmem:[#allocation9 + $0x4] sm:$0xf]
        %v8475 = vld [vmem:[#allocation9 + $0x8] sm:$0xf]
        %v8476 = vld [vmem:[#allocation9 + $0xc] sm:$0xf]
        %v8477 = vld [vmem:[#allocation9 + $0x10] sm:$0xf]
        %v8478 = vld [vmem:[#allocation9 + $0x14] sm:$0xf]
        %v8479 = vld [vmem:[#allocation9 + $0x18] sm:$0xf]
        %v8480 = vld [vmem:[#allocation9 + $0x1c] sm:$0xf]
        %v8481 = vld [vmem:[#allocation9 + $0x20] sm:$0xf]
        %v8482 = vld [vmem:[#allocation9 + $0x24] sm:$0xf]
        %v8483 = vld [vmem:[#allocation9 + $0x28] sm:$0xf]
        %v8484 = vld [vmem:[#allocation9 + $0x2c] sm:$0xf]
        %v8485 = vld [vmem:[#allocation9 + $0x30] sm:$0xf]
        %v8486 = vld [vmem:[#allocation9 + $0x34] sm:$0xf]
        %v8487 = vld [vmem:[#allocation9 + $0x38] sm:$0xf]
        %v8488 = vld [vmem:[#allocation9 + $0x3c] sm:$0xf]
        %v8489 = vld [vmem:[#allocation9 + $0x40] sm:$0xf]
        %v8490 = vld [vmem:[#allocation9 + $0x44] sm:$0xf]
        %v8491 = vld [vmem:[#allocation9 + $0x48] sm:$0xf]
        %v8492 = vld [vmem:[#allocation9 + $0x4c] sm:$0xf]
        %v8493 = vld [vmem:[#allocation9 + $0x50] sm:$0xf]
        %v8494 = vld [vmem:[#allocation9 + $0x54] sm:$0xf]
        %v8495 = vld [vmem:[#allocation9 + $0x58] sm:$0xf]
        %v8496 = vld [vmem:[#allocation9 + $0x5c] sm:$0xf]
        %v8497 = vld [vmem:[#allocation9 + $0x60] sm:$0xf]
        %v8498 = vld [vmem:[#allocation9 + $0x64] sm:$0xf]
        %v8499 = vld [vmem:[#allocation9 + $0x68] sm:$0xf]
        %v8500 = vld [vmem:[#allocation9 + $0x6c] sm:$0xf]
        %v8501 = vld [vmem:[#allocation9 + $0x70] sm:$0xf]
        %v8502 = vld [vmem:[#allocation9 + $0x74] sm:$0xf]
        %v8503 = vld [vmem:[#allocation9 + $0x78] sm:$0xf]
        %v8504 = vld [vmem:[#allocation9 + $0x7c] sm:$0xf]
        %v8505 = vld [vmem:[#allocation9 + $0x80] sm:$0xf]
        %v8506 = vld [vmem:[#allocation9 + $0x84] sm:$0xf]
        %v8507 = vld [vmem:[#allocation9 + $0x88] sm:$0xf]
        %v8508 = vld [vmem:[#allocation9 + $0x8c] sm:$0xf]
        %v8509 = vld [vmem:[#allocation9 + $0x90] sm:$0xf]
        %v8510 = vld [vmem:[#allocation9 + $0x94] sm:$0xf]
        %v8511 = vld [vmem:[#allocation9 + $0x98] sm:$0xf]
        %v8512 = vld [vmem:[#allocation9 + $0x9c] sm:$0xf]
        %v8513 = vld [vmem:[#allocation9 + $0xa0] sm:$0xf]
        %v8514 = vld [vmem:[#allocation9 + $0xa4] sm:$0xf]
        %v8515 = vld [vmem:[#allocation9 + $0xa8] sm:$0xf]
        %v8516 = vld [vmem:[#allocation9 + $0xac] sm:$0xf]
        %v8517 = vld [vmem:[#allocation9 + $0xb0] sm:$0xf]
        %v8518 = vld [vmem:[#allocation9 + $0xb4] sm:$0xf]
        %v8519 = vld [vmem:[#allocation9 + $0xb8] sm:$0xf]
        %v8520 = vld [vmem:[#allocation9 + $0xbc] sm:$0xf]
        %v8521 = vld [vmem:[#allocation9 + $0xc0] sm:$0xf]
        %v8522 = vld [vmem:[#allocation9 + $0xc4] sm:$0xf]
        %v8523 = vld [vmem:[#allocation9 + $0xc8] sm:$0xf]
        %v8524 = vld [vmem:[#allocation9 + $0xcc] sm:$0xf]
        %v8525 = vld [vmem:[#allocation9 + $0xd0] sm:$0xf]
        %v8526 = vld [vmem:[#allocation9 + $0xd4] sm:$0xf]
        %v8527 = vld [vmem:[#allocation9 + $0xd8] sm:$0xf]
        %v8528 = vld [vmem:[#allocation9 + $0xdc] sm:$0xf]
        %v8529 = vld [vmem:[#allocation9 + $0xe0] sm:$0xf]
        %v8530 = vld [vmem:[#allocation9 + $0xe4] sm:$0xf]
        %v8531 = vld [vmem:[#allocation9 + $0xe8] sm:$0xf]
        %v8532 = vld [vmem:[#allocation9 + $0xec] sm:$0xf]
        %v8533 = vld [vmem:[#allocation9 + $0xf0] sm:$0xf]
        %v8534 = vld [vmem:[#allocation9 + $0xf4] sm:$0xf]
        %v8535 = vld [vmem:[#allocation9 + $0xf8] sm:$0xf]
        %v8536 = vld [vmem:[#allocation9 + $0xfc] sm:$0xf]
        %v8537 = vld [vmem:[#allocation9 + $0x100] sm:$0xf]
        %v8538 = vld [vmem:[#allocation9 + $0x104] sm:$0xf]
        %v8539 = vld [vmem:[#allocation9 + $0x108] sm:$0xf]
        %v8540 = vld [vmem:[#allocation9 + $0x10c] sm:$0xf]
        %v8541 = vld [vmem:[#allocation9 + $0x110] sm:$0xf]
        %v8542 = vld [vmem:[#allocation9 + $0x114] sm:$0xf]
        %v8543 = vld [vmem:[#allocation9 + $0x118] sm:$0xf]
        %v8544 = vld [vmem:[#allocation9 + $0x11c] sm:$0xf]
        %v8641 = vunpack.c.l.b16 %v8377
        %v8642 = vunpack.c.h.b16 %v8377
        %v8643 = vunpack.c.l.b16 %v8378
        %v8644 = vunpack.c.h.b16 %v8378
        %v8645 = vunpack.c.l.b16 %v8379
        %v8646 = vunpack.c.l.b16 %v8380
        %v8647 = vunpack.c.h.b16 %v8380
        %v8648 = vunpack.c.l.b16 %v8381
        %v8649 = vunpack.c.h.b16 %v8381
        %v8650 = vunpack.c.l.b16 %v8382
        %v8651 = vunpack.c.l.b16 %v8383
        %v8652 = vunpack.c.h.b16 %v8383
        %v8653 = vunpack.c.l.b16 %v8384
        %v8654 = vunpack.c.h.b16 %v8384
        %v8655 = vunpack.c.l.b16 %v8385
        %v8656 = vunpack.c.l.b16 %v8386
        %v8657 = vunpack.c.h.b16 %v8386
        %v8658 = vunpack.c.l.b16 %v8387
        %v8659 = vunpack.c.h.b16 %v8387
        %v8660 = vunpack.c.l.b16 %v8388
        %v8661 = vunpack.c.l.b16 %v8389
        %v8662 = vunpack.c.h.b16 %v8389
        %v8663 = vunpack.c.l.b16 %v8390
        %v8664 = vunpack.c.h.b16 %v8390
        %v8665 = vunpack.c.l.b16 %v8391
        %v8666 = vunpack.c.l.b16 %v8392
        %v8667 = vunpack.c.h.b16 %v8392
        %v8668 = vunpack.c.l.b16 %v8393
        %v8669 = vunpack.c.h.b16 %v8393
        %v8670 = vunpack.c.l.b16 %v8394
        %v8671 = vunpack.c.l.b16 %v8395
        %v8672 = vunpack.c.h.b16 %v8395
        %v8673 = vunpack.c.l.b16 %v8396
        %v8674 = vunpack.c.h.b16 %v8396
        %v8675 = vunpack.c.l.b16 %v8397
        %v8676 = vunpack.c.l.b16 %v8398
        %v8677 = vunpack.c.h.b16 %v8398
        %v8678 = vunpack.c.l.b16 %v8399
        %v8679 = vunpack.c.h.b16 %v8399
        %v8680 = vunpack.c.l.b16 %v8400
        %v8681 = vunpack.c.l.b16 %v8401
        %v8682 = vunpack.c.h.b16 %v8401
        %v8683 = vunpack.c.l.b16 %v8402
        %v8684 = vunpack.c.h.b16 %v8402
        %v8685 = vunpack.c.l.b16 %v8403
        %v8686 = vunpack.c.l.b16 %v8404
        %v8687 = vunpack.c.h.b16 %v8404
        %v8688 = vunpack.c.l.b16 %v8405
        %v8689 = vunpack.c.h.b16 %v8405
        %v8690 = vunpack.c.l.b16 %v8406
        %v8691 = vunpack.c.l.b16 %v8407
        %v8692 = vunpack.c.h.b16 %v8407
        %v8693 = vunpack.c.l.b16 %v8408
        %v8694 = vunpack.c.h.b16 %v8408
        %v8695 = vunpack.c.l.b16 %v8409
        %v8696 = vunpack.c.l.b16 %v8410
        %v8697 = vunpack.c.h.b16 %v8410
        %v8698 = vunpack.c.l.b16 %v8411
        %v8699 = vunpack.c.h.b16 %v8411
        %v8700 = vunpack.c.l.b16 %v8412
        %v8701 = vunpack.c.l.b16 %v8413
        %v8702 = vunpack.c.h.b16 %v8413
        %v8703 = vunpack.c.l.b16 %v8414
        %v8704 = vunpack.c.h.b16 %v8414
        %v8705 = vunpack.c.l.b16 %v8415
        %v8706 = vunpack.c.l.b16 %v8416
        %v8707 = vunpack.c.h.b16 %v8416
        %v8708 = vunpack.c.l.b16 %v8417
        %v8709 = vunpack.c.h.b16 %v8417
        %v8710 = vunpack.c.l.b16 %v8418
        %v8711 = vunpack.c.l.b16 %v8419
        %v8712 = vunpack.c.h.b16 %v8419
        %v8713 = vunpack.c.l.b16 %v8420
        %v8714 = vunpack.c.h.b16 %v8420
        %v8715 = vunpack.c.l.b16 %v8421
        %v8716 = vunpack.c.l.b16 %v8422
        %v8717 = vunpack.c.h.b16 %v8422
        %v8718 = vunpack.c.l.b16 %v8423
        %v8719 = vunpack.c.h.b16 %v8423
        %v8720 = vunpack.c.l.b16 %v8424
        %v8721 = vunpack.c.l.b16 %v8425
        %v8722 = vunpack.c.h.b16 %v8425
        %v8723 = vunpack.c.l.b16 %v8426
        %v8724 = vunpack.c.h.b16 %v8426
        %v8725 = vunpack.c.l.b16 %v8427
        %v8726 = vunpack.c.l.b16 %v8428
        %v8727 = vunpack.c.h.b16 %v8428
        %v8728 = vunpack.c.l.b16 %v8429
        %v8729 = vunpack.c.h.b16 %v8429
        %v8730 = vunpack.c.l.b16 %v8430
        %v8731 = vunpack.c.l.b16 %v8431
        %v8732 = vunpack.c.h.b16 %v8431
        %v8733 = vunpack.c.l.b16 %v8432
        %v8734 = vunpack.c.h.b16 %v8432
        %v8735 = vunpack.c.l.b16 %v8433
        %v8736 = vunpack.c.l.b16 %v8434
        %v8737 = vunpack.c.h.b16 %v8434
        %v8738 = vunpack.c.l.b16 %v8435
        %v8739 = vunpack.c.h.b16 %v8435
        %v8740 = vunpack.c.l.b16 %v8436
        %v8741 = vunpack.c.l.b16 %v8437
        %v8742 = vunpack.c.h.b16 %v8437
        %v8743 = vunpack.c.l.b16 %v8438
        %v8744 = vunpack.c.h.b16 %v8438
        %v8745 = vunpack.c.l.b16 %v8439
        %v8746 = vunpack.c.l.b16 %v8440
        %v8747 = vunpack.c.h.b16 %v8440
        %v8748 = vunpack.c.l.b16 %v8441
        %v8749 = vunpack.c.h.b16 %v8441
        %v8750 = vunpack.c.l.b16 %v8442
        %v8751 = vunpack.c.l.b16 %v8443
        %v8752 = vunpack.c.h.b16 %v8443
        %v8753 = vunpack.c.l.b16 %v8444
        %v8754 = vunpack.c.h.b16 %v8444
        %v8755 = vunpack.c.l.b16 %v8445
        %v8756 = vunpack.c.l.b16 %v8446
        %v8757 = vunpack.c.h.b16 %v8446
        %v8758 = vunpack.c.l.b16 %v8447
        %v8759 = vunpack.c.h.b16 %v8447
        %v8760 = vunpack.c.l.b16 %v8448
        %v8761 = vunpack.c.l.b16 %v8449
        %v8762 = vunpack.c.h.b16 %v8449
        %v8763 = vunpack.c.l.b16 %v8450
        %v8764 = vunpack.c.h.b16 %v8450
        %v8765 = vunpack.c.l.b16 %v8451
        %v8766 = vunpack.c.l.b16 %v8452
        %v8767 = vunpack.c.h.b16 %v8452
        %v8768 = vunpack.c.l.b16 %v8453
        %v8769 = vunpack.c.h.b16 %v8453
        %v8770 = vunpack.c.l.b16 %v8454
        %v8771 = vunpack.c.l.b16 %v8455
        %v8772 = vunpack.c.h.b16 %v8455
        %v8773 = vunpack.c.l.b16 %v8456
        %v8774 = vunpack.c.h.b16 %v8456
        %v8775 = vunpack.c.l.b16 %v8457
        %v8776 = vunpack.c.l.b16 %v8458
        %v8777 = vunpack.c.h.b16 %v8458
        %v8778 = vunpack.c.l.b16 %v8459
        %v8779 = vunpack.c.h.b16 %v8459
        %v8780 = vunpack.c.l.b16 %v8460
        %v8781 = vunpack.c.l.b16 %v8461
        %v8782 = vunpack.c.h.b16 %v8461
        %v8783 = vunpack.c.l.b16 %v8462
        %v8784 = vunpack.c.h.b16 %v8462
        %v8785 = vunpack.c.l.b16 %v8463
        %v8786 = vunpack.c.l.b16 %v8464
        %v8787 = vunpack.c.h.b16 %v8464
        %v8788 = vunpack.c.l.b16 %v8465
        %v8789 = vunpack.c.h.b16 %v8465
        %v8790 = vunpack.c.l.b16 %v8466
        %v8791 = vunpack.c.l.b16 %v8467
        %v8792 = vunpack.c.h.b16 %v8467
        %v8793 = vunpack.c.l.b16 %v8468
        %v8794 = vunpack.c.h.b16 %v8468
        %v8795 = vunpack.c.l.b16 %v8469
        %v8796 = vunpack.c.l.b16 %v8470
        %v8797 = vunpack.c.h.b16 %v8470
        %v8798 = vunpack.c.l.b16 %v8471
        %v8799 = vunpack.c.h.b16 %v8471
        %v8800 = vunpack.c.l.b16 %v8472
        %v8801 = vpack.c.b16 %v8646, %v8641
        %v8802 = vpack.c.b16 %v8647, %v8642
        %v8803 = vpack.c.b16 %v8648, %v8643
        %v8804 = vpack.c.b16 %v8649, %v8644
        %v8805 = vpack.c.b16 %v8650, %v8645
        %v8806 = vpack.c.b16 %v8656, %v8651
        %v8807 = vpack.c.b16 %v8657, %v8652
        %v8808 = vpack.c.b16 %v8658, %v8653
        %v8809 = vpack.c.b16 %v8659, %v8654
        %v8810 = vpack.c.b16 %v8660, %v8655
        %v8811 = vpack.c.b16 %v8666, %v8661
        %v8812 = vpack.c.b16 %v8667, %v8662
        %v8813 = vpack.c.b16 %v8668, %v8663
        %v8814 = vpack.c.b16 %v8669, %v8664
        %v8815 = vpack.c.b16 %v8670, %v8665
        %v8816 = vpack.c.b16 %v8676, %v8671
        %v8817 = vpack.c.b16 %v8677, %v8672
        %v8818 = vpack.c.b16 %v8678, %v8673
        %v8819 = vpack.c.b16 %v8679, %v8674
        %v8820 = vpack.c.b16 %v8680, %v8675
        %v8821 = vpack.c.b16 %v8686, %v8681
        %v8822 = vpack.c.b16 %v8687, %v8682
        %v8823 = vpack.c.b16 %v8688, %v8683
        %v8824 = vpack.c.b16 %v8689, %v8684
        %v8825 = vpack.c.b16 %v8690, %v8685
        %v8826 = vpack.c.b16 %v8696, %v8691
        %v8827 = vpack.c.b16 %v8697, %v8692
        %v8828 = vpack.c.b16 %v8698, %v8693
        %v8829 = vpack.c.b16 %v8699, %v8694
        %v8830 = vpack.c.b16 %v8700, %v8695
        %v8831 = vpack.c.b16 %v8706, %v8701
        %v8832 = vpack.c.b16 %v8707, %v8702
        %v8833 = vpack.c.b16 %v8708, %v8703
        %v8834 = vpack.c.b16 %v8709, %v8704
        %v8835 = vpack.c.b16 %v8710, %v8705
        %v8836 = vpack.c.b16 %v8716, %v8711
        %v8837 = vpack.c.b16 %v8717, %v8712
        %v8838 = vpack.c.b16 %v8718, %v8713
        %v8839 = vpack.c.b16 %v8719, %v8714
        %v8840 = vpack.c.b16 %v8720, %v8715
        %v8841 = vpack.c.b16 %v8726, %v8721
        %v8842 = vpack.c.b16 %v8727, %v8722
        %v8843 = vpack.c.b16 %v8728, %v8723
        %v8844 = vpack.c.b16 %v8729, %v8724
        %v8845 = vpack.c.b16 %v8730, %v8725
        %v8846 = vpack.c.b16 %v8736, %v8731
        %v8847 = vpack.c.b16 %v8737, %v8732
        %v8848 = vpack.c.b16 %v8738, %v8733
        %v8849 = vpack.c.b16 %v8739, %v8734
        %v8850 = vpack.c.b16 %v8740, %v8735
        %v8851 = vpack.c.b16 %v8746, %v8741
        %v8852 = vpack.c.b16 %v8747, %v8742
        %v8853 = vpack.c.b16 %v8748, %v8743
        %v8854 = vpack.c.b16 %v8749, %v8744
        %v8855 = vpack.c.b16 %v8750, %v8745
        %v8856 = vpack.c.b16 %v8756, %v8751
        %v8857 = vpack.c.b16 %v8757, %v8752
        %v8858 = vpack.c.b16 %v8758, %v8753
        %v8859 = vpack.c.b16 %v8759, %v8754
        %v8860 = vpack.c.b16 %v8760, %v8755
        %v8861 = vpack.c.b16 %v8766, %v8761
        %v8862 = vpack.c.b16 %v8767, %v8762
        %v8863 = vpack.c.b16 %v8768, %v8763
        %v8864 = vpack.c.b16 %v8769, %v8764
        %v8865 = vpack.c.b16 %v8770, %v8765
        %v8866 = vpack.c.b16 %v8776, %v8771
        %v8867 = vpack.c.b16 %v8777, %v8772
        %v8868 = vpack.c.b16 %v8778, %v8773
        %v8869 = vpack.c.b16 %v8779, %v8774
        %v8870 = vpack.c.b16 %v8780, %v8775
        %v8871 = vpack.c.b16 %v8786, %v8781
        %v8872 = vpack.c.b16 %v8787, %v8782
        %v8873 = vpack.c.b16 %v8788, %v8783
        %v8874 = vpack.c.b16 %v8789, %v8784
        %v8875 = vpack.c.b16 %v8790, %v8785
        %v8876 = vpack.c.b16 %v8796, %v8791
        %v8877 = vpack.c.b16 %v8797, %v8792
        %v8878 = vpack.c.b16 %v8798, %v8793
        %v8879 = vpack.c.b16 %v8799, %v8794
        %v8880 = vpack.c.b16 %v8800, %v8795
        %v9017 = vunpack.c.l.b16 %v8473
        %v9018 = vunpack.c.l.b16 %v8474
        %v9019 = vunpack.c.l.b16 %v8475
        %v9020 = vunpack.c.l.b16 %v8476
        %v9021 = vunpack.c.l.b16 %v8477
        %v9022 = vunpack.c.l.b16 %v8478
        %v9023 = vunpack.c.l.b16 %v8479
        %v9024 = vunpack.c.l.b16 %v8480
        %v9025 = vunpack.c.l.b16 %v8481
        %v9026 = vunpack.c.l.b16 %v8482
        %v9027 = vunpack.c.l.b16 %v8483
        %v9028 = vunpack.c.l.b16 %v8484
        %v9029 = vunpack.c.l.b16 %v8485
        %v9030 = vunpack.c.l.b16 %v8486
        %v9031 = vunpack.c.l.b16 %v8487
        %v9032 = vunpack.c.l.b16 %v8488
        %v9033 = vunpack.c.l.b16 %v8489
        %v9034 = vunpack.c.l.b16 %v8490
        %v9035 = vunpack.c.l.b16 %v8491
        %v9036 = vunpack.c.l.b16 %v8492
        %v9037 = vunpack.c.l.b16 %v8493
        %v9038 = vunpack.c.l.b16 %v8494
        %v9039 = vunpack.c.l.b16 %v8495
        %v9040 = vunpack.c.l.b16 %v8496
        %v9041 = vunpack.c.l.b16 %v8497
        %v9042 = vunpack.c.l.b16 %v8498
        %v9043 = vunpack.c.l.b16 %v8499
        %v9044 = vunpack.c.l.b16 %v8500
        %v9045 = vunpack.c.l.b16 %v8501
        %v9046 = vunpack.c.l.b16 %v8502
        %v9047 = vunpack.c.l.b16 %v8503
        %v9048 = vunpack.c.l.b16 %v8504
        %v9049 = vunpack.c.l.b16 %v8505
        %v9050 = vunpack.c.l.b16 %v8506
        %v9051 = vunpack.c.l.b16 %v8507
        %v9052 = vunpack.c.l.b16 %v8508
        %v9053 = vunpack.c.l.b16 %v8509
        %v9054 = vunpack.c.l.b16 %v8510
        %v9055 = vunpack.c.l.b16 %v8511
        %v9056 = vunpack.c.l.b16 %v8512
        %v9057 = vunpack.c.l.b16 %v8513
        %v9058 = vunpack.c.l.b16 %v8514
        %v9059 = vunpack.c.l.b16 %v8515
        %v9060 = vunpack.c.l.b16 %v8516
        %v9061 = vunpack.c.l.b16 %v8517
        %v9062 = vunpack.c.l.b16 %v8518
        %v9063 = vunpack.c.l.b16 %v8519
        %v9064 = vunpack.c.l.b16 %v8520
        %v9065 = vunpack.c.l.b16 %v8521
        %v9066 = vunpack.c.l.b16 %v8522
        %v9067 = vunpack.c.l.b16 %v8523
        %v9068 = vunpack.c.l.b16 %v8524
        %v9069 = vunpack.c.l.b16 %v8525
        %v9070 = vunpack.c.l.b16 %v8526
        %v9071 = vunpack.c.l.b16 %v8527
        %v9072 = vunpack.c.l.b16 %v8528
        %v9073 = vunpack.c.l.b16 %v8529
        %v9074 = vunpack.c.l.b16 %v8530
        %v9075 = vunpack.c.l.b16 %v8531
        %v9076 = vunpack.c.l.b16 %v8532
        %v9077 = vunpack.c.l.b16 %v8533
        %v9078 = vunpack.c.l.b16 %v8534
        %v9079 = vunpack.c.l.b16 %v8535
        %v9080 = vunpack.c.l.b16 %v8536
        %v9081 = vunpack.c.l.b16 %v8537
        %v9082 = vunpack.c.l.b16 %v8538
        %v9083 = vunpack.c.l.b16 %v8539
        %v9084 = vunpack.c.l.b16 %v8540
        %v9085 = vunpack.c.l.b16 %v8541
        %v9086 = vunpack.c.l.b16 %v8542
        %v9087 = vunpack.c.l.b16 %v8543
        %v9088 = vunpack.c.l.b16 %v8544
        %v9089 = vpack.c.b16 %v9018, %v9017
        %v9090 = vpack.c.b16 %v9020, %v9019
        %v9091 = vpack.c.b16 %v9022, %v9021
        %v9092 = vpack.c.b16 %v9024, %v9023
        %v9093 = vpack.c.b16 %v9026, %v9025
        %v9094 = vpack.c.b16 %v9028, %v9027
        %v9095 = vpack.c.b16 %v9030, %v9029
        %v9096 = vpack.c.b16 %v9032, %v9031
        %v9097 = vpack.c.b16 %v9034, %v9033
        %v9098 = vpack.c.b16 %v9036, %v9035
        %v9099 = vpack.c.b16 %v9038, %v9037
        %v9100 = vpack.c.b16 %v9040, %v9039
        %v9101 = vpack.c.b16 %v9042, %v9041
        %v9102 = vpack.c.b16 %v9044, %v9043
        %v9103 = vpack.c.b16 %v9046, %v9045
        %v9104 = vpack.c.b16 %v9048, %v9047
        %v9105 = vpack.c.b16 %v9050, %v9049
        %v9106 = vpack.c.b16 %v9052, %v9051
        %v9107 = vpack.c.b16 %v9054, %v9053
        %v9108 = vpack.c.b16 %v9056, %v9055
        %v9109 = vpack.c.b16 %v9058, %v9057
        %v9110 = vpack.c.b16 %v9060, %v9059
        %v9111 = vpack.c.b16 %v9062, %v9061
        %v9112 = vpack.c.b16 %v9064, %v9063
        %v9113 = vpack.c.b16 %v9066, %v9065
        %v9114 = vpack.c.b16 %v9068, %v9067
        %v9115 = vpack.c.b16 %v9070, %v9069
        %v9116 = vpack.c.b16 %v9072, %v9071
        %v9117 = vpack.c.b16 %v9074, %v9073
        %v9118 = vpack.c.b16 %v9076, %v9075
        %v9119 = vpack.c.b16 %v9078, %v9077
        %v9120 = vpack.c.b16 %v9080, %v9079
        %v9121 = vpack.c.b16 %v9082, %v9081
        %v9122 = vpack.c.b16 %v9084, %v9083
        %v9123 = vpack.c.b16 %v9086, %v9085
        %v9124 = vpack.c.b16 %v9088, %v9087
        %vm9161 = vcmask 523264
        %v9163 = vsel %vm9161, %v8805, 0
        %v9166 = vsel %vm9161, %v8810, 0
        %v9169 = vsel %vm9161, %v8815, 0
        %v9172 = vsel %vm9161, %v8820, 0
        %v9175 = vsel %vm9161, %v8825, 0
        %v9178 = vsel %vm9161, %v8830, 0
        %v9181 = vsel %vm9161, %v8835, 0
        %v9184 = vsel %vm9161, %v8840, 0
        %v9187 = vsel %vm9161, %v8845, 0
        %v9190 = vsel %vm9161, %v8850, 0
        %v9193 = vsel %vm9161, %v8855, 0
        %v9196 = vsel %vm9161, %v8860, 0
        %v9199 = vsel %vm9161, %v8865, 0
        %v9202 = vsel %vm9161, %v8870, 0
        %v9205 = vsel %vm9161, %v8875, 0
        %v9208 = vsel %vm9161, %v8880, 0
        %9210 = vmatprep.subr.bf16.mxu0 0
        %9211 = vmatpush1.bf16.msra.mxu0 %v9096
        %9212 = vmatprep.subr.bf16.mxu0 0
        %9213 = vmatpush1.bf16.msra.mxu0 %v9095
        %9214 = vmatprep.subr.bf16.mxu0 0
        %9215 = vmatpush1.bf16.msra.mxu0 %v9094
        %9216 = vmatprep.subr.bf16.mxu0 0
        %9217 = vmatpush1.bf16.msra.mxu0 %v9093
        %9218 = vmatprep.subr.bf16.mxu0 0
        %9219 = vmatpush1.bf16.msra.mxu0 %v9092
        %9220 = vmatprep.subr.bf16.mxu0 0
        %9221 = vmatpush1.bf16.msra.mxu0 %v9091
        %9222 = vmatprep.subr.bf16.mxu0 0
        %9223 = vmatpush1.bf16.msra.mxu0 %v9090
        %9224 = vmatprep.subr.bf16.mxu0 0
        %9225 = vmatpush1.bf16.msra.mxu0 %v9089
        %9226 = vmatprep.subr.bf16.mxu0 0
        %9227 = vmatpush2.bf16.msra.mxu0 %v9104
        %9228 = vmatprep.subr.bf16.mxu0 0
        %9229 = vmatpush2.bf16.msra.mxu0 %v9103
        %9230 = vmatprep.subr.bf16.mxu0 0
        %9231 = vmatpush2.bf16.msra.mxu0 %v9102
        %9232 = vmatprep.subr.bf16.mxu0 0
        %9233 = vmatpush2.bf16.msra.mxu0 %v9101
        %9234 = vmatprep.subr.bf16.mxu0 0
        %9235 = vmatpush2.bf16.msra.mxu0 %v9100
        %9236 = vmatprep.subr.bf16.mxu0 0
        %9237 = vmatpush2.bf16.msra.mxu0 %v9099
        %9238 = vmatprep.subr.bf16.mxu0 0
        %9239 = vmatpush2.bf16.msra.mxu0 %v9098
        %9240 = vmatprep.subr.bf16.mxu0 0
        %9241 = vmatpush2.bf16.msra.mxu0 %v9097
        %9242 = vmatprep.mubr.bf16.mxu0 %v8802
        %9243 = vmatmul.mubr.bf16.gmra.mxu0 %v8801
        %v9244 = vpop.f32.mrf.mxu0
        %v9245 = vadd.f32 0.0, %v9244
        %v9246 = vpop.f32.mrf.mxu0
        %v9247 = vpop.f32.mrf.mxu0
        %v9248 = vadd.f32 0.0, %v9247
        %v9249 = vpop.f32.mrf.mxu0
        %9250 = vmatprep.mubr.bf16.mxu0 %v8807
        %9251 = vmatmul.mubr.bf16.gmra.mxu0 %v8806
        %v9252 = vpop.f32.mrf.mxu0
        %v9253 = vadd.f32 0.0, %v9252
        %v9254 = vpop.f32.mrf.mxu0
        %v9255 = vpop.f32.mrf.mxu0
        %v9256 = vadd.f32 0.0, %v9255
        %v9257 = vpop.f32.mrf.mxu0
        %9258 = vmatprep.mubr.bf16.mxu0 %v8812
        %9259 = vmatmul.mubr.bf16.gmra.mxu0 %v8811
        %v9260 = vpop.f32.mrf.mxu0
        %v9261 = vadd.f32 0.0, %v9260
        %v9262 = vpop.f32.mrf.mxu0
        %v9263 = vpop.f32.mrf.mxu0
        %v9264 = vadd.f32 0.0, %v9263
        %v9265 = vpop.f32.mrf.mxu0
        %9266 = vmatprep.mubr.bf16.mxu0 %v8817
        %9267 = vmatmul.mubr.bf16.gmra.mxu0 %v8816
        %v9268 = vpop.f32.mrf.mxu0
        %v9269 = vadd.f32 0.0, %v9268
        %v9270 = vpop.f32.mrf.mxu0
        %v9271 = vpop.f32.mrf.mxu0
        %v9272 = vadd.f32 0.0, %v9271
        %v9273 = vpop.f32.mrf.mxu0
        %9274 = vmatprep.mubr.bf16.mxu0 %v8822
        %9275 = vmatmul.mubr.bf16.gmra.mxu0 %v8821
        %v9276 = vpop.f32.mrf.mxu0
        %v9277 = vadd.f32 0.0, %v9276
        %v9278 = vpop.f32.mrf.mxu0
        %v9279 = vpop.f32.mrf.mxu0
        %v9280 = vadd.f32 0.0, %v9279
        %v9281 = vpop.f32.mrf.mxu0
        %9282 = vmatprep.mubr.bf16.mxu0 %v8827
        %9283 = vmatmul.mubr.bf16.gmra.mxu0 %v8826
        %v9284 = vpop.f32.mrf.mxu0
        %v9285 = vadd.f32 0.0, %v9284
        %v9286 = vpop.f32.mrf.mxu0
        %v9287 = vpop.f32.mrf.mxu0
        %v9288 = vadd.f32 0.0, %v9287
        %v9289 = vpop.f32.mrf.mxu0
        %9290 = vmatprep.mubr.bf16.mxu0 %v8832
        %9291 = vmatmul.mubr.bf16.gmra.mxu0 %v8831
        %v9292 = vpop.f32.mrf.mxu0
        %v9293 = vadd.f32 0.0, %v9292
        %v9294 = vpop.f32.mrf.mxu0
        %v9295 = vpop.f32.mrf.mxu0
        %v9296 = vadd.f32 0.0, %v9295
        %v9297 = vpop.f32.mrf.mxu0
        %9298 = vmatprep.mubr.bf16.mxu0 %v8837
        %9299 = vmatmul.mubr.bf16.gmra.mxu0 %v8836
        %v9300 = vpop.f32.mrf.mxu0
        %v9301 = vadd.f32 0.0, %v9300
        %v9302 = vpop.f32.mrf.mxu0
        %v9303 = vpop.f32.mrf.mxu0
        %v9304 = vadd.f32 0.0, %v9303
        %v9305 = vpop.f32.mrf.mxu0
        %9306 = vmatprep.mubr.bf16.mxu0 %v8842
        %9307 = vmatmul.mubr.bf16.gmra.mxu0 %v8841
        %v9308 = vpop.f32.mrf.mxu0
        %v9309 = vadd.f32 0.0, %v9308
        %v9310 = vpop.f32.mrf.mxu0
        %v9311 = vpop.f32.mrf.mxu0
        %v9312 = vadd.f32 0.0, %v9311
        %v9313 = vpop.f32.mrf.mxu0
        %9314 = vmatprep.mubr.bf16.mxu0 %v8847
        %9315 = vmatmul.mubr.bf16.gmra.mxu0 %v8846
        %v9316 = vpop.f32.mrf.mxu0
        %v9317 = vadd.f32 0.0, %v9316
        %v9318 = vpop.f32.mrf.mxu0
        %v9319 = vpop.f32.mrf.mxu0
        %v9320 = vadd.f32 0.0, %v9319
        %v9321 = vpop.f32.mrf.mxu0
        %9322 = vmatprep.mubr.bf16.mxu0 %v8852
        %9323 = vmatmul.mubr.bf16.gmra.mxu0 %v8851
        %v9324 = vpop.f32.mrf.mxu0
        %v9325 = vadd.f32 0.0, %v9324
        %v9326 = vpop.f32.mrf.mxu0
        %v9327 = vpop.f32.mrf.mxu0
        %v9328 = vadd.f32 0.0, %v9327
        %v9329 = vpop.f32.mrf.mxu0
        %9330 = vmatprep.mubr.bf16.mxu0 %v8857
        %9331 = vmatmul.mubr.bf16.gmra.mxu0 %v8856
        %v9332 = vpop.f32.mrf.mxu0
        %v9333 = vadd.f32 0.0, %v9332
        %v9334 = vpop.f32.mrf.mxu0
        %v9335 = vpop.f32.mrf.mxu0
        %v9336 = vadd.f32 0.0, %v9335
        %v9337 = vpop.f32.mrf.mxu0
        %9338 = vmatprep.mubr.bf16.mxu0 %v8862
        %9339 = vmatmul.mubr.bf16.gmra.mxu0 %v8861
        %v9340 = vpop.f32.mrf.mxu0
        %v9341 = vadd.f32 0.0, %v9340
        %v9342 = vpop.f32.mrf.mxu0
        %v9343 = vpop.f32.mrf.mxu0
        %v9344 = vadd.f32 0.0, %v9343
        %v9345 = vpop.f32.mrf.mxu0
        %9346 = vmatprep.mubr.bf16.mxu0 %v8867
        %9347 = vmatmul.mubr.bf16.gmra.mxu0 %v8866
        %v9348 = vpop.f32.mrf.mxu0
        %v9349 = vadd.f32 0.0, %v9348
        %v9350 = vpop.f32.mrf.mxu0
        %v9351 = vpop.f32.mrf.mxu0
        %v9352 = vadd.f32 0.0, %v9351
        %v9353 = vpop.f32.mrf.mxu0
        %9354 = vmatprep.mubr.bf16.mxu0 %v8872
        %9355 = vmatmul.mubr.bf16.gmra.mxu0 %v8871
        %v9356 = vpop.f32.mrf.mxu0
        %v9357 = vadd.f32 0.0, %v9356
        %v9358 = vpop.f32.mrf.mxu0
        %v9359 = vpop.f32.mrf.mxu0
        %v9360 = vadd.f32 0.0, %v9359
        %v9361 = vpop.f32.mrf.mxu0
        %9362 = vmatprep.mubr.bf16.mxu0 %v8877
        %9363 = vmatmul.mubr.bf16.gmra.mxu0 %v8876
        %v9364 = vpop.f32.mrf.mxu0
        %v9365 = vadd.f32 0.0, %v9364
        %v9366 = vpop.f32.mrf.mxu0
        %v9367 = vpop.f32.mrf.mxu0
        %v9368 = vadd.f32 0.0, %v9367
        %v9369 = vpop.f32.mrf.mxu0
        %9370 = vdwg.mxu0
        %9371 = vmatprep.subr.bf16.mxu0 0
        %9372 = vmatpush1.bf16.msra.mxu0 %v9112
        %9373 = vmatprep.subr.bf16.mxu0 0
        %9374 = vmatpush1.bf16.msra.mxu0 %v9111
        %9375 = vmatprep.subr.bf16.mxu0 0
        %9376 = vmatpush1.bf16.msra.mxu0 %v9110
        %9377 = vmatprep.subr.bf16.mxu0 0
        %9378 = vmatpush1.bf16.msra.mxu0 %v9109
        %9379 = vmatprep.subr.bf16.mxu0 0
        %9380 = vmatpush1.bf16.msra.mxu0 %v9108
        %9381 = vmatprep.subr.bf16.mxu0 0
        %9382 = vmatpush1.bf16.msra.mxu0 %v9107
        %9383 = vmatprep.subr.bf16.mxu0 0
        %9384 = vmatpush1.bf16.msra.mxu0 %v9106
        %9385 = vmatprep.subr.bf16.mxu0 0
        %9386 = vmatpush1.bf16.msra.mxu0 %v9105
        %9387 = vmatprep.subr.bf16.mxu0 0
        %9388 = vmatpush2.bf16.msra.mxu0 %v9120
        %9389 = vmatprep.subr.bf16.mxu0 0
        %9390 = vmatpush2.bf16.msra.mxu0 %v9119
        %9391 = vmatprep.subr.bf16.mxu0 0
        %9392 = vmatpush2.bf16.msra.mxu0 %v9118
        %9393 = vmatprep.subr.bf16.mxu0 0
        %9394 = vmatpush2.bf16.msra.mxu0 %v9117
        %9395 = vmatprep.subr.bf16.mxu0 0
        %9396 = vmatpush2.bf16.msra.mxu0 %v9116
        %9397 = vmatprep.subr.bf16.mxu0 0
        %9398 = vmatpush2.bf16.msra.mxu0 %v9115
        %9399 = vmatprep.subr.bf16.mxu0 0
        %9400 = vmatpush2.bf16.msra.mxu0 %v9114
        %9401 = vmatprep.subr.bf16.mxu0 0
        %9402 = vmatpush2.bf16.msra.mxu0 %v9113
        %9403 = vmatprep.mubr.bf16.mxu0 %v8804
        %9404 = vmatmul.mubr.bf16.gmra.mxu0 %v8803
        %v9405 = vpop.f32.mrf.mxu0
        %v9406 = vadd.f32 %v9245, %v9405
        %v9407 = vpop.f32.mrf.mxu0
        %v9408 = vpop.f32.mrf.mxu0
        %v9409 = vadd.f32 %v9248, %v9408
        %v9410 = vpop.f32.mrf.mxu0
        %9411 = vmatprep.mubr.bf16.mxu0 %v8809
        %9412 = vmatmul.mubr.bf16.gmra.mxu0 %v8808
        %v9413 = vpop.f32.mrf.mxu0
        %v9414 = vadd.f32 %v9253, %v9413
        %v9415 = vpop.f32.mrf.mxu0
        %v9416 = vpop.f32.mrf.mxu0
        %v9417 = vadd.f32 %v9256, %v9416
        %v9418 = vpop.f32.mrf.mxu0
        %9419 = vmatprep.mubr.bf16.mxu0 %v8814
        %9420 = vmatmul.mubr.bf16.gmra.mxu0 %v8813
        %v9421 = vpop.f32.mrf.mxu0
        %v9422 = vadd.f32 %v9261, %v9421
        %v9423 = vpop.f32.mrf.mxu0
        %v9424 = vpop.f32.mrf.mxu0
        %v9425 = vadd.f32 %v9264, %v9424
        %v9426 = vpop.f32.mrf.mxu0
        %9427 = vmatprep.mubr.bf16.mxu0 %v8819
        %9428 = vmatmul.mubr.bf16.gmra.mxu0 %v8818
        %v9429 = vpop.f32.mrf.mxu0
        %v9430 = vadd.f32 %v9269, %v9429
        %v9431 = vpop.f32.mrf.mxu0
        %v9432 = vpop.f32.mrf.mxu0
        %v9433 = vadd.f32 %v9272, %v9432
        %v9434 = vpop.f32.mrf.mxu0
        %9435 = vmatprep.mubr.bf16.mxu0 %v8824
        %9436 = vmatmul.mubr.bf16.gmra.mxu0 %v8823
        %v9437 = vpop.f32.mrf.mxu0
        %v9438 = vadd.f32 %v9277, %v9437
        %v9439 = vpop.f32.mrf.mxu0
        %v9440 = vpop.f32.mrf.mxu0
        %v9441 = vadd.f32 %v9280, %v9440
        %v9442 = vpop.f32.mrf.mxu0
        %9443 = vmatprep.mubr.bf16.mxu0 %v8829
        %9444 = vmatmul.mubr.bf16.gmra.mxu0 %v8828
        %v9445 = vpop.f32.mrf.mxu0
        %v9446 = vadd.f32 %v9285, %v9445
        %v9447 = vpop.f32.mrf.mxu0
        %v9448 = vpop.f32.mrf.mxu0
        %v9449 = vadd.f32 %v9288, %v9448
        %v9450 = vpop.f32.mrf.mxu0
        %9451 = vmatprep.mubr.bf16.mxu0 %v8834
        %9452 = vmatmul.mubr.bf16.gmra.mxu0 %v8833
        %v9453 = vpop.f32.mrf.mxu0
        %v9454 = vadd.f32 %v9293, %v9453
        %v9455 = vpop.f32.mrf.mxu0
        %v9456 = vpop.f32.mrf.mxu0
        %v9457 = vadd.f32 %v9296, %v9456
        %v9458 = vpop.f32.mrf.mxu0
        %9459 = vmatprep.mubr.bf16.mxu0 %v8839
        %9460 = vmatmul.mubr.bf16.gmra.mxu0 %v8838
        %v9461 = vpop.f32.mrf.mxu0
        %v9462 = vadd.f32 %v9301, %v9461
        %v9463 = vpop.f32.mrf.mxu0
        %v9464 = vpop.f32.mrf.mxu0
        %v9465 = vadd.f32 %v9304, %v9464
        %v9466 = vpop.f32.mrf.mxu0
        %9467 = vmatprep.mubr.bf16.mxu0 %v8844
        %9468 = vmatmul.mubr.bf16.gmra.mxu0 %v8843
        %v9469 = vpop.f32.mrf.mxu0
        %v9470 = vadd.f32 %v9309, %v9469
        %v9471 = vpop.f32.mrf.mxu0
        %v9472 = vpop.f32.mrf.mxu0
        %v9473 = vadd.f32 %v9312, %v9472
        %v9474 = vpop.f32.mrf.mxu0
        %9475 = vmatprep.mubr.bf16.mxu0 %v8849
        %9476 = vmatmul.mubr.bf16.gmra.mxu0 %v8848
        %v9477 = vpop.f32.mrf.mxu0
        %v9478 = vadd.f32 %v9317, %v9477
        %v9479 = vpop.f32.mrf.mxu0
        %v9480 = vpop.f32.mrf.mxu0
        %v9481 = vadd.f32 %v9320, %v9480
        %v9482 = vpop.f32.mrf.mxu0
        %9483 = vmatprep.mubr.bf16.mxu0 %v8854
        %9484 = vmatmul.mubr.bf16.gmra.mxu0 %v8853
        %v9485 = vpop.f32.mrf.mxu0
        %v9486 = vadd.f32 %v9325, %v9485
        %v9487 = vpop.f32.mrf.mxu0
        %v9488 = vpop.f32.mrf.mxu0
        %v9489 = vadd.f32 %v9328, %v9488
        %v9490 = vpop.f32.mrf.mxu0
        %9491 = vmatprep.mubr.bf16.mxu0 %v8859
        %9492 = vmatmul.mubr.bf16.gmra.mxu0 %v8858
        %v9493 = vpop.f32.mrf.mxu0
        %v9494 = vadd.f32 %v9333, %v9493
        %v9495 = vpop.f32.mrf.mxu0
        %v9496 = vpop.f32.mrf.mxu0
        %v9497 = vadd.f32 %v9336, %v9496
        %v9498 = vpop.f32.mrf.mxu0
        %9499 = vmatprep.mubr.bf16.mxu0 %v8864
        %9500 = vmatmul.mubr.bf16.gmra.mxu0 %v8863
        %v9501 = vpop.f32.mrf.mxu0
        %v9502 = vadd.f32 %v9341, %v9501
        %v9503 = vpop.f32.mrf.mxu0
        %v9504 = vpop.f32.mrf.mxu0
        %v9505 = vadd.f32 %v9344, %v9504
        %v9506 = vpop.f32.mrf.mxu0
        %9507 = vmatprep.mubr.bf16.mxu0 %v8869
        %9508 = vmatmul.mubr.bf16.gmra.mxu0 %v8868
        %v9509 = vpop.f32.mrf.mxu0
        %v9510 = vadd.f32 %v9349, %v9509
        %v9511 = vpop.f32.mrf.mxu0
        %v9512 = vpop.f32.mrf.mxu0
        %v9513 = vadd.f32 %v9352, %v9512
        %v9514 = vpop.f32.mrf.mxu0
        %9515 = vmatprep.mubr.bf16.mxu0 %v8874
        %9516 = vmatmul.mubr.bf16.gmra.mxu0 %v8873
        %v9517 = vpop.f32.mrf.mxu0
        %v9518 = vadd.f32 %v9357, %v9517
        %v9519 = vpop.f32.mrf.mxu0
        %v9520 = vpop.f32.mrf.mxu0
        %v9521 = vadd.f32 %v9360, %v9520
        %v9522 = vpop.f32.mrf.mxu0
        %9523 = vmatprep.mubr.bf16.mxu0 %v8879
        %9524 = vmatmul.mubr.bf16.gmra.mxu0 %v8878
        %v9525 = vpop.f32.mrf.mxu0
        %v9526 = vadd.f32 %v9365, %v9525
        %v9527 = vpop.f32.mrf.mxu0
        %v9528 = vpop.f32.mrf.mxu0
        %v9529 = vadd.f32 %v9368, %v9528
        %v9530 = vpop.f32.mrf.mxu0
        %9531 = vdwg.mxu0
        %9532 = vmatprep.subr.bf16.mxu0 0
        %9533 = vmatpush1.bf16.msra.mxu0 0
        %9534 = vmatprep.subr.bf16.mxu0 0
        %9535 = vmatpush1.bf16.msra.mxu0 0
        %9536 = vmatprep.subr.bf16.mxu0 0
        %9537 = vmatpush1.bf16.msra.mxu0 0
        %9538 = vmatprep.subr.bf16.mxu0 0
        %9539 = vmatpush1.bf16.msra.mxu0 0
        %9540 = vmatprep.subr.bf16.mxu0 0
        %9541 = vmatpush1.bf16.msra.mxu0 %v9124
        %9542 = vmatprep.subr.bf16.mxu0 0
        %9543 = vmatpush1.bf16.msra.mxu0 %v9123
        %9544 = vmatprep.subr.bf16.mxu0 0
        %9545 = vmatpush1.bf16.msra.mxu0 %v9122
        %9546 = vmatprep.subr.bf16.mxu0 0
        %9547 = vmatpush1.bf16.msra.mxu0 %v9121
        %9548 = vmatprep.subr.bf16.mxu0 0
        %9549 = vmatpush2.bf16.msra.mxu0 0
        %9550 = vmatprep.subr.bf16.mxu0 0
        %9551 = vmatpush2.bf16.msra.mxu0 0
        %9552 = vmatprep.subr.bf16.mxu0 0
        %9553 = vmatpush2.bf16.msra.mxu0 0
        %9554 = vmatprep.subr.bf16.mxu0 0
        %9555 = vmatpush2.bf16.msra.mxu0 0
        %9556 = vmatprep.subr.bf16.mxu0 0
        %9557 = vmatpush2.bf16.msra.mxu0 0
        %9558 = vmatprep.subr.bf16.mxu0 0
        %9559 = vmatpush2.bf16.msra.mxu0 0
        %9560 = vmatprep.subr.bf16.mxu0 0
        %9561 = vmatpush2.bf16.msra.mxu0 0
        %9562 = vmatprep.subr.bf16.mxu0 0
        %9563 = vmatpush2.bf16.msra.mxu0 0
        %9564 = vmatprep.mubr.bf16.mxu0 0
        %9565 = vmatmul.mubr.bf16.gmra.mxu0 %v9163
        %v9566 = vpop.f32.mrf.mxu0
        %v9567 = vadd.f32 %v9406, %v9566
        %v9568 = vpop.f32.mrf.mxu0
        %v9569 = vpop.f32.mrf.mxu0
        %v9570 = vadd.f32 %v9409, %v9569
        %v9571 = vpop.f32.mrf.mxu0
        %9572 = vmatprep.mubr.bf16.mxu0 0
        %9573 = vmatmul.mubr.bf16.gmra.mxu0 %v9166
        %v9574 = vpop.f32.mrf.mxu0
        %v9575 = vadd.f32 %v9414, %v9574
        %v9576 = vpop.f32.mrf.mxu0
        %v9577 = vpop.f32.mrf.mxu0
        %v9578 = vadd.f32 %v9417, %v9577
        %v9579 = vpop.f32.mrf.mxu0
        %9580 = vmatprep.mubr.bf16.mxu0 0
        %9581 = vmatmul.mubr.bf16.gmra.mxu0 %v9169
        %v9582 = vpop.f32.mrf.mxu0
        %v9583 = vadd.f32 %v9422, %v9582
        %v9584 = vpop.f32.mrf.mxu0
        %v9585 = vpop.f32.mrf.mxu0
        %v9586 = vadd.f32 %v9425, %v9585
        %v9587 = vpop.f32.mrf.mxu0
        %9588 = vmatprep.mubr.bf16.mxu0 0
        %9589 = vmatmul.mubr.bf16.gmra.mxu0 %v9172
        %v9590 = vpop.f32.mrf.mxu0
        %v9591 = vadd.f32 %v9430, %v9590
        %v9592 = vpop.f32.mrf.mxu0
        %v9593 = vpop.f32.mrf.mxu0
        %v9594 = vadd.f32 %v9433, %v9593
        %v9595 = vpop.f32.mrf.mxu0
        %9596 = vmatprep.mubr.bf16.mxu0 0
        %9597 = vmatmul.mubr.bf16.gmra.mxu0 %v9175
        %v9598 = vpop.f32.mrf.mxu0
        %v9599 = vadd.f32 %v9438, %v9598
        %v9600 = vpop.f32.mrf.mxu0
        %v9601 = vpop.f32.mrf.mxu0
        %v9602 = vadd.f32 %v9441, %v9601
        %v9603 = vpop.f32.mrf.mxu0
        %9604 = vmatprep.mubr.bf16.mxu0 0
        %9605 = vmatmul.mubr.bf16.gmra.mxu0 %v9178
        %v9606 = vpop.f32.mrf.mxu0
        %v9607 = vadd.f32 %v9446, %v9606
        %v9608 = vpop.f32.mrf.mxu0
        %v9609 = vpop.f32.mrf.mxu0
        %v9610 = vadd.f32 %v9449, %v9609
        %v9611 = vpop.f32.mrf.mxu0
        %9612 = vmatprep.mubr.bf16.mxu0 0
        %9613 = vmatmul.mubr.bf16.gmra.mxu0 %v9181
        %v9614 = vpop.f32.mrf.mxu0
        %v9615 = vadd.f32 %v9454, %v9614
        %v9616 = vpop.f32.mrf.mxu0
        %v9617 = vpop.f32.mrf.mxu0
        %v9618 = vadd.f32 %v9457, %v9617
        %v9619 = vpop.f32.mrf.mxu0
        %9620 = vmatprep.mubr.bf16.mxu0 0
        %9621 = vmatmul.mubr.bf16.gmra.mxu0 %v9184
        %v9622 = vpop.f32.mrf.mxu0
        %v9623 = vadd.f32 %v9462, %v9622
        %v9624 = vpop.f32.mrf.mxu0
        %v9625 = vpop.f32.mrf.mxu0
        %v9626 = vadd.f32 %v9465, %v9625
        %v9627 = vpop.f32.mrf.mxu0
        %9628 = vmatprep.mubr.bf16.mxu0 0
        %9629 = vmatmul.mubr.bf16.gmra.mxu0 %v9187
        %v9630 = vpop.f32.mrf.mxu0
        %v9631 = vadd.f32 %v9470, %v9630
        %v9632 = vpop.f32.mrf.mxu0
        %v9633 = vpop.f32.mrf.mxu0
        %v9634 = vadd.f32 %v9473, %v9633
        %v9635 = vpop.f32.mrf.mxu0
        %9636 = vmatprep.mubr.bf16.mxu0 0
        %9637 = vmatmul.mubr.bf16.gmra.mxu0 %v9190
        %v9638 = vpop.f32.mrf.mxu0
        %v9639 = vadd.f32 %v9478, %v9638
        %v9640 = vpop.f32.mrf.mxu0
        %v9641 = vpop.f32.mrf.mxu0
        %v9642 = vadd.f32 %v9481, %v9641
        %v9643 = vpop.f32.mrf.mxu0
        %9644 = vmatprep.mubr.bf16.mxu0 0
        %9645 = vmatmul.mubr.bf16.gmra.mxu0 %v9193
        %v9646 = vpop.f32.mrf.mxu0
        %v9647 = vadd.f32 %v9486, %v9646
        %v9648 = vpop.f32.mrf.mxu0
        %v9649 = vpop.f32.mrf.mxu0
        %v9650 = vadd.f32 %v9489, %v9649
        %v9651 = vpop.f32.mrf.mxu0
        %9652 = vmatprep.mubr.bf16.mxu0 0
        %9653 = vmatmul.mubr.bf16.gmra.mxu0 %v9196
        %v9654 = vpop.f32.mrf.mxu0
        %v9655 = vadd.f32 %v9494, %v9654
        %v9656 = vpop.f32.mrf.mxu0
        %v9657 = vpop.f32.mrf.mxu0
        %v9658 = vadd.f32 %v9497, %v9657
        %v9659 = vpop.f32.mrf.mxu0
        %9660 = vmatprep.mubr.bf16.mxu0 0
        %9661 = vmatmul.mubr.bf16.gmra.mxu0 %v9199
        %v9662 = vpop.f32.mrf.mxu0
        %v9663 = vadd.f32 %v9502, %v9662
        %v9664 = vpop.f32.mrf.mxu0
        %v9665 = vpop.f32.mrf.mxu0
        %v9666 = vadd.f32 %v9505, %v9665
        %v9667 = vpop.f32.mrf.mxu0
        %9668 = vmatprep.mubr.bf16.mxu0 0
        %9669 = vmatmul.mubr.bf16.gmra.mxu0 %v9202
        %v9670 = vpop.f32.mrf.mxu0
        %v9671 = vadd.f32 %v9510, %v9670
        %v9672 = vpop.f32.mrf.mxu0
        %v9673 = vpop.f32.mrf.mxu0
        %v9674 = vadd.f32 %v9513, %v9673
        %v9675 = vpop.f32.mrf.mxu0
        %9676 = vmatprep.mubr.bf16.mxu0 0
        %9677 = vmatmul.mubr.bf16.gmra.mxu0 %v9205
        %v9678 = vpop.f32.mrf.mxu0
        %v9679 = vadd.f32 %v9518, %v9678
        %v9680 = vpop.f32.mrf.mxu0
        %v9681 = vpop.f32.mrf.mxu0
        %v9682 = vadd.f32 %v9521, %v9681
        %v9683 = vpop.f32.mrf.mxu0
        %9684 = vmatprep.mubr.bf16.mxu0 0
        %9685 = vmatmul.mubr.bf16.gmra.mxu0 %v9208
        %v9686 = vpop.f32.mrf.mxu0
        %v9687 = vadd.f32 %v9526, %v9686
        %v9688 = vpop.f32.mrf.mxu0
        %v9689 = vpop.f32.mrf.mxu0
        %v9690 = vadd.f32 %v9529, %v9689
        %v9691 = vpop.f32.mrf.mxu0
        %9692 = vdwg.mxu0
        %v9693 = vld [vmem:[%s5] sm:$0x1]
        %v9695 = vlaneseq
        %v9696 = vshrl.u32 %v9695, 7
        %v9697 = vsub.s32 0, %v9696
        %v9698 = vrot.slane %v9693, %v9697
        %v9700 = vmul.f32 %v9567, %v9698
        %v9701 = vmul.f32 %v9570, %v9698
        %v9702 = vmul.f32 %v9575, %v9698
        %v9703 = vmul.f32 %v9578, %v9698
        %v9704 = vmul.f32 %v9583, %v9698
        %v9705 = vmul.f32 %v9586, %v9698
        %v9706 = vmul.f32 %v9591, %v9698
        %v9707 = vmul.f32 %v9594, %v9698
        %v9708 = vmul.f32 %v9599, %v9698
        %v9709 = vmul.f32 %v9602, %v9698
        %v9710 = vmul.f32 %v9607, %v9698
        %v9711 = vmul.f32 %v9610, %v9698
        %v9712 = vmul.f32 %v9615, %v9698
        %v9713 = vmul.f32 %v9618, %v9698
        %v9714 = vmul.f32 %v9623, %v9698
        %v9715 = vmul.f32 %v9626, %v9698
        %v9716 = vmul.f32 %v9631, %v9698
        %v9717 = vmul.f32 %v9634, %v9698
        %v9718 = vmul.f32 %v9639, %v9698
        %v9719 = vmul.f32 %v9642, %v9698
        %v9720 = vmul.f32 %v9647, %v9698
        %v9721 = vmul.f32 %v9650, %v9698
        %v9722 = vmul.f32 %v9655, %v9698
        %v9723 = vmul.f32 %v9658, %v9698
        %v9724 = vmul.f32 %v9663, %v9698
        %v9725 = vmul.f32 %v9666, %v9698
        %v9726 = vmul.f32 %v9671, %v9698
        %v9727 = vmul.f32 %v9674, %v9698
        %v9728 = vmul.f32 %v9679, %v9698
        %v9729 = vmul.f32 %v9682, %v9698
        %v9730 = vmul.f32 %v9687, %v9698
        %v9731 = vmul.f32 %v9690, %v9698
        %v9732 = vld [vmem:[%s6] sm:$0x1]
        %v9734 = vlaneseq
        %v9735 = vshrl.u32 %v9734, 7
        %v9736 = vsub.s32 0, %v9735
        %v9737 = vrot.slane %v9732, %v9736
        %v9739 = vadd.f32 %v9700, %v9737
        %v9740 = vadd.f32 %v9701, %v9737
        %v9741 = vadd.f32 %v9702, %v9737
        %v9742 = vadd.f32 %v9703, %v9737
        %v9743 = vadd.f32 %v9704, %v9737
        %v9744 = vadd.f32 %v9705, %v9737
        %v9745 = vadd.f32 %v9706, %v9737
        %v9746 = vadd.f32 %v9707, %v9737
        %v9747 = vadd.f32 %v9708, %v9737
        %v9748 = vadd.f32 %v9709, %v9737
        %v9749 = vadd.f32 %v9710, %v9737
        %v9750 = vadd.f32 %v9711, %v9737
        %v9751 = vadd.f32 %v9712, %v9737
        %v9752 = vadd.f32 %v9713, %v9737
        %v9753 = vadd.f32 %v9714, %v9737
        %v9754 = vadd.f32 %v9715, %v9737
        %v9755 = vadd.f32 %v9716, %v9737
        %v9756 = vadd.f32 %v9717, %v9737
        %v9757 = vadd.f32 %v9718, %v9737
        %v9758 = vadd.f32 %v9719, %v9737
        %v9759 = vadd.f32 %v9720, %v9737
        %v9760 = vadd.f32 %v9721, %v9737
        %v9761 = vadd.f32 %v9722, %v9737
        %v9762 = vadd.f32 %v9723, %v9737
        %v9763 = vadd.f32 %v9724, %v9737
        %v9764 = vadd.f32 %v9725, %v9737
        %v9765 = vadd.f32 %v9726, %v9737
        %v9766 = vadd.f32 %v9727, %v9737
        %v9767 = vadd.f32 %v9728, %v9737
        %v9768 = vadd.f32 %v9729, %v9737
        %v9769 = vadd.f32 %v9730, %v9737
        %v9770 = vadd.f32 %v9731, %v9737
        %v9771 = vld [vmem:[%s352] sm:$0xf]
        %v9772 = vld [vmem:[%s352 + $0x4] sm:$0xf]
        %v9773 = vld [vmem:[%s352 + $0x8] sm:$0xf]
        %v9774 = vld [vmem:[%s352 + $0xc] sm:$0xf]
        %v9775 = vld [vmem:[%s352 + $0x10] sm:$0xf]
        %v9776 = vld [vmem:[%s352 + $0x14] sm:$0xf]
        %v9777 = vld [vmem:[%s352 + $0x18] sm:$0xf]
        %v9778 = vld [vmem:[%s352 + $0x1c] sm:$0xf]
        %v9779 = vld [vmem:[%s352 + $0x20] sm:$0xf]
        %v9780 = vld [vmem:[%s352 + $0x24] sm:$0xf]
        %v9781 = vld [vmem:[%s352 + $0x28] sm:$0xf]
        %v9782 = vld [vmem:[%s352 + $0x2c] sm:$0xf]
        %v9783 = vld [vmem:[%s352 + $0x30] sm:$0xf]
        %v9784 = vld [vmem:[%s352 + $0x34] sm:$0xf]
        %v9785 = vld [vmem:[%s352 + $0x38] sm:$0xf]
        %v9786 = vld [vmem:[%s352 + $0x3c] sm:$0xf]
        %v9787 = vld [vmem:[%s352 + $0x40] sm:$0xf]
        %v9788 = vld [vmem:[%s352 + $0x44] sm:$0xf]
        %v9789 = vld [vmem:[%s352 + $0x48] sm:$0xf]
        %v9790 = vld [vmem:[%s352 + $0x4c] sm:$0xf]
        %v9791 = vld [vmem:[%s352 + $0x50] sm:$0xf]
        %v9792 = vld [vmem:[%s352 + $0x54] sm:$0xf]
        %v9793 = vld [vmem:[%s352 + $0x58] sm:$0xf]
        %v9794 = vld [vmem:[%s352 + $0x5c] sm:$0xf]
        %v9795 = vld [vmem:[%s352 + $0x60] sm:$0xf]
        %v9796 = vld [vmem:[%s352 + $0x64] sm:$0xf]
        %v9797 = vld [vmem:[%s352 + $0x68] sm:$0xf]
        %v9798 = vld [vmem:[%s352 + $0x6c] sm:$0xf]
        %v9799 = vld [vmem:[%s352 + $0x70] sm:$0xf]
        %v9800 = vld [vmem:[%s352 + $0x74] sm:$0xf]
        %v9801 = vld [vmem:[%s352 + $0x78] sm:$0xf]
        %v9802 = vld [vmem:[%s352 + $0x7c] sm:$0xf]
        %v9803 = vld [vmem:[%s7] sm:$0xf]
        %v9804 = vld [vmem:[%s7 + $0x4] sm:$0xf]
        %v9805 = vld [vmem:[%s7 + $0x8] sm:$0xf]
        %v9806 = vld [vmem:[%s7 + $0xc] sm:$0xf]
        %v9839 = vunpack.c.l.b16 %v9771
        %v9840 = vunpack.c.l.b16 %v9772
        %v9841 = vunpack.c.l.b16 %v9773
        %v9842 = vunpack.c.l.b16 %v9774
        %v9843 = vunpack.c.l.b16 %v9775
        %v9844 = vunpack.c.l.b16 %v9776
        %v9845 = vunpack.c.l.b16 %v9777
        %v9846 = vunpack.c.l.b16 %v9778
        %v9847 = vunpack.c.l.b16 %v9779
        %v9848 = vunpack.c.l.b16 %v9780
        %v9849 = vunpack.c.l.b16 %v9781
        %v9850 = vunpack.c.l.b16 %v9782
        %v9851 = vunpack.c.l.b16 %v9783
        %v9852 = vunpack.c.l.b16 %v9784
        %v9853 = vunpack.c.l.b16 %v9785
        %v9854 = vunpack.c.l.b16 %v9786
        %v9855 = vunpack.c.l.b16 %v9787
        %v9856 = vunpack.c.l.b16 %v9788
        %v9857 = vunpack.c.l.b16 %v9789
        %v9858 = vunpack.c.l.b16 %v9790
        %v9859 = vunpack.c.l.b16 %v9791
        %v9860 = vunpack.c.l.b16 %v9792
        %v9861 = vunpack.c.l.b16 %v9793
        %v9862 = vunpack.c.l.b16 %v9794
        %v9863 = vunpack.c.l.b16 %v9795
        %v9864 = vunpack.c.l.b16 %v9796
        %v9865 = vunpack.c.l.b16 %v9797
        %v9866 = vunpack.c.l.b16 %v9798
        %v9867 = vunpack.c.l.b16 %v9799
        %v9868 = vunpack.c.l.b16 %v9800
        %v9869 = vunpack.c.l.b16 %v9801
        %v9870 = vunpack.c.l.b16 %v9802
        %v9871 = vpack.c.b16 %v9840, %v9839
        %v9872 = vpack.c.b16 %v9842, %v9841
        %v9873 = vpack.c.b16 %v9844, %v9843
        %v9874 = vpack.c.b16 %v9846, %v9845
        %v9875 = vpack.c.b16 %v9848, %v9847
        %v9876 = vpack.c.b16 %v9850, %v9849
        %v9877 = vpack.c.b16 %v9852, %v9851
        %v9878 = vpack.c.b16 %v9854, %v9853
        %v9879 = vpack.c.b16 %v9856, %v9855
        %v9880 = vpack.c.b16 %v9858, %v9857
        %v9881 = vpack.c.b16 %v9860, %v9859
        %v9882 = vpack.c.b16 %v9862, %v9861
        %v9883 = vpack.c.b16 %v9864, %v9863
        %v9884 = vpack.c.b16 %v9866, %v9865
        %v9885 = vpack.c.b16 %v9868, %v9867
        %v9886 = vpack.c.b16 %v9870, %v9869
        %v9891 = vunpack.c.l.b16 %v9803
        %v9892 = vunpack.c.l.b16 %v9804
        %v9893 = vunpack.c.l.b16 %v9805
        %v9894 = vunpack.c.l.b16 %v9806
        %v9895 = vpack.c.b16 %v9892, %v9891
        %v9896 = vpack.c.b16 %v9894, %v9893
        %v9900 = vsel %vm4439, %v9871, 0
        %v9903 = vsel %vm4439, %v9872, 0
        %v9906 = vsel %vm4439, %v9873, 0
        %v9909 = vsel %vm4439, %v9874, 0
        %v9912 = vsel %vm4439, %v9875, 0
        %v9915 = vsel %vm4439, %v9876, 0
        %v9918 = vsel %vm4439, %v9877, 0
        %v9921 = vsel %vm4439, %v9878, 0
        %v9924 = vsel %vm4439, %v9879, 0
        %v9927 = vsel %vm4439, %v9880, 0
        %v9930 = vsel %vm4439, %v9881, 0
        %v9933 = vsel %vm4439, %v9882, 0
        %v9936 = vsel %vm4439, %v9883, 0
        %v9939 = vsel %vm4439, %v9884, 0
        %v9942 = vsel %vm4439, %v9885, 0
        %v9945 = vsel %vm4439, %v9886, 0
        %9947 = vmatprep.subr.bf16.mxu0 0
        %9948 = vmatpush1.bf16.msra.mxu0 0
        %9949 = vmatprep.subr.bf16.mxu0 0
        %9950 = vmatpush1.bf16.msra.mxu0 0
        %9951 = vmatprep.subr.bf16.mxu0 0
        %9952 = vmatpush1.bf16.msra.mxu0 0
        %9953 = vmatprep.subr.bf16.mxu0 0
        %9954 = vmatpush1.bf16.msra.mxu0 0
        %9955 = vmatprep.subr.bf16.mxu0 0
        %9956 = vmatpush1.bf16.msra.mxu0 0
        %9957 = vmatprep.subr.bf16.mxu0 0
        %9958 = vmatpush1.bf16.msra.mxu0 0
        %9959 = vmatprep.subr.bf16.mxu0 0
        %9960 = vmatpush1.bf16.msra.mxu0 %v9896
        %9961 = vmatprep.subr.bf16.mxu0 0
        %9962 = vmatpush1.bf16.msra.mxu0 %v9895
        %9963 = vmatprep.subr.bf16.mxu0 0
        %9964 = vmatpush2.bf16.msra.mxu0 0
        %9965 = vmatprep.subr.bf16.mxu0 0
        %9966 = vmatpush2.bf16.msra.mxu0 0
        %9967 = vmatprep.subr.bf16.mxu0 0
        %9968 = vmatpush2.bf16.msra.mxu0 0
        %9969 = vmatprep.subr.bf16.mxu0 0
        %9970 = vmatpush2.bf16.msra.mxu0 0
        %9971 = vmatprep.subr.bf16.mxu0 0
        %9972 = vmatpush2.bf16.msra.mxu0 0
        %9973 = vmatprep.subr.bf16.mxu0 0
        %9974 = vmatpush2.bf16.msra.mxu0 0
        %9975 = vmatprep.subr.bf16.mxu0 0
        %9976 = vmatpush2.bf16.msra.mxu0 0
        %9977 = vmatprep.subr.bf16.mxu0 0
        %9978 = vmatpush2.bf16.msra.mxu0 0
        %9979 = vmatprep.mubr.bf16.mxu0 0
        %9980 = vmatmul.mubr.bf16.gmra.mxu0 %v9900
        %v9981 = vpop.f32.mrf.mxu0
        %v9982 = vadd.f32 0.0, %v9981
        %v9983 = vpop.f32.mrf.mxu0
        %v9984 = vpop.f32.mrf.mxu0
        %v9985 = vadd.f32 0.0, %v9984
        %v9986 = vpop.f32.mrf.mxu0
        %9987 = vmatprep.mubr.bf16.mxu0 0
        %9988 = vmatmul.mubr.bf16.gmra.mxu0 %v9903
        %v9989 = vpop.f32.mrf.mxu0
        %v9990 = vadd.f32 0.0, %v9989
        %v9991 = vpop.f32.mrf.mxu0
        %v9992 = vpop.f32.mrf.mxu0
        %v9993 = vadd.f32 0.0, %v9992
        %v9994 = vpop.f32.mrf.mxu0
        %9995 = vmatprep.mubr.bf16.mxu0 0
        %9996 = vmatmul.mubr.bf16.gmra.mxu0 %v9906
        %v9997 = vpop.f32.mrf.mxu0
        %v9998 = vadd.f32 0.0, %v9997
        %v9999 = vpop.f32.mrf.mxu0
        %v10000 = vpop.f32.mrf.mxu0
        %v10001 = vadd.f32 0.0, %v10000
        %v10002 = vpop.f32.mrf.mxu0
        %10003 = vmatprep.mubr.bf16.mxu0 0
        %10004 = vmatmul.mubr.bf16.gmra.mxu0 %v9909
        %v10005 = vpop.f32.mrf.mxu0
        %v10006 = vadd.f32 0.0, %v10005
        %v10007 = vpop.f32.mrf.mxu0
        %v10008 = vpop.f32.mrf.mxu0
        %v10009 = vadd.f32 0.0, %v10008
        %v10010 = vpop.f32.mrf.mxu0
        %10011 = vmatprep.mubr.bf16.mxu0 0
        %10012 = vmatmul.mubr.bf16.gmra.mxu0 %v9912
        %v10013 = vpop.f32.mrf.mxu0
        %v10014 = vadd.f32 0.0, %v10013
        %v10015 = vpop.f32.mrf.mxu0
        %v10016 = vpop.f32.mrf.mxu0
        %v10017 = vadd.f32 0.0, %v10016
        %v10018 = vpop.f32.mrf.mxu0
        %10019 = vmatprep.mubr.bf16.mxu0 0
        %10020 = vmatmul.mubr.bf16.gmra.mxu0 %v9915
        %v10021 = vpop.f32.mrf.mxu0
        %v10022 = vadd.f32 0.0, %v10021
        %v10023 = vpop.f32.mrf.mxu0
        %v10024 = vpop.f32.mrf.mxu0
        %v10025 = vadd.f32 0.0, %v10024
        %v10026 = vpop.f32.mrf.mxu0
        %10027 = vmatprep.mubr.bf16.mxu0 0
        %10028 = vmatmul.mubr.bf16.gmra.mxu0 %v9918
        %v10029 = vpop.f32.mrf.mxu0
        %v10030 = vadd.f32 0.0, %v10029
        %v10031 = vpop.f32.mrf.mxu0
        %v10032 = vpop.f32.mrf.mxu0
        %v10033 = vadd.f32 0.0, %v10032
        %v10034 = vpop.f32.mrf.mxu0
        %10035 = vmatprep.mubr.bf16.mxu0 0
        %10036 = vmatmul.mubr.bf16.gmra.mxu0 %v9921
        %v10037 = vpop.f32.mrf.mxu0
        %v10038 = vadd.f32 0.0, %v10037
        %v10039 = vpop.f32.mrf.mxu0
        %v10040 = vpop.f32.mrf.mxu0
        %v10041 = vadd.f32 0.0, %v10040
        %v10042 = vpop.f32.mrf.mxu0
        %10043 = vmatprep.mubr.bf16.mxu0 0
        %10044 = vmatmul.mubr.bf16.gmra.mxu0 %v9924
        %v10045 = vpop.f32.mrf.mxu0
        %v10046 = vadd.f32 0.0, %v10045
        %v10047 = vpop.f32.mrf.mxu0
        %v10048 = vpop.f32.mrf.mxu0
        %v10049 = vadd.f32 0.0, %v10048
        %v10050 = vpop.f32.mrf.mxu0
        %10051 = vmatprep.mubr.bf16.mxu0 0
        %10052 = vmatmul.mubr.bf16.gmra.mxu0 %v9927
        %v10053 = vpop.f32.mrf.mxu0
        %v10054 = vadd.f32 0.0, %v10053
        %v10055 = vpop.f32.mrf.mxu0
        %v10056 = vpop.f32.mrf.mxu0
        %v10057 = vadd.f32 0.0, %v10056
        %v10058 = vpop.f32.mrf.mxu0
        %10059 = vmatprep.mubr.bf16.mxu0 0
        %10060 = vmatmul.mubr.bf16.gmra.mxu0 %v9930
        %v10061 = vpop.f32.mrf.mxu0
        %v10062 = vadd.f32 0.0, %v10061
        %v10063 = vpop.f32.mrf.mxu0
        %v10064 = vpop.f32.mrf.mxu0
        %v10065 = vadd.f32 0.0, %v10064
        %v10066 = vpop.f32.mrf.mxu0
        %10067 = vmatprep.mubr.bf16.mxu0 0
        %10068 = vmatmul.mubr.bf16.gmra.mxu0 %v9933
        %v10069 = vpop.f32.mrf.mxu0
        %v10070 = vadd.f32 0.0, %v10069
        %v10071 = vpop.f32.mrf.mxu0
        %v10072 = vpop.f32.mrf.mxu0
        %v10073 = vadd.f32 0.0, %v10072
        %v10074 = vpop.f32.mrf.mxu0
        %10075 = vmatprep.mubr.bf16.mxu0 0
        %10076 = vmatmul.mubr.bf16.gmra.mxu0 %v9936
        %v10077 = vpop.f32.mrf.mxu0
        %v10078 = vadd.f32 0.0, %v10077
        %v10079 = vpop.f32.mrf.mxu0
        %v10080 = vpop.f32.mrf.mxu0
        %v10081 = vadd.f32 0.0, %v10080
        %v10082 = vpop.f32.mrf.mxu0
        %10083 = vmatprep.mubr.bf16.mxu0 0
        %10084 = vmatmul.mubr.bf16.gmra.mxu0 %v9939
        %v10085 = vpop.f32.mrf.mxu0
        %v10086 = vadd.f32 0.0, %v10085
        %v10087 = vpop.f32.mrf.mxu0
        %v10088 = vpop.f32.mrf.mxu0
        %v10089 = vadd.f32 0.0, %v10088
        %v10090 = vpop.f32.mrf.mxu0
        %10091 = vmatprep.mubr.bf16.mxu0 0
        %10092 = vmatmul.mubr.bf16.gmra.mxu0 %v9942
        %v10093 = vpop.f32.mrf.mxu0
        %v10094 = vadd.f32 0.0, %v10093
        %v10095 = vpop.f32.mrf.mxu0
        %v10096 = vpop.f32.mrf.mxu0
        %v10097 = vadd.f32 0.0, %v10096
        %v10098 = vpop.f32.mrf.mxu0
        %10099 = vmatprep.mubr.bf16.mxu0 0
        %10100 = vmatmul.mubr.bf16.gmra.mxu0 %v9945
        %v10101 = vpop.f32.mrf.mxu0
        %v10102 = vadd.f32 0.0, %v10101
        %v10103 = vpop.f32.mrf.mxu0
        %v10104 = vpop.f32.mrf.mxu0
        %v10105 = vadd.f32 0.0, %v10104
        %v10106 = vpop.f32.mrf.mxu0
        %10107 = vdwg.mxu0
        %v10108 = vld [vmem:[%s8] sm:$0x1]
        %v10110 = vlaneseq
        %v10111 = vshrl.u32 %v10110, 7
        %v10112 = vsub.s32 0, %v10111
        %v10113 = vrot.slane %v10108, %v10112
        %v10115 = vmul.f32 %v9982, %v10113
        %v10116 = vmul.f32 %v9985, %v10113
        %v10117 = vmul.f32 %v9990, %v10113
        %v10118 = vmul.f32 %v9993, %v10113
        %v10119 = vmul.f32 %v9998, %v10113
        %v10120 = vmul.f32 %v10001, %v10113
        %v10121 = vmul.f32 %v10006, %v10113
        %v10122 = vmul.f32 %v10009, %v10113
        %v10123 = vmul.f32 %v10014, %v10113
        %v10124 = vmul.f32 %v10017, %v10113
        %v10125 = vmul.f32 %v10022, %v10113
        %v10126 = vmul.f32 %v10025, %v10113
        %v10127 = vmul.f32 %v10030, %v10113
        %v10128 = vmul.f32 %v10033, %v10113
        %v10129 = vmul.f32 %v10038, %v10113
        %v10130 = vmul.f32 %v10041, %v10113
        %v10131 = vmul.f32 %v10046, %v10113
        %v10132 = vmul.f32 %v10049, %v10113
        %v10133 = vmul.f32 %v10054, %v10113
        %v10134 = vmul.f32 %v10057, %v10113
        %v10135 = vmul.f32 %v10062, %v10113
        %v10136 = vmul.f32 %v10065, %v10113
        %v10137 = vmul.f32 %v10070, %v10113
        %v10138 = vmul.f32 %v10073, %v10113
        %v10139 = vmul.f32 %v10078, %v10113
        %v10140 = vmul.f32 %v10081, %v10113
        %v10141 = vmul.f32 %v10086, %v10113
        %v10142 = vmul.f32 %v10089, %v10113
        %v10143 = vmul.f32 %v10094, %v10113
        %v10144 = vmul.f32 %v10097, %v10113
        %v10145 = vmul.f32 %v10102, %v10113
        %v10146 = vmul.f32 %v10105, %v10113
        %v10147 = vld [vmem:[%s9] sm:$0x1]
        %v10149 = vlaneseq
        %v10150 = vshrl.u32 %v10149, 7
        %v10151 = vsub.s32 0, %v10150
        %v10152 = vrot.slane %v10147, %v10151
        %v10154 = vadd.f32 %v10115, %v10152
        %v10155 = vadd.f32 %v10116, %v10152
        %v10156 = vadd.f32 %v10117, %v10152
        %v10157 = vadd.f32 %v10118, %v10152
        %v10158 = vadd.f32 %v10119, %v10152
        %v10159 = vadd.f32 %v10120, %v10152
        %v10160 = vadd.f32 %v10121, %v10152
        %v10161 = vadd.f32 %v10122, %v10152
        %v10162 = vadd.f32 %v10123, %v10152
        %v10163 = vadd.f32 %v10124, %v10152
        %v10164 = vadd.f32 %v10125, %v10152
        %v10165 = vadd.f32 %v10126, %v10152
        %v10166 = vadd.f32 %v10127, %v10152
        %v10167 = vadd.f32 %v10128, %v10152
        %v10168 = vadd.f32 %v10129, %v10152
        %v10169 = vadd.f32 %v10130, %v10152
        %v10170 = vadd.f32 %v10131, %v10152
        %v10171 = vadd.f32 %v10132, %v10152
        %v10172 = vadd.f32 %v10133, %v10152
        %v10173 = vadd.f32 %v10134, %v10152
        %v10174 = vadd.f32 %v10135, %v10152
        %v10175 = vadd.f32 %v10136, %v10152
        %v10176 = vadd.f32 %v10137, %v10152
        %v10177 = vadd.f32 %v10138, %v10152
        %v10178 = vadd.f32 %v10139, %v10152
        %v10179 = vadd.f32 %v10140, %v10152
        %v10180 = vadd.f32 %v10141, %v10152
        %v10181 = vadd.f32 %v10142, %v10152
        %v10182 = vadd.f32 %v10143, %v10152
        %v10183 = vadd.f32 %v10144, %v10152
        %v10184 = vadd.f32 %v10145, %v10152
        %v10185 = vadd.f32 %v10146, %v10152
        %v10186 = vadd.f32 %v9739, %v10154
        %v10187 = vadd.f32 %v9740, %v10155
        %v10188 = vadd.f32 %v9741, %v10156
        %v10189 = vadd.f32 %v9742, %v10157
        %v10190 = vadd.f32 %v9743, %v10158
        %v10191 = vadd.f32 %v9744, %v10159
        %v10192 = vadd.f32 %v9745, %v10160
        %v10193 = vadd.f32 %v9746, %v10161
        %v10194 = vadd.f32 %v9747, %v10162
        %v10195 = vadd.f32 %v9748, %v10163
        %v10196 = vadd.f32 %v9749, %v10164
        %v10197 = vadd.f32 %v9750, %v10165
        %v10198 = vadd.f32 %v9751, %v10166
        %v10199 = vadd.f32 %v9752, %v10167
        %v10200 = vadd.f32 %v9753, %v10168
        %v10201 = vadd.f32 %v9754, %v10169
        %v10202 = vadd.f32 %v9755, %v10170
        %v10203 = vadd.f32 %v9756, %v10171
        %v10204 = vadd.f32 %v9757, %v10172
        %v10205 = vadd.f32 %v9758, %v10173
        %v10206 = vadd.f32 %v9759, %v10174
        %v10207 = vadd.f32 %v9760, %v10175
        %v10208 = vadd.f32 %v9761, %v10176
        %v10209 = vadd.f32 %v9762, %v10177
        %v10210 = vadd.f32 %v9763, %v10178
        %v10211 = vadd.f32 %v9764, %v10179
        %v10212 = vadd.f32 %v9765, %v10180
        %v10213 = vadd.f32 %v9766, %v10181
        %v10214 = vadd.f32 %v9767, %v10182
        %v10215 = vadd.f32 %v9768, %v10183
        %v10216 = vadd.f32 %v9769, %v10184
        %v10217 = vadd.f32 %v9770, %v10185
        %v10218 = vmax.f32 %v10186, 0.0
        %v10219 = vmax.f32 %v10187, 0.0
        %v10220 = vmax.f32 %v10188, 0.0
        %v10221 = vmax.f32 %v10189, 0.0
        %v10222 = vmax.f32 %v10190, 0.0
        %v10223 = vmax.f32 %v10191, 0.0
        %v10224 = vmax.f32 %v10192, 0.0
        %v10225 = vmax.f32 %v10193, 0.0
        %v10226 = vmax.f32 %v10194, 0.0
        %v10227 = vmax.f32 %v10195, 0.0
        %v10228 = vmax.f32 %v10196, 0.0
        %v10229 = vmax.f32 %v10197, 0.0
        %v10230 = vmax.f32 %v10198, 0.0
        %v10231 = vmax.f32 %v10199, 0.0
        %v10232 = vmax.f32 %v10200, 0.0
        %v10233 = vmax.f32 %v10201, 0.0
        %v10234 = vmax.f32 %v10202, 0.0
        %v10235 = vmax.f32 %v10203, 0.0
        %v10236 = vmax.f32 %v10204, 0.0
        %v10237 = vmax.f32 %v10205, 0.0
        %v10238 = vmax.f32 %v10206, 0.0
        %v10239 = vmax.f32 %v10207, 0.0
        %v10240 = vmax.f32 %v10208, 0.0
        %v10241 = vmax.f32 %v10209, 0.0
        %v10242 = vmax.f32 %v10210, 0.0
        %v10243 = vmax.f32 %v10211, 0.0
        %v10244 = vmax.f32 %v10212, 0.0
        %v10245 = vmax.f32 %v10213, 0.0
        %v10246 = vmax.f32 %v10214, 0.0
        %v10247 = vmax.f32 %v10215, 0.0
        %v10248 = vmax.f32 %v10216, 0.0
        %v10249 = vmax.f32 %v10217, 0.0
        %10250 = vst [vmem:[%s392] sm:$0xff] %v10218
        %10251 = vst [vmem:[%s392 + $0x8] sm:$0xff] %v10219
        %10252 = vst [vmem:[%s392 + $0x10] sm:$0xff] %v10220
        %10253 = vst [vmem:[%s392 + $0x18] sm:$0xff] %v10221
        %10254 = vst [vmem:[%s392 + $0x20] sm:$0xff] %v10222
        %10255 = vst [vmem:[%s392 + $0x28] sm:$0xff] %v10223
        %10256 = vst [vmem:[%s392 + $0x30] sm:$0xff] %v10224
        %10257 = vst [vmem:[%s392 + $0x38] sm:$0xff] %v10225
        %10258 = vst [vmem:[%s392 + $0x40] sm:$0xff] %v10226
        %10259 = vst [vmem:[%s392 + $0x48] sm:$0xff] %v10227
        %10260 = vst [vmem:[%s392 + $0x50] sm:$0xff] %v10228
        %10261 = vst [vmem:[%s392 + $0x58] sm:$0xff] %v10229
        %10262 = vst [vmem:[%s392 + $0x60] sm:$0xff] %v10230
        %10263 = vst [vmem:[%s392 + $0x68] sm:$0xff] %v10231
        %10264 = vst [vmem:[%s392 + $0x70] sm:$0xff] %v10232
        %10265 = vst [vmem:[%s392 + $0x78] sm:$0xff] %v10233
        %10266 = vst [vmem:[%s392 + $0x80] sm:$0xff] %v10234
        %10267 = vst [vmem:[%s392 + $0x88] sm:$0xff] %v10235
        %10268 = vst [vmem:[%s392 + $0x90] sm:$0xff] %v10236
        %10269 = vst [vmem:[%s392 + $0x98] sm:$0xff] %v10237
        %10270 = vst [vmem:[%s392 + $0xa0] sm:$0xff] %v10238
        %10271 = vst [vmem:[%s392 + $0xa8] sm:$0xff] %v10239
        %10272 = vst [vmem:[%s392 + $0xb0] sm:$0xff] %v10240
        %10273 = vst [vmem:[%s392 + $0xb8] sm:$0xff] %v10241
        %10274 = vst [vmem:[%s392 + $0xc0] sm:$0xff] %v10242
        %10275 = vst [vmem:[%s392 + $0xc8] sm:$0xff] %v10243
        %10276 = vst [vmem:[%s392 + $0xd0] sm:$0xff] %v10244
        %10277 = vst [vmem:[%s392 + $0xd8] sm:$0xff] %v10245
        %10278 = vst [vmem:[%s392 + $0xe0] sm:$0xff] %v10246
        %10279 = vst [vmem:[%s392 + $0xe8] sm:$0xff] %v10247
        %10280 = vst [vmem:[%s392 + $0xf0] sm:$0xff] %v10248
        %10281 = vst [vmem:[%s392 + $0xf8] sm:$0xff] %v10249
        %s10282 = sand.u32 %s251, 1
        %s10283 = scalar_lea.sflag [#allocation8], %s10282
        %s10284 = sand.u32 %s251, 1
        %s10285 = smul.addr %s10284, 256
        %s10286 = scalar_lea.vmem [#allocation11], %s10285
        // Predicated region
        $region69: #{tpu_custom_call.1} parent=59 // pred_check
          %p10287 = pneg %p261
        $region70: #{tpu_custom_call.1} parent=59 // pred_check_branch
          %10289 = sbr.rel (%p10287) target = $region72
        $region71: #{tpu_custom_call.1} parent=59 // pred_region
          %s10291 = ssub.s32 4096, 4096
          %10292 = vsyncadd %s10283, %s10291
          %s10293 = smul.addr %s28, 32
          %s10294 = smul.addr %s10293, 128
          %s10295 = scalar_lea.hbm %s10, %s10294
          %s10296 = sshll.u32 %s10286, 4
          %s10297 = int_to_ptr.vmem [resolvable:$true] %s10296
          %10302 = dma.vmem_to_hbm [thread:$0]  %s10297, 4096, %s10295, %s10283, 128, 128, 8
        $region72: #{tpu_custom_call.1} parent=59 // pred_fallthru
          _
      $region60: #{tpu_custom_call.1} parent=5 // pred_fallthru
        _
      %p10303 = scmp.le.s32.totalorder 2, %s23
      // Predicated region
      $region73: #{tpu_custom_call.1} parent=5 // pred_check
        %p10304 = pneg %p10303
      $region74: #{tpu_custom_call.1} parent=5 // pred_check_branch
        %10306 = sbr.rel (%p10304) target = $region76
      $region75: #{tpu_custom_call.1} parent=5 // pred_region
        %s10307 = ssub.s32 %s23, 2
        // Predicated region
        $region77: #{tpu_custom_call.1} parent=75 // pred_check
          %p10308 = pneg %p267
        $region78: #{tpu_custom_call.1} parent=75 // pred_check_branch
          %10310 = sbr.rel (%p10308) target = $region80
        $region79: #{tpu_custom_call.1} parent=75 // pred_region
          %s10311 = sand.u32 %s252, 1
          %s10312 = scalar_lea.sflag [#allocation8], %s10311
          %s10313 = sand.u32 %s252, 1
          %s10314 = smul.addr %s10313, 256
          %s10315 = scalar_lea.vmem [#allocation11], %s10314
          %10316 = dma.done %s10312, 4096
        $region80: #{tpu_custom_call.1} parent=75 // pred_fallthru
          _
      $region76: #{tpu_custom_call.1} parent=5 // pred_fallthru
        _
    $region6: #{tpu_custom_call.1} parent=1 // loop_footer
      %s27 = sadd.s32 1, %s23
    $region7: #{tpu_custom_call.1} parent=1 // loop_footer_branch
      %22 = sbr.rel target = $region3
    $region8: #{tpu_custom_call.1} parent=1 // loop_exit
      _
    %10317 = vsyncpa [#allocation7], 1
    %s10318 = scalar_lea.sflag [#allocation7], 1
    %10319 = vsyncpa %s10318, 1
    %10320 = vsyncpa [#allocation10], 1
    %10321 = vsyncpa [#allocation8], 1
    %s10322 = scalar_lea.sflag [#allocation8], 1
    %10323 = vsyncpa %s10322, 1

</llo_original>
